<compile_context>
chip_gen: v6e
topology: v6e:2x2x1
jax: 0.10.0
libtpu: 0.0.40
codegen_flags: <defaults>
</compile_context>

<pallas_src>
import functools

import jax
import jax.numpy as jnp
from jax import lax
from jax.experimental import pallas as pl
from jax.experimental.pallas import tpu as pltpu

_LN_EPS = 1e-5
_SQRT_HALF = 0.7071067811865476
_F32 = jnp.float32
_BF16 = jnp.bfloat16


# ----------------------------- in-kernel helpers -----------------------------

def _ln(x, w, b, eps=_LN_EPS):
    # WithBias LayerNorm over the last (channel) dim; w, b are (1, C).
    mu = jnp.mean(x, axis=-1, keepdims=True)
    xc = x - mu
    var = jnp.mean(xc * xc, axis=-1, keepdims=True)
    return xc * lax.rsqrt(var + eps) * w + b


def _erf(x):
    # Abramowitz-Stegun 7.1.26 rational approximation (|err| <= 1.5e-7);
    # the 1/(1+p|x|) goes to the EUP via pl.reciprocal.
    a1, a2, a3, a4, a5 = 0.254829592, -0.284496736, 1.421413741, -1.453152027, 1.061405429
    p = 0.3275911
    ax = jnp.abs(x)
    t = pl.reciprocal(1.0 + p * ax, approx=True)
    poly = ((((a5 * t + a4) * t + a3) * t + a2) * t + a1) * t
    y = 1.0 - poly * jnp.exp(-ax * ax)
    return jnp.where(x >= 0, y, -y)


def _gelu(x):
    # exact-erf GELU (matches nn.GELU() / F.gelu default, modulo the erf approx)
    return 0.5 * x * (1.0 + _erf(x * _SQRT_HALF))


def _softmax_lastdim(s):
    m = jnp.max(s, axis=-1, keepdims=True)
    e = jnp.exp(s - m)
    return e * pl.reciprocal(jnp.sum(e, axis=-1, keepdims=True), approx=True)


def _mm(a, b):
    # bf16 MXU matmul with f32 accumulation.
    return jnp.dot(a.astype(_BF16), b.astype(_BF16), preferred_element_type=_F32)


def _dwconv3x3_flat(x, mask_ref, w9, W):
    # Depthwise 3x3 conv (stride 1, pad 1) on row-major-flattened (HW, Cx) f32 data:
    # 9 sublane rolls (XLU) + precomputed boundary masks + per-tap FMAs (VPU).
    #   mask_ref: (9, HW, 1) ref of {0,1} f32, w9: (9, Cx) f32 value.
    HW = x.shape[0]
    acc = jnp.zeros(x.shape, _F32)
    k = 0
    for dy in (-1, 0, 1):
        for dx in (-1, 0, 1):
            s = dy * W + dx                       # out[p] reads x[p + s] (when valid)
            xs = x if s == 0 else pltpu.roll(x, shift=(-s) % HW, axis=0)
            acc = acc + xs * mask_ref[k] * w9[k:k + 1, :]
            k += 1
    return acc


# ----------------------------- Pallas kernels -----------------------------

def _encoder_head_kernel(x_ref, y_ref,
                         n11w_ref, n11b_ref, n12w_ref, n12b_ref,
                         wq_ref, bq_ref,
                         offdw_ref, offdb_ref, offlnw_ref, offlnb_ref,
                         grpavg_ref, woff_ref, refgrid_ref, mask_ref,
                         q_out_ref, y12_out_ref, pos_out_ref, *, W):
    x = x_ref[0].astype(_F32)                      # (HW, C)
    y = y_ref[0].astype(_F32)                      # (HW, C)

    # LayerNorms that only depend on the raw inputs (norm1_1, norm1_2).
    xln = _ln(x, n11w_ref[...], n11b_ref[...])
    y12 = _ln(y, n12w_ref[...], n12b_ref[...])
    y12_out_ref[0] = y12.astype(y12_out_ref.dtype)

    # DCA query projection (1x1 conv) -- all heads in one bf16 matmul.
    q = _mm(xln, wq_ref[...]) + bq_ref[...]
    q_out_ref[0] = q.astype(q_out_ref.dtype)

    # conv_offset branch: dwconv3x3 -> per-head LayerNorm (group stats via matmul,
    # centered variance) -> GELU -> block-diagonal 1x1 (dim_head -> 2 per head).
    t = _dwconv3x3_flat(q, mask_ref, offdw_ref[...], W) + offdb_ref[...]
    grp = grpavg_ref[...]
    mean_g = jnp.dot(t, grp, preferred_element_type=_F32)
    tc = t - mean_g
    var_g = jnp.dot(tc * tc, grp, preferred_element_type=_F32)
    tn = tc * lax.rsqrt(var_g + _LN_EPS) * offlnw_ref[...] + offlnb_ref[...]
    off = jnp.dot(_gelu(tn), woff_ref[...], preferred_element_type=_F32)
    pos = jnp.clip(off + refgrid_ref[...], -1.0, 1.0)   # (HW, heads*2), (y, x) pairs
    pos_out_ref[0] = pos.astype(pos_out_ref.dtype)


def _encoder_tail_kernel(x_ref, q_ref, kvs_ref, y_ref,
                         wkv_ref, bkv_ref, wo_ref, bo_ref,
                         n21w_ref, n21b_ref, n22w_ref, n22b_ref,
                         cqw_ref, cqdw_ref, ckvw_ref, ckvdw_ref, cpow_ref, temp_ref,
                         n3w_ref, n3b_ref,
                         fpi_ref, fdw_ref, fpo_ref,
                         mask_ref,
                         out_ref,
                         dca_sc, cca_sc,
                         *, heads, dim_head, dim, hidden, scale, W):
    inner = heads * dim_head
    cph = dim // heads

    x = x_ref[0].astype(_F32)                      # (HW, C)  original x (residual)
    q = q_ref[0].astype(_F32) * scale              # (HW, inner)
    kvs = kvs_ref[0].astype(_F32)                  # (HW, C)  deformable-sampled kv
    y = y_ref[0].astype(_F32)                      # (HW, C)  raw y

    # -------- DCA: fused k/v projection, per-head attention, one fused out-proj --------
    kv = _mm(kvs, wkv_ref[...]) + bkv_ref[...]
    k = kv[:, :inner]
    v = kv[:, inner:]
    for h in range(heads):
        sl = slice(h * dim_head, (h + 1) * dim_head)
        s = lax.dot_general(q[:, sl].astype(_BF16), k[:, sl].astype(_BF16),
                            (((1,), (1,)), ((), ())),
                            preferred_element_type=_F32)            # (HW, HW)
        p = _softmax_lastdim(s)
        dca_sc[:, sl] = _mm(p, v[:, sl])                             # (HW, dh)
    dca = _mm(dca_sc[...], wo_ref[...]) + bo_ref[...]
    x1 = x + dca

    # -------- Channel cross attention (norm2_1(x1), norm2_2(y), CCA, residual) --------
    xl = _ln(x1, n21w_ref[...], n21b_ref[...])
    y22 = _ln(y, n22w_ref[...], n22b_ref[...])
    cq = _dwconv3x3_flat(_mm(xl, cqw_ref[...]), mask_ref, cqdw_ref[...], W)
    ckv = _dwconv3x3_flat(_mm(y22, ckvw_ref[...]), mask_ref, ckvdw_ref[...], W)
    ck = ckv[:, :dim]
    cv = ckv[:, dim:]
    for h in range(heads):
        sl = slice(h * cph, (h + 1) * cph)
        qh = cq[:, sl]                                               # (HW, cph)
        kh = ck[:, sl]
        qn = qh * lax.rsqrt(jnp.maximum(jnp.sum(qh * qh, axis=0, keepdims=True), 1e-24))
        kn = kh * lax.rsqrt(jnp.maximum(jnp.sum(kh * kh, axis=0, keepdims=True), 1e-24))
        att = lax.dot_general(qn, kn, (((0,), (0,)), ((), ())),
                              preferred_element_type=_F32) * temp_ref[h]   # (cph, cph)
        p = _softmax_lastdim(att)
        cca_sc[:, sl] = lax.dot_general(cv[:, sl], p, (((1,), (1,)), ((), ())),
                                        preferred_element_type=_F32)       # (HW, cph)
    cca = _mm(cca_sc[...], cpow_ref[...])
    x2 = x1 + cca

    # -------- gated-dconv FeedForward (norm3 + FFN + residual) --------
    x2l = _ln(x2, n3w_ref[...], n3b_ref[...])
    t = _dwconv3x3_flat(_mm(x2l, fpi_ref[...]), mask_ref, fdw_ref[...], W)
    g = _gelu(t[:, :hidden]) * t[:, hidden:]
    ffn = _mm(g, fpo_ref[...])
    out_ref[0] = (x2 + ffn).astype(out_ref.dtype)


# ----------------------------- wrappers -----------------------------

def _batch_spec(block_shape):
    nd = len(block_shape)
    return pl.BlockSpec(block_shape, lambda b, _nd=nd: (b,) + (0,) * (_nd - 1))


def _full_spec(shape):
    nd = len(shape)
    return pl.BlockSpec(shape, lambda b, _nd=nd: (0,) * _nd)


_VMEM_LIMIT = 64 * 1024 * 1024


def encoder_head(x_seq, y_seq, pk, *, heads, W):
    B, HW, C = x_seq.shape
    inner = pk['wq'].shape[1]
    dt = x_seq.dtype
    ins = [x_seq, y_seq,
           pk['n11w'], pk['n11b'], pk['n12w'], pk['n12b'],
           pk['wq'], pk['bq'],
           pk['off_dw9'], pk['off_db'], pk['off_lnw'], pk['off_lnb'],
           pk['grp_avg'], pk['woff_bd'], pk['refgrid'], pk['dwmask']]
    in_specs = ([_batch_spec((1, HW, C)), _batch_spec((1, HW, C))]
                + [_full_spec(a.shape) for a in ins[2:]])
    out_shape = (jax.ShapeDtypeStruct((B, HW, inner), dt),
                 jax.ShapeDtypeStruct((B, HW, C), dt),
                 jax.ShapeDtypeStruct((B, HW, 2 * heads), dt))
    out_specs = (_batch_spec((1, HW, inner)), _batch_spec((1, HW, C)),
                 _batch_spec((1, HW, 2 * heads)))
    return pl.pallas_call(
        functools.partial(_encoder_head_kernel, W=W),
        grid=(B,),
        in_specs=in_specs,
        out_specs=out_specs,
        out_shape=out_shape,
        compiler_params=pltpu.CompilerParams(
            dimension_semantics=("parallel",),
            vmem_limit_bytes=_VMEM_LIMIT),
    )(*ins)


def encoder_tail(x_seq, q, kv_s, y_seq, pk, *, heads, dim_head, hidden, W):
    B, HW, C = x_seq.shape
    inner = heads * dim_head
    scale = dim_head ** -0.5
    kernel = functools.partial(_encoder_tail_kernel, heads=heads, dim_head=dim_head,
                               dim=C, hidden=hidden, scale=scale, W=W)
    ins = [x_seq, q, kv_s, y_seq,
           pk['wkv'], pk['bkv'], pk['wo'], pk['bo'],
           pk['n21w'], pk['n21b'], pk['n22w'], pk['n22b'],
           pk['cq_w'], pk['cq_dw9'], pk['ckv_w'], pk['ckv_dw9'], pk['cpo_w'], pk['temp'],
           pk['n3w'], pk['n3b'],
           pk['fpi_w'], pk['fdw9'], pk['fpo_w'],
           pk['dwmask']]
    in_specs = [
        _batch_spec((1, HW, C)), _batch_spec((1, HW, inner)),
        _batch_spec((1, HW, C)), _batch_spec((1, HW, C)),
    ]
    for name in ('wkv', 'bkv', 'wo', 'bo', 'n21w', 'n21b', 'n22w', 'n22b',
                 'cq_w', 'cq_dw9', 'ckv_w', 'ckv_dw9', 'cpo_w'):
        in_specs.append(_full_spec(pk[name].shape))
    in_specs.append(pl.BlockSpec(memory_space=pltpu.MemorySpace.SMEM))   # temperature
    for name in ('n3w', 'n3b', 'fpi_w', 'fdw9', 'fpo_w', 'dwmask'):
        in_specs.append(_full_spec(pk[name].shape))
    return pl.pallas_call(
        kernel,
        grid=(B,),
        in_specs=in_specs,
        out_specs=_batch_spec((1, HW, C)),
        out_shape=jax.ShapeDtypeStruct((B, HW, C), x_seq.dtype),
        scratch_shapes=[pltpu.VMEM((HW, inner), jnp.float32),
                        pltpu.VMEM((HW, C), jnp.float32)],
        input_output_aliases={0: 0},          # output reuses the x_seq buffer
        compiler_params=pltpu.CompilerParams(
            dimension_semantics=("parallel",),
            vmem_limit_bytes=_VMEM_LIMIT),
    )(*ins)


# ----------------------------- host-side constant builders -----------------------------

def _make_dw_masks(H, W):
    # (9, HW, 1) {0,1} masks: tap (dy, dx) of a padding=1 depthwise 3x3 conv is valid at
    # row-major position p = i*W + j iff (i+dy, j+dx) lies inside the image.
    i = jnp.arange(H * W) // W
    j = jnp.arange(H * W) % W
    masks = []
    for dy in (-1, 0, 1):
        for dx in (-1, 0, 1):
            valid = (i + dy >= 0) & (i + dy < H) & (j + dx >= 0) & (j + dx < W)
            masks.append(valid.astype(jnp.float32))
    return jnp.stack(masks)[:, :, None]


def _ref_grid(H, W, heads):
    # Matches DCA._get_ref_points exactly: linspace(0.5, H-0.5, H) -> /(H-1)*2-1.
    ry = ((jnp.arange(H, dtype=jnp.float32) + 0.5) / (H - 1.0)) * 2.0 - 1.0
    rx = ((jnp.arange(W, dtype=jnp.float32) + 0.5) / (W - 1.0)) * 2.0 - 1.0
    ref = jnp.stack(jnp.meshgrid(ry, rx, indexing='ij'), axis=-1).reshape(H * W, 2)  # (y, x)
    return jnp.tile(ref, (1, heads))


def _pack_params(params, H, W, heads, dim_head, hidden):
    C = params['n11_w'].shape[0]
    inner = heads * dim_head
    f32 = jnp.float32
    row = lambda v: v.reshape(1, -1).astype(f32)
    d, c, f = params['dca'], params['cca'], params['ffn']
    return {
        'n11w': row(params['n11_w']), 'n11b': row(params['n11_b']),
        'n12w': row(params['n12_w']), 'n12b': row(params['n12_b']),
        'n21w': row(params['n21_w']), 'n21b': row(params['n21_b']),
        'n22w': row(params['n22_w']), 'n22b': row(params['n22_b']),
        'n3w': row(params['n3_w']), 'n3b': row(params['n3_b']),
        # DCA head-kernel params
        'wq': d['proj_q_w'].astype(_BF16), 'bq': row(d['proj_q_b']),
        'off_dw9': jnp.tile(d['off_dw_w'], (1, 1, heads)).reshape(9, inner).astype(f32),
        'off_db': row(jnp.tile(d['off_dw_b'], heads)),
        'off_lnw': row(jnp.tile(d['off_ln_w'], heads)),
        'off_lnb': row(jnp.tile(d['off_ln_b'], heads)),
        'grp_avg': jnp.kron(jnp.eye(heads, dtype=f32),
                            jnp.full((dim_head, dim_head), 1.0 / dim_head, f32)),
        'woff_bd': jnp.kron(jnp.eye(heads, dtype=f32), d['off_proj_w'].astype(f32)),
        'refgrid': _ref_grid(H, W, heads).astype(f32),
        'dwmask': _make_dw_masks(H, W),
        # DCA tail-kernel params (k/v projections fused)
        'wkv': jnp.concatenate([d['proj_k_w'], d['proj_v_w']], axis=1).astype(_BF16),
        'bkv': row(jnp.concatenate([d['proj_k_b'], d['proj_v_b']])),
        'wo': d['proj_out_w'].astype(_BF16), 'bo': row(d['proj_out_b']),
        # CCA params (bias=False)
        'cq_w': c['q_w'].astype(_BF16), 'cq_dw9': c['q_dw_w'].reshape(9, C).astype(f32),
        'ckv_w': c['kv_w'].astype(_BF16), 'ckv_dw9': c['kv_dw_w'].reshape(9, 2 * C).astype(f32),
        'cpo_w': c['po_w'].astype(_BF16), 'temp': c['temperature'].astype(f32),
        # FFN params (bias=False)
        'fpi_w': f['pi_w'].astype(_BF16), 'fdw9': f['dw_w'].reshape(9, 2 * hidden).astype(f32),
        'fpo_w': f['po_w'].astype(_BF16),
    }


# ----------------------------- JAX glue (grid_sample) -----------------------------

def _grid_sample_bilinear(img, grid_xy):
    # img: (N, H, W, C); grid_xy: (N, Hk, Wk, 2) with (x, y) in [-1, 1].
    # bilinear, align_corners=True, zero padding (matches F.grid_sample).
    N, H, W, C = img.shape
    x = (grid_xy[..., 0] + 1.0) * 0.5 * (W - 1)
    y = (grid_xy[..., 1] + 1.0) * 0.5 * (H - 1)
    x0 = jnp.floor(x)
    y0 = jnp.floor(y)
    x1 = x0 + 1.0
    y1 = y0 + 1.0
    wx1 = x - x0
    wx0 = 1.0 - wx1
    wy1 = y - y0
    wy0 = 1.0 - wy1
    bidx = jnp.arange(N)[:, None, None]

    def tap(ix, iy):
        valid = (ix >= 0) & (ix <= W - 1) & (iy >= 0) & (iy <= H - 1)
        ic = jnp.clip(ix, 0, W - 1).astype(jnp.int32)
        jc = jnp.clip(iy, 0, H - 1).astype(jnp.int32)
        return img[bidx, jc, ic] * valid[..., None].astype(img.dtype)

    return (tap(x0, y0) * (wx0 * wy0)[..., None]
            + tap(x1, y0) * (wx1 * wy0)[..., None]
            + tap(x0, y1) * (wx0 * wy1)[..., None]
            + tap(x1, y1) * (wx1 * wy1)[..., None])


def _deformable_sample(y12, pos, B, H, W, heads, dh):
    # TODO(synk): data-dependent bilinear gather (F.grid_sample) kept in plain JAX;
    # fusing it into the tail kernel would remove the remaining HBM round-trips.
    HW = H * W
    kv_img = y12.reshape(B, H, W, heads, dh).transpose(0, 3, 1, 2, 4).reshape(B * heads, H, W, dh)
    pos_bh = pos.reshape(B, H, W, heads, 2).transpose(0, 3, 1, 2, 4).reshape(B * heads, H, W, 2)
    sampled = _grid_sample_bilinear(kv_img, pos_bh[..., ::-1])      # grid order (x, y)
    return sampled.reshape(B, heads, HW, dh).transpose(0, 2, 1, 3).reshape(B, HW, heads * dh)


# ----------------------------- forward -----------------------------

def transformer_encoder_forward(params, x, y, *, heads, dim_head, hidden):
    B, H, W, C = x.shape
    HW = H * W
    x_seq = x.reshape(B, HW, C)
    y_seq = y.reshape(B, HW, C)
    pk = _pack_params(params, H, W, heads, dim_head, hidden)

    q, y12, pos = encoder_head(x_seq, y_seq, pk, heads=heads, W=W)
    kv_s = _deformable_sample(y12, pos, B, H, W, heads, dim_head)
    out_seq = encoder_tail(x_seq, q, kv_s, y_seq, pk,
                           heads=heads, dim_head=dim_head, hidden=hidden, W=W)
    return out_seq.reshape(B, H, W, C)


# ----------------------------- parameters -----------------------------

def init_params(key, dim, heads, dim_head, ffn_factor):
    inner = heads * dim_head
    hidden = int(dim * ffn_factor)
    keys = iter(jax.random.split(key, 64))

    def w(shape, scale=0.05):
        return jax.random.normal(next(keys), shape, jnp.float32) * scale

    zeros = lambda n: jnp.zeros((n,), jnp.float32)
    ones = lambda n: jnp.ones((n,), jnp.float32)

    return {
        'n11_w': ones(dim), 'n11_b': zeros(dim),
        'n12_w': ones(dim), 'n12_b': zeros(dim),
        'n21_w': ones(dim), 'n21_b': zeros(dim),
        'n22_w': ones(dim), 'n22_b': zeros(dim),
        'n3_w': ones(dim), 'n3_b': zeros(dim),
        'dca': {
            'proj_q_w': w((dim, inner)), 'proj_q_b': w((inner,), 0.02),
            'proj_k_w': w((dim, inner)), 'proj_k_b': w((inner,), 0.02),
            'proj_v_w': w((dim, inner)), 'proj_v_b': w((inner,), 0.02),
            'off_dw_w': w((3, 3, dim_head)), 'off_dw_b': w((dim_head,), 0.02),
            'off_ln_w': ones(dim_head), 'off_ln_b': zeros(dim_head),
            'off_proj_w': w((dim_head, 2)),            # bias=False
            'proj_out_w': w((inner, dim)), 'proj_out_b': w((dim,), 0.02),
        },
        'cca': {                                        # module built with bias=False
            'q_w': w((dim, dim)), 'q_dw_w': w((3, 3, dim)),
            'kv_w': w((dim, 2 * dim)), 'kv_dw_w': w((3, 3, 2 * dim)),
            'po_w': w((dim, dim)),
            'temperature': ones(heads),
        },
        'ffn': {
            'pi_w': w((dim, 2 * hidden)), 'dw_w': w((3, 3, 2 * hidden)),
            'po_w': w((hidden, dim)),
        },
    }


# ----------------------------- main -----------------------------

if __name__ == "__main__":
    # TransformerEncoder(dim=16, num_heads=2, ffn_expansion_factor=2, bias=False,
    #                    LayerNorm_type='WithBias', offset_kernel=3, offset_stride=1, dim_head=8)
    dim, heads, dim_head = 16, 2, 8
    ffn_factor = 2.0
    hidden = int(dim * ffn_factor)
    B, H, W = 2, 8, 8

    key = jax.random.PRNGKey(0)
    kx, ky, kp = jax.random.split(key, 3)
    x_nchw = jax.random.normal(kx, (B, dim, H, W), jnp.float32)   # PyTorch NCHW inputs
    y_nchw = jax.random.normal(ky, (B, dim, H, W), jnp.float32)
    params = init_params(kp, dim, heads, dim_head, ffn_factor)

    x = jnp.transpose(x_nchw, (0, 2, 3, 1))   # NCHW -> NHWC (kernel layout)
    y = jnp.transpose(y_nchw, (0, 2, 3, 1))

    fwd = jax.jit(functools.partial(transformer_encoder_forward,
                                    heads=heads, dim_head=dim_head, hidden=hidden))
    out = fwd(params, x, y)
    jax.block_until_ready(out)
    assert out.shape == (B, H, W, dim) and out.dtype == jnp.float32
    assert bool(jnp.isfinite(out).all())
    print("KERNEL_OK")
</pallas_src>

<mosaic_0001>
module attributes {stable_mosaic.version = 11 : i64} {
  func.func @_encoder_head_kernel(%arg0: i32, %arg1: memref<1x64x16xf32, #tpu.memory_space<vmem>>, %arg2: memref<1x64x16xf32, #tpu.memory_space<vmem>>, %arg3: memref<1x16xf32, #tpu.memory_space<vmem>>, %arg4: memref<1x16xf32, #tpu.memory_space<vmem>>, %arg5: memref<1x16xf32, #tpu.memory_space<vmem>>, %arg6: memref<1x16xf32, #tpu.memory_space<vmem>>, %arg7: memref<16x16xbf16, #tpu.memory_space<vmem>>, %arg8: memref<1x16xf32, #tpu.memory_space<vmem>>, %arg9: memref<9x16xf32, #tpu.memory_space<vmem>>, %arg10: memref<1x16xf32, #tpu.memory_space<vmem>>, %arg11: memref<1x16xf32, #tpu.memory_space<vmem>>, %arg12: memref<1x16xf32, #tpu.memory_space<vmem>>, %arg13: memref<16x16xf32, #tpu.memory_space<vmem>>, %arg14: memref<16x4xf32, #tpu.memory_space<vmem>>, %arg15: memref<64x4xf32, #tpu.memory_space<vmem>>, %arg16: memref<9x64x1xf32, #tpu.memory_space<vmem>>, %arg17: memref<1x64x16xf32, #tpu.memory_space<vmem>>, %arg18: memref<1x64x16xf32, #tpu.memory_space<vmem>>, %arg19: memref<1x64x4xf32, #tpu.memory_space<vmem>>) attributes {dimension_semantics = [#tpu.dimension_semantics<parallel>], iteration_bounds = array<i64: 2>, scalar_prefetch = 0 : i64, scratch_operands = 0 : i64, tpu.core_type = #tpu.core_type<tc>, window_params = [{transform_indices = @transform_0, window_bounds = array<i64: 1, 64, 16>}, {transform_indices = @transform_1, window_bounds = array<i64: 1, 64, 16>}, {pipeline_mode = #tpu.pipeline_mode<synchronous>, transform_indices = @transform_2, window_bounds = array<i64: 1, 16>}, {pipeline_mode = #tpu.pipeline_mode<synchronous>, transform_indices = @transform_3, window_bounds = array<i64: 1, 16>}, {pipeline_mode = #tpu.pipeline_mode<synchronous>, transform_indices = @transform_4, window_bounds = array<i64: 1, 16>}, {pipeline_mode = #tpu.pipeline_mode<synchronous>, transform_indices = @transform_5, window_bounds = array<i64: 1, 16>}, {pipeline_mode = #tpu.pipeline_mode<synchronous>, transform_indices = @transform_6, window_bounds = array<i64: 16, 16>}, {pipeline_mode = #tpu.pipeline_mode<synchronous>, transform_indices = @transform_7, window_bounds = array<i64: 1, 16>}, {pipeline_mode = #tpu.pipeline_mode<synchronous>, transform_indices = @transform_8, window_bounds = array<i64: 9, 16>}, {pipeline_mode = #tpu.pipeline_mode<synchronous>, transform_indices = @transform_9, window_bounds = array<i64: 1, 16>}, {pipeline_mode = #tpu.pipeline_mode<synchronous>, transform_indices = @transform_10, window_bounds = array<i64: 1, 16>}, {pipeline_mode = #tpu.pipeline_mode<synchronous>, transform_indices = @transform_11, window_bounds = array<i64: 1, 16>}, {pipeline_mode = #tpu.pipeline_mode<synchronous>, transform_indices = @transform_12, window_bounds = array<i64: 16, 16>}, {pipeline_mode = #tpu.pipeline_mode<synchronous>, transform_indices = @transform_13, window_bounds = array<i64: 16, 4>}, {pipeline_mode = #tpu.pipeline_mode<synchronous>, transform_indices = @transform_14, window_bounds = array<i64: 64, 4>}, {pipeline_mode = #tpu.pipeline_mode<synchronous>, transform_indices = @transform_15, window_bounds = array<i64: 9, 64, 1>}, {transform_indices = @transform_16, window_bounds = array<i64: 1, 64, 16>}, {transform_indices = @transform_17, window_bounds = array<i64: 1, 64, 16>}, {transform_indices = @transform_18, window_bounds = array<i64: 1, 64, 4>}]} {
    %c0 = arith.constant 0 : index
    %c0_0 = arith.constant 0 : index
    %c0_1 = arith.constant 0 : index
    %0 = vector.load %arg1[%c0, %c0_0, %c0_1] : memref<1x64x16xf32, #tpu.memory_space<vmem>>, vector<1x64x16xf32>
    %1 = vector.shape_cast %0 : vector<1x64x16xf32> to vector<64x16xf32>
    %c0_2 = arith.constant 0 : index
    %c0_3 = arith.constant 0 : index
    %c0_4 = arith.constant 0 : index
    %2 = vector.load %arg2[%c0_2, %c0_3, %c0_4] : memref<1x64x16xf32, #tpu.memory_space<vmem>>, vector<1x64x16xf32>
    %3 = vector.shape_cast %2 : vector<1x64x16xf32> to vector<64x16xf32>
    %c0_5 = arith.constant 0 : index
    %c0_6 = arith.constant 0 : index
    %4 = vector.load %arg3[%c0_5, %c0_6] : memref<1x16xf32, #tpu.memory_space<vmem>>, vector<1x16xf32>
    %c0_7 = arith.constant 0 : index
    %c0_8 = arith.constant 0 : index
    %5 = vector.load %arg4[%c0_7, %c0_8] : memref<1x16xf32, #tpu.memory_space<vmem>>, vector<1x16xf32>
    %cst = arith.constant dense<0.000000e+00> : vector<64xf32>
    %6 = vector.multi_reduction <add>, %1, %cst [1] : vector<64x16xf32> to vector<64xf32>
    %7 = vector.shape_cast %6 : vector<64xf32> to vector<64x1xf32>
    %cst_9 = arith.constant 1.600000e+01 : f32
    %8 = vector.broadcast %cst_9 : f32 to vector<64x1xf32>
    %9 = arith.divf %7, %8 : vector<64x1xf32>
    %10 = vector.broadcast %9 : vector<64x1xf32> to vector<64x16xf32>
    %11 = arith.subf %1, %10 : vector<64x16xf32>
    %12 = arith.mulf %11, %11 : vector<64x16xf32>
    %cst_10 = arith.constant dense<0.000000e+00> : vector<64xf32>
    %13 = vector.multi_reduction <add>, %12, %cst_10 [1] : vector<64x16xf32> to vector<64xf32>
    %14 = vector.shape_cast %13 : vector<64xf32> to vector<64x1xf32>
    %cst_11 = arith.constant 1.600000e+01 : f32
    %15 = vector.broadcast %cst_11 : f32 to vector<64x1xf32>
    %16 = arith.divf %14, %15 : vector<64x1xf32>
    %cst_12 = arith.constant 9.99999974E-6 : f32
    %17 = vector.broadcast %cst_12 : f32 to vector<64x1xf32>
    %18 = arith.addf %16, %17 : vector<64x1xf32>
    %19 = math.rsqrt %18 : vector<64x1xf32>
    %20 = vector.broadcast %19 : vector<64x1xf32> to vector<64x16xf32>
    %21 = arith.mulf %11, %20 : vector<64x16xf32>
    %22 = vector.broadcast %4 : vector<1x16xf32> to vector<64x16xf32>
    %23 = arith.mulf %21, %22 : vector<64x16xf32>
    %24 = vector.broadcast %5 : vector<1x16xf32> to vector<64x16xf32>
    %25 = arith.addf %23, %24 : vector<64x16xf32>
    %c0_13 = arith.constant 0 : index
    %c0_14 = arith.constant 0 : index
    %26 = vector.load %arg5[%c0_13, %c0_14] : memref<1x16xf32, #tpu.memory_space<vmem>>, vector<1x16xf32>
    %c0_15 = arith.constant 0 : index
    %c0_16 = arith.constant 0 : index
    %27 = vector.load %arg6[%c0_15, %c0_16] : memref<1x16xf32, #tpu.memory_space<vmem>>, vector<1x16xf32>
    %cst_17 = arith.constant dense<0.000000e+00> : vector<64xf32>
    %28 = vector.multi_reduction <add>, %3, %cst_17 [1] : vector<64x16xf32> to vector<64xf32>
    %29 = vector.shape_cast %28 : vector<64xf32> to vector<64x1xf32>
    %cst_18 = arith.constant 1.600000e+01 : f32
    %30 = vector.broadcast %cst_18 : f32 to vector<64x1xf32>
    %31 = arith.divf %29, %30 : vector<64x1xf32>
    %32 = vector.broadcast %31 : vector<64x1xf32> to vector<64x16xf32>
    %33 = arith.subf %3, %32 : vector<64x16xf32>
    %34 = arith.mulf %33, %33 : vector<64x16xf32>
    %cst_19 = arith.constant dense<0.000000e+00> : vector<64xf32>
    %35 = vector.multi_reduction <add>, %34, %cst_19 [1] : vector<64x16xf32> to vector<64xf32>
    %36 = vector.shape_cast %35 : vector<64xf32> to vector<64x1xf32>
    %cst_20 = arith.constant 1.600000e+01 : f32
    %37 = vector.broadcast %cst_20 : f32 to vector<64x1xf32>
    %38 = arith.divf %36, %37 : vector<64x1xf32>
    %cst_21 = arith.constant 9.99999974E-6 : f32
    %39 = vector.broadcast %cst_21 : f32 to vector<64x1xf32>
    %40 = arith.addf %38, %39 : vector<64x1xf32>
    %41 = math.rsqrt %40 : vector<64x1xf32>
    %42 = vector.broadcast %41 : vector<64x1xf32> to vector<64x16xf32>
    %43 = arith.mulf %33, %42 : vector<64x16xf32>
    %44 = vector.broadcast %26 : vector<1x16xf32> to vector<64x16xf32>
    %45 = arith.mulf %43, %44 : vector<64x16xf32>
    %46 = vector.broadcast %27 : vector<1x16xf32> to vector<64x16xf32>
    %47 = arith.addf %45, %46 : vector<64x16xf32>
    %c0_22 = arith.constant 0 : index
    %c0_23 = arith.constant 0 : index
    %c0_24 = arith.constant 0 : index
    %48 = vector.load %arg18[%c0_22, %c0_23, %c0_24] : memref<1x64x16xf32, #tpu.memory_space<vmem>>, vector<1x64x16xf32>
    %49 = vector.shape_cast %48 : vector<1x64x16xf32> to vector<64x16xf32>
    %50 = vector.shape_cast %47 : vector<64x16xf32> to vector<1x64x16xf32>
    tpu.vector_store %arg18[%c0_22, %c0_23, %c0_24], %50 {strides = array<i32>} : memref<1x64x16xf32, #tpu.memory_space<vmem>>, vector<1x64x16xf32>,
    %c0_25 = arith.constant 0 : index
    %c0_26 = arith.constant 0 : index
    %51 = vector.load %arg7[%c0_25, %c0_26] : memref<16x16xbf16, #tpu.memory_space<vmem>>, vector<16x16xbf16>
    %52 = arith.truncf %25 : vector<64x16xf32> to vector<64x16xbf16>
    %cst_27 = arith.constant dense<0.000000e+00> : vector<64x16xf32>
    %53 = tpu.matmul %52, %51, %cst_27 {dimension_numbers = #tpu.dot_dimension_numbers<[1], [0], [0], [1], [0, 0, 1, 1], [], []>} : vector<64x16xbf16>, vector<16x16xbf16>, vector<64x16xf32> -> vector<64x16xf32>
    %c0_28 = arith.constant 0 : index
    %c0_29 = arith.constant 0 : index
    %54 = vector.load %arg8[%c0_28, %c0_29] : memref<1x16xf32, #tpu.memory_space<vmem>>, vector<1x16xf32>
    %55 = vector.broadcast %54 : vector<1x16xf32> to vector<64x16xf32>
    %56 = arith.addf %53, %55 : vector<64x16xf32>
    %c0_30 = arith.constant 0 : index
    %c0_31 = arith.constant 0 : index
    %c0_32 = arith.constant 0 : index
    %57 = vector.load %arg17[%c0_30, %c0_31, %c0_32] : memref<1x64x16xf32, #tpu.memory_space<vmem>>, vector<1x64x16xf32>
    %58 = vector.shape_cast %57 : vector<1x64x16xf32> to vector<64x16xf32>
    %59 = vector.shape_cast %56 : vector<64x16xf32> to vector<1x64x16xf32>
    tpu.vector_store %arg17[%c0_30, %c0_31, %c0_32], %59 {strides = array<i32>} : memref<1x64x16xf32, #tpu.memory_space<vmem>>, vector<1x64x16xf32>,
    %c0_33 = arith.constant 0 : index
    %c0_34 = arith.constant 0 : index
    %60 = vector.load %arg9[%c0_33, %c0_34] : memref<9x16xf32, #tpu.memory_space<vmem>>, vector<9x16xf32>
    %cst_35 = arith.constant 0.000000e+00 : f32
    %61 = vector.broadcast %cst_35 : f32 to vector<64x16xf32>
    %c9_i32 = arith.constant 9 : i32
    %62 = tpu.dynamic_rotate %56 by %c9_i32 dim 0 : vector<64x16xf32>, i32 -> vector<64x16xf32>
    %c0_36 = arith.constant 0 : index
    %c0_37 = arith.constant 0 : index
    %c0_38 = arith.constant 0 : index
    %63 = vector.load %arg16[%c0_36, %c0_37, %c0_38] : memref<9x64x1xf32, #tpu.memory_space<vmem>>, vector<1x64x1xf32>
    %64 = vector.shape_cast %63 : vector<1x64x1xf32> to vector<64x1xf32>
    %65 = vector.broadcast %64 : vector<64x1xf32> to vector<64x16xf32>
    %66 = arith.mulf %62, %65 : vector<64x16xf32>
    %67 = vector.extract_strided_slice %60 {offsets = [0, 0], sizes = [1, 16], strides = [1, 1]} : vector<9x16xf32> to vector<1x16xf32>
    %68 = vector.broadcast %67 : vector<1x16xf32> to vector<64x16xf32>
    %69 = arith.mulf %66, %68 : vector<64x16xf32>
    %70 = arith.addf %61, %69 : vector<64x16xf32>
    %c8_i32 = arith.constant 8 : i32
    %71 = tpu.dynamic_rotate %56 by %c8_i32 dim 0 : vector<64x16xf32>, i32 -> vector<64x16xf32>
    %c1 = arith.constant 1 : index
    %c0_39 = arith.constant 0 : index
    %c0_40 = arith.constant 0 : index
    %72 = vector.load %arg16[%c1, %c0_39, %c0_40] : memref<9x64x1xf32, #tpu.memory_space<vmem>>, vector<1x64x1xf32>
    %73 = vector.shape_cast %72 : vector<1x64x1xf32> to vector<64x1xf32>
    %74 = vector.broadcast %73 : vector<64x1xf32> to vector<64x16xf32>
    %75 = arith.mulf %71, %74 : vector<64x16xf32>
    %76 = vector.extract_strided_slice %60 {offsets = [1, 0], sizes = [1, 16], strides = [1, 1]} : vector<9x16xf32> to vector<1x16xf32>
    %77 = vector.broadcast %76 : vector<1x16xf32> to vector<64x16xf32>
    %78 = arith.mulf %75, %77 : vector<64x16xf32>
    %79 = arith.addf %70, %78 : vector<64x16xf32>
    %c7_i32 = arith.constant 7 : i32
    %80 = tpu.dynamic_rotate %56 by %c7_i32 dim 0 : vector<64x16xf32>, i32 -> vector<64x16xf32>
    %c2 = arith.constant 2 : index
    %c0_41 = arith.constant 0 : index
    %c0_42 = arith.constant 0 : index
    %81 = vector.load %arg16[%c2, %c0_41, %c0_42] : memref<9x64x1xf32, #tpu.memory_space<vmem>>, vector<1x64x1xf32>
    %82 = vector.shape_cast %81 : vector<1x64x1xf32> to vector<64x1xf32>
    %83 = vector.broadcast %82 : vector<64x1xf32> to vector<64x16xf32>
    %84 = arith.mulf %80, %83 : vector<64x16xf32>
    %85 = vector.extract_strided_slice %60 {offsets = [2, 0], sizes = [1, 16], strides = [1, 1]} : vector<9x16xf32> to vector<1x16xf32>
    %86 = vector.broadcast %85 : vector<1x16xf32> to vector<64x16xf32>
    %87 = arith.mulf %84, %86 : vector<64x16xf32>
    %88 = arith.addf %79, %87 : vector<64x16xf32>
    %c1_i32 = arith.constant 1 : i32
    %89 = tpu.dynamic_rotate %56 by %c1_i32 dim 0 : vector<64x16xf32>, i32 -> vector<64x16xf32>
    %c3 = arith.constant 3 : index
    %c0_43 = arith.constant 0 : index
    %c0_44 = arith.constant 0 : index
    %90 = vector.load %arg16[%c3, %c0_43, %c0_44] : memref<9x64x1xf32, #tpu.memory_space<vmem>>, vector<1x64x1xf32>
    %91 = vector.shape_cast %90 : vector<1x64x1xf32> to vector<64x1xf32>
    %92 = vector.broadcast %91 : vector<64x1xf32> to vector<64x16xf32>
    %93 = arith.mulf %89, %92 : vector<64x16xf32>
    %94 = vector.extract_strided_slice %60 {offsets = [3, 0], sizes = [1, 16], strides = [1, 1]} : vector<9x16xf32> to vector<1x16xf32>
    %95 = vector.broadcast %94 : vector<1x16xf32> to vector<64x16xf32>
    %96 = arith.mulf %93, %95 : vector<64x16xf32>
    %97 = arith.addf %88, %96 : vector<64x16xf32>
    %c4 = arith.constant 4 : index
    %c0_45 = arith.constant 0 : index
    %c0_46 = arith.constant 0 : index
    %98 = vector.load %arg16[%c4, %c0_45, %c0_46] : memref<9x64x1xf32, #tpu.memory_space<vmem>>, vector<1x64x1xf32>
    %99 = vector.shape_cast %98 : vector<1x64x1xf32> to vector<64x1xf32>
    %100 = vector.broadcast %99 : vector<64x1xf32> to vector<64x16xf32>
    %101 = arith.mulf %56, %100 : vector<64x16xf32>
    %102 = vector.extract_strided_slice %60 {offsets = [4, 0], sizes = [1, 16], strides = [1, 1]} : vector<9x16xf32> to vector<1x16xf32>
    %103 = vector.broadcast %102 : vector<1x16xf32> to vector<64x16xf32>
    %104 = arith.mulf %101, %103 : vector<64x16xf32>
    %105 = arith.addf %97, %104 : vector<64x16xf32>
    %c63_i32 = arith.constant 63 : i32
    %106 = tpu.dynamic_rotate %56 by %c63_i32 dim 0 : vector<64x16xf32>, i32 -> vector<64x16xf32>
    %c5 = arith.constant 5 : index
    %c0_47 = arith.constant 0 : index
    %c0_48 = arith.constant 0 : index
    %107 = vector.load %arg16[%c5, %c0_47, %c0_48] : memref<9x64x1xf32, #tpu.memory_space<vmem>>, vector<1x64x1xf32>
    %108 = vector.shape_cast %107 : vector<1x64x1xf32> to vector<64x1xf32>
    %109 = vector.broadcast %108 : vector<64x1xf32> to vector<64x16xf32>
    %110 = arith.mulf %106, %109 : vector<64x16xf32>
    %111 = vector.extract_strided_slice %60 {offsets = [5, 0], sizes = [1, 16], strides = [1, 1]} : vector<9x16xf32> to vector<1x16xf32>
    %112 = vector.broadcast %111 : vector<1x16xf32> to vector<64x16xf32>
    %113 = arith.mulf %110, %112 : vector<64x16xf32>
    %114 = arith.addf %105, %113 : vector<64x16xf32>
    %c57_i32 = arith.constant 57 : i32
    %115 = tpu.dynamic_rotate %56 by %c57_i32 dim 0 : vector<64x16xf32>, i32 -> vector<64x16xf32>
    %c6 = arith.constant 6 : index
    %c0_49 = arith.constant 0 : index
    %c0_50 = arith.constant 0 : index
    %116 = vector.load %arg16[%c6, %c0_49, %c0_50] : memref<9x64x1xf32, #tpu.memory_space<vmem>>, vector<1x64x1xf32>
    %117 = vector.shape_cast %116 : vector<1x64x1xf32> to vector<64x1xf32>
    %118 = vector.broadcast %117 : vector<64x1xf32> to vector<64x16xf32>
    %119 = arith.mulf %115, %118 : vector<64x16xf32>
    %120 = vector.extract_strided_slice %60 {offsets = [6, 0], sizes = [1, 16], strides = [1, 1]} : vector<9x16xf32> to vector<1x16xf32>
    %121 = vector.broadcast %120 : vector<1x16xf32> to vector<64x16xf32>
    %122 = arith.mulf %119, %121 : vector<64x16xf32>
    %123 = arith.addf %114, %122 : vector<64x16xf32>
    %c56_i32 = arith.constant 56 : i32
    %124 = tpu.dynamic_rotate %56 by %c56_i32 dim 0 : vector<64x16xf32>, i32 -> vector<64x16xf32>
    %c7 = arith.constant 7 : index
    %c0_51 = arith.constant 0 : index
    %c0_52 = arith.constant 0 : index
    %125 = vector.load %arg16[%c7, %c0_51, %c0_52] : memref<9x64x1xf32, #tpu.memory_space<vmem>>, vector<1x64x1xf32>
    %126 = vector.shape_cast %125 : vector<1x64x1xf32> to vector<64x1xf32>
    %127 = vector.broadcast %126 : vector<64x1xf32> to vector<64x16xf32>
    %128 = arith.mulf %124, %127 : vector<64x16xf32>
    %129 = vector.extract_strided_slice %60 {offsets = [7, 0], sizes = [1, 16], strides = [1, 1]} : vector<9x16xf32> to vector<1x16xf32>
    %130 = vector.broadcast %129 : vector<1x16xf32> to vector<64x16xf32>
    %131 = arith.mulf %128, %130 : vector<64x16xf32>
    %132 = arith.addf %123, %131 : vector<64x16xf32>
    %c55_i32 = arith.constant 55 : i32
    %133 = tpu.dynamic_rotate %56 by %c55_i32 dim 0 : vector<64x16xf32>, i32 -> vector<64x16xf32>
    %c8 = arith.constant 8 : index
    %c0_53 = arith.constant 0 : index
    %c0_54 = arith.constant 0 : index
    %134 = vector.load %arg16[%c8, %c0_53, %c0_54] : memref<9x64x1xf32, #tpu.memory_space<vmem>>, vector<1x64x1xf32>
    %135 = vector.shape_cast %134 : vector<1x64x1xf32> to vector<64x1xf32>
    %136 = vector.broadcast %135 : vector<64x1xf32> to vector<64x16xf32>
    %137 = arith.mulf %133, %136 : vector<64x16xf32>
    %138 = vector.extract_strided_slice %60 {offsets = [8, 0], sizes = [1, 16], strides = [1, 1]} : vector<9x16xf32> to vector<1x16xf32>
    %139 = vector.broadcast %138 : vector<1x16xf32> to vector<64x16xf32>
    %140 = arith.mulf %137, %139 : vector<64x16xf32>
    %141 = arith.addf %132, %140 : vector<64x16xf32>
    %c0_55 = arith.constant 0 : index
    %c0_56 = arith.constant 0 : index
    %142 = vector.load %arg10[%c0_55, %c0_56] : memref<1x16xf32, #tpu.memory_space<vmem>>, vector<1x16xf32>
    %143 = vector.broadcast %142 : vector<1x16xf32> to vector<64x16xf32>
    %144 = arith.addf %141, %143 : vector<64x16xf32>
    %c0_57 = arith.constant 0 : index
    %c0_58 = arith.constant 0 : index
    %145 = vector.load %arg13[%c0_57, %c0_58] : memref<16x16xf32, #tpu.memory_space<vmem>>, vector<16x16xf32>
    %cst_59 = arith.constant dense<0.000000e+00> : vector<64x16xf32>
    %146 = tpu.matmul %144, %145, %cst_59 {dimension_numbers = #tpu.dot_dimension_numbers<[1], [0], [0], [1], [0, 0, 1, 1], [], []>} : vector<64x16xf32>, vector<16x16xf32>, vector<64x16xf32> -> vector<64x16xf32>
    %147 = arith.subf %144, %146 : vector<64x16xf32>
    %148 = arith.mulf %147, %147 : vector<64x16xf32>
    %cst_60 = arith.constant dense<0.000000e+00> : vector<64x16xf32>
    %149 = tpu.matmul %148, %145, %cst_60 {dimension_numbers = #tpu.dot_dimension_numbers<[1], [0], [0], [1], [0, 0, 1, 1], [], []>} : vector<64x16xf32>, vector<16x16xf32>, vector<64x16xf32> -> vector<64x16xf32>
    %cst_61 = arith.constant 9.99999974E-6 : f32
    %150 = vector.broadcast %cst_61 : f32 to vector<64x16xf32>
    %151 = arith.addf %149, %150 : vector<64x16xf32>
    %152 = math.rsqrt %151 : vector<64x16xf32>
    %153 = arith.mulf %147, %152 : vector<64x16xf32>
    %c0_62 = arith.constant 0 : index
    %c0_63 = arith.constant 0 : index
    %154 = vector.load %arg11[%c0_62, %c0_63] : memref<1x16xf32, #tpu.memory_space<vmem>>, vector<1x16xf32>
    %155 = vector.broadcast %154 : vector<1x16xf32> to vector<64x16xf32>
    %156 = arith.mulf %153, %155 : vector<64x16xf32>
    %c0_64 = arith.constant 0 : index
    %c0_65 = arith.constant 0 : index
    %157 = vector.load %arg12[%c0_64, %c0_65] : memref<1x16xf32, #tpu.memory_space<vmem>>, vector<1x16xf32>
    %158 = vector.broadcast %157 : vector<1x16xf32> to vector<64x16xf32>
    %159 = arith.addf %156, %158 : vector<64x16xf32>
    %cst_66 = arith.constant 5.000000e-01 : f32
    %160 = vector.broadcast %cst_66 : f32 to vector<64x16xf32>
    %161 = arith.mulf %160, %159 : vector<64x16xf32>
    %cst_67 = arith.constant 0.707106769 : f32
    %162 = vector.broadcast %cst_67 : f32 to vector<64x16xf32>
    %163 = arith.mulf %159, %162 : vector<64x16xf32>
    %164 = math.absf %163 : vector<64x16xf32>
    %cst_68 = arith.constant 0.327591091 : f32
    %165 = vector.broadcast %cst_68 : f32 to vector<64x16xf32>
    %166 = arith.mulf %165, %164 : vector<64x16xf32>
    %cst_69 = arith.constant 1.000000e+00 : f32
    %167 = vector.broadcast %cst_69 : f32 to vector<64x16xf32>
    %168 = arith.addf %167, %166 : vector<64x16xf32>
    %169 = tpu.reciprocal %168 {approx = true} : vector<64x16xf32> -> vector<64x16xf32>
    %cst_70 = arith.constant 1.06140542 : f32
    %170 = vector.broadcast %cst_70 : f32 to vector<64x16xf32>
    %171 = arith.mulf %170, %169 : vector<64x16xf32>
    %cst_71 = arith.constant -1.45315206 : f32
    %172 = vector.broadcast %cst_71 : f32 to vector<64x16xf32>
    %173 = arith.addf %171, %172 : vector<64x16xf32>
    %174 = arith.mulf %173, %169 : vector<64x16xf32>
    %cst_72 = arith.constant 1.42141378 : f32
    %175 = vector.broadcast %cst_72 : f32 to vector<64x16xf32>
    %176 = arith.addf %174, %175 : vector<64x16xf32>
    %177 = arith.mulf %176, %169 : vector<64x16xf32>
    %cst_73 = arith.constant -0.284496725 : f32
    %178 = vector.broadcast %cst_73 : f32 to vector<64x16xf32>
    %179 = arith.addf %177, %178 : vector<64x16xf32>
    %180 = arith.mulf %179, %169 : vector<64x16xf32>
    %cst_74 = arith.constant 0.254829586 : f32
    %181 = vector.broadcast %cst_74 : f32 to vector<64x16xf32>
    %182 = arith.addf %180, %181 : vector<64x16xf32>
    %183 = arith.mulf %182, %169 : vector<64x16xf32>
    %cst_75 = arith.constant 0.000000e+00 : f32
    %184 = vector.broadcast %cst_75 : f32 to vector<64x16xf32>
    %185 = arith.subf %184, %164 : vector<64x16xf32>
    %186 = arith.mulf %185, %164 : vector<64x16xf32>
    %187 = math.exp %186 : vector<64x16xf32>
    %188 = arith.mulf %183, %187 : vector<64x16xf32>
    %cst_76 = arith.constant 1.000000e+00 : f32
    %189 = vector.broadcast %cst_76 : f32 to vector<64x16xf32>
    %190 = arith.subf %189, %188 : vector<64x16xf32>
    %cst_77 = arith.constant 0.000000e+00 : f32
    %191 = vector.broadcast %cst_77 : f32 to vector<64x16xf32>
    %192 = arith.cmpf oge, %163, %191 : vector<64x16xf32>
    %cst_78 = arith.constant 0.000000e+00 : f32
    %193 = vector.broadcast %cst_78 : f32 to vector<64x16xf32>
    %194 = arith.subf %193, %190 : vector<64x16xf32>
    %195 = arith.select %192, %190, %194 : vector<64x16xi1>, vector<64x16xf32>
    %cst_79 = arith.constant 1.000000e+00 : f32
    %196 = vector.broadcast %cst_79 : f32 to vector<64x16xf32>
    %197 = arith.addf %196, %195 : vector<64x16xf32>
    %198 = arith.mulf %161, %197 : vector<64x16xf32>
    %c0_80 = arith.constant 0 : index
    %c0_81 = arith.constant 0 : index
    %199 = vector.load %arg14[%c0_80, %c0_81] : memref<16x4xf32, #tpu.memory_space<vmem>>, vector<16x4xf32>
    %cst_82 = arith.constant dense<0.000000e+00> : vector<64x4xf32>
    %200 = tpu.matmul %198, %199, %cst_82 {dimension_numbers = #tpu.dot_dimension_numbers<[1], [0], [0], [1], [0, 0, 1, 1], [], []>} : vector<64x16xf32>, vector<16x4xf32>, vector<64x4xf32> -> vector<64x4xf32>
    %c0_83 = arith.constant 0 : index
    %c0_84 = arith.constant 0 : index
    %201 = vector.load %arg15[%c0_83, %c0_84] : memref<64x4xf32, #tpu.memory_space<vmem>>, vector<64x4xf32>
    %202 = arith.addf %200, %201 : vector<64x4xf32>
    %cst_85 = arith.constant -1.000000e+00 : f32
    %cst_86 = arith.constant 1.000000e+00 : f32
    %203 = vector.broadcast %cst_85 : f32 to vector<64x4xf32>
    %204 = arith.maximumf %203, %202 : vector<64x4xf32>
    %205 = vector.broadcast %cst_86 : f32 to vector<64x4xf32>
    %206 = arith.minimumf %205, %204 : vector<64x4xf32>
    %c0_87 = arith.constant 0 : index
    %c0_88 = arith.constant 0 : index
    %c0_89 = arith.constant 0 : index
    %207 = vector.load %arg19[%c0_87, %c0_88, %c0_89] : memref<1x64x4xf32, #tpu.memory_space<vmem>>, vector<1x64x4xf32>
    %208 = vector.shape_cast %207 : vector<1x64x4xf32> to vector<64x4xf32>
    %209 = vector.shape_cast %206 : vector<64x4xf32> to vector<1x64x4xf32>
    tpu.vector_store %arg19[%c0_87, %c0_88, %c0_89], %209 {strides = array<i32>} : memref<1x64x4xf32, #tpu.memory_space<vmem>>, vector<1x64x4xf32>,
    return
  }
  func.func @transform_0(%arg0: i32) -> (i32, i32, i32) {
    %c0_i32 = arith.constant 0 : i32
    %c0_i32_0 = arith.constant 0 : i32
    %c0_i32_1 = arith.constant 0 : i32
    return %arg0, %c0_i32, %c0_i32_0 : i32, i32, i32
  }
  func.func @transform_1(%arg0: i32) -> (i32, i32, i32) {
    %c0_i32 = arith.constant 0 : i32
    %c0_i32_0 = arith.constant 0 : i32
    %c0_i32_1 = arith.constant 0 : i32
    return %arg0, %c0_i32, %c0_i32_0 : i32, i32, i32
  }
  func.func @transform_2(%arg0: i32) -> (i32, i32) {
    %c0_i32 = arith.constant 0 : i32
    %c0_i32_0 = arith.constant 0 : i32
    %c0_i32_1 = arith.constant 0 : i32
    return %c0_i32, %c0_i32_0 : i32, i32
  }
  func.func @transform_3(%arg0: i32) -> (i32, i32) {
    %c0_i32 = arith.constant 0 : i32
    %c0_i32_0 = arith.constant 0 : i32
    %c0_i32_1 = arith.constant 0 : i32
    return %c0_i32, %c0_i32_0 : i32, i32
  }
  func.func @transform_4(%arg0: i32) -> (i32, i32) {
    %c0_i32 = arith.constant 0 : i32
    %c0_i32_0 = arith.constant 0 : i32
    %c0_i32_1 = arith.constant 0 : i32
    return %c0_i32, %c0_i32_0 : i32, i32
  }
  func.func @transform_5(%arg0: i32) -> (i32, i32) {
    %c0_i32 = arith.constant 0 : i32
    %c0_i32_0 = arith.constant 0 : i32
    %c0_i32_1 = arith.constant 0 : i32
    return %c0_i32, %c0_i32_0 : i32, i32
  }
  func.func @transform_6(%arg0: i32) -> (i32, i32) {
    %c0_i32 = arith.constant 0 : i32
    %c0_i32_0 = arith.constant 0 : i32
    %c0_i32_1 = arith.constant 0 : i32
    return %c0_i32, %c0_i32_0 : i32, i32
  }
  func.func @transform_7(%arg0: i32) -> (i32, i32) {
    %c0_i32 = arith.constant 0 : i32
    %c0_i32_0 = arith.constant 0 : i32
    %c0_i32_1 = arith.constant 0 : i32
    return %c0_i32, %c0_i32_0 : i32, i32
  }
  func.func @transform_8(%arg0: i32) -> (i32, i32) {
    %c0_i32 = arith.constant 0 : i32
    %c0_i32_0 = arith.constant 0 : i32
    %c0_i32_1 = arith.constant 0 : i32
    return %c0_i32, %c0_i32_0 : i32, i32
  }
  func.func @transform_9(%arg0: i32) -> (i32, i32) {
    %c0_i32 = arith.constant 0 : i32
    %c0_i32_0 = arith.constant 0 : i32
    %c0_i32_1 = arith.constant 0 : i32
    return %c0_i32, %c0_i32_0 : i32, i32
  }
  func.func @transform_10(%arg0: i32) -> (i32, i32) {
    %c0_i32 = arith.constant 0 : i32
    %c0_i32_0 = arith.constant 0 : i32
    %c0_i32_1 = arith.constant 0 : i32
    return %c0_i32, %c0_i32_0 : i32, i32
  }
  func.func @transform_11(%arg0: i32) -> (i32, i32) {
    %c0_i32 = arith.constant 0 : i32
    %c0_i32_0 = arith.constant 0 : i32
    %c0_i32_1 = arith.constant 0 : i32
    return %c0_i32, %c0_i32_0 : i32, i32
  }
  func.func @transform_12(%arg0: i32) -> (i32, i32) {
    %c0_i32 = arith.constant 0 : i32
    %c0_i32_0 = arith.constant 0 : i32
    %c0_i32_1 = arith.constant 0 : i32
    return %c0_i32, %c0_i32_0 : i32, i32
  }
  func.func @transform_13(%arg0: i32) -> (i32, i32) {
    %c0_i32 = arith.constant 0 : i32
    %c0_i32_0 = arith.constant 0 : i32
    %c0_i32_1 = arith.constant 0 : i32
    return %c0_i32, %c0_i32_0 : i32, i32
  }
  func.func @transform_14(%arg0: i32) -> (i32, i32) {
    %c0_i32 = arith.constant 0 : i32
    %c0_i32_0 = arith.constant 0 : i32
    %c0_i32_1 = arith.constant 0 : i32
    return %c0_i32, %c0_i32_0 : i32, i32
  }
  func.func @transform_15(%arg0: i32) -> (i32, i32, i32) {
    %c0_i32 = arith.constant 0 : i32
    %c0_i32_0 = arith.constant 0 : i32
    %c0_i32_1 = arith.constant 0 : i32
    %c0_i32_2 = arith.constant 0 : i32
    return %c0_i32, %c0_i32_0, %c0_i32_1 : i32, i32, i32
  }
  func.func @transform_16(%arg0: i32) -> (i32, i32, i32) {
    %c0_i32 = arith.constant 0 : i32
    %c0_i32_0 = arith.constant 0 : i32
    %c0_i32_1 = arith.constant 0 : i32
    return %arg0, %c0_i32, %c0_i32_0 : i32, i32, i32
  }
  func.func @transform_17(%arg0: i32) -> (i32, i32, i32) {
    %c0_i32 = arith.constant 0 : i32
    %c0_i32_0 = arith.constant 0 : i32
    %c0_i32_1 = arith.constant 0 : i32
    return %arg0, %c0_i32, %c0_i32_0 : i32, i32, i32
  }
  func.func @transform_18(%arg0: i32) -> (i32, i32, i32) {
    %c0_i32 = arith.constant 0 : i32
    %c0_i32_0 = arith.constant 0 : i32
    %c0_i32_1 = arith.constant 0 : i32
    return %arg0, %c0_i32, %c0_i32_0 : i32, i32, i32
  }
}

module attributes {stable_mosaic.version = 11 : i64} {
  func.func @_encoder_tail_kernel(%arg0: i32, %arg1: memref<1x64x16xf32, #tpu.memory_space<vmem>>, %arg2: memref<1x64x16xf32, #tpu.memory_space<vmem>>, %arg3: memref<1x64x16xf32, #tpu.memory_space<vmem>>, %arg4: memref<1x64x16xf32, #tpu.memory_space<vmem>>, %arg5: memref<16x32xbf16, #tpu.memory_space<vmem>>, %arg6: memref<1x32xf32, #tpu.memory_space<vmem>>, %arg7: memref<16x16xbf16, #tpu.memory_space<vmem>>, %arg8: memref<1x16xf32, #tpu.memory_space<vmem>>, %arg9: memref<1x16xf32, #tpu.memory_space<vmem>>, %arg10: memref<1x16xf32, #tpu.memory_space<vmem>>, %arg11: memref<1x16xf32, #tpu.memory_space<vmem>>, %arg12: memref<1x16xf32, #tpu.memory_space<vmem>>, %arg13: memref<16x16xbf16, #tpu.memory_space<vmem>>, %arg14: memref<9x16xf32, #tpu.memory_space<vmem>>, %arg15: memref<16x32xbf16, #tpu.memory_space<vmem>>, %arg16: memref<9x32xf32, #tpu.memory_space<vmem>>, %arg17: memref<16x16xbf16, #tpu.memory_space<vmem>>, %arg18: memref<2xf32, #tpu.memory_space<smem>>, %arg19: memref<1x16xf32, #tpu.memory_space<vmem>>, %arg20: memref<1x16xf32, #tpu.memory_space<vmem>>, %arg21: memref<16x64xbf16, #tpu.memory_space<vmem>>, %arg22: memref<9x64xf32, #tpu.memory_space<vmem>>, %arg23: memref<32x16xbf16, #tpu.memory_space<vmem>>, %arg24: memref<9x64x1xf32, #tpu.memory_space<vmem>>, %arg25: memref<1x64x16xf32, #tpu.memory_space<vmem>>, %arg26: memref<64x16xf32, #tpu.memory_space<vmem>>, %arg27: memref<64x16xf32, #tpu.memory_space<vmem>>) attributes {dimension_semantics = [#tpu.dimension_semantics<parallel>], iteration_bounds = array<i64: 2>, scalar_prefetch = 0 : i64, scratch_operands = 2 : i64, tpu.core_type = #tpu.core_type<tc>, window_params = [{transform_indices = @transform_0, window_bounds = array<i64: 1, 64, 16>}, {transform_indices = @transform_1, window_bounds = array<i64: 1, 64, 16>}, {transform_indices = @transform_2, window_bounds = array<i64: 1, 64, 16>}, {transform_indices = @transform_3, window_bounds = array<i64: 1, 64, 16>}, {pipeline_mode = #tpu.pipeline_mode<synchronous>, transform_indices = @transform_4, window_bounds = array<i64: 16, 32>}, {pipeline_mode = #tpu.pipeline_mode<synchronous>, transform_indices = @transform_5, window_bounds = array<i64: 1, 32>}, {pipeline_mode = #tpu.pipeline_mode<synchronous>, transform_indices = @transform_6, window_bounds = array<i64: 16, 16>}, {pipeline_mode = #tpu.pipeline_mode<synchronous>, transform_indices = @transform_7, window_bounds = array<i64: 1, 16>}, {pipeline_mode = #tpu.pipeline_mode<synchronous>, transform_indices = @transform_8, window_bounds = array<i64: 1, 16>}, {pipeline_mode = #tpu.pipeline_mode<synchronous>, transform_indices = @transform_9, window_bounds = array<i64: 1, 16>}, {pipeline_mode = #tpu.pipeline_mode<synchronous>, transform_indices = @transform_10, window_bounds = array<i64: 1, 16>}, {pipeline_mode = #tpu.pipeline_mode<synchronous>, transform_indices = @transform_11, window_bounds = array<i64: 1, 16>}, {pipeline_mode = #tpu.pipeline_mode<synchronous>, transform_indices = @transform_12, window_bounds = array<i64: 16, 16>}, {pipeline_mode = #tpu.pipeline_mode<synchronous>, transform_indices = @transform_13, window_bounds = array<i64: 9, 16>}, {pipeline_mode = #tpu.pipeline_mode<synchronous>, transform_indices = @transform_14, window_bounds = array<i64: 16, 32>}, {pipeline_mode = #tpu.pipeline_mode<synchronous>, transform_indices = @transform_15, window_bounds = array<i64: 9, 32>}, {pipeline_mode = #tpu.pipeline_mode<synchronous>, transform_indices = @transform_16, window_bounds = array<i64: 16, 16>}, {transform_indices = @transform_17, window_bounds = array<i64: 2>}, {pipeline_mode = #tpu.pipeline_mode<synchronous>, transform_indices = @transform_18, window_bounds = array<i64: 1, 16>}, {pipeline_mode = #tpu.pipeline_mode<synchronous>, transform_indices = @transform_19, window_bounds = array<i64: 1, 16>}, {pipeline_mode = #tpu.pipeline_mode<synchronous>, transform_indices = @transform_20, window_bounds = array<i64: 16, 64>}, {pipeline_mode = #tpu.pipeline_mode<synchronous>, transform_indices = @transform_21, window_bounds = array<i64: 9, 64>}, {pipeline_mode = #tpu.pipeline_mode<synchronous>, transform_indices = @transform_22, window_bounds = array<i64: 32, 16>}, {pipeline_mode = #tpu.pipeline_mode<synchronous>, transform_indices = @transform_23, window_bounds = array<i64: 9, 64, 1>}, {transform_indices = @transform_24, window_bounds = array<i64: 1, 64, 16>}]} {
    %c0 = arith.constant 0 : index
    %c0_0 = arith.constant 0 : index
    %c0_1 = arith.constant 0 : index
    %0 = vector.load %arg1[%c0, %c0_0, %c0_1] : memref<1x64x16xf32, #tpu.memory_space<vmem>>, vector<1x64x16xf32>
    %1 = vector.shape_cast %0 : vector<1x64x16xf32> to vector<64x16xf32>
    %c0_2 = arith.constant 0 : index
    %c0_3 = arith.constant 0 : index
    %c0_4 = arith.constant 0 : index
    %2 = vector.load %arg2[%c0_2, %c0_3, %c0_4] : memref<1x64x16xf32, #tpu.memory_space<vmem>>, vector<1x64x16xf32>
    %3 = vector.shape_cast %2 : vector<1x64x16xf32> to vector<64x16xf32>
    %cst = arith.constant 0.353553385 : f32
    %4 = vector.broadcast %cst : f32 to vector<64x16xf32>
    %5 = arith.mulf %3, %4 : vector<64x16xf32>
    %c0_5 = arith.constant 0 : index
    %c0_6 = arith.constant 0 : index
    %c0_7 = arith.constant 0 : index
    %6 = vector.load %arg3[%c0_5, %c0_6, %c0_7] : memref<1x64x16xf32, #tpu.memory_space<vmem>>, vector<1x64x16xf32>
    %7 = vector.shape_cast %6 : vector<1x64x16xf32> to vector<64x16xf32>
    %c0_8 = arith.constant 0 : index
    %c0_9 = arith.constant 0 : index
    %c0_10 = arith.constant 0 : index
    %8 = vector.load %arg4[%c0_8, %c0_9, %c0_10] : memref<1x64x16xf32, #tpu.memory_space<vmem>>, vector<1x64x16xf32>
    %9 = vector.shape_cast %8 : vector<1x64x16xf32> to vector<64x16xf32>
    %c0_11 = arith.constant 0 : index
    %c0_12 = arith.constant 0 : index
    %10 = vector.load %arg5[%c0_11, %c0_12] : memref<16x32xbf16, #tpu.memory_space<vmem>>, vector<16x32xbf16>
    %11 = arith.truncf %7 : vector<64x16xf32> to vector<64x16xbf16>
    %cst_13 = arith.constant dense<0.000000e+00> : vector<64x32xf32>
    %12 = tpu.matmul %11, %10, %cst_13 {dimension_numbers = #tpu.dot_dimension_numbers<[1], [0], [0], [1], [0, 0, 1, 1], [], []>} : vector<64x16xbf16>, vector<16x32xbf16>, vector<64x32xf32> -> vector<64x32xf32>
    %c0_14 = arith.constant 0 : index
    %c0_15 = arith.constant 0 : index
    %13 = vector.load %arg6[%c0_14, %c0_15] : memref<1x32xf32, #tpu.memory_space<vmem>>, vector<1x32xf32>
    %14 = vector.broadcast %13 : vector<1x32xf32> to vector<64x32xf32>
    %15 = arith.addf %12, %14 : vector<64x32xf32>
    %16 = vector.extract_strided_slice %15 {offsets = [0, 0], sizes = [64, 16], strides = [1, 1]} : vector<64x32xf32> to vector<64x16xf32>
    %17 = vector.extract_strided_slice %15 {offsets = [0, 16], sizes = [64, 16], strides = [1, 1]} : vector<64x32xf32> to vector<64x16xf32>
    %18 = vector.extract_strided_slice %5 {offsets = [0, 0], sizes = [64, 8], strides = [1, 1]} : vector<64x16xf32> to vector<64x8xf32>
    %19 = arith.truncf %18 : vector<64x8xf32> to vector<64x8xbf16>
    %20 = vector.extract_strided_slice %16 {offsets = [0, 0], sizes = [64, 8], strides = [1, 1]} : vector<64x16xf32> to vector<64x8xf32>
    %21 = arith.truncf %20 : vector<64x8xf32> to vector<64x8xbf16>
    %cst_16 = arith.constant dense<0.000000e+00> : vector<64x64xf32>
    %22 = tpu.matmul %19, %21, %cst_16 {dimension_numbers = #tpu.dot_dimension_numbers<[1], [1], [0], [0], [0, 0, 1, 0], [], []>} : vector<64x8xbf16>, vector<64x8xbf16>, vector<64x64xf32> -> vector<64x64xf32>
    %cst_17 = arith.constant dense<0xFF800000> : vector<64xf32>
    %23 = vector.multi_reduction <maximumf>, %22, %cst_17 [1] : vector<64x64xf32> to vector<64xf32>
    %24 = vector.shape_cast %23 : vector<64xf32> to vector<64x1xf32>
    %25 = vector.broadcast %24 : vector<64x1xf32> to vector<64x64xf32>
    %26 = arith.subf %22, %25 : vector<64x64xf32>
    %27 = math.exp %26 : vector<64x64xf32>
    %cst_18 = arith.constant dense<0.000000e+00> : vector<64xf32>
    %28 = vector.multi_reduction <add>, %27, %cst_18 [1] : vector<64x64xf32> to vector<64xf32>
    %29 = vector.shape_cast %28 : vector<64xf32> to vector<64x1xf32>
    %30 = tpu.reciprocal %29 {approx = true} : vector<64x1xf32> -> vector<64x1xf32>
    %31 = vector.broadcast %30 : vector<64x1xf32> to vector<64x64xf32>
    %32 = arith.mulf %27, %31 : vector<64x64xf32>
    %33 = vector.extract_strided_slice %17 {offsets = [0, 0], sizes = [64, 8], strides = [1, 1]} : vector<64x16xf32> to vector<64x8xf32>
    %34 = arith.truncf %32 : vector<64x64xf32> to vector<64x64xbf16>
    %35 = arith.truncf %33 : vector<64x8xf32> to vector<64x8xbf16>
    %cst_19 = arith.constant dense<0.000000e+00> : vector<64x8xf32>
    %36 = tpu.matmul %34, %35, %cst_19 {dimension_numbers = #tpu.dot_dimension_numbers<[1], [0], [0], [1], [0, 0, 1, 1], [], []>} : vector<64x64xbf16>, vector<64x8xbf16>, vector<64x8xf32> -> vector<64x8xf32>
    %c0_20 = arith.constant 0 : index
    %c0_21 = arith.constant 0 : index
    %37 = vector.load %arg26[%c0_20, %c0_21] : memref<64x16xf32, #tpu.memory_space<vmem>>, vector<64x8xf32>
    tpu.vector_store %arg26[%c0_20, %c0_21], %36 {strides = array<i32>} : memref<64x16xf32, #tpu.memory_space<vmem>>, vector<64x8xf32>,
    %38 = vector.extract_strided_slice %5 {offsets = [0, 8], sizes = [64, 8], strides = [1, 1]} : vector<64x16xf32> to vector<64x8xf32>
    %39 = arith.truncf %38 : vector<64x8xf32> to vector<64x8xbf16>
    %40 = vector.extract_strided_slice %16 {offsets = [0, 8], sizes = [64, 8], strides = [1, 1]} : vector<64x16xf32> to vector<64x8xf32>
    %41 = arith.truncf %40 : vector<64x8xf32> to vector<64x8xbf16>
    %cst_22 = arith.constant dense<0.000000e+00> : vector<64x64xf32>
    %42 = tpu.matmul %39, %41, %cst_22 {dimension_numbers = #tpu.dot_dimension_numbers<[1], [1], [0], [0], [0, 0, 1, 0], [], []>} : vector<64x8xbf16>, vector<64x8xbf16>, vector<64x64xf32> -> vector<64x64xf32>
    %cst_23 = arith.constant dense<0xFF800000> : vector<64xf32>
    %43 = vector.multi_reduction <maximumf>, %42, %cst_23 [1] : vector<64x64xf32> to vector<64xf32>
    %44 = vector.shape_cast %43 : vector<64xf32> to vector<64x1xf32>
    %45 = vector.broadcast %44 : vector<64x1xf32> to vector<64x64xf32>
    %46 = arith.subf %42, %45 : vector<64x64xf32>
    %47 = math.exp %46 : vector<64x64xf32>
    %cst_24 = arith.constant dense<0.000000e+00> : vector<64xf32>
    %48 = vector.multi_reduction <add>, %47, %cst_24 [1] : vector<64x64xf32> to vector<64xf32>
    %49 = vector.shape_cast %48 : vector<64xf32> to vector<64x1xf32>
    %50 = tpu.reciprocal %49 {approx = true} : vector<64x1xf32> -> vector<64x1xf32>
    %51 = vector.broadcast %50 : vector<64x1xf32> to vector<64x64xf32>
    %52 = arith.mulf %47, %51 : vector<64x64xf32>
    %53 = vector.extract_strided_slice %17 {offsets = [0, 8], sizes = [64, 8], strides = [1, 1]} : vector<64x16xf32> to vector<64x8xf32>
    %54 = arith.truncf %52 : vector<64x64xf32> to vector<64x64xbf16>
    %55 = arith.truncf %53 : vector<64x8xf32> to vector<64x8xbf16>
    %cst_25 = arith.constant dense<0.000000e+00> : vector<64x8xf32>
    %56 = tpu.matmul %54, %55, %cst_25 {dimension_numbers = #tpu.dot_dimension_numbers<[1], [0], [0], [1], [0, 0, 1, 1], [], []>} : vector<64x64xbf16>, vector<64x8xbf16>, vector<64x8xf32> -> vector<64x8xf32>
    %c0_26 = arith.constant 0 : index
    %c8 = arith.constant 8 : index
    %57 = vector.load %arg26[%c0_26, %c8] : memref<64x16xf32, #tpu.memory_space<vmem>>, vector<64x8xf32>
    tpu.vector_store %arg26[%c0_26, %c8], %56 {strides = array<i32>} : memref<64x16xf32, #tpu.memory_space<vmem>>, vector<64x8xf32>,
    %c0_27 = arith.constant 0 : index
    %c0_28 = arith.constant 0 : index
    %58 = vector.load %arg26[%c0_27, %c0_28] : memref<64x16xf32, #tpu.memory_space<vmem>>, vector<64x16xf32>
    %c0_29 = arith.constant 0 : index
    %c0_30 = arith.constant 0 : index
    %59 = vector.load %arg7[%c0_29, %c0_30] : memref<16x16xbf16, #tpu.memory_space<vmem>>, vector<16x16xbf16>
    %60 = arith.truncf %58 : vector<64x16xf32> to vector<64x16xbf16>
    %cst_31 = arith.constant dense<0.000000e+00> : vector<64x16xf32>
    %61 = tpu.matmul %60, %59, %cst_31 {dimension_numbers = #tpu.dot_dimension_numbers<[1], [0], [0], [1], [0, 0, 1, 1], [], []>} : vector<64x16xbf16>, vector<16x16xbf16>, vector<64x16xf32> -> vector<64x16xf32>
    %c0_32 = arith.constant 0 : index
    %c0_33 = arith.constant 0 : index
    %62 = vector.load %arg8[%c0_32, %c0_33] : memref<1x16xf32, #tpu.memory_space<vmem>>, vector<1x16xf32>
    %63 = vector.broadcast %62 : vector<1x16xf32> to vector<64x16xf32>
    %64 = arith.addf %61, %63 : vector<64x16xf32>
    %65 = arith.addf %1, %64 : vector<64x16xf32>
    %c0_34 = arith.constant 0 : index
    %c0_35 = arith.constant 0 : index
    %66 = vector.load %arg9[%c0_34, %c0_35] : memref<1x16xf32, #tpu.memory_space<vmem>>, vector<1x16xf32>
    %c0_36 = arith.constant 0 : index
    %c0_37 = arith.constant 0 : index
    %67 = vector.load %arg10[%c0_36, %c0_37] : memref<1x16xf32, #tpu.memory_space<vmem>>, vector<1x16xf32>
    %cst_38 = arith.constant dense<0.000000e+00> : vector<64xf32>
    %68 = vector.multi_reduction <add>, %65, %cst_38 [1] : vector<64x16xf32> to vector<64xf32>
    %69 = vector.shape_cast %68 : vector<64xf32> to vector<64x1xf32>
    %cst_39 = arith.constant 1.600000e+01 : f32
    %70 = vector.broadcast %cst_39 : f32 to vector<64x1xf32>
    %71 = arith.divf %69, %70 : vector<64x1xf32>
    %72 = vector.broadcast %71 : vector<64x1xf32> to vector<64x16xf32>
    %73 = arith.subf %65, %72 : vector<64x16xf32>
    %74 = arith.mulf %73, %73 : vector<64x16xf32>
    %cst_40 = arith.constant dense<0.000000e+00> : vector<64xf32>
    %75 = vector.multi_reduction <add>, %74, %cst_40 [1] : vector<64x16xf32> to vector<64xf32>
    %76 = vector.shape_cast %75 : vector<64xf32> to vector<64x1xf32>
    %cst_41 = arith.constant 1.600000e+01 : f32
    %77 = vector.broadcast %cst_41 : f32 to vector<64x1xf32>
    %78 = arith.divf %76, %77 : vector<64x1xf32>
    %cst_42 = arith.constant 9.99999974E-6 : f32
    %79 = vector.broadcast %cst_42 : f32 to vector<64x1xf32>
    %80 = arith.addf %78, %79 : vector<64x1xf32>
    %81 = math.rsqrt %80 : vector<64x1xf32>
    %82 = vector.broadcast %81 : vector<64x1xf32> to vector<64x16xf32>
    %83 = arith.mulf %73, %82 : vector<64x16xf32>
    %84 = vector.broadcast %66 : vector<1x16xf32> to vector<64x16xf32>
    %85 = arith.mulf %83, %84 : vector<64x16xf32>
    %86 = vector.broadcast %67 : vector<1x16xf32> to vector<64x16xf32>
    %87 = arith.addf %85, %86 : vector<64x16xf32>
    %c0_43 = arith.constant 0 : index
    %c0_44 = arith.constant 0 : index
    %88 = vector.load %arg11[%c0_43, %c0_44] : memref<1x16xf32, #tpu.memory_space<vmem>>, vector<1x16xf32>
    %c0_45 = arith.constant 0 : index
    %c0_46 = arith.constant 0 : index
    %89 = vector.load %arg12[%c0_45, %c0_46] : memref<1x16xf32, #tpu.memory_space<vmem>>, vector<1x16xf32>
    %cst_47 = arith.constant dense<0.000000e+00> : vector<64xf32>
    %90 = vector.multi_reduction <add>, %9, %cst_47 [1] : vector<64x16xf32> to vector<64xf32>
    %91 = vector.shape_cast %90 : vector<64xf32> to vector<64x1xf32>
    %cst_48 = arith.constant 1.600000e+01 : f32
    %92 = vector.broadcast %cst_48 : f32 to vector<64x1xf32>
    %93 = arith.divf %91, %92 : vector<64x1xf32>
    %94 = vector.broadcast %93 : vector<64x1xf32> to vector<64x16xf32>
    %95 = arith.subf %9, %94 : vector<64x16xf32>
    %96 = arith.mulf %95, %95 : vector<64x16xf32>
    %cst_49 = arith.constant dense<0.000000e+00> : vector<64xf32>
    %97 = vector.multi_reduction <add>, %96, %cst_49 [1] : vector<64x16xf32> to vector<64xf32>
    %98 = vector.shape_cast %97 : vector<64xf32> to vector<64x1xf32>
    %cst_50 = arith.constant 1.600000e+01 : f32
    %99 = vector.broadcast %cst_50 : f32 to vector<64x1xf32>
    %100 = arith.divf %98, %99 : vector<64x1xf32>
    %cst_51 = arith.constant 9.99999974E-6 : f32
    %101 = vector.broadcast %cst_51 : f32 to vector<64x1xf32>
    %102 = arith.addf %100, %101 : vector<64x1xf32>
    %103 = math.rsqrt %102 : vector<64x1xf32>
    %104 = vector.broadcast %103 : vector<64x1xf32> to vector<64x16xf32>
    %105 = arith.mulf %95, %104 : vector<64x16xf32>
    %106 = vector.broadcast %88 : vector<1x16xf32> to vector<64x16xf32>
    %107 = arith.mulf %105, %106 : vector<64x16xf32>
    %108 = vector.broadcast %89 : vector<1x16xf32> to vector<64x16xf32>
    %109 = arith.addf %107, %108 : vector<64x16xf32>
    %c0_52 = arith.constant 0 : index
    %c0_53 = arith.constant 0 : index
    %110 = vector.load %arg13[%c0_52, %c0_53] : memref<16x16xbf16, #tpu.memory_space<vmem>>, vector<16x16xbf16>
    %111 = arith.truncf %87 : vector<64x16xf32> to vector<64x16xbf16>
    %cst_54 = arith.constant dense<0.000000e+00> : vector<64x16xf32>
    %112 = tpu.matmul %111, %110, %cst_54 {dimension_numbers = #tpu.dot_dimension_numbers<[1], [0], [0], [1], [0, 0, 1, 1], [], []>} : vector<64x16xbf16>, vector<16x16xbf16>, vector<64x16xf32> -> vector<64x16xf32>
    %c0_55 = arith.constant 0 : index
    %c0_56 = arith.constant 0 : index
    %113 = vector.load %arg14[%c0_55, %c0_56] : memref<9x16xf32, #tpu.memory_space<vmem>>, vector<9x16xf32>
    %cst_57 = arith.constant 0.000000e+00 : f32
    %114 = vector.broadcast %cst_57 : f32 to vector<64x16xf32>
    %c9_i32 = arith.constant 9 : i32
    %115 = tpu.dynamic_rotate %112 by %c9_i32 dim 0 : vector<64x16xf32>, i32 -> vector<64x16xf32>
    %c0_58 = arith.constant 0 : index
    %c0_59 = arith.constant 0 : index
    %c0_60 = arith.constant 0 : index
    %116 = vector.load %arg24[%c0_58, %c0_59, %c0_60] : memref<9x64x1xf32, #tpu.memory_space<vmem>>, vector<1x64x1xf32>
    %117 = vector.shape_cast %116 : vector<1x64x1xf32> to vector<64x1xf32>
    %118 = vector.broadcast %117 : vector<64x1xf32> to vector<64x16xf32>
    %119 = arith.mulf %115, %118 : vector<64x16xf32>
    %120 = vector.extract_strided_slice %113 {offsets = [0, 0], sizes = [1, 16], strides = [1, 1]} : vector<9x16xf32> to vector<1x16xf32>
    %121 = vector.broadcast %120 : vector<1x16xf32> to vector<64x16xf32>
    %122 = arith.mulf %119, %121 : vector<64x16xf32>
    %123 = arith.addf %114, %122 : vector<64x16xf32>
    %c8_i32 = arith.constant 8 : i32
    %124 = tpu.dynamic_rotate %112 by %c8_i32 dim 0 : vector<64x16xf32>, i32 -> vector<64x16xf32>
    %c1 = arith.constant 1 : index
    %c0_61 = arith.constant 0 : index
    %c0_62 = arith.constant 0 : index
    %125 = vector.load %arg24[%c1, %c0_61, %c0_62] : memref<9x64x1xf32, #tpu.memory_space<vmem>>, vector<1x64x1xf32>
    %126 = vector.shape_cast %125 : vector<1x64x1xf32> to vector<64x1xf32>
    %127 = vector.broadcast %126 : vector<64x1xf32> to vector<64x16xf32>
    %128 = arith.mulf %124, %127 : vector<64x16xf32>
    %129 = vector.extract_strided_slice %113 {offsets = [1, 0], sizes = [1, 16], strides = [1, 1]} : vector<9x16xf32> to vector<1x16xf32>
    %130 = vector.broadcast %129 : vector<1x16xf32> to vector<64x16xf32>
    %131 = arith.mulf %128, %130 : vector<64x16xf32>
    %132 = arith.addf %123, %131 : vector<64x16xf32>
    %c7_i32 = arith.constant 7 : i32
    %133 = tpu.dynamic_rotate %112 by %c7_i32 dim 0 : vector<64x16xf32>, i32 -> vector<64x16xf32>
    %c2 = arith.constant 2 : index
    %c0_63 = arith.constant 0 : index
    %c0_64 = arith.constant 0 : index
    %134 = vector.load %arg24[%c2, %c0_63, %c0_64] : memref<9x64x1xf32, #tpu.memory_space<vmem>>, vector<1x64x1xf32>
    %135 = vector.shape_cast %134 : vector<1x64x1xf32> to vector<64x1xf32>
    %136 = vector.broadcast %135 : vector<64x1xf32> to vector<64x16xf32>
    %137 = arith.mulf %133, %136 : vector<64x16xf32>
    %138 = vector.extract_strided_slice %113 {offsets = [2, 0], sizes = [1, 16], strides = [1, 1]} : vector<9x16xf32> to vector<1x16xf32>
    %139 = vector.broadcast %138 : vector<1x16xf32> to vector<64x16xf32>
    %140 = arith.mulf %137, %139 : vector<64x16xf32>
    %141 = arith.addf %132, %140 : vector<64x16xf32>
    %c1_i32 = arith.constant 1 : i32
    %142 = tpu.dynamic_rotate %112 by %c1_i32 dim 0 : vector<64x16xf32>, i32 -> vector<64x16xf32>
    %c3 = arith.constant 3 : index
    %c0_65 = arith.constant 0 : index
    %c0_66 = arith.constant 0 : index
    %143 = vector.load %arg24[%c3, %c0_65, %c0_66] : memref<9x64x1xf32, #tpu.memory_space<vmem>>, vector<1x64x1xf32>
    %144 = vector.shape_cast %143 : vector<1x64x1xf32> to vector<64x1xf32>
    %145 = vector.broadcast %144 : vector<64x1xf32> to vector<64x16xf32>
    %146 = arith.mulf %142, %145 : vector<64x16xf32>
    %147 = vector.extract_strided_slice %113 {offsets = [3, 0], sizes = [1, 16], strides = [1, 1]} : vector<9x16xf32> to vector<1x16xf32>
    %148 = vector.broadcast %147 : vector<1x16xf32> to vector<64x16xf32>
    %149 = arith.mulf %146, %148 : vector<64x16xf32>
    %150 = arith.addf %141, %149 : vector<64x16xf32>
    %c4 = arith.constant 4 : index
    %c0_67 = arith.constant 0 : index
    %c0_68 = arith.constant 0 : index
    %151 = vector.load %arg24[%c4, %c0_67, %c0_68] : memref<9x64x1xf32, #tpu.memory_space<vmem>>, vector<1x64x1xf32>
    %152 = vector.shape_cast %151 : vector<1x64x1xf32> to vector<64x1xf32>
    %153 = vector.broadcast %152 : vector<64x1xf32> to vector<64x16xf32>
    %154 = arith.mulf %112, %153 : vector<64x16xf32>
    %155 = vector.extract_strided_slice %113 {offsets = [4, 0], sizes = [1, 16], strides = [1, 1]} : vector<9x16xf32> to vector<1x16xf32>
    %156 = vector.broadcast %155 : vector<1x16xf32> to vector<64x16xf32>
    %157 = arith.mulf %154, %156 : vector<64x16xf32>
    %158 = arith.addf %150, %157 : vector<64x16xf32>
    %c63_i32 = arith.constant 63 : i32
    %159 = tpu.dynamic_rotate %112 by %c63_i32 dim 0 : vector<64x16xf32>, i32 -> vector<64x16xf32>
    %c5 = arith.constant 5 : index
    %c0_69 = arith.constant 0 : index
    %c0_70 = arith.constant 0 : index
    %160 = vector.load %arg24[%c5, %c0_69, %c0_70] : memref<9x64x1xf32, #tpu.memory_space<vmem>>, vector<1x64x1xf32>
    %161 = vector.shape_cast %160 : vector<1x64x1xf32> to vector<64x1xf32>
    %162 = vector.broadcast %161 : vector<64x1xf32> to vector<64x16xf32>
    %163 = arith.mulf %159, %162 : vector<64x16xf32>
    %164 = vector.extract_strided_slice %113 {offsets = [5, 0], sizes = [1, 16], strides = [1, 1]} : vector<9x16xf32> to vector<1x16xf32>
    %165 = vector.broadcast %164 : vector<1x16xf32> to vector<64x16xf32>
    %166 = arith.mulf %163, %165 : vector<64x16xf32>
    %167 = arith.addf %158, %166 : vector<64x16xf32>
    %c57_i32 = arith.constant 57 : i32
    %168 = tpu.dynamic_rotate %112 by %c57_i32 dim 0 : vector<64x16xf32>, i32 -> vector<64x16xf32>
    %c6 = arith.constant 6 : index
    %c0_71 = arith.constant 0 : index
    %c0_72 = arith.constant 0 : index
    %169 = vector.load %arg24[%c6, %c0_71, %c0_72] : memref<9x64x1xf32, #tpu.memory_space<vmem>>, vector<1x64x1xf32>
    %170 = vector.shape_cast %169 : vector<1x64x1xf32> to vector<64x1xf32>
    %171 = vector.broadcast %170 : vector<64x1xf32> to vector<64x16xf32>
    %172 = arith.mulf %168, %171 : vector<64x16xf32>
    %173 = vector.extract_strided_slice %113 {offsets = [6, 0], sizes = [1, 16], strides = [1, 1]} : vector<9x16xf32> to vector<1x16xf32>
    %174 = vector.broadcast %173 : vector<1x16xf32> to vector<64x16xf32>
    %175 = arith.mulf %172, %174 : vector<64x16xf32>
    %176 = arith.addf %167, %175 : vector<64x16xf32>
    %c56_i32 = arith.constant 56 : i32
    %177 = tpu.dynamic_rotate %112 by %c56_i32 dim 0 : vector<64x16xf32>, i32 -> vector<64x16xf32>
    %c7 = arith.constant 7 : index
    %c0_73 = arith.constant 0 : index
    %c0_74 = arith.constant 0 : index
    %178 = vector.load %arg24[%c7, %c0_73, %c0_74] : memref<9x64x1xf32, #tpu.memory_space<vmem>>, vector<1x64x1xf32>
    %179 = vector.shape_cast %178 : vector<1x64x1xf32> to vector<64x1xf32>
    %180 = vector.broadcast %179 : vector<64x1xf32> to vector<64x16xf32>
    %181 = arith.mulf %177, %180 : vector<64x16xf32>
    %182 = vector.extract_strided_slice %113 {offsets = [7, 0], sizes = [1, 16], strides = [1, 1]} : vector<9x16xf32> to vector<1x16xf32>
    %183 = vector.broadcast %182 : vector<1x16xf32> to vector<64x16xf32>
    %184 = arith.mulf %181, %183 : vector<64x16xf32>
    %185 = arith.addf %176, %184 : vector<64x16xf32>
    %c55_i32 = arith.constant 55 : i32
    %186 = tpu.dynamic_rotate %112 by %c55_i32 dim 0 : vector<64x16xf32>, i32 -> vector<64x16xf32>
    %c8_75 = arith.constant 8 : index
    %c0_76 = arith.constant 0 : index
    %c0_77 = arith.constant 0 : index
    %187 = vector.load %arg24[%c8_75, %c0_76, %c0_77] : memref<9x64x1xf32, #tpu.memory_space<vmem>>, vector<1x64x1xf32>
    %188 = vector.shape_cast %187 : vector<1x64x1xf32> to vector<64x1xf32>
    %189 = vector.broadcast %188 : vector<64x1xf32> to vector<64x16xf32>
    %190 = arith.mulf %186, %189 : vector<64x16xf32>
    %191 = vector.extract_strided_slice %113 {offsets = [8, 0], sizes = [1, 16], strides = [1, 1]} : vector<9x16xf32> to vector<1x16xf32>
    %192 = vector.broadcast %191 : vector<1x16xf32> to vector<64x16xf32>
    %193 = arith.mulf %190, %192 : vector<64x16xf32>
    %194 = arith.addf %185, %193 : vector<64x16xf32>
    %c0_78 = arith.constant 0 : index
    %c0_79 = arith.constant 0 : index
    %195 = vector.load %arg15[%c0_78, %c0_79] : memref<16x32xbf16, #tpu.memory_space<vmem>>, vector<16x32xbf16>
    %196 = arith.truncf %109 : vector<64x16xf32> to vector<64x16xbf16>
    %cst_80 = arith.constant dense<0.000000e+00> : vector<64x32xf32>
    %197 = tpu.matmul %196, %195, %cst_80 {dimension_numbers = #tpu.dot_dimension_numbers<[1], [0], [0], [1], [0, 0, 1, 1], [], []>} : vector<64x16xbf16>, vector<16x32xbf16>, vector<64x32xf32> -> vector<64x32xf32>
    %c0_81 = arith.constant 0 : index
    %c0_82 = arith.constant 0 : index
    %198 = vector.load %arg16[%c0_81, %c0_82] : memref<9x32xf32, #tpu.memory_space<vmem>>, vector<9x32xf32>
    %cst_83 = arith.constant 0.000000e+00 : f32
    %199 = vector.broadcast %cst_83 : f32 to vector<64x32xf32>
    %c9_i32_84 = arith.constant 9 : i32
    %200 = tpu.dynamic_rotate %197 by %c9_i32_84 dim 0 : vector<64x32xf32>, i32 -> vector<64x32xf32>
    %c0_85 = arith.constant 0 : index
    %c0_86 = arith.constant 0 : index
    %c0_87 = arith.constant 0 : index
    %201 = vector.load %arg24[%c0_85, %c0_86, %c0_87] : memref<9x64x1xf32, #tpu.memory_space<vmem>>, vector<1x64x1xf32>
    %202 = vector.shape_cast %201 : vector<1x64x1xf32> to vector<64x1xf32>
    %203 = vector.broadcast %202 : vector<64x1xf32> to vector<64x32xf32>
    %204 = arith.mulf %200, %203 : vector<64x32xf32>
    %205 = vector.extract_strided_slice %198 {offsets = [0, 0], sizes = [1, 32], strides = [1, 1]} : vector<9x32xf32> to vector<1x32xf32>
    %206 = vector.broadcast %205 : vector<1x32xf32> to vector<64x32xf32>
    %207 = arith.mulf %204, %206 : vector<64x32xf32>
    %208 = arith.addf %199, %207 : vector<64x32xf32>
    %c8_i32_88 = arith.constant 8 : i32
    %209 = tpu.dynamic_rotate %197 by %c8_i32_88 dim 0 : vector<64x32xf32>, i32 -> vector<64x32xf32>
    %c1_89 = arith.constant 1 : index
    %c0_90 = arith.constant 0 : index
    %c0_91 = arith.constant 0 : index
    %210 = vector.load %arg24[%c1_89, %c0_90, %c0_91] : memref<9x64x1xf32, #tpu.memory_space<vmem>>, vector<1x64x1xf32>
    %211 = vector.shape_cast %210 : vector<1x64x1xf32> to vector<64x1xf32>
    %212 = vector.broadcast %211 : vector<64x1xf32> to vector<64x32xf32>
    %213 = arith.mulf %209, %212 : vector<64x32xf32>
    %214 = vector.extract_strided_slice %198 {offsets = [1, 0], sizes = [1, 32], strides = [1, 1]} : vector<9x32xf32> to vector<1x32xf32>
    %215 = vector.broadcast %214 : vector<1x32xf32> to vector<64x32xf32>
    %216 = arith.mulf %213, %215 : vector<64x32xf32>
    %217 = arith.addf %208, %216 : vector<64x32xf32>
    %c7_i32_92 = arith.constant 7 : i32
    %218 = tpu.dynamic_rotate %197 by %c7_i32_92 dim 0 : vector<64x32xf32>, i32 -> vector<64x32xf32>
    %c2_93 = arith.constant 2 : index
    %c0_94 = arith.constant 0 : index
    %c0_95 = arith.constant 0 : index
    %219 = vector.load %arg24[%c2_93, %c0_94, %c0_95] : memref<9x64x1xf32, #tpu.memory_space<vmem>>, vector<1x64x1xf32>
    %220 = vector.shape_cast %219 : vector<1x64x1xf32> to vector<64x1xf32>
    %221 = vector.broadcast %220 : vector<64x1xf32> to vector<64x32xf32>
    %222 = arith.mulf %218, %221 : vector<64x32xf32>
    %223 = vector.extract_strided_slice %198 {offsets = [2, 0], sizes = [1, 32], strides = [1, 1]} : vector<9x32xf32> to vector<1x32xf32>
    %224 = vector.broadcast %223 : vector<1x32xf32> to vector<64x32xf32>
    %225 = arith.mulf %222, %224 : vector<64x32xf32>
    %226 = arith.addf %217, %225 : vector<64x32xf32>
    %c1_i32_96 = arith.constant 1 : i32
    %227 = tpu.dynamic_rotate %197 by %c1_i32_96 dim 0 : vector<64x32xf32>, i32 -> vector<64x32xf32>
    %c3_97 = arith.constant 3 : index
    %c0_98 = arith.constant 0 : index
    %c0_99 = arith.constant 0 : index
    %228 = vector.load %arg24[%c3_97, %c0_98, %c0_99] : memref<9x64x1xf32, #tpu.memory_space<vmem>>, vector<1x64x1xf32>
    %229 = vector.shape_cast %228 : vector<1x64x1xf32> to vector<64x1xf32>
    %230 = vector.broadcast %229 : vector<64x1xf32> to vector<64x32xf32>
    %231 = arith.mulf %227, %230 : vector<64x32xf32>
    %232 = vector.extract_strided_slice %198 {offsets = [3, 0], sizes = [1, 32], strides = [1, 1]} : vector<9x32xf32> to vector<1x32xf32>
    %233 = vector.broadcast %232 : vector<1x32xf32> to vector<64x32xf32>
    %234 = arith.mulf %231, %233 : vector<64x32xf32>
    %235 = arith.addf %226, %234 : vector<64x32xf32>
    %c4_100 = arith.constant 4 : index
    %c0_101 = arith.constant 0 : index
    %c0_102 = arith.constant 0 : index
    %236 = vector.load %arg24[%c4_100, %c0_101, %c0_102] : memref<9x64x1xf32, #tpu.memory_space<vmem>>, vector<1x64x1xf32>
    %237 = vector.shape_cast %236 : vector<1x64x1xf32> to vector<64x1xf32>
    %238 = vector.broadcast %237 : vector<64x1xf32> to vector<64x32xf32>
    %239 = arith.mulf %197, %238 : vector<64x32xf32>
    %240 = vector.extract_strided_slice %198 {offsets = [4, 0], sizes = [1, 32], strides = [1, 1]} : vector<9x32xf32> to vector<1x32xf32>
    %241 = vector.broadcast %240 : vector<1x32xf32> to vector<64x32xf32>
    %242 = arith.mulf %239, %241 : vector<64x32xf32>
    %243 = arith.addf %235, %242 : vector<64x32xf32>
    %c63_i32_103 = arith.constant 63 : i32
    %244 = tpu.dynamic_rotate %197 by %c63_i32_103 dim 0 : vector<64x32xf32>, i32 -> vector<64x32xf32>
    %c5_104 = arith.constant 5 : index
    %c0_105 = arith.constant 0 : index
    %c0_106 = arith.constant 0 : index
    %245 = vector.load %arg24[%c5_104, %c0_105, %c0_106] : memref<9x64x1xf32, #tpu.memory_space<vmem>>, vector<1x64x1xf32>
    %246 = vector.shape_cast %245 : vector<1x64x1xf32> to vector<64x1xf32>
    %247 = vector.broadcast %246 : vector<64x1xf32> to vector<64x32xf32>
    %248 = arith.mulf %244, %247 : vector<64x32xf32>
    %249 = vector.extract_strided_slice %198 {offsets = [5, 0], sizes = [1, 32], strides = [1, 1]} : vector<9x32xf32> to vector<1x32xf32>
    %250 = vector.broadcast %249 : vector<1x32xf32> to vector<64x32xf32>
    %251 = arith.mulf %248, %250 : vector<64x32xf32>
    %252 = arith.addf %243, %251 : vector<64x32xf32>
    %c57_i32_107 = arith.constant 57 : i32
    %253 = tpu.dynamic_rotate %197 by %c57_i32_107 dim 0 : vector<64x32xf32>, i32 -> vector<64x32xf32>
    %c6_108 = arith.constant 6 : index
    %c0_109 = arith.constant 0 : index
    %c0_110 = arith.constant 0 : index
    %254 = vector.load %arg24[%c6_108, %c0_109, %c0_110] : memref<9x64x1xf32, #tpu.memory_space<vmem>>, vector<1x64x1xf32>
    %255 = vector.shape_cast %254 : vector<1x64x1xf32> to vector<64x1xf32>
    %256 = vector.broadcast %255 : vector<64x1xf32> to vector<64x32xf32>
    %257 = arith.mulf %253, %256 : vector<64x32xf32>
    %258 = vector.extract_strided_slice %198 {offsets = [6, 0], sizes = [1, 32], strides = [1, 1]} : vector<9x32xf32> to vector<1x32xf32>
    %259 = vector.broadcast %258 : vector<1x32xf32> to vector<64x32xf32>
    %260 = arith.mulf %257, %259 : vector<64x32xf32>
    %261 = arith.addf %252, %260 : vector<64x32xf32>
    %c56_i32_111 = arith.constant 56 : i32
    %262 = tpu.dynamic_rotate %197 by %c56_i32_111 dim 0 : vector<64x32xf32>, i32 -> vector<64x32xf32>
    %c7_112 = arith.constant 7 : index
    %c0_113 = arith.constant 0 : index
    %c0_114 = arith.constant 0 : index
    %263 = vector.load %arg24[%c7_112, %c0_113, %c0_114] : memref<9x64x1xf32, #tpu.memory_space<vmem>>, vector<1x64x1xf32>
    %264 = vector.shape_cast %263 : vector<1x64x1xf32> to vector<64x1xf32>
    %265 = vector.broadcast %264 : vector<64x1xf32> to vector<64x32xf32>
    %266 = arith.mulf %262, %265 : vector<64x32xf32>
    %267 = vector.extract_strided_slice %198 {offsets = [7, 0], sizes = [1, 32], strides = [1, 1]} : vector<9x32xf32> to vector<1x32xf32>
    %268 = vector.broadcast %267 : vector<1x32xf32> to vector<64x32xf32>
    %269 = arith.mulf %266, %268 : vector<64x32xf32>
    %270 = arith.addf %261, %269 : vector<64x32xf32>
    %c55_i32_115 = arith.constant 55 : i32
    %271 = tpu.dynamic_rotate %197 by %c55_i32_115 dim 0 : vector<64x32xf32>, i32 -> vector<64x32xf32>
    %c8_116 = arith.constant 8 : index
    %c0_117 = arith.constant 0 : index
    %c0_118 = arith.constant 0 : index
    %272 = vector.load %arg24[%c8_116, %c0_117, %c0_118] : memref<9x64x1xf32, #tpu.memory_space<vmem>>, vector<1x64x1xf32>
    %273 = vector.shape_cast %272 : vector<1x64x1xf32> to vector<64x1xf32>
    %274 = vector.broadcast %273 : vector<64x1xf32> to vector<64x32xf32>
    %275 = arith.mulf %271, %274 : vector<64x32xf32>
    %276 = vector.extract_strided_slice %198 {offsets = [8, 0], sizes = [1, 32], strides = [1, 1]} : vector<9x32xf32> to vector<1x32xf32>
    %277 = vector.broadcast %276 : vector<1x32xf32> to vector<64x32xf32>
    %278 = arith.mulf %275, %277 : vector<64x32xf32>
    %279 = arith.addf %270, %278 : vector<64x32xf32>
    %280 = vector.extract_strided_slice %279 {offsets = [0, 0], sizes = [64, 16], strides = [1, 1]} : vector<64x32xf32> to vector<64x16xf32>
    %281 = vector.extract_strided_slice %279 {offsets = [0, 16], sizes = [64, 16], strides = [1, 1]} : vector<64x32xf32> to vector<64x16xf32>
    %282 = vector.extract_strided_slice %194 {offsets = [0, 0], sizes = [64, 8], strides = [1, 1]} : vector<64x16xf32> to vector<64x8xf32>
    %283 = vector.extract_strided_slice %280 {offsets = [0, 0], sizes = [64, 8], strides = [1, 1]} : vector<64x16xf32> to vector<64x8xf32>
    %284 = arith.mulf %282, %282 : vector<64x8xf32>
    %cst_119 = arith.constant dense<0.000000e+00> : vector<8xf32>
    %285 = vector.multi_reduction <add>, %284, %cst_119 [0] : vector<64x8xf32> to vector<8xf32>
    %286 = vector.shape_cast %285 : vector<8xf32> to vector<1x8xf32>
    %cst_120 = arith.constant 1.000000e-24 : f32
    %287 = vector.broadcast %cst_120 : f32 to vector<1x8xf32>
    %288 = arith.maximumf %286, %287 : vector<1x8xf32>
    %289 = math.rsqrt %288 : vector<1x8xf32>
    %290 = vector.broadcast %289 : vector<1x8xf32> to vector<64x8xf32>
    %291 = arith.mulf %282, %290 : vector<64x8xf32>
    %292 = arith.mulf %283, %283 : vector<64x8xf32>
    %cst_121 = arith.constant dense<0.000000e+00> : vector<8xf32>
    %293 = vector.multi_reduction <add>, %292, %cst_121 [0] : vector<64x8xf32> to vector<8xf32>
    %294 = vector.shape_cast %293 : vector<8xf32> to vector<1x8xf32>
    %cst_122 = arith.constant 1.000000e-24 : f32
    %295 = vector.broadcast %cst_122 : f32 to vector<1x8xf32>
    %296 = arith.maximumf %294, %295 : vector<1x8xf32>
    %297 = math.rsqrt %296 : vector<1x8xf32>
    %298 = vector.broadcast %297 : vector<1x8xf32> to vector<64x8xf32>
    %299 = arith.mulf %283, %298 : vector<64x8xf32>
    %cst_123 = arith.constant dense<0.000000e+00> : vector<8x8xf32>
    %300 = tpu.matmul %291, %299, %cst_123 {dimension_numbers = #tpu.dot_dimension_numbers<[0], [0], [1], [1], [0, 1, 1, 1], [], []>} : vector<64x8xf32>, vector<64x8xf32>, vector<8x8xf32> -> vector<8x8xf32>
    %c0_124 = arith.constant 0 : index
    %301 = memref.load %arg18[%c0_124] : memref<2xf32, #tpu.memory_space<smem>>
    %302 = vector.broadcast %301 : f32 to vector<8x8xf32>
    %303 = arith.mulf %300, %302 : vector<8x8xf32>
    %cst_125 = arith.constant dense<0xFF800000> : vector<8xf32>
    %304 = vector.multi_reduction <maximumf>, %303, %cst_125 [1] : vector<8x8xf32> to vector<8xf32>
    %305 = vector.shape_cast %304 : vector<8xf32> to vector<8x1xf32>
    %306 = vector.broadcast %305 : vector<8x1xf32> to vector<8x8xf32>
    %307 = arith.subf %303, %306 : vector<8x8xf32>
    %308 = math.exp %307 : vector<8x8xf32>
    %cst_126 = arith.constant dense<0.000000e+00> : vector<8xf32>
    %309 = vector.multi_reduction <add>, %308, %cst_126 [1] : vector<8x8xf32> to vector<8xf32>
    %310 = vector.shape_cast %309 : vector<8xf32> to vector<8x1xf32>
    %311 = tpu.reciprocal %310 {approx = true} : vector<8x1xf32> -> vector<8x1xf32>
    %312 = vector.broadcast %311 : vector<8x1xf32> to vector<8x8xf32>
    %313 = arith.mulf %308, %312 : vector<8x8xf32>
    %314 = vector.extract_strided_slice %281 {offsets = [0, 0], sizes = [64, 8], strides = [1, 1]} : vector<64x16xf32> to vector<64x8xf32>
    %cst_127 = arith.constant dense<0.000000e+00> : vector<64x8xf32>
    %315 = tpu.matmul %314, %313, %cst_127 {dimension_numbers = #tpu.dot_dimension_numbers<[1], [1], [0], [0], [0, 0, 1, 0], [], []>} : vector<64x8xf32>, vector<8x8xf32>, vector<64x8xf32> -> vector<64x8xf32>
    %c0_128 = arith.constant 0 : index
    %c0_129 = arith.constant 0 : index
    %316 = vector.load %arg27[%c0_128, %c0_129] : memref<64x16xf32, #tpu.memory_space<vmem>>, vector<64x8xf32>
    tpu.vector_store %arg27[%c0_128, %c0_129], %315 {strides = array<i32>} : memref<64x16xf32, #tpu.memory_space<vmem>>, vector<64x8xf32>,
    %317 = vector.extract_strided_slice %194 {offsets = [0, 8], sizes = [64, 8], strides = [1, 1]} : vector<64x16xf32> to vector<64x8xf32>
    %318 = vector.extract_strided_slice %280 {offsets = [0, 8], sizes = [64, 8], strides = [1, 1]} : vector<64x16xf32> to vector<64x8xf32>
    %319 = arith.mulf %317, %317 : vector<64x8xf32>
    %cst_130 = arith.constant dense<0.000000e+00> : vector<8xf32>
    %320 = vector.multi_reduction <add>, %319, %cst_130 [0] : vector<64x8xf32> to vector<8xf32>
    %321 = vector.shape_cast %320 : vector<8xf32> to vector<1x8xf32>
    %cst_131 = arith.constant 1.000000e-24 : f32
    %322 = vector.broadcast %cst_131 : f32 to vector<1x8xf32>
    %323 = arith.maximumf %321, %322 : vector<1x8xf32>
    %324 = math.rsqrt %323 : vector<1x8xf32>
    %325 = vector.broadcast %324 : vector<1x8xf32> to vector<64x8xf32>
    %326 = arith.mulf %317, %325 : vector<64x8xf32>
    %327 = arith.mulf %318, %318 : vector<64x8xf32>
    %cst_132 = arith.constant dense<0.000000e+00> : vector<8xf32>
    %328 = vector.multi_reduction <add>, %327, %cst_132 [0] : vector<64x8xf32> to vector<8xf32>
    %329 = vector.shape_cast %328 : vector<8xf32> to vector<1x8xf32>
    %cst_133 = arith.constant 1.000000e-24 : f32
    %330 = vector.broadcast %cst_133 : f32 to vector<1x8xf32>
    %331 = arith.maximumf %329, %330 : vector<1x8xf32>
    %332 = math.rsqrt %331 : vector<1x8xf32>
    %333 = vector.broadcast %332 : vector<1x8xf32> to vector<64x8xf32>
    %334 = arith.mulf %318, %333 : vector<64x8xf32>
    %cst_134 = arith.constant dense<0.000000e+00> : vector<8x8xf32>
    %335 = tpu.matmul %326, %334, %cst_134 {dimension_numbers = #tpu.dot_dimension_numbers<[0], [0], [1], [1], [0, 1, 1, 1], [], []>} : vector<64x8xf32>, vector<64x8xf32>, vector<8x8xf32> -> vector<8x8xf32>
    %c1_135 = arith.constant 1 : index
    %336 = memref.load %arg18[%c1_135] : memref<2xf32, #tpu.memory_space<smem>>
    %337 = vector.broadcast %336 : f32 to vector<8x8xf32>
    %338 = arith.mulf %335, %337 : vector<8x8xf32>
    %cst_136 = arith.constant dense<0xFF800000> : vector<8xf32>
    %339 = vector.multi_reduction <maximumf>, %338, %cst_136 [1] : vector<8x8xf32> to vector<8xf32>
    %340 = vector.shape_cast %339 : vector<8xf32> to vector<8x1xf32>
    %341 = vector.broadcast %340 : vector<8x1xf32> to vector<8x8xf32>
    %342 = arith.subf %338, %341 : vector<8x8xf32>
    %343 = math.exp %342 : vector<8x8xf32>
    %cst_137 = arith.constant dense<0.000000e+00> : vector<8xf32>
    %344 = vector.multi_reduction <add>, %343, %cst_137 [1] : vector<8x8xf32> to vector<8xf32>
    %345 = vector.shape_cast %344 : vector<8xf32> to vector<8x1xf32>
    %346 = tpu.reciprocal %345 {approx = true} : vector<8x1xf32> -> vector<8x1xf32>
    %347 = vector.broadcast %346 : vector<8x1xf32> to vector<8x8xf32>
    %348 = arith.mulf %343, %347 : vector<8x8xf32>
    %349 = vector.extract_strided_slice %281 {offsets = [0, 8], sizes = [64, 8], strides = [1, 1]} : vector<64x16xf32> to vector<64x8xf32>
    %cst_138 = arith.constant dense<0.000000e+00> : vector<64x8xf32>
    %350 = tpu.matmul %349, %348, %cst_138 {dimension_numbers = #tpu.dot_dimension_numbers<[1], [1], [0], [0], [0, 0, 1, 0], [], []>} : vector<64x8xf32>, vector<8x8xf32>, vector<64x8xf32> -> vector<64x8xf32>
    %c0_139 = arith.constant 0 : index
    %c8_140 = arith.constant 8 : index
    %351 = vector.load %arg27[%c0_139, %c8_140] : memref<64x16xf32, #tpu.memory_space<vmem>>, vector<64x8xf32>
    tpu.vector_store %arg27[%c0_139, %c8_140], %350 {strides = array<i32>} : memref<64x16xf32, #tpu.memory_space<vmem>>, vector<64x8xf32>,
    %c0_141 = arith.constant 0 : index
    %c0_142 = arith.constant 0 : index
    %352 = vector.load %arg27[%c0_141, %c0_142] : memref<64x16xf32, #tpu.memory_space<vmem>>, vector<64x16xf32>
    %c0_143 = arith.constant 0 : index
    %c0_144 = arith.constant 0 : index
    %353 = vector.load %arg17[%c0_143, %c0_144] : memref<16x16xbf16, #tpu.memory_space<vmem>>, vector<16x16xbf16>
    %354 = arith.truncf %352 : vector<64x16xf32> to vector<64x16xbf16>
    %cst_145 = arith.constant dense<0.000000e+00> : vector<64x16xf32>
    %355 = tpu.matmul %354, %353, %cst_145 {dimension_numbers = #tpu.dot_dimension_numbers<[1], [0], [0], [1], [0, 0, 1, 1], [], []>} : vector<64x16xbf16>, vector<16x16xbf16>, vector<64x16xf32> -> vector<64x16xf32>
    %356 = arith.addf %65, %355 : vector<64x16xf32>
    %c0_146 = arith.constant 0 : index
    %c0_147 = arith.constant 0 : index
    %357 = vector.load %arg19[%c0_146, %c0_147] : memref<1x16xf32, #tpu.memory_space<vmem>>, vector<1x16xf32>
    %c0_148 = arith.constant 0 : index
    %c0_149 = arith.constant 0 : index
    %358 = vector.load %arg20[%c0_148, %c0_149] : memref<1x16xf32, #tpu.memory_space<vmem>>, vector<1x16xf32>
    %cst_150 = arith.constant dense<0.000000e+00> : vector<64xf32>
    %359 = vector.multi_reduction <add>, %356, %cst_150 [1] : vector<64x16xf32> to vector<64xf32>
    %360 = vector.shape_cast %359 : vector<64xf32> to vector<64x1xf32>
    %cst_151 = arith.constant 1.600000e+01 : f32
    %361 = vector.broadcast %cst_151 : f32 to vector<64x1xf32>
    %362 = arith.divf %360, %361 : vector<64x1xf32>
    %363 = vector.broadcast %362 : vector<64x1xf32> to vector<64x16xf32>
    %364 = arith.subf %356, %363 : vector<64x16xf32>
    %365 = arith.mulf %364, %364 : vector<64x16xf32>
    %cst_152 = arith.constant dense<0.000000e+00> : vector<64xf32>
    %366 = vector.multi_reduction <add>, %365, %cst_152 [1] : vector<64x16xf32> to vector<64xf32>
    %367 = vector.shape_cast %366 : vector<64xf32> to vector<64x1xf32>
    %cst_153 = arith.constant 1.600000e+01 : f32
    %368 = vector.broadcast %cst_153 : f32 to vector<64x1xf32>
    %369 = arith.divf %367, %368 : vector<64x1xf32>
    %cst_154 = arith.constant 9.99999974E-6 : f32
    %370 = vector.broadcast %cst_154 : f32 to vector<64x1xf32>
    %371 = arith.addf %369, %370 : vector<64x1xf32>
    %372 = math.rsqrt %371 : vector<64x1xf32>
    %373 = vector.broadcast %372 : vector<64x1xf32> to vector<64x16xf32>
    %374 = arith.mulf %364, %373 : vector<64x16xf32>
    %375 = vector.broadcast %357 : vector<1x16xf32> to vector<64x16xf32>
    %376 = arith.mulf %374, %375 : vector<64x16xf32>
    %377 = vector.broadcast %358 : vector<1x16xf32> to vector<64x16xf32>
    %378 = arith.addf %376, %377 : vector<64x16xf32>
    %c0_155 = arith.constant 0 : index
    %c0_156 = arith.constant 0 : index
    %379 = vector.load %arg21[%c0_155, %c0_156] : memref<16x64xbf16, #tpu.memory_space<vmem>>, vector<16x64xbf16>
    %380 = arith.truncf %378 : vector<64x16xf32> to vector<64x16xbf16>
    %cst_157 = arith.constant dense<0.000000e+00> : vector<64x64xf32>
    %381 = tpu.matmul %380, %379, %cst_157 {dimension_numbers = #tpu.dot_dimension_numbers<[1], [0], [0], [1], [0, 0, 1, 1], [], []>} : vector<64x16xbf16>, vector<16x64xbf16>, vector<64x64xf32> -> vector<64x64xf32>
    %c0_158 = arith.constant 0 : index
    %c0_159 = arith.constant 0 : index
    %382 = vector.load %arg22[%c0_158, %c0_159] : memref<9x64xf32, #tpu.memory_space<vmem>>, vector<9x64xf32>
    %cst_160 = arith.constant 0.000000e+00 : f32
    %383 = vector.broadcast %cst_160 : f32 to vector<64x64xf32>
    %c9_i32_161 = arith.constant 9 : i32
    %384 = tpu.dynamic_rotate %381 by %c9_i32_161 dim 0 : vector<64x64xf32>, i32 -> vector<64x64xf32>
    %c0_162 = arith.constant 0 : index
    %c0_163 = arith.constant 0 : index
    %c0_164 = arith.constant 0 : index
    %385 = vector.load %arg24[%c0_162, %c0_163, %c0_164] : memref<9x64x1xf32, #tpu.memory_space<vmem>>, vector<1x64x1xf32>
    %386 = vector.shape_cast %385 : vector<1x64x1xf32> to vector<64x1xf32>
    %387 = vector.broadcast %386 : vector<64x1xf32> to vector<64x64xf32>
    %388 = arith.mulf %384, %387 : vector<64x64xf32>
    %389 = vector.extract_strided_slice %382 {offsets = [0, 0], sizes = [1, 64], strides = [1, 1]} : vector<9x64xf32> to vector<1x64xf32>
    %390 = vector.broadcast %389 : vector<1x64xf32> to vector<64x64xf32>
    %391 = arith.mulf %388, %390 : vector<64x64xf32>
    %392 = arith.addf %383, %391 : vector<64x64xf32>
    %c8_i32_165 = arith.constant 8 : i32
    %393 = tpu.dynamic_rotate %381 by %c8_i32_165 dim 0 : vector<64x64xf32>, i32 -> vector<64x64xf32>
    %c1_166 = arith.constant 1 : index
    %c0_167 = arith.constant 0 : index
    %c0_168 = arith.constant 0 : index
    %394 = vector.load %arg24[%c1_166, %c0_167, %c0_168] : memref<9x64x1xf32, #tpu.memory_space<vmem>>, vector<1x64x1xf32>
    %395 = vector.shape_cast %394 : vector<1x64x1xf32> to vector<64x1xf32>
    %396 = vector.broadcast %395 : vector<64x1xf32> to vector<64x64xf32>
    %397 = arith.mulf %393, %396 : vector<64x64xf32>
    %398 = vector.extract_strided_slice %382 {offsets = [1, 0], sizes = [1, 64], strides = [1, 1]} : vector<9x64xf32> to vector<1x64xf32>
    %399 = vector.broadcast %398 : vector<1x64xf32> to vector<64x64xf32>
    %400 = arith.mulf %397, %399 : vector<64x64xf32>
    %401 = arith.addf %392, %400 : vector<64x64xf32>
    %c7_i32_169 = arith.constant 7 : i32
    %402 = tpu.dynamic_rotate %381 by %c7_i32_169 dim 0 : vector<64x64xf32>, i32 -> vector<64x64xf32>
    %c2_170 = arith.constant 2 : index
    %c0_171 = arith.constant 0 : index
    %c0_172 = arith.constant 0 : index
    %403 = vector.load %arg24[%c2_170, %c0_171, %c0_172] : memref<9x64x1xf32, #tpu.memory_space<vmem>>, vector<1x64x1xf32>
    %404 = vector.shape_cast %403 : vector<1x64x1xf32> to vector<64x1xf32>
    %405 = vector.broadcast %404 : vector<64x1xf32> to vector<64x64xf32>
    %406 = arith.mulf %402, %405 : vector<64x64xf32>
    %407 = vector.extract_strided_slice %382 {offsets = [2, 0], sizes = [1, 64], strides = [1, 1]} : vector<9x64xf32> to vector<1x64xf32>
    %408 = vector.broadcast %407 : vector<1x64xf32> to vector<64x64xf32>
    %409 = arith.mulf %406, %408 : vector<64x64xf32>
    %410 = arith.addf %401, %409 : vector<64x64xf32>
    %c1_i32_173 = arith.constant 1 : i32
    %411 = tpu.dynamic_rotate %381 by %c1_i32_173 dim 0 : vector<64x64xf32>, i32 -> vector<64x64xf32>
    %c3_174 = arith.constant 3 : index
    %c0_175 = arith.constant 0 : index
    %c0_176 = arith.constant 0 : index
    %412 = vector.load %arg24[%c3_174, %c0_175, %c0_176] : memref<9x64x1xf32, #tpu.memory_space<vmem>>, vector<1x64x1xf32>
    %413 = vector.shape_cast %412 : vector<1x64x1xf32> to vector<64x1xf32>
    %414 = vector.broadcast %413 : vector<64x1xf32> to vector<64x64xf32>
    %415 = arith.mulf %411, %414 : vector<64x64xf32>
    %416 = vector.extract_strided_slice %382 {offsets = [3, 0], sizes = [1, 64], strides = [1, 1]} : vector<9x64xf32> to vector<1x64xf32>
    %417 = vector.broadcast %416 : vector<1x64xf32> to vector<64x64xf32>
    %418 = arith.mulf %415, %417 : vector<64x64xf32>
    %419 = arith.addf %410, %418 : vector<64x64xf32>
    %c4_177 = arith.constant 4 : index
    %c0_178 = arith.constant 0 : index
    %c0_179 = arith.constant 0 : index
    %420 = vector.load %arg24[%c4_177, %c0_178, %c0_179] : memref<9x64x1xf32, #tpu.memory_space<vmem>>, vector<1x64x1xf32>
    %421 = vector.shape_cast %420 : vector<1x64x1xf32> to vector<64x1xf32>
    %422 = vector.broadcast %421 : vector<64x1xf32> to vector<64x64xf32>
    %423 = arith.mulf %381, %422 : vector<64x64xf32>
    %424 = vector.extract_strided_slice %382 {offsets = [4, 0], sizes = [1, 64], strides = [1, 1]} : vector<9x64xf32> to vector<1x64xf32>
    %425 = vector.broadcast %424 : vector<1x64xf32> to vector<64x64xf32>
    %426 = arith.mulf %423, %425 : vector<64x64xf32>
    %427 = arith.addf %419, %426 : vector<64x64xf32>
    %c63_i32_180 = arith.constant 63 : i32
    %428 = tpu.dynamic_rotate %381 by %c63_i32_180 dim 0 : vector<64x64xf32>, i32 -> vector<64x64xf32>
    %c5_181 = arith.constant 5 : index
    %c0_182 = arith.constant 0 : index
    %c0_183 = arith.constant 0 : index
    %429 = vector.load %arg24[%c5_181, %c0_182, %c0_183] : memref<9x64x1xf32, #tpu.memory_space<vmem>>, vector<1x64x1xf32>
    %430 = vector.shape_cast %429 : vector<1x64x1xf32> to vector<64x1xf32>
    %431 = vector.broadcast %430 : vector<64x1xf32> to vector<64x64xf32>
    %432 = arith.mulf %428, %431 : vector<64x64xf32>
    %433 = vector.extract_strided_slice %382 {offsets = [5, 0], sizes = [1, 64], strides = [1, 1]} : vector<9x64xf32> to vector<1x64xf32>
    %434 = vector.broadcast %433 : vector<1x64xf32> to vector<64x64xf32>
    %435 = arith.mulf %432, %434 : vector<64x64xf32>
    %436 = arith.addf %427, %435 : vector<64x64xf32>
    %c57_i32_184 = arith.constant 57 : i32
    %437 = tpu.dynamic_rotate %381 by %c57_i32_184 dim 0 : vector<64x64xf32>, i32 -> vector<64x64xf32>
    %c6_185 = arith.constant 6 : index
    %c0_186 = arith.constant 0 : index
    %c0_187 = arith.constant 0 : index
    %438 = vector.load %arg24[%c6_185, %c0_186, %c0_187] : memref<9x64x1xf32, #tpu.memory_space<vmem>>, vector<1x64x1xf32>
    %439 = vector.shape_cast %438 : vector<1x64x1xf32> to vector<64x1xf32>
    %440 = vector.broadcast %439 : vector<64x1xf32> to vector<64x64xf32>
    %441 = arith.mulf %437, %440 : vector<64x64xf32>
    %442 = vector.extract_strided_slice %382 {offsets = [6, 0], sizes = [1, 64], strides = [1, 1]} : vector<9x64xf32> to vector<1x64xf32>
    %443 = vector.broadcast %442 : vector<1x64xf32> to vector<64x64xf32>
    %444 = arith.mulf %441, %443 : vector<64x64xf32>
    %445 = arith.addf %436, %444 : vector<64x64xf32>
    %c56_i32_188 = arith.constant 56 : i32
    %446 = tpu.dynamic_rotate %381 by %c56_i32_188 dim 0 : vector<64x64xf32>, i32 -> vector<64x64xf32>
    %c7_189 = arith.constant 7 : index
    %c0_190 = arith.constant 0 : index
    %c0_191 = arith.constant 0 : index
    %447 = vector.load %arg24[%c7_189, %c0_190, %c0_191] : memref<9x64x1xf32, #tpu.memory_space<vmem>>, vector<1x64x1xf32>
    %448 = vector.shape_cast %447 : vector<1x64x1xf32> to vector<64x1xf32>
    %449 = vector.broadcast %448 : vector<64x1xf32> to vector<64x64xf32>
    %450 = arith.mulf %446, %449 : vector<64x64xf32>
    %451 = vector.extract_strided_slice %382 {offsets = [7, 0], sizes = [1, 64], strides = [1, 1]} : vector<9x64xf32> to vector<1x64xf32>
    %452 = vector.broadcast %451 : vector<1x64xf32> to vector<64x64xf32>
    %453 = arith.mulf %450, %452 : vector<64x64xf32>
    %454 = arith.addf %445, %453 : vector<64x64xf32>
    %c55_i32_192 = arith.constant 55 : i32
    %455 = tpu.dynamic_rotate %381 by %c55_i32_192 dim 0 : vector<64x64xf32>, i32 -> vector<64x64xf32>
    %c8_193 = arith.constant 8 : index
    %c0_194 = arith.constant 0 : index
    %c0_195 = arith.constant 0 : index
    %456 = vector.load %arg24[%c8_193, %c0_194, %c0_195] : memref<9x64x1xf32, #tpu.memory_space<vmem>>, vector<1x64x1xf32>
    %457 = vector.shape_cast %456 : vector<1x64x1xf32> to vector<64x1xf32>
    %458 = vector.broadcast %457 : vector<64x1xf32> to vector<64x64xf32>
    %459 = arith.mulf %455, %458 : vector<64x64xf32>
    %460 = vector.extract_strided_slice %382 {offsets = [8, 0], sizes = [1, 64], strides = [1, 1]} : vector<9x64xf32> to vector<1x64xf32>
    %461 = vector.broadcast %460 : vector<1x64xf32> to vector<64x64xf32>
    %462 = arith.mulf %459, %461 : vector<64x64xf32>
    %463 = arith.addf %454, %462 : vector<64x64xf32>
    %464 = vector.extract_strided_slice %463 {offsets = [0, 0], sizes = [64, 32], strides = [1, 1]} : vector<64x64xf32> to vector<64x32xf32>
    %cst_196 = arith.constant 5.000000e-01 : f32
    %465 = vector.broadcast %cst_196 : f32 to vector<64x32xf32>
    %466 = arith.mulf %465, %464 : vector<64x32xf32>
    %cst_197 = arith.constant 0.707106769 : f32
    %467 = vector.broadcast %cst_197 : f32 to vector<64x32xf32>
    %468 = arith.mulf %464, %467 : vector<64x32xf32>
    %469 = math.absf %468 : vector<64x32xf32>
    %cst_198 = arith.constant 0.327591091 : f32
    %470 = vector.broadcast %cst_198 : f32 to vector<64x32xf32>
    %471 = arith.mulf %470, %469 : vector<64x32xf32>
    %cst_199 = arith.constant 1.000000e+00 : f32
    %472 = vector.broadcast %cst_199 : f32 to vector<64x32xf32>
    %473 = arith.addf %472, %471 : vector<64x32xf32>
    %474 = tpu.reciprocal %473 {approx = true} : vector<64x32xf32> -> vector<64x32xf32>
    %cst_200 = arith.constant 1.06140542 : f32
    %475 = vector.broadcast %cst_200 : f32 to vector<64x32xf32>
    %476 = arith.mulf %475, %474 : vector<64x32xf32>
    %cst_201 = arith.constant -1.45315206 : f32
    %477 = vector.broadcast %cst_201 : f32 to vector<64x32xf32>
    %478 = arith.addf %476, %477 : vector<64x32xf32>
    %479 = arith.mulf %478, %474 : vector<64x32xf32>
    %cst_202 = arith.constant 1.42141378 : f32
    %480 = vector.broadcast %cst_202 : f32 to vector<64x32xf32>
    %481 = arith.addf %479, %480 : vector<64x32xf32>
    %482 = arith.mulf %481, %474 : vector<64x32xf32>
    %cst_203 = arith.constant -0.284496725 : f32
    %483 = vector.broadcast %cst_203 : f32 to vector<64x32xf32>
    %484 = arith.addf %482, %483 : vector<64x32xf32>
    %485 = arith.mulf %484, %474 : vector<64x32xf32>
    %cst_204 = arith.constant 0.254829586 : f32
    %486 = vector.broadcast %cst_204 : f32 to vector<64x32xf32>
    %487 = arith.addf %485, %486 : vector<64x32xf32>
    %488 = arith.mulf %487, %474 : vector<64x32xf32>
    %cst_205 = arith.constant 0.000000e+00 : f32
    %489 = vector.broadcast %cst_205 : f32 to vector<64x32xf32>
    %490 = arith.subf %489, %469 : vector<64x32xf32>
    %491 = arith.mulf %490, %469 : vector<64x32xf32>
    %492 = math.exp %491 : vector<64x32xf32>
    %493 = arith.mulf %488, %492 : vector<64x32xf32>
    %cst_206 = arith.constant 1.000000e+00 : f32
    %494 = vector.broadcast %cst_206 : f32 to vector<64x32xf32>
    %495 = arith.subf %494, %493 : vector<64x32xf32>
    %cst_207 = arith.constant 0.000000e+00 : f32
    %496 = vector.broadcast %cst_207 : f32 to vector<64x32xf32>
    %497 = arith.cmpf oge, %468, %496 : vector<64x32xf32>
    %cst_208 = arith.constant 0.000000e+00 : f32
    %498 = vector.broadcast %cst_208 : f32 to vector<64x32xf32>
    %499 = arith.subf %498, %495 : vector<64x32xf32>
    %500 = arith.select %497, %495, %499 : vector<64x32xi1>, vector<64x32xf32>
    %cst_209 = arith.constant 1.000000e+00 : f32
    %501 = vector.broadcast %cst_209 : f32 to vector<64x32xf32>
    %502 = arith.addf %501, %500 : vector<64x32xf32>
    %503 = arith.mulf %466, %502 : vector<64x32xf32>
    %504 = vector.extract_strided_slice %463 {offsets = [0, 32], sizes = [64, 32], strides = [1, 1]} : vector<64x64xf32> to vector<64x32xf32>
    %505 = arith.mulf %503, %504 : vector<64x32xf32>
    %c0_210 = arith.constant 0 : index
    %c0_211 = arith.constant 0 : index
    %506 = vector.load %arg23[%c0_210, %c0_211] : memref<32x16xbf16, #tpu.memory_space<vmem>>, vector<32x16xbf16>
    %507 = arith.truncf %505 : vector<64x32xf32> to vector<64x32xbf16>
    %cst_212 = arith.constant dense<0.000000e+00> : vector<64x16xf32>
    %508 = tpu.matmul %507, %506, %cst_212 {dimension_numbers = #tpu.dot_dimension_numbers<[1], [0], [0], [1], [0, 0, 1, 1], [], []>} : vector<64x32xbf16>, vector<32x16xbf16>, vector<64x16xf32> -> vector<64x16xf32>
    %509 = arith.addf %356, %508 : vector<64x16xf32>
    %c0_213 = arith.constant 0 : index
    %c0_214 = arith.constant 0 : index
    %c0_215 = arith.constant 0 : index
    %510 = vector.load %arg25[%c0_213, %c0_214, %c0_215] : memref<1x64x16xf32, #tpu.memory_space<vmem>>, vector<1x64x16xf32>
    %511 = vector.shape_cast %510 : vector<1x64x16xf32> to vector<64x16xf32>
    %512 = vector.shape_cast %509 : vector<64x16xf32> to vector<1x64x16xf32>
    tpu.vector_store %arg25[%c0_213, %c0_214, %c0_215], %512 {strides = array<i32>} : memref<1x64x16xf32, #tpu.memory_space<vmem>>, vector<1x64x16xf32>,
    return
  }
  func.func @transform_0(%arg0: i32) -> (i32, i32, i32) {
    %c0_i32 = arith.constant 0 : i32
    %c0_i32_0 = arith.constant 0 : i32
    %c0_i32_1 = arith.constant 0 : i32
    return %arg0, %c0_i32, %c0_i32_0 : i32, i32, i32
  }
  func.func @transform_1(%arg0: i32) -> (i32, i32, i32) {
    %c0_i32 = arith.constant 0 : i32
    %c0_i32_0 = arith.constant 0 : i32
    %c0_i32_1 = arith.constant 0 : i32
    return %arg0, %c0_i32, %c0_i32_0 : i32, i32, i32
  }
  func.func @transform_2(%arg0: i32) -> (i32, i32, i32) {
    %c0_i32 = arith.constant 0 : i32
    %c0_i32_0 = arith.constant 0 : i32
    %c0_i32_1 = arith.constant 0 : i32
    return %arg0, %c0_i32, %c0_i32_0 : i32, i32, i32
  }
  func.func @transform_3(%arg0: i32) -> (i32, i32, i32) {
    %c0_i32 = arith.constant 0 : i32
    %c0_i32_0 = arith.constant 0 : i32
    %c0_i32_1 = arith.constant 0 : i32
    return %arg0, %c0_i32, %c0_i32_0 : i32, i32, i32
  }
  func.func @transform_4(%arg0: i32) -> (i32, i32) {
    %c0_i32 = arith.constant 0 : i32
    %c0_i32_0 = arith.constant 0 : i32
    %c0_i32_1 = arith.constant 0 : i32
    return %c0_i32, %c0_i32_0 : i32, i32
  }
  func.func @transform_5(%arg0: i32) -> (i32, i32) {
    %c0_i32 = arith.constant 0 : i32
    %c0_i32_0 = arith.constant 0 : i32
    %c0_i32_1 = arith.constant 0 : i32
    return %c0_i32, %c0_i32_0 : i32, i32
  }
  func.func @transform_6(%arg0: i32) -> (i32, i32) {
    %c0_i32 = arith.constant 0 : i32
    %c0_i32_0 = arith.constant 0 : i32
    %c0_i32_1 = arith.constant 0 : i32
    return %c0_i32, %c0_i32_0 : i32, i32
  }
  func.func @transform_7(%arg0: i32) -> (i32, i32) {
    %c0_i32 = arith.constant 0 : i32
    %c0_i32_0 = arith.constant 0 : i32
    %c0_i32_1 = arith.constant 0 : i32
    return %c0_i32, %c0_i32_0 : i32, i32
  }
  func.func @transform_8(%arg0: i32) -> (i32, i32) {
    %c0_i32 = arith.constant 0 : i32
    %c0_i32_0 = arith.constant 0 : i32
    %c0_i32_1 = arith.constant 0 : i32
    return %c0_i32, %c0_i32_0 : i32, i32
  }
  func.func @transform_9(%arg0: i32) -> (i32, i32) {
    %c0_i32 = arith.constant 0 : i32
    %c0_i32_0 = arith.constant 0 : i32
    %c0_i32_1 = arith.constant 0 : i32
    return %c0_i32, %c0_i32_0 : i32, i32
  }
  func.func @transform_10(%arg0: i32) -> (i32, i32) {
    %c0_i32 = arith.constant 0 : i32
    %c0_i32_0 = arith.constant 0 : i32
    %c0_i32_1 = arith.constant 0 : i32
    return %c0_i32, %c0_i32_0 : i32, i32
  }
  func.func @transform_11(%arg0: i32) -> (i32, i32) {
    %c0_i32 = arith.constant 0 : i32
    %c0_i32_0 = arith.constant 0 : i32
    %c0_i32_1 = arith.constant 0 : i32
    return %c0_i32, %c0_i32_0 : i32, i32
  }
  func.func @transform_12(%arg0: i32) -> (i32, i32) {
    %c0_i32 = arith.constant 0 : i32
    %c0_i32_0 = arith.constant 0 : i32
    %c0_i32_1 = arith.constant 0 : i32
    return %c0_i32, %c0_i32_0 : i32, i32
  }
  func.func @transform_13(%arg0: i32) -> (i32, i32) {
    %c0_i32 = arith.constant 0 : i32
    %c0_i32_0 = arith.constant 0 : i32
    %c0_i32_1 = arith.constant 0 : i32
    return %c0_i32, %c0_i32_0 : i32, i32
  }
  func.func @transform_14(%arg0: i32) -> (i32, i32) {
    %c0_i32 = arith.constant 0 : i32
    %c0_i32_0 = arith.constant 0 : i32
    %c0_i32_1 = arith.constant 0 : i32
    return %c0_i32, %c0_i32_0 : i32, i32
  }
  func.func @transform_15(%arg0: i32) -> (i32, i32) {
    %c0_i32 = arith.constant 0 : i32
    %c0_i32_0 = arith.constant 0 : i32
    %c0_i32_1 = arith.constant 0 : i32
    return %c0_i32, %c0_i32_0 : i32, i32
  }
  func.func @transform_16(%arg0: i32) -> (i32, i32) {
    %c0_i32 = arith.constant 0 : i32
    %c0_i32_0 = arith.constant 0 : i32
    %c0_i32_1 = arith.constant 0 : i32
    return %c0_i32, %c0_i32_0 : i32, i32
  }
  func.func @transform_17(%arg0: i32) -> i32 {
    %c0_i32 = arith.constant 0 : i32
    %c0_i32_0 = arith.constant 0 : i32
    return %c0_i32 : i32
  }
  func.func @transform_18(%arg0: i32) -> (i32, i32) {
    %c0_i32 = arith.constant 0 : i32
    %c0_i32_0 = arith.constant 0 : i32
    %c0_i32_1 = arith.constant 0 : i32
    return %c0_i32, %c0_i32_0 : i32, i32
  }
  func.func @transform_19(%arg0: i32) -> (i32, i32) {
    %c0_i32 = arith.constant 0 : i32
    %c0_i32_0 = arith.constant 0 : i32
    %c0_i32_1 = arith.constant 0 : i32
    return %c0_i32, %c0_i32_0 : i32, i32
  }
  func.func @transform_20(%arg0: i32) -> (i32, i32) {
    %c0_i32 = arith.constant 0 : i32
    %c0_i32_0 = arith.constant 0 : i32
    %c0_i32_1 = arith.constant 0 : i32
    return %c0_i32, %c0_i32_0 : i32, i32
  }
  func.func @transform_21(%arg0: i32) -> (i32, i32) {
    %c0_i32 = arith.constant 0 : i32
    %c0_i32_0 = arith.constant 0 : i32
    %c0_i32_1 = arith.constant 0 : i32
    return %c0_i32, %c0_i32_0 : i32, i32
  }
  func.func @transform_22(%arg0: i32) -> (i32, i32) {
    %c0_i32 = arith.constant 0 : i32
    %c0_i32_0 = arith.constant 0 : i32
    %c0_i32_1 = arith.constant 0 : i32
    return %c0_i32, %c0_i32_0 : i32, i32
  }
  func.func @transform_23(%arg0: i32) -> (i32, i32, i32) {
    %c0_i32 = arith.constant 0 : i32
    %c0_i32_0 = arith.constant 0 : i32
    %c0_i32_1 = arith.constant 0 : i32
    %c0_i32_2 = arith.constant 0 : i32
    return %c0_i32, %c0_i32_0, %c0_i32_1 : i32, i32, i32
  }
  func.func @transform_24(%arg0: i32) -> (i32, i32, i32) {
    %c0_i32 = arith.constant 0 : i32
    %c0_i32_0 = arith.constant 0 : i32
    %c0_i32_1 = arith.constant 0 : i32
    return %arg0, %c0_i32, %c0_i32_0 : i32, i32, i32
  }
}

</mosaic_0001>

<llo_original>
// kernel: tile.28
$region0: #{tile.28}
  %s0 = inlined_call_operand.vmem [shape: f32[3,1,3,2,8], index: 0, kind: input, shape index: {}]
  %s1 = inlined_call_operand.vmem [shape: f32[9,16], index: 1, kind: output, shape index: {}]
  $region1: #{tile.28} parent=0
    #allocation0 [shape = 'u8[36864]{0}', space=vmem, size = 0x9000, scoped, tag = 'scoped mem for input reshape']
    %s3 = sshll.u32 1, 2
    %s4 = ssub.s32 %s3, 1
    %s5 = smul.addr 2, 8
    %s6 = scalar_lea.vmem %s0, %s5
    %v7 = vld [vmem:[%s6] sm:%s4]
    %s8 = scalar_lea.vmem [#allocation0], 64
    %9 = vst [vmem:[%s8] sm:%s4] %v7
    %s10 = smul.addr 2, 7
    %s11 = scalar_lea.vmem %s0, %s10
    %v12 = vld [vmem:[%s11] sm:%s4]
    %s13 = scalar_lea.vmem [#allocation0], 56
    %14 = vst [vmem:[%s13] sm:%s4] %v12
    %s15 = smul.addr 2, 6
    %s16 = scalar_lea.vmem %s0, %s15
    %v17 = vld [vmem:[%s16] sm:%s4]
    %s18 = scalar_lea.vmem [#allocation0], 48
    %19 = vst [vmem:[%s18] sm:%s4] %v17
    %s20 = smul.addr 2, 5
    %s21 = scalar_lea.vmem %s0, %s20
    %v22 = vld [vmem:[%s21] sm:%s4]
    %s23 = scalar_lea.vmem [#allocation0], 40
    %24 = vst [vmem:[%s23] sm:%s4] %v22
    %s25 = smul.addr 2, 4
    %s26 = scalar_lea.vmem %s0, %s25
    %v27 = vld [vmem:[%s26] sm:%s4]
    %s28 = scalar_lea.vmem [#allocation0], 32
    %29 = vst [vmem:[%s28] sm:%s4] %v27
    %s30 = smul.addr 2, 3
    %s31 = scalar_lea.vmem %s0, %s30
    %v32 = vld [vmem:[%s31] sm:%s4]
    %s33 = scalar_lea.vmem [#allocation0], 24
    %34 = vst [vmem:[%s33] sm:%s4] %v32
    %s35 = smul.addr 2, 2
    %s36 = scalar_lea.vmem %s0, %s35
    %v37 = vld [vmem:[%s36] sm:%s4]
    %s38 = scalar_lea.vmem [#allocation0], 16
    %39 = vst [vmem:[%s38] sm:%s4] %v37
    %s40 = scalar_lea.vmem %s0, 2
    %v41 = vld [vmem:[%s40] sm:%s4]
    %s42 = scalar_lea.vmem [#allocation0], 8
    %43 = vst [vmem:[%s42] sm:%s4] %v41
    %v44 = vld [vmem:[%s0] sm:%s4]
    %45 = vst [vmem:[#allocation0] sm:%s4] %v44
    %v46 = vld [vmem:[#allocation0] ss:$8 sm:$0xf]
    %v47 = vld [vmem:[#allocation0] ss:$8 sm:$0xf0]
    %vm48 = vcmask 1047556
    %v49 = vsel %vm48, %v47, %v46
    %vm50 = vcmask 64512
    %51 = vst.msk [vmem:[%s1] sm:$0xff] %vm50, %v49
    %s52 = scalar_lea.vmem [#allocation0], 64
    %v53 = vld [vmem:[%s52] sm:$0x1]
    %vm54 = vcmask 64512
    %s55 = scalar_lea.vmem %s1, 8
    %56 = vst.msk [vmem:[%s55] sm:$0x1] %vm54, %v53
    %s57 = scalar_lea.vmem [#allocation0], 1
    %v58 = vld [vmem:[%s57] ss:$8 sm:$0xf]
    %s59 = scalar_lea.vmem [#allocation0], 1
    %v60 = vld [vmem:[%s59] ss:$8 sm:$0xf0]
    %vm61 = vcmask 1047556
    %v62 = vsel %vm61, %v60, %v58
    %63 = vrot.lane.b32.xlu0 %v62, 8
    %v64 = vpop.permute.xlu0 %63
    %vm65 = vcmask 130112
    %66 = vst.msk [vmem:[%s1] sm:$0xff] %vm65, %v64
    %s67 = scalar_lea.vmem [#allocation0], 65
    %v68 = vld [vmem:[%s67] sm:$0x1]
    %69 = vrot.lane.b32.xlu0 %v68, 8
    %v70 = vpop.permute.xlu0 %69
    %vm71 = vcmask 130112
    %s72 = scalar_lea.vmem %s1, 8
    %73 = vst.msk [vmem:[%s72] sm:$0x1] %vm71, %v70

// kernel: tile.33
$region0: #{tile.33}
  %s0 = inlined_call_operand.vmem [shape: f32[2,8], index: 0, kind: input, shape index: {}]
  %s1 = inlined_call_operand.vmem [shape: f32[1,16], index: 1, kind: output, shape index: {}]
  $region1: #{tile.33} parent=0
    #allocation0 [shape = 'u8[4096]{0}', space=vmem, size = 0x1000, scoped, tag = 'scoped mem for output reshape']
    #allocation1 [shape = 'u8[4096]{0}', space=vmem, size = 0x1000, scoped, tag = 'scoped mem for input reshape']
    %s3 = sshll.u32 1, 2
    %s4 = ssub.s32 %s3, 1
    %v5 = vld [vmem:[%s0] sm:%s4]
    %6 = vst [vmem:[#allocation1] sm:%s4] %v5
    %v7 = vld [vmem:[#allocation1] sm:$0x1]
    %vm8 = vcmask 64512
    %9 = vst.msk [vmem:[#allocation0] sm:$0x1] %vm8, %v7
    %s10 = scalar_lea.vmem [#allocation1], 1
    %v11 = vld [vmem:[%s10] sm:$0x1]
    %12 = vrot.lane.b32.xlu0 %v11, 8
    %v13 = vpop.permute.xlu0 %12
    %vm14 = vcmask 130112
    %15 = vst.msk [vmem:[#allocation0] sm:$0x1] %vm14, %v13
    %s17 = sshll.u32 1, 1
    %s18 = ssub.s32 %s17, 1
    %v20 = vld [vmem:[#allocation0] sm:%s18]
    %s21 = sshll.u32 1, 1
    %s22 = ssub.s32 %s21, 1
    %23 = vst [vmem:[%s1] sm:%s22] %v20

// kernel: tile.32
$region0: #{tile.32}
  #allocation0 [shape = 's32[1]{0}', space=sflag, size = 0x4, scoped, tag = 'scoped memory for tile.32']
  %s0 = inlined_call_operand.vmem [shape: f32[8], index: 0, kind: input, shape index: {}]
  %s1 = inlined_call_operand.vmem [shape: f32[2,8], index: 1, kind: output, shape index: {}]
  // Predicated region
  $region2: #{tile.32} parent=0 // pred_check
    _
  $region3: #{tile.32} parent=0 // pred_check_branch
    %3 = sbr.rel (0) target = $region5
  $region4: #{tile.32} parent=0 // pred_region
    _
  $region5: #{tile.32} parent=0 // pred_fallthru
    _
  %v4 = vld [vmem:[%s0] ss:$0 sm:$0xff]
  %5 = vst [vmem:[%s1] sm:$0x3] %v4

// kernel: transformer_encoder_forward.2
$region0: #{transformer_encoder_forward.2}
  #allocation0 [shape = 'u32[]', space=smem, size = 0x4, offset = 0x4, fixed_abs, tag = 'smem constant byte address 0x4 - core index']
  #allocation1 [shape = 'u32[144,128]{1,0:T(1,128)}', space=vmem, size = 0x12000, scoped, tag = 'internal scratch']
  %s0 = inlined_call_operand.vmem [shape: f32[2,64,16], index: 0, kind: input, shape index: {}]
  %s1 = inlined_call_operand.vmem [shape: f32[2,64,16], index: 1, kind: input, shape index: {}]
  %s2 = inlined_call_operand.vmem [shape: f32[1,16], index: 2, kind: input, shape index: {}]
  %s3 = inlined_call_operand.vmem [shape: f32[1,16], index: 3, kind: input, shape index: {}]
  %s4 = inlined_call_operand.vmem [shape: f32[1,16], index: 4, kind: input, shape index: {}]
  %s5 = inlined_call_operand.vmem [shape: f32[1,16], index: 5, kind: input, shape index: {}]
  %s6 = inlined_call_operand.vmem [shape: bf16[16,16], index: 6, kind: input, shape index: {}]
  %s7 = inlined_call_operand.vmem [shape: f32[1,16], index: 7, kind: input, shape index: {}]
  %s8 = inlined_call_operand.vmem [shape: f32[9,16], index: 8, kind: input, shape index: {}]
  %s9 = inlined_call_operand.vmem [shape: f32[1,16], index: 9, kind: input, shape index: {}]
  %s10 = inlined_call_operand.vmem [shape: f32[1,16], index: 10, kind: input, shape index: {}]
  %s11 = inlined_call_operand.vmem [shape: f32[1,16], index: 11, kind: input, shape index: {}]
  %s12 = inlined_call_operand.vmem [shape: f32[16,16], index: 12, kind: input, shape index: {}]
  %s13 = inlined_call_operand.vmem [shape: f32[16,4], index: 13, kind: input, shape index: {}]
  %s14 = inlined_call_operand.vmem [shape: f32[64,4], index: 14, kind: input, shape index: {}]
  %s15 = inlined_call_operand.vmem [shape: f32[9,64,1], index: 15, kind: input, shape index: {}]
  %s16 = inlined_call_operand.vmem [shape: f32[2,64,16], index: 16, kind: output, shape index: {0}]
  %s17 = inlined_call_operand.vmem [shape: f32[2,64,16], index: 17, kind: output, shape index: {1}]
  %s18 = inlined_call_operand.vmem [shape: f32[2,64,4], index: 18, kind: output, shape index: {2}]
  %19 = xla_tuple %s16, %s17, %s18
  %s20 = sld [smem:[#allocation0]]
  $region113: #{transformer_encoder_forward.2} parent=0
    _
  %s22 = ssub.s32 1, %s20
  %s23 = scalar_select 0, %s22, %s20
  loop: start=0, step=1, limit=4
  $region2: #{transformer_encoder_forward.2} parent=0 // loop_pre_header
    _
  $region3: #{transformer_encoder_forward.2} parent=0 // loop_header
    %s25 = sphi 0, %s29
    %p26 = scmp.ge.s32.totalorder %s25, 4
    %s35 = sphi 0, %s37
    %s38 = sphi 0, %s35
    %s39 = sphi 0, %s38
    %s55 = sphi 0, %s39
    %s61 = sphi 0, %s63
    %s64 = sphi 0, %s61
    %s65 = sphi 0, %s64
    %s81 = sphi 0, %s65
    %s85 = sphi 0, %s85
    %s87 = sphi 0, %s85
    %s88 = sphi 0, %s87
    %s102 = sphi 0, %s88
    %s106 = sphi 0, %s106
    %s108 = sphi 0, %s106
    %s109 = sphi 0, %s108
    %s123 = sphi 0, %s109
    %s127 = sphi 0, %s127
    %s129 = sphi 0, %s127
    %s130 = sphi 0, %s129
    %s144 = sphi 0, %s130
    %s148 = sphi 0, %s148
    %s150 = sphi 0, %s148
    %s151 = sphi 0, %s150
    %s165 = sphi 0, %s151
    %s169 = sphi 0, %s169
    %s171 = sphi 0, %s169
    %s172 = sphi 0, %s171
    %s186 = sphi 0, %s172
    %s190 = sphi 0, %s190
    %s192 = sphi 0, %s190
    %s193 = sphi 0, %s192
    %s207 = sphi 0, %s193
    %s211 = sphi 0, %s211
    %s213 = sphi 0, %s211
    %s214 = sphi 0, %s213
    %s228 = sphi 0, %s214
    %s232 = sphi 0, %s232
    %s234 = sphi 0, %s232
    %s235 = sphi 0, %s234
    %s249 = sphi 0, %s235
    %s253 = sphi 0, %s253
    %s255 = sphi 0, %s253
    %s256 = sphi 0, %s255
    %s270 = sphi 0, %s256
    %s274 = sphi 0, %s274
    %s276 = sphi 0, %s274
    %s277 = sphi 0, %s276
    %s291 = sphi 0, %s277
    %s295 = sphi 0, %s295
    %s297 = sphi 0, %s295
    %s298 = sphi 0, %s297
    %s312 = sphi 0, %s298
    %s316 = sphi 0, %s316
    %s318 = sphi 0, %s316
    %s319 = sphi 0, %s318
    %s333 = sphi 0, %s319
    %s337 = sphi 0, %s337
    %s339 = sphi 0, %s337
    %s340 = sphi 0, %s339
    %s354 = sphi 0, %s340
    %s358 = sphi 0, %s358
    %s360 = sphi 0, %s358
    %s361 = sphi 0, %s360
    %s375 = sphi 0, %s361
    %s381 = sphi 0, %s383
    %s384 = sphi 0, %s381
    %s385 = sphi 0, %s384
    %s401 = sphi 0, %s385
    %s407 = sphi 0, %s409
    %s410 = sphi 0, %s407
    %s411 = sphi 0, %s410
    %s427 = sphi 0, %s411
    %s433 = sphi 0, %s435
    %s436 = sphi 0, %s433
    %s437 = sphi 0, %s436
    %s453 = sphi 0, %s437
  $region4: #{transformer_encoder_forward.2} parent=0 // loop_header_branch
    %28 = sbr.rel (%p26) target = $region8
  $region5: #{transformer_encoder_forward.2} parent=0 // loop_body
    %s30 = ssub.s32 %s25, 1
    %s31 = ssub.s32 %s25, 2
    %s32 = sadd.s32 %s25, 1
    %s33 = ssub.s32 %s25, %s32
    %p34 = scmp.eq.s32.totalorder %s33, 0
    %s36 = sadd.s32 %s35, 1
    %s37 = scalar_select %p34, %s35, %s36
    %p40 = pneg %p34
    %p41 = scmp.eq.s32.totalorder %s25, 1
    %p42 = por %p40, %p41
    %p43 = scmp.ne.s32.totalorder %s35, %s38
    %p44 = scmp.eq.s32.totalorder %s25, 0
    %p45 = por %p43, %p44
    %p46 = scmp.ne.s32.totalorder %s35, %s38
    %p47 = scmp.eq.s32.totalorder %s30, 1
    %p48 = por %p46, %p47
    %p49 = scmp.ne.s32.totalorder %s38, %s39
    %p50 = scmp.eq.s32.totalorder %s30, 0
    %p51 = por %p49, %p50
    %p52 = scmp.ne.s32.totalorder %s38, %s39
    %p53 = scmp.eq.s32.totalorder %s31, 1
    %p54 = por %p52, %p53
    %p56 = scmp.ne.s32.totalorder %s39, %s55
    %p57 = scmp.eq.s32.totalorder %s31, 0
    %p58 = por %p56, %p57
    %s59 = ssub.s32 %s25, %s32
    %p60 = scmp.eq.s32.totalorder %s59, 0
    %s62 = sadd.s32 %s61, 1
    %s63 = scalar_select %p60, %s61, %s62
    %p66 = pneg %p60
    %p67 = scmp.eq.s32.totalorder %s25, 1
    %p68 = por %p66, %p67
    %p69 = scmp.ne.s32.totalorder %s61, %s64
    %p70 = scmp.eq.s32.totalorder %s25, 0
    %p71 = por %p69, %p70
    %p72 = scmp.ne.s32.totalorder %s61, %s64
    %p73 = scmp.eq.s32.totalorder %s30, 1
    %p74 = por %p72, %p73
    %p75 = scmp.ne.s32.totalorder %s64, %s65
    %p76 = scmp.eq.s32.totalorder %s30, 0
    %p77 = por %p75, %p76
    %p78 = scmp.ne.s32.totalorder %s64, %s65
    %p79 = scmp.eq.s32.totalorder %s31, 1
    %p80 = por %p78, %p79
    %p82 = scmp.ne.s32.totalorder %s65, %s81
    %p83 = scmp.eq.s32.totalorder %s31, 0
    %p84 = por %p82, %p83
    %s86 = sadd.s32 %s85, 1
    %p89 = scmp.eq.s32.totalorder %s25, 1
    %p90 = scmp.ne.s32.totalorder %s85, %s87
    %p91 = scmp.eq.s32.totalorder %s25, 0
    %p92 = por %p90, %p91
    %p93 = scmp.ne.s32.totalorder %s85, %s87
    %p94 = scmp.eq.s32.totalorder %s30, 1
    %p95 = por %p93, %p94
    %p96 = scmp.ne.s32.totalorder %s87, %s88
    %p97 = scmp.eq.s32.totalorder %s30, 0
    %p98 = por %p96, %p97
    %p99 = scmp.ne.s32.totalorder %s87, %s88
    %p100 = scmp.eq.s32.totalorder %s31, 1
    %p101 = por %p99, %p100
    %p103 = scmp.ne.s32.totalorder %s88, %s102
    %p104 = scmp.eq.s32.totalorder %s31, 0
    %p105 = por %p103, %p104
    %s107 = sadd.s32 %s106, 1
    %p110 = scmp.eq.s32.totalorder %s25, 1
    %p111 = scmp.ne.s32.totalorder %s106, %s108
    %p112 = scmp.eq.s32.totalorder %s25, 0
    %p113 = por %p111, %p112
    %p114 = scmp.ne.s32.totalorder %s106, %s108
    %p115 = scmp.eq.s32.totalorder %s30, 1
    %p116 = por %p114, %p115
    %p117 = scmp.ne.s32.totalorder %s108, %s109
    %p118 = scmp.eq.s32.totalorder %s30, 0
    %p119 = por %p117, %p118
    %p120 = scmp.ne.s32.totalorder %s108, %s109
    %p121 = scmp.eq.s32.totalorder %s31, 1
    %p122 = por %p120, %p121
    %p124 = scmp.ne.s32.totalorder %s109, %s123
    %p125 = scmp.eq.s32.totalorder %s31, 0
    %p126 = por %p124, %p125
    %s128 = sadd.s32 %s127, 1
    %p131 = scmp.eq.s32.totalorder %s25, 1
    %p132 = scmp.ne.s32.totalorder %s127, %s129
    %p133 = scmp.eq.s32.totalorder %s25, 0
    %p134 = por %p132, %p133
    %p135 = scmp.ne.s32.totalorder %s127, %s129
    %p136 = scmp.eq.s32.totalorder %s30, 1
    %p137 = por %p135, %p136
    %p138 = scmp.ne.s32.totalorder %s129, %s130
    %p139 = scmp.eq.s32.totalorder %s30, 0
    %p140 = por %p138, %p139
    %p141 = scmp.ne.s32.totalorder %s129, %s130
    %p142 = scmp.eq.s32.totalorder %s31, 1
    %p143 = por %p141, %p142
    %p145 = scmp.ne.s32.totalorder %s130, %s144
    %p146 = scmp.eq.s32.totalorder %s31, 0
    %p147 = por %p145, %p146
    %s149 = sadd.s32 %s148, 1
    %p152 = scmp.eq.s32.totalorder %s25, 1
    %p153 = scmp.ne.s32.totalorder %s148, %s150
    %p154 = scmp.eq.s32.totalorder %s25, 0
    %p155 = por %p153, %p154
    %p156 = scmp.ne.s32.totalorder %s148, %s150
    %p157 = scmp.eq.s32.totalorder %s30, 1
    %p158 = por %p156, %p157
    %p159 = scmp.ne.s32.totalorder %s150, %s151
    %p160 = scmp.eq.s32.totalorder %s30, 0
    %p161 = por %p159, %p160
    %p162 = scmp.ne.s32.totalorder %s150, %s151
    %p163 = scmp.eq.s32.totalorder %s31, 1
    %p164 = por %p162, %p163
    %p166 = scmp.ne.s32.totalorder %s151, %s165
    %p167 = scmp.eq.s32.totalorder %s31, 0
    %p168 = por %p166, %p167
    %s170 = sadd.s32 %s169, 1
    %p173 = scmp.eq.s32.totalorder %s25, 1
    %p174 = scmp.ne.s32.totalorder %s169, %s171
    %p175 = scmp.eq.s32.totalorder %s25, 0
    %p176 = por %p174, %p175
    %p177 = scmp.ne.s32.totalorder %s169, %s171
    %p178 = scmp.eq.s32.totalorder %s30, 1
    %p179 = por %p177, %p178
    %p180 = scmp.ne.s32.totalorder %s171, %s172
    %p181 = scmp.eq.s32.totalorder %s30, 0
    %p182 = por %p180, %p181
    %p183 = scmp.ne.s32.totalorder %s171, %s172
    %p184 = scmp.eq.s32.totalorder %s31, 1
    %p185 = por %p183, %p184
    %p187 = scmp.ne.s32.totalorder %s172, %s186
    %p188 = scmp.eq.s32.totalorder %s31, 0
    %p189 = por %p187, %p188
    %s191 = sadd.s32 %s190, 1
    %p194 = scmp.eq.s32.totalorder %s25, 1
    %p195 = scmp.ne.s32.totalorder %s190, %s192
    %p196 = scmp.eq.s32.totalorder %s25, 0
    %p197 = por %p195, %p196
    %p198 = scmp.ne.s32.totalorder %s190, %s192
    %p199 = scmp.eq.s32.totalorder %s30, 1
    %p200 = por %p198, %p199
    %p201 = scmp.ne.s32.totalorder %s192, %s193
    %p202 = scmp.eq.s32.totalorder %s30, 0
    %p203 = por %p201, %p202
    %p204 = scmp.ne.s32.totalorder %s192, %s193
    %p205 = scmp.eq.s32.totalorder %s31, 1
    %p206 = por %p204, %p205
    %p208 = scmp.ne.s32.totalorder %s193, %s207
    %p209 = scmp.eq.s32.totalorder %s31, 0
    %p210 = por %p208, %p209
    %s212 = sadd.s32 %s211, 1
    %p215 = scmp.eq.s32.totalorder %s25, 1
    %p216 = scmp.ne.s32.totalorder %s211, %s213
    %p217 = scmp.eq.s32.totalorder %s25, 0
    %p218 = por %p216, %p217
    %p219 = scmp.ne.s32.totalorder %s211, %s213
    %p220 = scmp.eq.s32.totalorder %s30, 1
    %p221 = por %p219, %p220
    %p222 = scmp.ne.s32.totalorder %s213, %s214
    %p223 = scmp.eq.s32.totalorder %s30, 0
    %p224 = por %p222, %p223
    %p225 = scmp.ne.s32.totalorder %s213, %s214
    %p226 = scmp.eq.s32.totalorder %s31, 1
    %p227 = por %p225, %p226
    %p229 = scmp.ne.s32.totalorder %s214, %s228
    %p230 = scmp.eq.s32.totalorder %s31, 0
    %p231 = por %p229, %p230
    %s233 = sadd.s32 %s232, 1
    %p236 = scmp.eq.s32.totalorder %s25, 1
    %p237 = scmp.ne.s32.totalorder %s232, %s234
    %p238 = scmp.eq.s32.totalorder %s25, 0
    %p239 = por %p237, %p238
    %p240 = scmp.ne.s32.totalorder %s232, %s234
    %p241 = scmp.eq.s32.totalorder %s30, 1
    %p242 = por %p240, %p241
    %p243 = scmp.ne.s32.totalorder %s234, %s235
    %p244 = scmp.eq.s32.totalorder %s30, 0
    %p245 = por %p243, %p244
    %p246 = scmp.ne.s32.totalorder %s234, %s235
    %p247 = scmp.eq.s32.totalorder %s31, 1
    %p248 = por %p246, %p247
    %p250 = scmp.ne.s32.totalorder %s235, %s249
    %p251 = scmp.eq.s32.totalorder %s31, 0
    %p252 = por %p250, %p251
    %s254 = sadd.s32 %s253, 1
    %p257 = scmp.eq.s32.totalorder %s25, 1
    %p258 = scmp.ne.s32.totalorder %s253, %s255
    %p259 = scmp.eq.s32.totalorder %s25, 0
    %p260 = por %p258, %p259
    %p261 = scmp.ne.s32.totalorder %s253, %s255
    %p262 = scmp.eq.s32.totalorder %s30, 1
    %p263 = por %p261, %p262
    %p264 = scmp.ne.s32.totalorder %s255, %s256
    %p265 = scmp.eq.s32.totalorder %s30, 0
    %p266 = por %p264, %p265
    %p267 = scmp.ne.s32.totalorder %s255, %s256
    %p268 = scmp.eq.s32.totalorder %s31, 1
    %p269 = por %p267, %p268
    %p271 = scmp.ne.s32.totalorder %s256, %s270
    %p272 = scmp.eq.s32.totalorder %s31, 0
    %p273 = por %p271, %p272
    %s275 = sadd.s32 %s274, 1
    %p278 = scmp.eq.s32.totalorder %s25, 1
    %p279 = scmp.ne.s32.totalorder %s274, %s276
    %p280 = scmp.eq.s32.totalorder %s25, 0
    %p281 = por %p279, %p280
    %p282 = scmp.ne.s32.totalorder %s274, %s276
    %p283 = scmp.eq.s32.totalorder %s30, 1
    %p284 = por %p282, %p283
    %p285 = scmp.ne.s32.totalorder %s276, %s277
    %p286 = scmp.eq.s32.totalorder %s30, 0
    %p287 = por %p285, %p286
    %p288 = scmp.ne.s32.totalorder %s276, %s277
    %p289 = scmp.eq.s32.totalorder %s31, 1
    %p290 = por %p288, %p289
    %p292 = scmp.ne.s32.totalorder %s277, %s291
    %p293 = scmp.eq.s32.totalorder %s31, 0
    %p294 = por %p292, %p293
    %s296 = sadd.s32 %s295, 1
    %p299 = scmp.eq.s32.totalorder %s25, 1
    %p300 = scmp.ne.s32.totalorder %s295, %s297
    %p301 = scmp.eq.s32.totalorder %s25, 0
    %p302 = por %p300, %p301
    %p303 = scmp.ne.s32.totalorder %s295, %s297
    %p304 = scmp.eq.s32.totalorder %s30, 1
    %p305 = por %p303, %p304
    %p306 = scmp.ne.s32.totalorder %s297, %s298
    %p307 = scmp.eq.s32.totalorder %s30, 0
    %p308 = por %p306, %p307
    %p309 = scmp.ne.s32.totalorder %s297, %s298
    %p310 = scmp.eq.s32.totalorder %s31, 1
    %p311 = por %p309, %p310
    %p313 = scmp.ne.s32.totalorder %s298, %s312
    %p314 = scmp.eq.s32.totalorder %s31, 0
    %p315 = por %p313, %p314
    %s317 = sadd.s32 %s316, 1
    %p320 = scmp.eq.s32.totalorder %s25, 1
    %p321 = scmp.ne.s32.totalorder %s316, %s318
    %p322 = scmp.eq.s32.totalorder %s25, 0
    %p323 = por %p321, %p322
    %p324 = scmp.ne.s32.totalorder %s316, %s318
    %p325 = scmp.eq.s32.totalorder %s30, 1
    %p326 = por %p324, %p325
    %p327 = scmp.ne.s32.totalorder %s318, %s319
    %p328 = scmp.eq.s32.totalorder %s30, 0
    %p329 = por %p327, %p328
    %p330 = scmp.ne.s32.totalorder %s318, %s319
    %p331 = scmp.eq.s32.totalorder %s31, 1
    %p332 = por %p330, %p331
    %p334 = scmp.ne.s32.totalorder %s319, %s333
    %p335 = scmp.eq.s32.totalorder %s31, 0
    %p336 = por %p334, %p335
    %s338 = sadd.s32 %s337, 1
    %p341 = scmp.eq.s32.totalorder %s25, 1
    %p342 = scmp.ne.s32.totalorder %s337, %s339
    %p343 = scmp.eq.s32.totalorder %s25, 0
    %p344 = por %p342, %p343
    %p345 = scmp.ne.s32.totalorder %s337, %s339
    %p346 = scmp.eq.s32.totalorder %s30, 1
    %p347 = por %p345, %p346
    %p348 = scmp.ne.s32.totalorder %s339, %s340
    %p349 = scmp.eq.s32.totalorder %s30, 0
    %p350 = por %p348, %p349
    %p351 = scmp.ne.s32.totalorder %s339, %s340
    %p352 = scmp.eq.s32.totalorder %s31, 1
    %p353 = por %p351, %p352
    %p355 = scmp.ne.s32.totalorder %s340, %s354
    %p356 = scmp.eq.s32.totalorder %s31, 0
    %p357 = por %p355, %p356
    %s359 = sadd.s32 %s358, 1
    %p362 = scmp.eq.s32.totalorder %s25, 1
    %p363 = scmp.ne.s32.totalorder %s358, %s360
    %p364 = scmp.eq.s32.totalorder %s25, 0
    %p365 = por %p363, %p364
    %p366 = scmp.ne.s32.totalorder %s358, %s360
    %p367 = scmp.eq.s32.totalorder %s30, 1
    %p368 = por %p366, %p367
    %p369 = scmp.ne.s32.totalorder %s360, %s361
    %p370 = scmp.eq.s32.totalorder %s30, 0
    %p371 = por %p369, %p370
    %p372 = scmp.ne.s32.totalorder %s360, %s361
    %p373 = scmp.eq.s32.totalorder %s31, 1
    %p374 = por %p372, %p373
    %p376 = scmp.ne.s32.totalorder %s361, %s375
    %p377 = scmp.eq.s32.totalorder %s31, 0
    %p378 = por %p376, %p377
    %s379 = ssub.s32 %s25, %s32
    %p380 = scmp.eq.s32.totalorder %s379, 0
    %s382 = sadd.s32 %s381, 1
    %s383 = scalar_select %p380, %s381, %s382
    %p386 = pneg %p380
    %p387 = scmp.eq.s32.totalorder %s25, 1
    %p388 = por %p386, %p387
    %p389 = scmp.ne.s32.totalorder %s381, %s384
    %p390 = scmp.eq.s32.totalorder %s25, 0
    %p391 = por %p389, %p390
    %p392 = scmp.ne.s32.totalorder %s381, %s384
    %p393 = scmp.eq.s32.totalorder %s30, 1
    %p394 = por %p392, %p393
    %p395 = scmp.ne.s32.totalorder %s384, %s385
    %p396 = scmp.eq.s32.totalorder %s30, 0
    %p397 = por %p395, %p396
    %p398 = scmp.ne.s32.totalorder %s384, %s385
    %p399 = scmp.eq.s32.totalorder %s31, 1
    %p400 = por %p398, %p399
    %p402 = scmp.ne.s32.totalorder %s385, %s401
    %p403 = scmp.eq.s32.totalorder %s31, 0
    %p404 = por %p402, %p403
    %s405 = ssub.s32 %s25, %s32
    %p406 = scmp.eq.s32.totalorder %s405, 0
    %s408 = sadd.s32 %s407, 1
    %s409 = scalar_select %p406, %s407, %s408
    %p412 = pneg %p406
    %p413 = scmp.eq.s32.totalorder %s25, 1
    %p414 = por %p412, %p413
    %p415 = scmp.ne.s32.totalorder %s407, %s410
    %p416 = scmp.eq.s32.totalorder %s25, 0
    %p417 = por %p415, %p416
    %p418 = scmp.ne.s32.totalorder %s407, %s410
    %p419 = scmp.eq.s32.totalorder %s30, 1
    %p420 = por %p418, %p419
    %p421 = scmp.ne.s32.totalorder %s410, %s411
    %p422 = scmp.eq.s32.totalorder %s30, 0
    %p423 = por %p421, %p422
    %p424 = scmp.ne.s32.totalorder %s410, %s411
    %p425 = scmp.eq.s32.totalorder %s31, 1
    %p426 = por %p424, %p425
    %p428 = scmp.ne.s32.totalorder %s411, %s427
    %p429 = scmp.eq.s32.totalorder %s31, 0
    %p430 = por %p428, %p429
    %s431 = ssub.s32 %s25, %s32
    %p432 = scmp.eq.s32.totalorder %s431, 0
    %s434 = sadd.s32 %s433, 1
    %s435 = scalar_select %p432, %s433, %s434
    %p438 = pneg %p432
    %p439 = scmp.eq.s32.totalorder %s25, 1
    %p440 = por %p438, %p439
    %p441 = scmp.ne.s32.totalorder %s433, %s436
    %p442 = scmp.eq.s32.totalorder %s25, 0
    %p443 = por %p441, %p442
    %p444 = scmp.ne.s32.totalorder %s433, %s436
    %p445 = scmp.eq.s32.totalorder %s30, 1
    %p446 = por %p444, %p445
    %p447 = scmp.ne.s32.totalorder %s436, %s437
    %p448 = scmp.eq.s32.totalorder %s30, 0
    %p449 = por %p447, %p448
    %p450 = scmp.ne.s32.totalorder %s436, %s437
    %p451 = scmp.eq.s32.totalorder %s31, 1
    %p452 = por %p450, %p451
    %p454 = scmp.ne.s32.totalorder %s437, %s453
    %p455 = scmp.eq.s32.totalorder %s31, 0
    %p456 = por %p454, %p455
    %p457 = scmp.le.s32.totalorder 1, %s25
    %p458 = scmp.lt.s32.totalorder %s25, 3
    %p459 = pnand %p457, %p458
    %p460 = pneg %p459
    // Predicated region
    $region9: #{transformer_encoder_forward.2} parent=5 // pred_check
      _
    $region10: #{transformer_encoder_forward.2} parent=5 // pred_check_branch
      %462 = sbr.rel (%p459) target = $region12
    $region11: #{transformer_encoder_forward.2} parent=5 // pred_region
      %s463 = ssub.s32 %s25, 1
      // Predicated region
      $region13: #{transformer_encoder_forward.2} parent=11 // pred_check
        %p464 = pneg %p98
      $region14: #{transformer_encoder_forward.2} parent=11 // pred_check_branch
        %466 = sbr.rel (%p464) target = $region16
      $region15: #{transformer_encoder_forward.2} parent=11 // pred_region
        _
      $region16: #{transformer_encoder_forward.2} parent=11 // pred_fallthru
        _
      // Predicated region
      $region17: #{transformer_encoder_forward.2} parent=11 // pred_check
        %p467 = pneg %p119
      $region18: #{transformer_encoder_forward.2} parent=11 // pred_check_branch
        %469 = sbr.rel (%p467) target = $region20
      $region19: #{transformer_encoder_forward.2} parent=11 // pred_region
        _
      $region20: #{transformer_encoder_forward.2} parent=11 // pred_fallthru
        _
      // Predicated region
      $region21: #{transformer_encoder_forward.2} parent=11 // pred_check
        %p470 = pneg %p140
      $region22: #{transformer_encoder_forward.2} parent=11 // pred_check_branch
        %472 = sbr.rel (%p470) target = $region24
      $region23: #{transformer_encoder_forward.2} parent=11 // pred_region
        _
      $region24: #{transformer_encoder_forward.2} parent=11 // pred_fallthru
        _
      // Predicated region
      $region25: #{transformer_encoder_forward.2} parent=11 // pred_check
        %p473 = pneg %p161
      $region26: #{transformer_encoder_forward.2} parent=11 // pred_check_branch
        %475 = sbr.rel (%p473) target = $region28
      $region27: #{transformer_encoder_forward.2} parent=11 // pred_region
        _
      $region28: #{transformer_encoder_forward.2} parent=11 // pred_fallthru
        _
      // Predicated region
      $region29: #{transformer_encoder_forward.2} parent=11 // pred_check
        %p476 = pneg %p182
      $region30: #{transformer_encoder_forward.2} parent=11 // pred_check_branch
        %478 = sbr.rel (%p476) target = $region32
      $region31: #{transformer_encoder_forward.2} parent=11 // pred_region
        _
      $region32: #{transformer_encoder_forward.2} parent=11 // pred_fallthru
        _
      // Predicated region
      $region33: #{transformer_encoder_forward.2} parent=11 // pred_check
        %p479 = pneg %p203
      $region34: #{transformer_encoder_forward.2} parent=11 // pred_check_branch
        %481 = sbr.rel (%p479) target = $region36
      $region35: #{transformer_encoder_forward.2} parent=11 // pred_region
        _
      $region36: #{transformer_encoder_forward.2} parent=11 // pred_fallthru
        _
      // Predicated region
      $region37: #{transformer_encoder_forward.2} parent=11 // pred_check
        %p482 = pneg %p224
      $region38: #{transformer_encoder_forward.2} parent=11 // pred_check_branch
        %484 = sbr.rel (%p482) target = $region40
      $region39: #{transformer_encoder_forward.2} parent=11 // pred_region
        _
      $region40: #{transformer_encoder_forward.2} parent=11 // pred_fallthru
        _
      // Predicated region
      $region41: #{transformer_encoder_forward.2} parent=11 // pred_check
        %p485 = pneg %p245
      $region42: #{transformer_encoder_forward.2} parent=11 // pred_check_branch
        %487 = sbr.rel (%p485) target = $region44
      $region43: #{transformer_encoder_forward.2} parent=11 // pred_region
        _
      $region44: #{transformer_encoder_forward.2} parent=11 // pred_fallthru
        _
      // Predicated region
      $region45: #{transformer_encoder_forward.2} parent=11 // pred_check
        %p488 = pneg %p266
      $region46: #{transformer_encoder_forward.2} parent=11 // pred_check_branch
        %490 = sbr.rel (%p488) target = $region48
      $region47: #{transformer_encoder_forward.2} parent=11 // pred_region
        _
      $region48: #{transformer_encoder_forward.2} parent=11 // pred_fallthru
        _
      // Predicated region
      $region49: #{transformer_encoder_forward.2} parent=11 // pred_check
        %p491 = pneg %p287
      $region50: #{transformer_encoder_forward.2} parent=11 // pred_check_branch
        %493 = sbr.rel (%p491) target = $region52
      $region51: #{transformer_encoder_forward.2} parent=11 // pred_region
        _
      $region52: #{transformer_encoder_forward.2} parent=11 // pred_fallthru
        _
      // Predicated region
      $region53: #{transformer_encoder_forward.2} parent=11 // pred_check
        %p494 = pneg %p308
      $region54: #{transformer_encoder_forward.2} parent=11 // pred_check_branch
        %496 = sbr.rel (%p494) target = $region56
      $region55: #{transformer_encoder_forward.2} parent=11 // pred_region
        _
      $region56: #{transformer_encoder_forward.2} parent=11 // pred_fallthru
        _
      // Predicated region
      $region57: #{transformer_encoder_forward.2} parent=11 // pred_check
        %p497 = pneg %p329
      $region58: #{transformer_encoder_forward.2} parent=11 // pred_check_branch
        %499 = sbr.rel (%p497) target = $region60
      $region59: #{transformer_encoder_forward.2} parent=11 // pred_region
        _
      $region60: #{transformer_encoder_forward.2} parent=11 // pred_fallthru
        _
      // Predicated region
      $region61: #{transformer_encoder_forward.2} parent=11 // pred_check
        %p500 = pneg %p350
      $region62: #{transformer_encoder_forward.2} parent=11 // pred_check_branch
        %502 = sbr.rel (%p500) target = $region64
      $region63: #{transformer_encoder_forward.2} parent=11 // pred_region
        _
      $region64: #{transformer_encoder_forward.2} parent=11 // pred_fallthru
        _
      // Predicated region
      $region65: #{transformer_encoder_forward.2} parent=11 // pred_check
        %p503 = pneg %p371
      $region66: #{transformer_encoder_forward.2} parent=11 // pred_check_branch
        %505 = sbr.rel (%p503) target = $region68
      $region67: #{transformer_encoder_forward.2} parent=11 // pred_region
        _
      $region68: #{transformer_encoder_forward.2} parent=11 // pred_fallthru
        _
    $region12: #{transformer_encoder_forward.2} parent=5 // pred_fallthru
      _
    %p506 = scmp.lt.s32.totalorder %s25, 2
    // Predicated region
    $region69: #{transformer_encoder_forward.2} parent=5 // pred_check
      %p507 = pneg %p506
    $region70: #{transformer_encoder_forward.2} parent=5 // pred_check_branch
      %509 = sbr.rel (%p507) target = $region72
    $region71: #{transformer_encoder_forward.2} parent=5 // pred_region
      // Predicated region
      $region73: #{transformer_encoder_forward.2} parent=71 // pred_check
        %p510 = pneg %p45
      $region74: #{transformer_encoder_forward.2} parent=71 // pred_check_branch
        %512 = sbr.rel (%p510) target = $region76
      $region75: #{transformer_encoder_forward.2} parent=71 // pred_region
        %p513 = scmp.lt.s32.totalorder %s25, 1
        %s514 = scalar_select %p513, %s25, 1
        %s515 = smul.addr %s514, 8
        %s516 = smul.addr %s515, 8
        %s517 = scalar_lea.vmem %s0, %s516
      $region76: #{transformer_encoder_forward.2} parent=71 // pred_fallthru
        _
      // Predicated region
      $region77: #{transformer_encoder_forward.2} parent=71 // pred_check
        %p518 = pneg %p71
      $region78: #{transformer_encoder_forward.2} parent=71 // pred_check_branch
        %520 = sbr.rel (%p518) target = $region80
      $region79: #{transformer_encoder_forward.2} parent=71 // pred_region
        %p521 = scmp.lt.s32.totalorder %s25, 1
        %s522 = scalar_select %p521, %s25, 1
        %s523 = smul.addr %s522, 8
        %s524 = smul.addr %s523, 8
        %s525 = scalar_lea.vmem %s1, %s524
      $region80: #{transformer_encoder_forward.2} parent=71 // pred_fallthru
        _
    $region72: #{transformer_encoder_forward.2} parent=5 // pred_fallthru
      _
    %p526 = scmp.le.s32.totalorder 1, %s25
    %p527 = scmp.lt.s32.totalorder %s25, 3
    %p528 = pnand %p526, %p527
    %p529 = pneg %p528
    // Predicated region
    $region81: #{transformer_encoder_forward.2} parent=5 // pred_check
      _
    $region82: #{transformer_encoder_forward.2} parent=5 // pred_check_branch
      %531 = sbr.rel (%p528) target = $region84
    $region83: #{transformer_encoder_forward.2} parent=5 // pred_region
      %s532 = ssub.s32 %s25, 1
      %p533 = scmp.lt.s32.totalorder %s30, 1
      %s534 = scalar_select %p533, %s30, 1
      %s535 = smul.addr %s534, 8
      %s536 = smul.addr %s535, 8
      %s537 = scalar_lea.vmem %s0, %s536
      %p538 = pneg %p51
      %p539 = pneg %p48
      %p540 = scmp.lt.s32.totalorder %s30, 1
      %s541 = scalar_select %p540, %s30, 1
      %s542 = smul.addr %s541, 8
      %s543 = smul.addr %s542, 8
      %s544 = scalar_lea.vmem %s1, %s543
      %p545 = pneg %p77
      %p546 = pneg %p74
      %p547 = pneg %p98
      %p548 = pneg %p95
      %p549 = pneg %p119
      %p550 = pneg %p116
      %p551 = pneg %p140
      %p552 = pneg %p137
      %p553 = pneg %p161
      %p554 = pneg %p158
      %p555 = pneg %p182
      %p556 = pneg %p179
      %p557 = pneg %p203
      %p558 = pneg %p200
      %p559 = pneg %p224
      %p560 = pneg %p221
      %p561 = pneg %p245
      %p562 = pneg %p242
      %p563 = pneg %p266
      %p564 = pneg %p263
      %p565 = pneg %p287
      %p566 = pneg %p284
      %p567 = pneg %p308
      %p568 = pneg %p305
      %p569 = pneg %p329
      %p570 = pneg %p326
      %p571 = pneg %p350
      %p572 = pneg %p347
      %p573 = pneg %p371
      %p574 = pneg %p368
      %p575 = pneg %p397
      %p576 = pneg %p394
      %p577 = scmp.lt.s32.totalorder %s30, 1
      %s578 = scalar_select %p577, %s30, 1
      %s579 = smul.addr %s578, 8
      %s580 = smul.addr %s579, 8
      %s581 = scalar_lea.vmem %s16, %s580
      %p582 = pneg %p423
      %p583 = pneg %p420
      %p584 = scmp.lt.s32.totalorder %s30, 1
      %s585 = scalar_select %p584, %s30, 1
      %s586 = smul.addr %s585, 8
      %s587 = smul.addr %s586, 8
      %s588 = scalar_lea.vmem %s17, %s587
      %p589 = pneg %p449
      %p590 = pneg %p446
      %p591 = scmp.lt.s32.totalorder %s30, 1
      %s592 = scalar_select %p591, %s30, 1
      %s593 = smul.addr %s592, 8
      %s594 = smul.addr %s593, 8
      %s595 = scalar_lea.vmem %s18, %s594
      %p596 = scmp.lt.s32.totalorder %s30, 1
      %s597 = scalar_select %p596, %s30, 1
      %s598 = smul.addr %s597, 8
      %s599 = smul.addr %s598, 8
      %s600 = scalar_lea.vmem %s0, %s599
      %p601 = scmp.lt.s32.totalorder %s30, 1
      %s602 = scalar_select %p601, %s30, 1
      %s603 = smul.addr %s602, 8
      %s604 = smul.addr %s603, 8
      %s605 = scalar_lea.vmem %s1, %s604
      %p606 = scmp.lt.s32.totalorder %s30, 1
      %s607 = scalar_select %p606, %s30, 1
      %s608 = smul.addr %s607, 8
      %s609 = smul.addr %s608, 8
      %s610 = scalar_lea.vmem %s16, %s609
      %p611 = scmp.lt.s32.totalorder %s30, 1
      %s612 = scalar_select %p611, %s30, 1
      %s613 = smul.addr %s612, 8
      %s614 = smul.addr %s613, 8
      %s615 = scalar_lea.vmem %s17, %s614
      %p616 = scmp.lt.s32.totalorder %s30, 1
      %s617 = scalar_select %p616, %s30, 1
      %s618 = smul.addr %s617, 8
      %s619 = smul.addr %s618, 8
      %s620 = scalar_lea.vmem %s18, %s619
      %v622 = vld [vmem:[%s600] sm:$0xff]
      %v623 = vld [vmem:[%s600 + $0x8] sm:$0xff]
      %v624 = vld [vmem:[%s600 + $0x10] sm:$0xff]
      %v625 = vld [vmem:[%s600 + $0x18] sm:$0xff]
      %v626 = vld [vmem:[%s600 + $0x20] sm:$0xff]
      %v627 = vld [vmem:[%s600 + $0x28] sm:$0xff]
      %v628 = vld [vmem:[%s600 + $0x30] sm:$0xff]
      %v629 = vld [vmem:[%s600 + $0x38] sm:$0xff]
      %v630 = vld [vmem:[%s605] sm:$0xff]
      %v631 = vld [vmem:[%s605 + $0x8] sm:$0xff]
      %v632 = vld [vmem:[%s605 + $0x10] sm:$0xff]
      %v633 = vld [vmem:[%s605 + $0x18] sm:$0xff]
      %v634 = vld [vmem:[%s605 + $0x20] sm:$0xff]
      %v635 = vld [vmem:[%s605 + $0x28] sm:$0xff]
      %v636 = vld [vmem:[%s605 + $0x30] sm:$0xff]
      %v637 = vld [vmem:[%s605 + $0x38] sm:$0xff]
      %v638 = vld [vmem:[%s2] sm:$0x1]
      %v639 = vld [vmem:[%s3] sm:$0x1]
      %vm640 = vcmask 130048
      %v641 = vsel %vm640, %v622, 0.0
      %642 = vadd.xlane.f32.xlu0 %v641
      %v643 = vpop.xlane.xlu0 %642
      %v644 = vsel %vm640, %v623, 0.0
      %645 = vadd.xlane.f32.xlu0 %v644
      %v646 = vpop.xlane.xlu0 %645
      %v647 = vsel %vm640, %v624, 0.0
      %648 = vadd.xlane.f32.xlu0 %v647
      %v649 = vpop.xlane.xlu0 %648
      %v650 = vsel %vm640, %v625, 0.0
      %651 = vadd.xlane.f32.xlu0 %v650
      %v652 = vpop.xlane.xlu0 %651
      %v653 = vsel %vm640, %v626, 0.0
      %654 = vadd.xlane.f32.xlu0 %v653
      %v655 = vpop.xlane.xlu0 %654
      %v656 = vsel %vm640, %v627, 0.0
      %657 = vadd.xlane.f32.xlu0 %v656
      %v658 = vpop.xlane.xlu0 %657
      %v659 = vsel %vm640, %v628, 0.0
      %660 = vadd.xlane.f32.xlu0 %v659
      %v661 = vpop.xlane.xlu0 %660
      %v662 = vsel %vm640, %v629, 0.0
      %663 = vadd.xlane.f32.xlu0 %v662
      %v664 = vpop.xlane.xlu0 %663
      %v665 = vrcp.pop 16.0
      %v666 = vmul.f32 %v643, %v665
      %v667 = vmul.f32 %v646, %v665
      %v668 = vmul.f32 %v649, %v665
      %v669 = vmul.f32 %v652, %v665
      %v670 = vmul.f32 %v655, %v665
      %v671 = vmul.f32 %v658, %v665
      %v672 = vmul.f32 %v661, %v665
      %v673 = vmul.f32 %v664, %v665
      %v674 = vsub.f32 %v622, %v666
      %v675 = vsub.f32 %v623, %v667
      %v676 = vsub.f32 %v624, %v668
      %v677 = vsub.f32 %v625, %v669
      %v678 = vsub.f32 %v626, %v670
      %v679 = vsub.f32 %v627, %v671
      %v680 = vsub.f32 %v628, %v672
      %v681 = vsub.f32 %v629, %v673
      %v682 = vmul.f32 %v674, %v674
      %v683 = vmul.f32 %v675, %v675
      %v684 = vmul.f32 %v676, %v676
      %v685 = vmul.f32 %v677, %v677
      %v686 = vmul.f32 %v678, %v678
      %v687 = vmul.f32 %v679, %v679
      %v688 = vmul.f32 %v680, %v680
      %v689 = vmul.f32 %v681, %v681
      %v690 = vsel %vm640, %v682, 0.0
      %691 = vadd.xlane.f32.xlu0 %v690
      %v692 = vpop.xlane.xlu0 %691
      %v693 = vsel %vm640, %v683, 0.0
      %694 = vadd.xlane.f32.xlu0 %v693
      %v695 = vpop.xlane.xlu0 %694
      %v696 = vsel %vm640, %v684, 0.0
      %697 = vadd.xlane.f32.xlu0 %v696
      %v698 = vpop.xlane.xlu0 %697
      %v699 = vsel %vm640, %v685, 0.0
      %700 = vadd.xlane.f32.xlu0 %v699
      %v701 = vpop.xlane.xlu0 %700
      %v702 = vsel %vm640, %v686, 0.0
      %703 = vadd.xlane.f32.xlu0 %v702
      %v704 = vpop.xlane.xlu0 %703
      %v705 = vsel %vm640, %v687, 0.0
      %706 = vadd.xlane.f32.xlu0 %v705
      %v707 = vpop.xlane.xlu0 %706
      %v708 = vsel %vm640, %v688, 0.0
      %709 = vadd.xlane.f32.xlu0 %v708
      %v710 = vpop.xlane.xlu0 %709
      %v711 = vsel %vm640, %v689, 0.0
      %712 = vadd.xlane.f32.xlu0 %v711
      %v713 = vpop.xlane.xlu0 %712
      %v714 = vmul.f32 %v692, %v665
      %v715 = vmul.f32 %v695, %v665
      %v716 = vmul.f32 %v698, %v665
      %v717 = vmul.f32 %v701, %v665
      %v718 = vmul.f32 %v704, %v665
      %v719 = vmul.f32 %v707, %v665
      %v720 = vmul.f32 %v710, %v665
      %v721 = vmul.f32 %v713, %v665
      %v722 = vadd.f32 %v714, 1e-05
      %v723 = vadd.f32 %v715, 1e-05
      %v724 = vadd.f32 %v716, 1e-05
      %v725 = vadd.f32 %v717, 1e-05
      %v726 = vadd.f32 %v718, 1e-05
      %v727 = vadd.f32 %v719, 1e-05
      %v728 = vadd.f32 %v720, 1e-05
      %v729 = vadd.f32 %v721, 1e-05
      %v730 = vrsqrt.pop %v722
      %v731 = vrsqrt.pop %v723
      %v732 = vrsqrt.pop %v724
      %v733 = vrsqrt.pop %v725
      %v734 = vrsqrt.pop %v726
      %v735 = vrsqrt.pop %v727
      %v736 = vrsqrt.pop %v728
      %v737 = vrsqrt.pop %v729
      %v738 = vmul.f32 %v674, %v730
      %v739 = vmul.f32 %v675, %v731
      %v740 = vmul.f32 %v676, %v732
      %v741 = vmul.f32 %v677, %v733
      %v742 = vmul.f32 %v678, %v734
      %v743 = vmul.f32 %v679, %v735
      %v744 = vmul.f32 %v680, %v736
      %v745 = vmul.f32 %v681, %v737
      %v747 = vlaneseq
      %v748 = vshrl.u32 %v747, 7
      %v749 = vsub.s32 0, %v748
      %v750 = vrot.slane %v638, %v749
      %v752 = vmul.f32 %v738, %v750
      %v753 = vmul.f32 %v739, %v750
      %v754 = vmul.f32 %v740, %v750
      %v755 = vmul.f32 %v741, %v750
      %v756 = vmul.f32 %v742, %v750
      %v757 = vmul.f32 %v743, %v750
      %v758 = vmul.f32 %v744, %v750
      %v759 = vmul.f32 %v745, %v750
      %v761 = vlaneseq
      %v762 = vshrl.u32 %v761, 7
      %v763 = vsub.s32 0, %v762
      %v764 = vrot.slane %v639, %v763
      %v766 = vadd.f32 %v752, %v764
      %v767 = vadd.f32 %v753, %v764
      %v768 = vadd.f32 %v754, %v764
      %v769 = vadd.f32 %v755, %v764
      %v770 = vadd.f32 %v756, %v764
      %v771 = vadd.f32 %v757, %v764
      %v772 = vadd.f32 %v758, %v764
      %v773 = vadd.f32 %v759, %v764
      %v774 = vld [vmem:[%s4] sm:$0x1]
      %v775 = vld [vmem:[%s5] sm:$0x1]
      %v776 = vsel %vm640, %v630, 0.0
      %777 = vadd.xlane.f32.xlu0 %v776
      %v778 = vpop.xlane.xlu0 %777
      %v779 = vsel %vm640, %v631, 0.0
      %780 = vadd.xlane.f32.xlu0 %v779
      %v781 = vpop.xlane.xlu0 %780
      %v782 = vsel %vm640, %v632, 0.0
      %783 = vadd.xlane.f32.xlu0 %v782
      %v784 = vpop.xlane.xlu0 %783
      %v785 = vsel %vm640, %v633, 0.0
      %786 = vadd.xlane.f32.xlu0 %v785
      %v787 = vpop.xlane.xlu0 %786
      %v788 = vsel %vm640, %v634, 0.0
      %789 = vadd.xlane.f32.xlu0 %v788
      %v790 = vpop.xlane.xlu0 %789
      %v791 = vsel %vm640, %v635, 0.0
      %792 = vadd.xlane.f32.xlu0 %v791
      %v793 = vpop.xlane.xlu0 %792
      %v794 = vsel %vm640, %v636, 0.0
      %795 = vadd.xlane.f32.xlu0 %v794
      %v796 = vpop.xlane.xlu0 %795
      %v797 = vsel %vm640, %v637, 0.0
      %798 = vadd.xlane.f32.xlu0 %v797
      %v799 = vpop.xlane.xlu0 %798
      %v800 = vmul.f32 %v778, %v665
      %v801 = vmul.f32 %v781, %v665
      %v802 = vmul.f32 %v784, %v665
      %v803 = vmul.f32 %v787, %v665
      %v804 = vmul.f32 %v790, %v665
      %v805 = vmul.f32 %v793, %v665
      %v806 = vmul.f32 %v796, %v665
      %v807 = vmul.f32 %v799, %v665
      %v808 = vsub.f32 %v630, %v800
      %v809 = vsub.f32 %v631, %v801
      %v810 = vsub.f32 %v632, %v802
      %v811 = vsub.f32 %v633, %v803
      %v812 = vsub.f32 %v634, %v804
      %v813 = vsub.f32 %v635, %v805
      %v814 = vsub.f32 %v636, %v806
      %v815 = vsub.f32 %v637, %v807
      %v816 = vmul.f32 %v808, %v808
      %v817 = vmul.f32 %v809, %v809
      %v818 = vmul.f32 %v810, %v810
      %v819 = vmul.f32 %v811, %v811
      %v820 = vmul.f32 %v812, %v812
      %v821 = vmul.f32 %v813, %v813
      %v822 = vmul.f32 %v814, %v814
      %v823 = vmul.f32 %v815, %v815
      %v824 = vsel %vm640, %v816, 0.0
      %825 = vadd.xlane.f32.xlu0 %v824
      %v826 = vpop.xlane.xlu0 %825
      %v827 = vsel %vm640, %v817, 0.0
      %828 = vadd.xlane.f32.xlu0 %v827
      %v829 = vpop.xlane.xlu0 %828
      %v830 = vsel %vm640, %v818, 0.0
      %831 = vadd.xlane.f32.xlu0 %v830
      %v832 = vpop.xlane.xlu0 %831
      %v833 = vsel %vm640, %v819, 0.0
      %834 = vadd.xlane.f32.xlu0 %v833
      %v835 = vpop.xlane.xlu0 %834
      %v836 = vsel %vm640, %v820, 0.0
      %837 = vadd.xlane.f32.xlu0 %v836
      %v838 = vpop.xlane.xlu0 %837
      %v839 = vsel %vm640, %v821, 0.0
      %840 = vadd.xlane.f32.xlu0 %v839
      %v841 = vpop.xlane.xlu0 %840
      %v842 = vsel %vm640, %v822, 0.0
      %843 = vadd.xlane.f32.xlu0 %v842
      %v844 = vpop.xlane.xlu0 %843
      %v845 = vsel %vm640, %v823, 0.0
      %846 = vadd.xlane.f32.xlu0 %v845
      %v847 = vpop.xlane.xlu0 %846
      %v848 = vmul.f32 %v826, %v665
      %v849 = vmul.f32 %v829, %v665
      %v850 = vmul.f32 %v832, %v665
      %v851 = vmul.f32 %v835, %v665
      %v852 = vmul.f32 %v838, %v665
      %v853 = vmul.f32 %v841, %v665
      %v854 = vmul.f32 %v844, %v665
      %v855 = vmul.f32 %v847, %v665
      %v856 = vadd.f32 %v848, 1e-05
      %v857 = vadd.f32 %v849, 1e-05
      %v858 = vadd.f32 %v850, 1e-05
      %v859 = vadd.f32 %v851, 1e-05
      %v860 = vadd.f32 %v852, 1e-05
      %v861 = vadd.f32 %v853, 1e-05
      %v862 = vadd.f32 %v854, 1e-05
      %v863 = vadd.f32 %v855, 1e-05
      %v864 = vrsqrt.pop %v856
      %v865 = vrsqrt.pop %v857
      %v866 = vrsqrt.pop %v858
      %v867 = vrsqrt.pop %v859
      %v868 = vrsqrt.pop %v860
      %v869 = vrsqrt.pop %v861
      %v870 = vrsqrt.pop %v862
      %v871 = vrsqrt.pop %v863
      %v872 = vmul.f32 %v808, %v864
      %v873 = vmul.f32 %v809, %v865
      %v874 = vmul.f32 %v810, %v866
      %v875 = vmul.f32 %v811, %v867
      %v876 = vmul.f32 %v812, %v868
      %v877 = vmul.f32 %v813, %v869
      %v878 = vmul.f32 %v814, %v870
      %v879 = vmul.f32 %v815, %v871
      %v881 = vlaneseq
      %v882 = vshrl.u32 %v881, 7
      %v883 = vsub.s32 0, %v882
      %v884 = vrot.slane %v774, %v883
      %v886 = vmul.f32 %v872, %v884
      %v887 = vmul.f32 %v873, %v884
      %v888 = vmul.f32 %v874, %v884
      %v889 = vmul.f32 %v875, %v884
      %v890 = vmul.f32 %v876, %v884
      %v891 = vmul.f32 %v877, %v884
      %v892 = vmul.f32 %v878, %v884
      %v893 = vmul.f32 %v879, %v884
      %v895 = vlaneseq
      %v896 = vshrl.u32 %v895, 7
      %v897 = vsub.s32 0, %v896
      %v898 = vrot.slane %v775, %v897
      %v900 = vadd.f32 %v886, %v898
      %v901 = vadd.f32 %v887, %v898
      %v902 = vadd.f32 %v888, %v898
      %v903 = vadd.f32 %v889, %v898
      %v904 = vadd.f32 %v890, %v898
      %v905 = vadd.f32 %v891, %v898
      %v906 = vadd.f32 %v892, %v898
      %v907 = vadd.f32 %v893, %v898
      %908 = vst.msk [vmem:[%s615] sm:$0xff] %vm640, %v900
      %909 = vst.msk [vmem:[%s615 + $0x8] sm:$0xff] %vm640, %v901
      %910 = vst.msk [vmem:[%s615 + $0x10] sm:$0xff] %vm640, %v902
      %911 = vst.msk [vmem:[%s615 + $0x18] sm:$0xff] %vm640, %v903
      %912 = vst.msk [vmem:[%s615 + $0x20] sm:$0xff] %vm640, %v904
      %913 = vst.msk [vmem:[%s615 + $0x28] sm:$0xff] %vm640, %v905
      %914 = vst.msk [vmem:[%s615 + $0x30] sm:$0xff] %vm640, %v906
      %915 = vst.msk [vmem:[%s615 + $0x38] sm:$0xff] %vm640, %v907
      %v916 = vld [vmem:[%s6] sm:$0xf]
      %v917 = vld [vmem:[%s6 + $0x4] sm:$0xf]
      %v918 = vpack.c.bf16 %v767, %v766
      %v919 = vpack.c.bf16 %v769, %v768
      %v920 = vpack.c.bf16 %v771, %v770
      %v921 = vpack.c.bf16 %v773, %v772
      %v922 = vld [vmem:[%s7] sm:$0x1]
      %v924 = vlaneseq
      %v925 = vshrl.u32 %v924, 7
      %v926 = vsub.s32 0, %v925
      %v927 = vrot.slane %v922, %v926
      %v931 = vunpack.c.l.b16 %v916
      %v932 = vunpack.c.l.b16 %v917
      %v933 = vpack.c.b16 %v932, %v931
      %v936 = vsel %vm640, %v918, 0
      %v939 = vsel %vm640, %v919, 0
      %v942 = vsel %vm640, %v920, 0
      %v945 = vsel %vm640, %v921, 0
      %947 = vmatprep.subr.bf16.mxu0 0
      %948 = vmatpush1.bf16.msra.mxu0 0
      %949 = vmatprep.subr.bf16.mxu0 0
      %950 = vmatpush1.bf16.msra.mxu0 0
      %951 = vmatprep.subr.bf16.mxu0 0
      %952 = vmatpush1.bf16.msra.mxu0 0
      %953 = vmatprep.subr.bf16.mxu0 0
      %954 = vmatpush1.bf16.msra.mxu0 0
      %955 = vmatprep.subr.bf16.mxu0 0
      %956 = vmatpush1.bf16.msra.mxu0 0
      %957 = vmatprep.subr.bf16.mxu0 0
      %958 = vmatpush1.bf16.msra.mxu0 0
      %959 = vmatprep.subr.bf16.mxu0 0
      %960 = vmatpush1.bf16.msra.mxu0 0
      %961 = vmatprep.subr.bf16.mxu0 0
      %962 = vmatpush1.bf16.msra.mxu0 %v933
      %963 = vmatprep.subr.bf16.mxu0 0
      %964 = vmatpush2.bf16.msra.mxu0 0
      %965 = vmatprep.subr.bf16.mxu0 0
      %966 = vmatpush2.bf16.msra.mxu0 0
      %967 = vmatprep.subr.bf16.mxu0 0
      %968 = vmatpush2.bf16.msra.mxu0 0
      %969 = vmatprep.subr.bf16.mxu0 0
      %970 = vmatpush2.bf16.msra.mxu0 0
      %971 = vmatprep.subr.bf16.mxu0 0
      %972 = vmatpush2.bf16.msra.mxu0 0
      %973 = vmatprep.subr.bf16.mxu0 0
      %974 = vmatpush2.bf16.msra.mxu0 0
      %975 = vmatprep.subr.bf16.mxu0 0
      %976 = vmatpush2.bf16.msra.mxu0 0
      %977 = vmatprep.subr.bf16.mxu0 0
      %978 = vmatpush2.bf16.msra.mxu0 0
      %979 = vmatprep.mubr.bf16.mxu0 0
      %980 = vmatmul.mubr.bf16.gmra.mxu0 %v936
      %v981 = vpop.f32.mrf.mxu0
      %v982 = vadd.f32 %v927, %v981
      %v983 = vpop.f32.mrf.mxu0
      %v984 = vpop.f32.mrf.mxu0
      %v985 = vadd.f32 %v927, %v984
      %v986 = vpop.f32.mrf.mxu0
      %987 = vmatprep.mubr.bf16.mxu0 0
      %988 = vmatmul.mubr.bf16.gmra.mxu0 %v939
      %v989 = vpop.f32.mrf.mxu0
      %v990 = vadd.f32 %v927, %v989
      %v991 = vpop.f32.mrf.mxu0
      %v992 = vpop.f32.mrf.mxu0
      %v993 = vadd.f32 %v927, %v992
      %v994 = vpop.f32.mrf.mxu0
      %995 = vmatprep.mubr.bf16.mxu0 0
      %996 = vmatmul.mubr.bf16.gmra.mxu0 %v942
      %v997 = vpop.f32.mrf.mxu0
      %v998 = vadd.f32 %v927, %v997
      %v999 = vpop.f32.mrf.mxu0
      %v1000 = vpop.f32.mrf.mxu0
      %v1001 = vadd.f32 %v927, %v1000
      %v1002 = vpop.f32.mrf.mxu0
      %1003 = vmatprep.mubr.bf16.mxu0 0
      %1004 = vmatmul.mubr.bf16.gmra.mxu0 %v945
      %v1005 = vpop.f32.mrf.mxu0
      %v1006 = vadd.f32 %v927, %v1005
      %v1007 = vpop.f32.mrf.mxu0
      %v1008 = vpop.f32.mrf.mxu0
      %v1009 = vadd.f32 %v927, %v1008
      %v1010 = vpop.f32.mrf.mxu0
      %1011 = vdwg.mxu0
      %1012 = vst.msk [vmem:[%s610] sm:$0xff] %vm640, %v982
      %1013 = vst.msk [vmem:[%s610 + $0x8] sm:$0xff] %vm640, %v985
      %1014 = vst.msk [vmem:[%s610 + $0x10] sm:$0xff] %vm640, %v990
      %1015 = vst.msk [vmem:[%s610 + $0x18] sm:$0xff] %vm640, %v993
      %1016 = vst.msk [vmem:[%s610 + $0x20] sm:$0xff] %vm640, %v998
      %1017 = vst.msk [vmem:[%s610 + $0x28] sm:$0xff] %vm640, %v1001
      %1018 = vst.msk [vmem:[%s610 + $0x30] sm:$0xff] %vm640, %v1006
      %1019 = vst.msk [vmem:[%s610 + $0x38] sm:$0xff] %vm640, %v1009
      %v1020 = vld [vmem:[%s8] sm:$0xff]
      %v1021 = vld [vmem:[%s8 + $0x8] sm:$0x1]
      %v1022 = vrot.slane %v982, 7
      %v1023 = vrot.slane %v985, 7
      %v1024 = vrot.slane %v990, 7
      %v1025 = vrot.slane %v993, 7
      %v1026 = vrot.slane %v998, 7
      %v1027 = vrot.slane %v1001, 7
      %v1028 = vrot.slane %v1006, 7
      %v1029 = vrot.slane %v1009, 7
      %v1030 = vlaneseq
      %v1031 = vshrl.u32 %v1030, 7
      %vm1032 = vcmp.lt.s32.totalorder %v1031, 1
      %v1033 = vsel %vm1032, %v1028, %v1029
      %v1034 = vsel %vm1032, %v1027, %v1028
      %v1035 = vsel %vm1032, %v1026, %v1027
      %v1036 = vsel %vm1032, %v1025, %v1026
      %v1037 = vsel %vm1032, %v1024, %v1025
      %v1038 = vsel %vm1032, %v1023, %v1024
      %v1039 = vsel %vm1032, %v1022, %v1023
      %v1040 = vsel %vm1032, %v1029, %v1022
      %v1041 = vld [vmem:[%s15] sm:$0xff]
      %v1042 = vld [vmem:[%s15 + $0x8] sm:$0xff]
      %v1043 = vld [vmem:[%s15 + $0x10] sm:$0xff]
      %v1044 = vld [vmem:[%s15 + $0x18] sm:$0xff]
      %v1045 = vld [vmem:[%s15 + $0x20] sm:$0xff]
      %v1046 = vld [vmem:[%s15 + $0x28] sm:$0xff]
      %v1047 = vld [vmem:[%s15 + $0x30] sm:$0xff]
      %v1048 = vld [vmem:[%s15 + $0x38] sm:$0xff]
      %1050 = vset.pattern.permute.xlu0 0
      %1051 = vperm.xlu0 %1050, %v1041
      %v1052 = vpop.permute.xlu0 %1051
      %1055 = vset.pattern.permute.xlu0 0
      %1056 = vperm.xlu0 %1055, %v1042
      %v1057 = vpop.permute.xlu0 %1056
      %1060 = vset.pattern.permute.xlu0 0
      %1061 = vperm.xlu0 %1060, %v1043
      %v1062 = vpop.permute.xlu0 %1061
      %1065 = vset.pattern.permute.xlu0 0
      %1066 = vperm.xlu0 %1065, %v1044
      %v1067 = vpop.permute.xlu0 %1066
      %1070 = vset.pattern.permute.xlu0 0
      %1071 = vperm.xlu0 %1070, %v1045
      %v1072 = vpop.permute.xlu0 %1071
      %1075 = vset.pattern.permute.xlu0 0
      %1076 = vperm.xlu0 %1075, %v1046
      %v1077 = vpop.permute.xlu0 %1076
      %1080 = vset.pattern.permute.xlu0 0
      %1081 = vperm.xlu0 %1080, %v1047
      %v1082 = vpop.permute.xlu0 %1081
      %1085 = vset.pattern.permute.xlu0 0
      %1086 = vperm.xlu0 %1085, %v1048
      %v1087 = vpop.permute.xlu0 %1086
      %v1089 = vmul.f32 %v1033, %v1052
      %v1090 = vmul.f32 %v1040, %v1057
      %v1091 = vmul.f32 %v1039, %v1062
      %v1092 = vmul.f32 %v1038, %v1067
      %v1093 = vmul.f32 %v1037, %v1072
      %v1094 = vmul.f32 %v1036, %v1077
      %v1095 = vmul.f32 %v1035, %v1082
      %v1096 = vmul.f32 %v1034, %v1087
      %v1097 = vlaneseq
      %v1098 = vshrl.u32 %v1097, 7
      %v1099 = vsub.s32 0, %v1098
      %v1100 = vrot.slane %v1020, %v1099
      %v1101 = vmul.f32 %v1089, %v1100
      %v1102 = vmul.f32 %v1090, %v1100
      %v1103 = vmul.f32 %v1091, %v1100
      %v1104 = vmul.f32 %v1092, %v1100
      %v1105 = vmul.f32 %v1093, %v1100
      %v1106 = vmul.f32 %v1094, %v1100
      %v1107 = vmul.f32 %v1095, %v1100
      %v1108 = vmul.f32 %v1096, %v1100
      %v1109 = vadd.f32 %v1101, 0.0
      %v1110 = vadd.f32 %v1102, 0.0
      %v1111 = vadd.f32 %v1103, 0.0
      %v1112 = vadd.f32 %v1104, 0.0
      %v1113 = vadd.f32 %v1105, 0.0
      %v1114 = vadd.f32 %v1106, 0.0
      %v1115 = vadd.f32 %v1107, 0.0
      %v1116 = vadd.f32 %v1108, 0.0
      %s1117 = scalar_lea.vmem %s15, 64
      %v1118 = vld [vmem:[%s1117] sm:$0xff]
      %v1119 = vld [vmem:[%s1117 + $0x8] sm:$0xff]
      %v1120 = vld [vmem:[%s1117 + $0x10] sm:$0xff]
      %v1121 = vld [vmem:[%s1117 + $0x18] sm:$0xff]
      %v1122 = vld [vmem:[%s1117 + $0x20] sm:$0xff]
      %v1123 = vld [vmem:[%s1117 + $0x28] sm:$0xff]
      %v1124 = vld [vmem:[%s1117 + $0x30] sm:$0xff]
      %v1125 = vld [vmem:[%s1117 + $0x38] sm:$0xff]
      %1127 = vset.pattern.permute.xlu0 0
      %1128 = vperm.xlu0 %1127, %v1118
      %v1129 = vpop.permute.xlu0 %1128
      %1132 = vset.pattern.permute.xlu0 0
      %1133 = vperm.xlu0 %1132, %v1119
      %v1134 = vpop.permute.xlu0 %1133
      %1137 = vset.pattern.permute.xlu0 0
      %1138 = vperm.xlu0 %1137, %v1120
      %v1139 = vpop.permute.xlu0 %1138
      %1142 = vset.pattern.permute.xlu0 0
      %1143 = vperm.xlu0 %1142, %v1121
      %v1144 = vpop.permute.xlu0 %1143
      %1147 = vset.pattern.permute.xlu0 0
      %1148 = vperm.xlu0 %1147, %v1122
      %v1149 = vpop.permute.xlu0 %1148
      %1152 = vset.pattern.permute.xlu0 0
      %1153 = vperm.xlu0 %1152, %v1123
      %v1154 = vpop.permute.xlu0 %1153
      %1157 = vset.pattern.permute.xlu0 0
      %1158 = vperm.xlu0 %1157, %v1124
      %v1159 = vpop.permute.xlu0 %1158
      %1162 = vset.pattern.permute.xlu0 0
      %1163 = vperm.xlu0 %1162, %v1125
      %v1164 = vpop.permute.xlu0 %1163
      %v1166 = vmul.f32 %v1009, %v1129
      %v1167 = vmul.f32 %v982, %v1134
      %v1168 = vmul.f32 %v985, %v1139
      %v1169 = vmul.f32 %v990, %v1144
      %v1170 = vmul.f32 %v993, %v1149
      %v1171 = vmul.f32 %v998, %v1154
      %v1172 = vmul.f32 %v1001, %v1159
      %v1173 = vmul.f32 %v1006, %v1164
      %v1174 = vlaneseq
      %v1175 = vshrl.u32 %v1174, 7
      %v1176 = vsub.s32 1, %v1175
      %v1177 = vrot.slane %v1020, %v1176
      %v1178 = vmul.f32 %v1166, %v1177
      %v1179 = vmul.f32 %v1167, %v1177
      %v1180 = vmul.f32 %v1168, %v1177
      %v1181 = vmul.f32 %v1169, %v1177
      %v1182 = vmul.f32 %v1170, %v1177
      %v1183 = vmul.f32 %v1171, %v1177
      %v1184 = vmul.f32 %v1172, %v1177
      %v1185 = vmul.f32 %v1173, %v1177
      %v1186 = vadd.f32 %v1109, %v1178
      %v1187 = vadd.f32 %v1110, %v1179
      %v1188 = vadd.f32 %v1111, %v1180
      %v1189 = vadd.f32 %v1112, %v1181
      %v1190 = vadd.f32 %v1113, %v1182
      %v1191 = vadd.f32 %v1114, %v1183
      %v1192 = vadd.f32 %v1115, %v1184
      %v1193 = vadd.f32 %v1116, %v1185
      %v1194 = vrot.slane %v982, 1
      %v1195 = vrot.slane %v985, 1
      %v1196 = vrot.slane %v990, 1
      %v1197 = vrot.slane %v993, 1
      %v1198 = vrot.slane %v998, 1
      %v1199 = vrot.slane %v1001, 1
      %v1200 = vrot.slane %v1006, 1
      %v1201 = vrot.slane %v1009, 1
      %vm1202 = vcmp.lt.s32.totalorder %v1031, 7
      %v1203 = vsel %vm1202, %v1200, %v1201
      %v1204 = vsel %vm1202, %v1199, %v1200
      %v1205 = vsel %vm1202, %v1198, %v1199
      %v1206 = vsel %vm1202, %v1197, %v1198
      %v1207 = vsel %vm1202, %v1196, %v1197
      %v1208 = vsel %vm1202, %v1195, %v1196
      %v1209 = vsel %vm1202, %v1194, %v1195
      %v1210 = vsel %vm1202, %v1201, %v1194
      %s1211 = scalar_lea.vmem %s15, 128
      %v1212 = vld [vmem:[%s1211] sm:$0xff]
      %v1213 = vld [vmem:[%s1211 + $0x8] sm:$0xff]
      %v1214 = vld [vmem:[%s1211 + $0x10] sm:$0xff]
      %v1215 = vld [vmem:[%s1211 + $0x18] sm:$0xff]
      %v1216 = vld [vmem:[%s1211 + $0x20] sm:$0xff]
      %v1217 = vld [vmem:[%s1211 + $0x28] sm:$0xff]
      %v1218 = vld [vmem:[%s1211 + $0x30] sm:$0xff]
      %v1219 = vld [vmem:[%s1211 + $0x38] sm:$0xff]
      %1221 = vset.pattern.permute.xlu0 0
      %1222 = vperm.xlu0 %1221, %v1212
      %v1223 = vpop.permute.xlu0 %1222
      %1226 = vset.pattern.permute.xlu0 0
      %1227 = vperm.xlu0 %1226, %v1213
      %v1228 = vpop.permute.xlu0 %1227
      %1231 = vset.pattern.permute.xlu0 0
      %1232 = vperm.xlu0 %1231, %v1214
      %v1233 = vpop.permute.xlu0 %1232
      %1236 = vset.pattern.permute.xlu0 0
      %1237 = vperm.xlu0 %1236, %v1215
      %v1238 = vpop.permute.xlu0 %1237
      %1241 = vset.pattern.permute.xlu0 0
      %1242 = vperm.xlu0 %1241, %v1216
      %v1243 = vpop.permute.xlu0 %1242
      %1246 = vset.pattern.permute.xlu0 0
      %1247 = vperm.xlu0 %1246, %v1217
      %v1248 = vpop.permute.xlu0 %1247
      %1251 = vset.pattern.permute.xlu0 0
      %1252 = vperm.xlu0 %1251, %v1218
      %v1253 = vpop.permute.xlu0 %1252
      %1256 = vset.pattern.permute.xlu0 0
      %1257 = vperm.xlu0 %1256, %v1219
      %v1258 = vpop.permute.xlu0 %1257
      %v1260 = vmul.f32 %v1210, %v1223
      %v1261 = vmul.f32 %v1209, %v1228
      %v1262 = vmul.f32 %v1208, %v1233
      %v1263 = vmul.f32 %v1207, %v1238
      %v1264 = vmul.f32 %v1206, %v1243
      %v1265 = vmul.f32 %v1205, %v1248
      %v1266 = vmul.f32 %v1204, %v1253
      %v1267 = vmul.f32 %v1203, %v1258
      %v1268 = vlaneseq
      %v1269 = vshrl.u32 %v1268, 7
      %v1270 = vsub.s32 2, %v1269
      %v1271 = vrot.slane %v1020, %v1270
      %v1272 = vmul.f32 %v1260, %v1271
      %v1273 = vmul.f32 %v1261, %v1271
      %v1274 = vmul.f32 %v1262, %v1271
      %v1275 = vmul.f32 %v1263, %v1271
      %v1276 = vmul.f32 %v1264, %v1271
      %v1277 = vmul.f32 %v1265, %v1271
      %v1278 = vmul.f32 %v1266, %v1271
      %v1279 = vmul.f32 %v1267, %v1271
      %v1280 = vadd.f32 %v1186, %v1272
      %v1281 = vadd.f32 %v1187, %v1273
      %v1282 = vadd.f32 %v1188, %v1274
      %v1283 = vadd.f32 %v1189, %v1275
      %v1284 = vadd.f32 %v1190, %v1276
      %v1285 = vadd.f32 %v1191, %v1277
      %v1286 = vadd.f32 %v1192, %v1278
      %v1287 = vadd.f32 %v1193, %v1279
      %s1288 = scalar_lea.vmem %s15, 192
      %v1289 = vld [vmem:[%s1288] sm:$0xff]
      %v1290 = vld [vmem:[%s1288 + $0x8] sm:$0xff]
      %v1291 = vld [vmem:[%s1288 + $0x10] sm:$0xff]
      %v1292 = vld [vmem:[%s1288 + $0x18] sm:$0xff]
      %v1293 = vld [vmem:[%s1288 + $0x20] sm:$0xff]
      %v1294 = vld [vmem:[%s1288 + $0x28] sm:$0xff]
      %v1295 = vld [vmem:[%s1288 + $0x30] sm:$0xff]
      %v1296 = vld [vmem:[%s1288 + $0x38] sm:$0xff]
      %1298 = vset.pattern.permute.xlu0 0
      %1299 = vperm.xlu0 %1298, %v1289
      %v1300 = vpop.permute.xlu0 %1299
      %1303 = vset.pattern.permute.xlu0 0
      %1304 = vperm.xlu0 %1303, %v1290
      %v1305 = vpop.permute.xlu0 %1304
      %1308 = vset.pattern.permute.xlu0 0
      %1309 = vperm.xlu0 %1308, %v1291
      %v1310 = vpop.permute.xlu0 %1309
      %1313 = vset.pattern.permute.xlu0 0
      %1314 = vperm.xlu0 %1313, %v1292
      %v1315 = vpop.permute.xlu0 %1314
      %1318 = vset.pattern.permute.xlu0 0
      %1319 = vperm.xlu0 %1318, %v1293
      %v1320 = vpop.permute.xlu0 %1319
      %1323 = vset.pattern.permute.xlu0 0
      %1324 = vperm.xlu0 %1323, %v1294
      %v1325 = vpop.permute.xlu0 %1324
      %1328 = vset.pattern.permute.xlu0 0
      %1329 = vperm.xlu0 %1328, %v1295
      %v1330 = vpop.permute.xlu0 %1329
      %1333 = vset.pattern.permute.xlu0 0
      %1334 = vperm.xlu0 %1333, %v1296
      %v1335 = vpop.permute.xlu0 %1334
      %v1337 = vmul.f32 %v1040, %v1300
      %v1338 = vmul.f32 %v1039, %v1305
      %v1339 = vmul.f32 %v1038, %v1310
      %v1340 = vmul.f32 %v1037, %v1315
      %v1341 = vmul.f32 %v1036, %v1320
      %v1342 = vmul.f32 %v1035, %v1325
      %v1343 = vmul.f32 %v1034, %v1330
      %v1344 = vmul.f32 %v1033, %v1335
      %v1345 = vlaneseq
      %v1346 = vshrl.u32 %v1345, 7
      %v1347 = vsub.s32 3, %v1346
      %v1348 = vrot.slane %v1020, %v1347
      %v1349 = vmul.f32 %v1337, %v1348
      %v1350 = vmul.f32 %v1338, %v1348
      %v1351 = vmul.f32 %v1339, %v1348
      %v1352 = vmul.f32 %v1340, %v1348
      %v1353 = vmul.f32 %v1341, %v1348
      %v1354 = vmul.f32 %v1342, %v1348
      %v1355 = vmul.f32 %v1343, %v1348
      %v1356 = vmul.f32 %v1344, %v1348
      %v1357 = vadd.f32 %v1280, %v1349
      %v1358 = vadd.f32 %v1281, %v1350
      %v1359 = vadd.f32 %v1282, %v1351
      %v1360 = vadd.f32 %v1283, %v1352
      %v1361 = vadd.f32 %v1284, %v1353
      %v1362 = vadd.f32 %v1285, %v1354
      %v1363 = vadd.f32 %v1286, %v1355
      %v1364 = vadd.f32 %v1287, %v1356
      %s1365 = scalar_lea.vmem %s15, 256
      %v1366 = vld [vmem:[%s1365] sm:$0xff]
      %v1367 = vld [vmem:[%s1365 + $0x8] sm:$0xff]
      %v1368 = vld [vmem:[%s1365 + $0x10] sm:$0xff]
      %v1369 = vld [vmem:[%s1365 + $0x18] sm:$0xff]
      %v1370 = vld [vmem:[%s1365 + $0x20] sm:$0xff]
      %v1371 = vld [vmem:[%s1365 + $0x28] sm:$0xff]
      %v1372 = vld [vmem:[%s1365 + $0x30] sm:$0xff]
      %v1373 = vld [vmem:[%s1365 + $0x38] sm:$0xff]
      %1375 = vset.pattern.permute.xlu0 0
      %1376 = vperm.xlu0 %1375, %v1366
      %v1377 = vpop.permute.xlu0 %1376
      %1380 = vset.pattern.permute.xlu0 0
      %1381 = vperm.xlu0 %1380, %v1367
      %v1382 = vpop.permute.xlu0 %1381
      %1385 = vset.pattern.permute.xlu0 0
      %1386 = vperm.xlu0 %1385, %v1368
      %v1387 = vpop.permute.xlu0 %1386
      %1390 = vset.pattern.permute.xlu0 0
      %1391 = vperm.xlu0 %1390, %v1369
      %v1392 = vpop.permute.xlu0 %1391
      %1395 = vset.pattern.permute.xlu0 0
      %1396 = vperm.xlu0 %1395, %v1370
      %v1397 = vpop.permute.xlu0 %1396
      %1400 = vset.pattern.permute.xlu0 0
      %1401 = vperm.xlu0 %1400, %v1371
      %v1402 = vpop.permute.xlu0 %1401
      %1405 = vset.pattern.permute.xlu0 0
      %1406 = vperm.xlu0 %1405, %v1372
      %v1407 = vpop.permute.xlu0 %1406
      %1410 = vset.pattern.permute.xlu0 0
      %1411 = vperm.xlu0 %1410, %v1373
      %v1412 = vpop.permute.xlu0 %1411
      %v1414 = vmul.f32 %v982, %v1377
      %v1415 = vmul.f32 %v985, %v1382
      %v1416 = vmul.f32 %v990, %v1387
      %v1417 = vmul.f32 %v993, %v1392
      %v1418 = vmul.f32 %v998, %v1397
      %v1419 = vmul.f32 %v1001, %v1402
      %v1420 = vmul.f32 %v1006, %v1407
      %v1421 = vmul.f32 %v1009, %v1412
      %v1422 = vlaneseq
      %v1423 = vshrl.u32 %v1422, 7
      %v1424 = vsub.s32 4, %v1423
      %v1425 = vrot.slane %v1020, %v1424
      %v1426 = vmul.f32 %v1414, %v1425
      %v1427 = vmul.f32 %v1415, %v1425
      %v1428 = vmul.f32 %v1416, %v1425
      %v1429 = vmul.f32 %v1417, %v1425
      %v1430 = vmul.f32 %v1418, %v1425
      %v1431 = vmul.f32 %v1419, %v1425
      %v1432 = vmul.f32 %v1420, %v1425
      %v1433 = vmul.f32 %v1421, %v1425
      %v1434 = vadd.f32 %v1357, %v1426
      %v1435 = vadd.f32 %v1358, %v1427
      %v1436 = vadd.f32 %v1359, %v1428
      %v1437 = vadd.f32 %v1360, %v1429
      %v1438 = vadd.f32 %v1361, %v1430
      %v1439 = vadd.f32 %v1362, %v1431
      %v1440 = vadd.f32 %v1363, %v1432
      %v1441 = vadd.f32 %v1364, %v1433
      %s1442 = scalar_lea.vmem %s15, 320
      %v1443 = vld [vmem:[%s1442] sm:$0xff]
      %v1444 = vld [vmem:[%s1442 + $0x8] sm:$0xff]
      %v1445 = vld [vmem:[%s1442 + $0x10] sm:$0xff]
      %v1446 = vld [vmem:[%s1442 + $0x18] sm:$0xff]
      %v1447 = vld [vmem:[%s1442 + $0x20] sm:$0xff]
      %v1448 = vld [vmem:[%s1442 + $0x28] sm:$0xff]
      %v1449 = vld [vmem:[%s1442 + $0x30] sm:$0xff]
      %v1450 = vld [vmem:[%s1442 + $0x38] sm:$0xff]
      %1452 = vset.pattern.permute.xlu0 0
      %1453 = vperm.xlu0 %1452, %v1443
      %v1454 = vpop.permute.xlu0 %1453
      %1457 = vset.pattern.permute.xlu0 0
      %1458 = vperm.xlu0 %1457, %v1444
      %v1459 = vpop.permute.xlu0 %1458
      %1462 = vset.pattern.permute.xlu0 0
      %1463 = vperm.xlu0 %1462, %v1445
      %v1464 = vpop.permute.xlu0 %1463
      %1467 = vset.pattern.permute.xlu0 0
      %1468 = vperm.xlu0 %1467, %v1446
      %v1469 = vpop.permute.xlu0 %1468
      %1472 = vset.pattern.permute.xlu0 0
      %1473 = vperm.xlu0 %1472, %v1447
      %v1474 = vpop.permute.xlu0 %1473
      %1477 = vset.pattern.permute.xlu0 0
      %1478 = vperm.xlu0 %1477, %v1448
      %v1479 = vpop.permute.xlu0 %1478
      %1482 = vset.pattern.permute.xlu0 0
      %1483 = vperm.xlu0 %1482, %v1449
      %v1484 = vpop.permute.xlu0 %1483
      %1487 = vset.pattern.permute.xlu0 0
      %1488 = vperm.xlu0 %1487, %v1450
      %v1489 = vpop.permute.xlu0 %1488
      %v1491 = vmul.f32 %v1209, %v1454
      %v1492 = vmul.f32 %v1208, %v1459
      %v1493 = vmul.f32 %v1207, %v1464
      %v1494 = vmul.f32 %v1206, %v1469
      %v1495 = vmul.f32 %v1205, %v1474
      %v1496 = vmul.f32 %v1204, %v1479
      %v1497 = vmul.f32 %v1203, %v1484
      %v1498 = vmul.f32 %v1210, %v1489
      %v1499 = vlaneseq
      %v1500 = vshrl.u32 %v1499, 7
      %v1501 = vsub.s32 5, %v1500
      %v1502 = vrot.slane %v1020, %v1501
      %v1503 = vmul.f32 %v1491, %v1502
      %v1504 = vmul.f32 %v1492, %v1502
      %v1505 = vmul.f32 %v1493, %v1502
      %v1506 = vmul.f32 %v1494, %v1502
      %v1507 = vmul.f32 %v1495, %v1502
      %v1508 = vmul.f32 %v1496, %v1502
      %v1509 = vmul.f32 %v1497, %v1502
      %v1510 = vmul.f32 %v1498, %v1502
      %v1511 = vadd.f32 %v1434, %v1503
      %v1512 = vadd.f32 %v1435, %v1504
      %v1513 = vadd.f32 %v1436, %v1505
      %v1514 = vadd.f32 %v1437, %v1506
      %v1515 = vadd.f32 %v1438, %v1507
      %v1516 = vadd.f32 %v1439, %v1508
      %v1517 = vadd.f32 %v1440, %v1509
      %v1518 = vadd.f32 %v1441, %v1510
      %s1519 = scalar_lea.vmem %s15, 384
      %v1520 = vld [vmem:[%s1519] sm:$0xff]
      %v1521 = vld [vmem:[%s1519 + $0x8] sm:$0xff]
      %v1522 = vld [vmem:[%s1519 + $0x10] sm:$0xff]
      %v1523 = vld [vmem:[%s1519 + $0x18] sm:$0xff]
      %v1524 = vld [vmem:[%s1519 + $0x20] sm:$0xff]
      %v1525 = vld [vmem:[%s1519 + $0x28] sm:$0xff]
      %v1526 = vld [vmem:[%s1519 + $0x30] sm:$0xff]
      %v1527 = vld [vmem:[%s1519 + $0x38] sm:$0xff]
      %1529 = vset.pattern.permute.xlu0 0
      %1530 = vperm.xlu0 %1529, %v1520
      %v1531 = vpop.permute.xlu0 %1530
      %1534 = vset.pattern.permute.xlu0 0
      %1535 = vperm.xlu0 %1534, %v1521
      %v1536 = vpop.permute.xlu0 %1535
      %1539 = vset.pattern.permute.xlu0 0
      %1540 = vperm.xlu0 %1539, %v1522
      %v1541 = vpop.permute.xlu0 %1540
      %1544 = vset.pattern.permute.xlu0 0
      %1545 = vperm.xlu0 %1544, %v1523
      %v1546 = vpop.permute.xlu0 %1545
      %1549 = vset.pattern.permute.xlu0 0
      %1550 = vperm.xlu0 %1549, %v1524
      %v1551 = vpop.permute.xlu0 %1550
      %1554 = vset.pattern.permute.xlu0 0
      %1555 = vperm.xlu0 %1554, %v1525
      %v1556 = vpop.permute.xlu0 %1555
      %1559 = vset.pattern.permute.xlu0 0
      %1560 = vperm.xlu0 %1559, %v1526
      %v1561 = vpop.permute.xlu0 %1560
      %1564 = vset.pattern.permute.xlu0 0
      %1565 = vperm.xlu0 %1564, %v1527
      %v1566 = vpop.permute.xlu0 %1565
      %v1568 = vmul.f32 %v1039, %v1531
      %v1569 = vmul.f32 %v1038, %v1536
      %v1570 = vmul.f32 %v1037, %v1541
      %v1571 = vmul.f32 %v1036, %v1546
      %v1572 = vmul.f32 %v1035, %v1551
      %v1573 = vmul.f32 %v1034, %v1556
      %v1574 = vmul.f32 %v1033, %v1561
      %v1575 = vmul.f32 %v1040, %v1566
      %v1576 = vlaneseq
      %v1577 = vshrl.u32 %v1576, 7
      %v1578 = vsub.s32 6, %v1577
      %v1579 = vrot.slane %v1020, %v1578
      %v1580 = vmul.f32 %v1568, %v1579
      %v1581 = vmul.f32 %v1569, %v1579
      %v1582 = vmul.f32 %v1570, %v1579
      %v1583 = vmul.f32 %v1571, %v1579
      %v1584 = vmul.f32 %v1572, %v1579
      %v1585 = vmul.f32 %v1573, %v1579
      %v1586 = vmul.f32 %v1574, %v1579
      %v1587 = vmul.f32 %v1575, %v1579
      %v1588 = vadd.f32 %v1511, %v1580
      %v1589 = vadd.f32 %v1512, %v1581
      %v1590 = vadd.f32 %v1513, %v1582
      %v1591 = vadd.f32 %v1514, %v1583
      %v1592 = vadd.f32 %v1515, %v1584
      %v1593 = vadd.f32 %v1516, %v1585
      %v1594 = vadd.f32 %v1517, %v1586
      %v1595 = vadd.f32 %v1518, %v1587
      %s1596 = scalar_lea.vmem %s15, 448
      %v1597 = vld [vmem:[%s1596] sm:$0xff]
      %v1598 = vld [vmem:[%s1596 + $0x8] sm:$0xff]
      %v1599 = vld [vmem:[%s1596 + $0x10] sm:$0xff]
      %v1600 = vld [vmem:[%s1596 + $0x18] sm:$0xff]
      %v1601 = vld [vmem:[%s1596 + $0x20] sm:$0xff]
      %v1602 = vld [vmem:[%s1596 + $0x28] sm:$0xff]
      %v1603 = vld [vmem:[%s1596 + $0x30] sm:$0xff]
      %v1604 = vld [vmem:[%s1596 + $0x38] sm:$0xff]
      %1606 = vset.pattern.permute.xlu0 0
      %1607 = vperm.xlu0 %1606, %v1597
      %v1608 = vpop.permute.xlu0 %1607
      %1611 = vset.pattern.permute.xlu0 0
      %1612 = vperm.xlu0 %1611, %v1598
      %v1613 = vpop.permute.xlu0 %1612
      %1616 = vset.pattern.permute.xlu0 0
      %1617 = vperm.xlu0 %1616, %v1599
      %v1618 = vpop.permute.xlu0 %1617
      %1621 = vset.pattern.permute.xlu0 0
      %1622 = vperm.xlu0 %1621, %v1600
      %v1623 = vpop.permute.xlu0 %1622
      %1626 = vset.pattern.permute.xlu0 0
      %1627 = vperm.xlu0 %1626, %v1601
      %v1628 = vpop.permute.xlu0 %1627
      %1631 = vset.pattern.permute.xlu0 0
      %1632 = vperm.xlu0 %1631, %v1602
      %v1633 = vpop.permute.xlu0 %1632
      %1636 = vset.pattern.permute.xlu0 0
      %1637 = vperm.xlu0 %1636, %v1603
      %v1638 = vpop.permute.xlu0 %1637
      %1641 = vset.pattern.permute.xlu0 0
      %1642 = vperm.xlu0 %1641, %v1604
      %v1643 = vpop.permute.xlu0 %1642
      %v1645 = vmul.f32 %v985, %v1608
      %v1646 = vmul.f32 %v990, %v1613
      %v1647 = vmul.f32 %v993, %v1618
      %v1648 = vmul.f32 %v998, %v1623
      %v1649 = vmul.f32 %v1001, %v1628
      %v1650 = vmul.f32 %v1006, %v1633
      %v1651 = vmul.f32 %v1009, %v1638
      %v1652 = vmul.f32 %v982, %v1643
      %v1653 = vlaneseq
      %v1654 = vshrl.u32 %v1653, 7
      %v1655 = vsub.s32 7, %v1654
      %v1656 = vrot.slane %v1020, %v1655
      %v1657 = vmul.f32 %v1645, %v1656
      %v1658 = vmul.f32 %v1646, %v1656
      %v1659 = vmul.f32 %v1647, %v1656
      %v1660 = vmul.f32 %v1648, %v1656
      %v1661 = vmul.f32 %v1649, %v1656
      %v1662 = vmul.f32 %v1650, %v1656
      %v1663 = vmul.f32 %v1651, %v1656
      %v1664 = vmul.f32 %v1652, %v1656
      %v1665 = vadd.f32 %v1588, %v1657
      %v1666 = vadd.f32 %v1589, %v1658
      %v1667 = vadd.f32 %v1590, %v1659
      %v1668 = vadd.f32 %v1591, %v1660
      %v1669 = vadd.f32 %v1592, %v1661
      %v1670 = vadd.f32 %v1593, %v1662
      %v1671 = vadd.f32 %v1594, %v1663
      %v1672 = vadd.f32 %v1595, %v1664
      %s1673 = scalar_lea.vmem %s15, 512
      %v1674 = vld [vmem:[%s1673] sm:$0xff]
      %v1675 = vld [vmem:[%s1673 + $0x8] sm:$0xff]
      %v1676 = vld [vmem:[%s1673 + $0x10] sm:$0xff]
      %v1677 = vld [vmem:[%s1673 + $0x18] sm:$0xff]
      %v1678 = vld [vmem:[%s1673 + $0x20] sm:$0xff]
      %v1679 = vld [vmem:[%s1673 + $0x28] sm:$0xff]
      %v1680 = vld [vmem:[%s1673 + $0x30] sm:$0xff]
      %v1681 = vld [vmem:[%s1673 + $0x38] sm:$0xff]
      %1683 = vset.pattern.permute.xlu0 0
      %1684 = vperm.xlu0 %1683, %v1674
      %v1685 = vpop.permute.xlu0 %1684
      %1688 = vset.pattern.permute.xlu0 0
      %1689 = vperm.xlu0 %1688, %v1675
      %v1690 = vpop.permute.xlu0 %1689
      %1693 = vset.pattern.permute.xlu0 0
      %1694 = vperm.xlu0 %1693, %v1676
      %v1695 = vpop.permute.xlu0 %1694
      %1698 = vset.pattern.permute.xlu0 0
      %1699 = vperm.xlu0 %1698, %v1677
      %v1700 = vpop.permute.xlu0 %1699
      %1703 = vset.pattern.permute.xlu0 0
      %1704 = vperm.xlu0 %1703, %v1678
      %v1705 = vpop.permute.xlu0 %1704
      %1708 = vset.pattern.permute.xlu0 0
      %1709 = vperm.xlu0 %1708, %v1679
      %v1710 = vpop.permute.xlu0 %1709
      %1713 = vset.pattern.permute.xlu0 0
      %1714 = vperm.xlu0 %1713, %v1680
      %v1715 = vpop.permute.xlu0 %1714
      %1718 = vset.pattern.permute.xlu0 0
      %1719 = vperm.xlu0 %1718, %v1681
      %v1720 = vpop.permute.xlu0 %1719
      %v1722 = vmul.f32 %v1208, %v1685
      %v1723 = vmul.f32 %v1207, %v1690
      %v1724 = vmul.f32 %v1206, %v1695
      %v1725 = vmul.f32 %v1205, %v1700
      %v1726 = vmul.f32 %v1204, %v1705
      %v1727 = vmul.f32 %v1203, %v1710
      %v1728 = vmul.f32 %v1210, %v1715
      %v1729 = vmul.f32 %v1209, %v1720
      %v1730 = vlaneseq
      %v1731 = vshrl.u32 %v1730, 7
      %v1732 = vsub.s32 0, %v1731
      %v1733 = vrot.slane %v1021, %v1732
      %v1734 = vmul.f32 %v1722, %v1733
      %v1735 = vmul.f32 %v1723, %v1733
      %v1736 = vmul.f32 %v1724, %v1733
      %v1737 = vmul.f32 %v1725, %v1733
      %v1738 = vmul.f32 %v1726, %v1733
      %v1739 = vmul.f32 %v1727, %v1733
      %v1740 = vmul.f32 %v1728, %v1733
      %v1741 = vmul.f32 %v1729, %v1733
      %v1742 = vadd.f32 %v1665, %v1734
      %v1743 = vadd.f32 %v1666, %v1735
      %v1744 = vadd.f32 %v1667, %v1736
      %v1745 = vadd.f32 %v1668, %v1737
      %v1746 = vadd.f32 %v1669, %v1738
      %v1747 = vadd.f32 %v1670, %v1739
      %v1748 = vadd.f32 %v1671, %v1740
      %v1749 = vadd.f32 %v1672, %v1741
      %v1750 = vld [vmem:[%s9] sm:$0x1]
      %v1752 = vlaneseq
      %v1753 = vshrl.u32 %v1752, 7
      %v1754 = vsub.s32 0, %v1753
      %v1755 = vrot.slane %v1750, %v1754
      %v1757 = vadd.f32 %v1742, %v1755
      %v1758 = vadd.f32 %v1743, %v1755
      %v1759 = vadd.f32 %v1744, %v1755
      %v1760 = vadd.f32 %v1745, %v1755
      %v1761 = vadd.f32 %v1746, %v1755
      %v1762 = vadd.f32 %v1747, %v1755
      %v1763 = vadd.f32 %v1748, %v1755
      %v1764 = vadd.f32 %v1749, %v1755
      %v1765 = vld [vmem:[%s12] sm:$0xff]
      %v1766 = vld [vmem:[%s12 + $0x8] sm:$0xff]
      %v1768 = vsel %vm640, %v1757, 0
      %v1771 = vsel %vm640, %v1758, 0
      %v1774 = vsel %vm640, %v1759, 0
      %v1777 = vsel %vm640, %v1760, 0
      %v1780 = vsel %vm640, %v1761, 0
      %v1783 = vsel %vm640, %v1762, 0
      %v1786 = vsel %vm640, %v1763, 0
      %v1789 = vsel %vm640, %v1764, 0
      %1791 = vmatprep.subr.mxu0 0.0
      %1792 = vmatpush1.msra.mxu0 0.0
      %1793 = vmatprep.subr.mxu0 0.0
      %1794 = vmatpush1.msra.mxu0 0.0
      %1795 = vmatprep.subr.mxu0 0.0
      %1796 = vmatpush1.msra.mxu0 0.0
      %1797 = vmatprep.subr.mxu0 0.0
      %1798 = vmatpush1.msra.mxu0 0.0
      %1799 = vmatprep.subr.mxu0 0.0
      %1800 = vmatpush1.msra.mxu0 0.0
      %1801 = vmatprep.subr.mxu0 0.0
      %1802 = vmatpush1.msra.mxu0 0.0
      %1803 = vmatprep.subr.mxu0 0.0
      %1804 = vmatpush1.msra.mxu0 0.0
      %1805 = vmatprep.subr.mxu0 0.0
      %1806 = vmatpush1.msra.mxu0 0.0
      %1807 = vmatprep.subr.mxu0 0.0
      %1808 = vmatpush1.msra.mxu0 0.0
      %1809 = vmatprep.subr.mxu0 0.0
      %1810 = vmatpush1.msra.mxu0 0.0
      %1811 = vmatprep.subr.mxu0 0.0
      %1812 = vmatpush1.msra.mxu0 0.0
      %1813 = vmatprep.subr.mxu0 0.0
      %1814 = vmatpush1.msra.mxu0 0.0
      %1815 = vmatprep.subr.mxu0 0.0
      %1816 = vmatpush1.msra.mxu0 0.0
      %1817 = vmatprep.subr.mxu0 0.0
      %1818 = vmatpush1.msra.mxu0 0.0
      %1819 = vmatprep.subr.mxu0 0.0
      %1820 = vmatpush1.msra.mxu0 %v1766
      %1821 = vmatprep.subr.mxu0 0.0
      %1822 = vmatpush1.msra.mxu0 %v1765
      %1823 = vmatprep.subr.mxu0 0.0
      %1824 = vmatpush2.msra.mxu0 0.0
      %1825 = vmatprep.subr.mxu0 0.0
      %1826 = vmatpush2.msra.mxu0 0.0
      %1827 = vmatprep.subr.mxu0 0.0
      %1828 = vmatpush2.msra.mxu0 0.0
      %1829 = vmatprep.subr.mxu0 0.0
      %1830 = vmatpush2.msra.mxu0 0.0
      %1831 = vmatprep.subr.mxu0 0.0
      %1832 = vmatpush2.msra.mxu0 0.0
      %1833 = vmatprep.subr.mxu0 0.0
      %1834 = vmatpush2.msra.mxu0 0.0
      %1835 = vmatprep.subr.mxu0 0.0
      %1836 = vmatpush2.msra.mxu0 0.0
      %1837 = vmatprep.subr.mxu0 0.0
      %1838 = vmatpush2.msra.mxu0 0.0
      %1839 = vmatprep.subr.mxu0 0.0
      %1840 = vmatpush2.msra.mxu0 0.0
      %1841 = vmatprep.subr.mxu0 0.0
      %1842 = vmatpush2.msra.mxu0 0.0
      %1843 = vmatprep.subr.mxu0 0.0
      %1844 = vmatpush2.msra.mxu0 0.0
      %1845 = vmatprep.subr.mxu0 0.0
      %1846 = vmatpush2.msra.mxu0 0.0
      %1847 = vmatprep.subr.mxu0 0.0
      %1848 = vmatpush2.msra.mxu0 0.0
      %1849 = vmatprep.subr.mxu0 0.0
      %1850 = vmatpush2.msra.mxu0 0.0
      %1851 = vmatprep.subr.mxu0 0.0
      %1852 = vmatpush2.msra.mxu0 0.0
      %1853 = vmatprep.subr.mxu0 0.0
      %1854 = vmatpush2.msra.mxu0 0.0
      %1855 = vmatprep.mubr.f32.mxu0 0.0
      %1856 = vmatmul.mubr.f32.gmra.mxu0 %v1768
      %v1857 = vpop.f32.mrf.mxu0
      %v1858 = vadd.f32 0.0, %v1857
      %v1859 = vpop.f32.mrf.mxu0
      %1860 = vmatprep.mubr.f32.mxu0 0.0
      %1861 = vmatmul.mubr.f32.gmra.mxu0 %v1771
      %v1862 = vpop.f32.mrf.mxu0
      %v1863 = vadd.f32 0.0, %v1862
      %v1864 = vpop.f32.mrf.mxu0
      %1865 = vmatprep.mubr.f32.mxu0 0.0
      %1866 = vmatmul.mubr.f32.gmra.mxu0 %v1774
      %v1867 = vpop.f32.mrf.mxu0
      %v1868 = vadd.f32 0.0, %v1867
      %v1869 = vpop.f32.mrf.mxu0
      %1870 = vmatprep.mubr.f32.mxu0 0.0
      %1871 = vmatmul.mubr.f32.gmra.mxu0 %v1777
      %v1872 = vpop.f32.mrf.mxu0
      %v1873 = vadd.f32 0.0, %v1872
      %v1874 = vpop.f32.mrf.mxu0
      %1875 = vmatprep.mubr.f32.mxu0 0.0
      %1876 = vmatmul.mubr.f32.gmra.mxu0 %v1780
      %v1877 = vpop.f32.mrf.mxu0
      %v1878 = vadd.f32 0.0, %v1877
      %v1879 = vpop.f32.mrf.mxu0
      %1880 = vmatprep.mubr.f32.mxu0 0.0
      %1881 = vmatmul.mubr.f32.gmra.mxu0 %v1783
      %v1882 = vpop.f32.mrf.mxu0
      %v1883 = vadd.f32 0.0, %v1882
      %v1884 = vpop.f32.mrf.mxu0
      %1885 = vmatprep.mubr.f32.mxu0 0.0
      %1886 = vmatmul.mubr.f32.gmra.mxu0 %v1786
      %v1887 = vpop.f32.mrf.mxu0
      %v1888 = vadd.f32 0.0, %v1887
      %v1889 = vpop.f32.mrf.mxu0
      %1890 = vmatprep.mubr.f32.mxu0 0.0
      %1891 = vmatmul.mubr.f32.gmra.mxu0 %v1789
      %v1892 = vpop.f32.mrf.mxu0
      %v1893 = vadd.f32 0.0, %v1892
      %v1894 = vpop.f32.mrf.mxu0
      %1895 = vdwg.mxu0
      %v1896 = vsub.f32 %v1757, %v1858
      %v1897 = vsub.f32 %v1758, %v1863
      %v1898 = vsub.f32 %v1759, %v1868
      %v1899 = vsub.f32 %v1760, %v1873
      %v1900 = vsub.f32 %v1761, %v1878
      %v1901 = vsub.f32 %v1762, %v1883
      %v1902 = vsub.f32 %v1763, %v1888
      %v1903 = vsub.f32 %v1764, %v1893
      %v1904 = vmul.f32 %v1896, %v1896
      %v1905 = vmul.f32 %v1897, %v1897
      %v1906 = vmul.f32 %v1898, %v1898
      %v1907 = vmul.f32 %v1899, %v1899
      %v1908 = vmul.f32 %v1900, %v1900
      %v1909 = vmul.f32 %v1901, %v1901
      %v1910 = vmul.f32 %v1902, %v1902
      %v1911 = vmul.f32 %v1903, %v1903
      %v1913 = vsel %vm640, %v1904, 0
      %v1916 = vsel %vm640, %v1905, 0
      %v1919 = vsel %vm640, %v1906, 0
      %v1922 = vsel %vm640, %v1907, 0
      %v1925 = vsel %vm640, %v1908, 0
      %v1928 = vsel %vm640, %v1909, 0
      %v1931 = vsel %vm640, %v1910, 0
      %v1934 = vsel %vm640, %v1911, 0
      %1936 = vmatprep.subr.mxu0 0.0
      %1937 = vmatpush1.msra.mxu0 0.0
      %1938 = vmatprep.subr.mxu0 0.0
      %1939 = vmatpush1.msra.mxu0 0.0
      %1940 = vmatprep.subr.mxu0 0.0
      %1941 = vmatpush1.msra.mxu0 0.0
      %1942 = vmatprep.subr.mxu0 0.0
      %1943 = vmatpush1.msra.mxu0 0.0
      %1944 = vmatprep.subr.mxu0 0.0
      %1945 = vmatpush1.msra.mxu0 0.0
      %1946 = vmatprep.subr.mxu0 0.0
      %1947 = vmatpush1.msra.mxu0 0.0
      %1948 = vmatprep.subr.mxu0 0.0
      %1949 = vmatpush1.msra.mxu0 0.0
      %1950 = vmatprep.subr.mxu0 0.0
      %1951 = vmatpush1.msra.mxu0 0.0
      %1952 = vmatprep.subr.mxu0 0.0
      %1953 = vmatpush1.msra.mxu0 0.0
      %1954 = vmatprep.subr.mxu0 0.0
      %1955 = vmatpush1.msra.mxu0 0.0
      %1956 = vmatprep.subr.mxu0 0.0
      %1957 = vmatpush1.msra.mxu0 0.0
      %1958 = vmatprep.subr.mxu0 0.0
      %1959 = vmatpush1.msra.mxu0 0.0
      %1960 = vmatprep.subr.mxu0 0.0
      %1961 = vmatpush1.msra.mxu0 0.0
      %1962 = vmatprep.subr.mxu0 0.0
      %1963 = vmatpush1.msra.mxu0 0.0
      %1964 = vmatprep.subr.mxu0 0.0
      %1965 = vmatpush1.msra.mxu0 %v1766
      %1966 = vmatprep.subr.mxu0 0.0
      %1967 = vmatpush1.msra.mxu0 %v1765
      %1968 = vmatprep.subr.mxu0 0.0
      %1969 = vmatpush2.msra.mxu0 0.0
      %1970 = vmatprep.subr.mxu0 0.0
      %1971 = vmatpush2.msra.mxu0 0.0
      %1972 = vmatprep.subr.mxu0 0.0
      %1973 = vmatpush2.msra.mxu0 0.0
      %1974 = vmatprep.subr.mxu0 0.0
      %1975 = vmatpush2.msra.mxu0 0.0
      %1976 = vmatprep.subr.mxu0 0.0
      %1977 = vmatpush2.msra.mxu0 0.0
      %1978 = vmatprep.subr.mxu0 0.0
      %1979 = vmatpush2.msra.mxu0 0.0
      %1980 = vmatprep.subr.mxu0 0.0
      %1981 = vmatpush2.msra.mxu0 0.0
      %1982 = vmatprep.subr.mxu0 0.0
      %1983 = vmatpush2.msra.mxu0 0.0
      %1984 = vmatprep.subr.mxu0 0.0
      %1985 = vmatpush2.msra.mxu0 0.0
      %1986 = vmatprep.subr.mxu0 0.0
      %1987 = vmatpush2.msra.mxu0 0.0
      %1988 = vmatprep.subr.mxu0 0.0
      %1989 = vmatpush2.msra.mxu0 0.0
      %1990 = vmatprep.subr.mxu0 0.0
      %1991 = vmatpush2.msra.mxu0 0.0
      %1992 = vmatprep.subr.mxu0 0.0
      %1993 = vmatpush2.msra.mxu0 0.0
      %1994 = vmatprep.subr.mxu0 0.0
      %1995 = vmatpush2.msra.mxu0 0.0
      %1996 = vmatprep.subr.mxu0 0.0
      %1997 = vmatpush2.msra.mxu0 0.0
      %1998 = vmatprep.subr.mxu0 0.0
      %1999 = vmatpush2.msra.mxu0 0.0
      %2000 = vmatprep.mubr.f32.mxu0 0.0
      %2001 = vmatmul.mubr.f32.gmra.mxu0 %v1913
      %v2002 = vpop.f32.mrf.mxu0
      %v2003 = vadd.f32 1e-05, %v2002
      %v2004 = vpop.f32.mrf.mxu0
      %2005 = vmatprep.mubr.f32.mxu0 0.0
      %2006 = vmatmul.mubr.f32.gmra.mxu0 %v1916
      %v2007 = vpop.f32.mrf.mxu0
      %v2008 = vadd.f32 1e-05, %v2007
      %v2009 = vpop.f32.mrf.mxu0
      %2010 = vmatprep.mubr.f32.mxu0 0.0
      %2011 = vmatmul.mubr.f32.gmra.mxu0 %v1919
      %v2012 = vpop.f32.mrf.mxu0
      %v2013 = vadd.f32 1e-05, %v2012
      %v2014 = vpop.f32.mrf.mxu0
      %2015 = vmatprep.mubr.f32.mxu0 0.0
      %2016 = vmatmul.mubr.f32.gmra.mxu0 %v1922
      %v2017 = vpop.f32.mrf.mxu0
      %v2018 = vadd.f32 1e-05, %v2017
      %v2019 = vpop.f32.mrf.mxu0
      %2020 = vmatprep.mubr.f32.mxu0 0.0
      %2021 = vmatmul.mubr.f32.gmra.mxu0 %v1925
      %v2022 = vpop.f32.mrf.mxu0
      %v2023 = vadd.f32 1e-05, %v2022
      %v2024 = vpop.f32.mrf.mxu0
      %2025 = vmatprep.mubr.f32.mxu0 0.0
      %2026 = vmatmul.mubr.f32.gmra.mxu0 %v1928
      %v2027 = vpop.f32.mrf.mxu0
      %v2028 = vadd.f32 1e-05, %v2027
      %v2029 = vpop.f32.mrf.mxu0
      %2030 = vmatprep.mubr.f32.mxu0 0.0
      %2031 = vmatmul.mubr.f32.gmra.mxu0 %v1931
      %v2032 = vpop.f32.mrf.mxu0
      %v2033 = vadd.f32 1e-05, %v2032
      %v2034 = vpop.f32.mrf.mxu0
      %2035 = vmatprep.mubr.f32.mxu0 0.0
      %2036 = vmatmul.mubr.f32.gmra.mxu0 %v1934
      %v2037 = vpop.f32.mrf.mxu0
      %v2038 = vadd.f32 1e-05, %v2037
      %v2039 = vpop.f32.mrf.mxu0
      %2040 = vdwg.mxu0
      %v2041 = vrsqrt.pop %v2003
      %v2042 = vrsqrt.pop %v2008
      %v2043 = vrsqrt.pop %v2013
      %v2044 = vrsqrt.pop %v2018
      %v2045 = vrsqrt.pop %v2023
      %v2046 = vrsqrt.pop %v2028
      %v2047 = vrsqrt.pop %v2033
      %v2048 = vrsqrt.pop %v2038
      %v2049 = vmul.f32 %v1896, %v2041
      %v2050 = vmul.f32 %v1897, %v2042
      %v2051 = vmul.f32 %v1898, %v2043
      %v2052 = vmul.f32 %v1899, %v2044
      %v2053 = vmul.f32 %v1900, %v2045
      %v2054 = vmul.f32 %v1901, %v2046
      %v2055 = vmul.f32 %v1902, %v2047
      %v2056 = vmul.f32 %v1903, %v2048
      %v2057 = vld [vmem:[%s10] sm:$0x1]
      %v2059 = vlaneseq
      %v2060 = vshrl.u32 %v2059, 7
      %v2061 = vsub.s32 0, %v2060
      %v2062 = vrot.slane %v2057, %v2061
      %v2064 = vmul.f32 %v2049, %v2062
      %v2065 = vmul.f32 %v2050, %v2062
      %v2066 = vmul.f32 %v2051, %v2062
      %v2067 = vmul.f32 %v2052, %v2062
      %v2068 = vmul.f32 %v2053, %v2062
      %v2069 = vmul.f32 %v2054, %v2062
      %v2070 = vmul.f32 %v2055, %v2062
      %v2071 = vmul.f32 %v2056, %v2062
      %v2072 = vld [vmem:[%s11] sm:$0x1]
      %v2074 = vlaneseq
      %v2075 = vshrl.u32 %v2074, 7
      %v2076 = vsub.s32 0, %v2075
      %v2077 = vrot.slane %v2072, %v2076
      %v2079 = vadd.f32 %v2064, %v2077
      %v2080 = vadd.f32 %v2065, %v2077
      %v2081 = vadd.f32 %v2066, %v2077
      %v2082 = vadd.f32 %v2067, %v2077
      %v2083 = vadd.f32 %v2068, %v2077
      %v2084 = vadd.f32 %v2069, %v2077
      %v2085 = vadd.f32 %v2070, %v2077
      %v2086 = vadd.f32 %v2071, %v2077
      %v2087 = vmul.f32 %v2079, 0.5
      %v2088 = vmul.f32 %v2080, 0.5
      %v2089 = vmul.f32 %v2081, 0.5
      %v2090 = vmul.f32 %v2082, 0.5
      %v2091 = vmul.f32 %v2083, 0.5
      %v2092 = vmul.f32 %v2084, 0.5
      %v2093 = vmul.f32 %v2085, 0.5
      %v2094 = vmul.f32 %v2086, 0.5
      %v2095 = vmul.f32 %v2079, 0.70710677
      %v2096 = vmul.f32 %v2080, 0.70710677
      %v2097 = vmul.f32 %v2081, 0.70710677
      %v2098 = vmul.f32 %v2082, 0.70710677
      %v2099 = vmul.f32 %v2083, 0.70710677
      %v2100 = vmul.f32 %v2084, 0.70710677
      %v2101 = vmul.f32 %v2085, 0.70710677
      %v2102 = vmul.f32 %v2086, 0.70710677
      %v2103 = vand.u32 2147483647, %v2095
      %v2104 = vand.u32 2147483647, %v2096
      %v2105 = vand.u32 2147483647, %v2097
      %v2106 = vand.u32 2147483647, %v2098
      %v2107 = vand.u32 2147483647, %v2099
      %v2108 = vand.u32 2147483647, %v2100
      %v2109 = vand.u32 2147483647, %v2101
      %v2110 = vand.u32 2147483647, %v2102
      %v2111 = vmul.f32 %v2103, 0.3275911
      %v2112 = vmul.f32 %v2104, 0.3275911
      %v2113 = vmul.f32 %v2105, 0.3275911
      %v2114 = vmul.f32 %v2106, 0.3275911
      %v2115 = vmul.f32 %v2107, 0.3275911
      %v2116 = vmul.f32 %v2108, 0.3275911
      %v2117 = vmul.f32 %v2109, 0.3275911
      %v2118 = vmul.f32 %v2110, 0.3275911
      %v2119 = vadd.f32 %v2111, 1.0
      %v2120 = vadd.f32 %v2112, 1.0
      %v2121 = vadd.f32 %v2113, 1.0
      %v2122 = vadd.f32 %v2114, 1.0
      %v2123 = vadd.f32 %v2115, 1.0
      %v2124 = vadd.f32 %v2116, 1.0
      %v2125 = vadd.f32 %v2117, 1.0
      %v2126 = vadd.f32 %v2118, 1.0
      %v2127 = vrcp.pop %v2119
      %v2128 = vrcp.pop %v2120
      %v2129 = vrcp.pop %v2121
      %v2130 = vrcp.pop %v2122
      %v2131 = vrcp.pop %v2123
      %v2132 = vrcp.pop %v2124
      %v2133 = vrcp.pop %v2125
      %v2134 = vrcp.pop %v2126
      %v2135 = vmul.f32 %v2127, 1.0614054
      %v2136 = vmul.f32 %v2128, 1.0614054
      %v2137 = vmul.f32 %v2129, 1.0614054
      %v2138 = vmul.f32 %v2130, 1.0614054
      %v2139 = vmul.f32 %v2131, 1.0614054
      %v2140 = vmul.f32 %v2132, 1.0614054
      %v2141 = vmul.f32 %v2133, 1.0614054
      %v2142 = vmul.f32 %v2134, 1.0614054
      %v2143 = vadd.f32 %v2135, -1.4531521
      %v2144 = vadd.f32 %v2136, -1.4531521
      %v2145 = vadd.f32 %v2137, -1.4531521
      %v2146 = vadd.f32 %v2138, -1.4531521
      %v2147 = vadd.f32 %v2139, -1.4531521
      %v2148 = vadd.f32 %v2140, -1.4531521
      %v2149 = vadd.f32 %v2141, -1.4531521
      %v2150 = vadd.f32 %v2142, -1.4531521
      %v2151 = vmul.f32 %v2143, %v2127
      %v2152 = vmul.f32 %v2144, %v2128
      %v2153 = vmul.f32 %v2145, %v2129
      %v2154 = vmul.f32 %v2146, %v2130
      %v2155 = vmul.f32 %v2147, %v2131
      %v2156 = vmul.f32 %v2148, %v2132
      %v2157 = vmul.f32 %v2149, %v2133
      %v2158 = vmul.f32 %v2150, %v2134
      %v2159 = vadd.f32 %v2151, 1.4214138
      %v2160 = vadd.f32 %v2152, 1.4214138
      %v2161 = vadd.f32 %v2153, 1.4214138
      %v2162 = vadd.f32 %v2154, 1.4214138
      %v2163 = vadd.f32 %v2155, 1.4214138
      %v2164 = vadd.f32 %v2156, 1.4214138
      %v2165 = vadd.f32 %v2157, 1.4214138
      %v2166 = vadd.f32 %v2158, 1.4214138
      %v2167 = vmul.f32 %v2159, %v2127
      %v2168 = vmul.f32 %v2160, %v2128
      %v2169 = vmul.f32 %v2161, %v2129
      %v2170 = vmul.f32 %v2162, %v2130
      %v2171 = vmul.f32 %v2163, %v2131
      %v2172 = vmul.f32 %v2164, %v2132
      %v2173 = vmul.f32 %v2165, %v2133
      %v2174 = vmul.f32 %v2166, %v2134
      %v2175 = vadd.f32 %v2167, -0.28449672
      %v2176 = vadd.f32 %v2168, -0.28449672
      %v2177 = vadd.f32 %v2169, -0.28449672
      %v2178 = vadd.f32 %v2170, -0.28449672
      %v2179 = vadd.f32 %v2171, -0.28449672
      %v2180 = vadd.f32 %v2172, -0.28449672
      %v2181 = vadd.f32 %v2173, -0.28449672
      %v2182 = vadd.f32 %v2174, -0.28449672
      %v2183 = vmul.f32 %v2175, %v2127
      %v2184 = vmul.f32 %v2176, %v2128
      %v2185 = vmul.f32 %v2177, %v2129
      %v2186 = vmul.f32 %v2178, %v2130
      %v2187 = vmul.f32 %v2179, %v2131
      %v2188 = vmul.f32 %v2180, %v2132
      %v2189 = vmul.f32 %v2181, %v2133
      %v2190 = vmul.f32 %v2182, %v2134
      %v2191 = vadd.f32 %v2183, 0.2548296
      %v2192 = vadd.f32 %v2184, 0.2548296
      %v2193 = vadd.f32 %v2185, 0.2548296
      %v2194 = vadd.f32 %v2186, 0.2548296
      %v2195 = vadd.f32 %v2187, 0.2548296
      %v2196 = vadd.f32 %v2188, 0.2548296
      %v2197 = vadd.f32 %v2189, 0.2548296
      %v2198 = vadd.f32 %v2190, 0.2548296
      %v2199 = vmul.f32 %v2191, %v2127
      %v2200 = vmul.f32 %v2192, %v2128
      %v2201 = vmul.f32 %v2193, %v2129
      %v2202 = vmul.f32 %v2194, %v2130
      %v2203 = vmul.f32 %v2195, %v2131
      %v2204 = vmul.f32 %v2196, %v2132
      %v2205 = vmul.f32 %v2197, %v2133
      %v2206 = vmul.f32 %v2198, %v2134
      %v2207 = vsub.f32 0.0, %v2103
      %v2208 = vsub.f32 0.0, %v2104
      %v2209 = vsub.f32 0.0, %v2105
      %v2210 = vsub.f32 0.0, %v2106
      %v2211 = vsub.f32 0.0, %v2107
      %v2212 = vsub.f32 0.0, %v2108
      %v2213 = vsub.f32 0.0, %v2109
      %v2214 = vsub.f32 0.0, %v2110
      %v2215 = vmul.f32 %v2207, %v2103
      %v2216 = vmul.f32 %v2208, %v2104
      %v2217 = vmul.f32 %v2209, %v2105
      %v2218 = vmul.f32 %v2210, %v2106
      %v2219 = vmul.f32 %v2211, %v2107
      %v2220 = vmul.f32 %v2212, %v2108
      %v2221 = vmul.f32 %v2213, %v2109
      %v2222 = vmul.f32 %v2214, %v2110
      %v2223 = vmul.f32 %v2215, 1.442695
      %v2224 = vpow.pop %v2223
      %v2225 = vmul.f32 %v2216, 1.442695
      %v2226 = vpow.pop %v2225
      %v2227 = vmul.f32 %v2217, 1.442695
      %v2228 = vpow.pop %v2227
      %v2229 = vmul.f32 %v2218, 1.442695
      %v2230 = vpow.pop %v2229
      %v2231 = vmul.f32 %v2219, 1.442695
      %v2232 = vpow.pop %v2231
      %v2233 = vmul.f32 %v2220, 1.442695
      %v2234 = vpow.pop %v2233
      %v2235 = vmul.f32 %v2221, 1.442695
      %v2236 = vpow.pop %v2235
      %v2237 = vmul.f32 %v2222, 1.442695
      %v2238 = vpow.pop %v2237
      %v2239 = vmul.f32 %v2199, %v2224
      %v2240 = vmul.f32 %v2200, %v2226
      %v2241 = vmul.f32 %v2201, %v2228
      %v2242 = vmul.f32 %v2202, %v2230
      %v2243 = vmul.f32 %v2203, %v2232
      %v2244 = vmul.f32 %v2204, %v2234
      %v2245 = vmul.f32 %v2205, %v2236
      %v2246 = vmul.f32 %v2206, %v2238
      %v2247 = vsub.f32 1.0, %v2239
      %v2248 = vsub.f32 1.0, %v2240
      %v2249 = vsub.f32 1.0, %v2241
      %v2250 = vsub.f32 1.0, %v2242
      %v2251 = vsub.f32 1.0, %v2243
      %v2252 = vsub.f32 1.0, %v2244
      %v2253 = vsub.f32 1.0, %v2245
      %v2254 = vsub.f32 1.0, %v2246
      %vm2255 = vcmp.ge.f32.partialorder %v2095, 0.0
      %vm2256 = vcmp.ge.f32.partialorder %v2096, 0.0
      %vm2257 = vcmp.ge.f32.partialorder %v2097, 0.0
      %vm2258 = vcmp.ge.f32.partialorder %v2098, 0.0
      %vm2259 = vcmp.ge.f32.partialorder %v2099, 0.0
      %vm2260 = vcmp.ge.f32.partialorder %v2100, 0.0
      %vm2261 = vcmp.ge.f32.partialorder %v2101, 0.0
      %vm2262 = vcmp.ge.f32.partialorder %v2102, 0.0
      %v2263 = vsub.f32 0.0, %v2247
      %v2264 = vsub.f32 0.0, %v2248
      %v2265 = vsub.f32 0.0, %v2249
      %v2266 = vsub.f32 0.0, %v2250
      %v2267 = vsub.f32 0.0, %v2251
      %v2268 = vsub.f32 0.0, %v2252
      %v2269 = vsub.f32 0.0, %v2253
      %v2270 = vsub.f32 0.0, %v2254
      %v2271 = vsel %vm2255, %v2247, %v2263
      %v2272 = vsel %vm2256, %v2248, %v2264
      %v2273 = vsel %vm2257, %v2249, %v2265
      %v2274 = vsel %vm2258, %v2250, %v2266
      %v2275 = vsel %vm2259, %v2251, %v2267
      %v2276 = vsel %vm2260, %v2252, %v2268
      %v2277 = vsel %vm2261, %v2253, %v2269
      %v2278 = vsel %vm2262, %v2254, %v2270
      %v2279 = vadd.f32 %v2271, 1.0
      %v2280 = vadd.f32 %v2272, 1.0
      %v2281 = vadd.f32 %v2273, 1.0
      %v2282 = vadd.f32 %v2274, 1.0
      %v2283 = vadd.f32 %v2275, 1.0
      %v2284 = vadd.f32 %v2276, 1.0
      %v2285 = vadd.f32 %v2277, 1.0
      %v2286 = vadd.f32 %v2278, 1.0
      %v2287 = vmul.f32 %v2087, %v2279
      %v2288 = vmul.f32 %v2088, %v2280
      %v2289 = vmul.f32 %v2089, %v2281
      %v2290 = vmul.f32 %v2090, %v2282
      %v2291 = vmul.f32 %v2091, %v2283
      %v2292 = vmul.f32 %v2092, %v2284
      %v2293 = vmul.f32 %v2093, %v2285
      %v2294 = vmul.f32 %v2094, %v2286
      %v2295 = vld [vmem:[%s13] sm:$0xff]
      %v2296 = vld [vmem:[%s13 + $0x8] sm:$0xff]
      %v2297 = vld [vmem:[%s14] sm:$0xff]
      %v2298 = vld [vmem:[%s14 + $0x8] sm:$0xff]
      %v2299 = vld [vmem:[%s14 + $0x10] sm:$0xff]
      %v2300 = vld [vmem:[%s14 + $0x18] sm:$0xff]
      %v2301 = vld [vmem:[%s14 + $0x20] sm:$0xff]
      %v2302 = vld [vmem:[%s14 + $0x28] sm:$0xff]
      %v2303 = vld [vmem:[%s14 + $0x30] sm:$0xff]
      %v2304 = vld [vmem:[%s14 + $0x38] sm:$0xff]
      %v2306 = vsel %vm640, %v2287, 0
      %v2309 = vsel %vm640, %v2288, 0
      %v2312 = vsel %vm640, %v2289, 0
      %v2315 = vsel %vm640, %v2290, 0
      %v2318 = vsel %vm640, %v2291, 0
      %v2321 = vsel %vm640, %v2292, 0
      %v2324 = vsel %vm640, %v2293, 0
      %v2327 = vsel %vm640, %v2294, 0
      %2329 = vmatprep.subr.mxu0 0.0
      %2330 = vmatpush1.msra.mxu0 0.0
      %2331 = vmatprep.subr.mxu0 0.0
      %2332 = vmatpush1.msra.mxu0 0.0
      %2333 = vmatprep.subr.mxu0 0.0
      %2334 = vmatpush1.msra.mxu0 0.0
      %2335 = vmatprep.subr.mxu0 0.0
      %2336 = vmatpush1.msra.mxu0 0.0
      %2337 = vmatprep.subr.mxu0 0.0
      %2338 = vmatpush1.msra.mxu0 0.0
      %2339 = vmatprep.subr.mxu0 0.0
      %2340 = vmatpush1.msra.mxu0 0.0
      %2341 = vmatprep.subr.mxu0 0.0
      %2342 = vmatpush1.msra.mxu0 0.0
      %2343 = vmatprep.subr.mxu0 0.0
      %2344 = vmatpush1.msra.mxu0 0.0
      %2345 = vmatprep.subr.mxu0 0.0
      %2346 = vmatpush1.msra.mxu0 0.0
      %2347 = vmatprep.subr.mxu0 0.0
      %2348 = vmatpush1.msra.mxu0 0.0
      %2349 = vmatprep.subr.mxu0 0.0
      %2350 = vmatpush1.msra.mxu0 0.0
      %2351 = vmatprep.subr.mxu0 0.0
      %2352 = vmatpush1.msra.mxu0 0.0
      %2353 = vmatprep.subr.mxu0 0.0
      %2354 = vmatpush1.msra.mxu0 0.0
      %2355 = vmatprep.subr.mxu0 0.0
      %2356 = vmatpush1.msra.mxu0 0.0
      %2357 = vmatprep.subr.mxu0 0.0
      %2358 = vmatpush1.msra.mxu0 %v2296
      %2359 = vmatprep.subr.mxu0 0.0
      %2360 = vmatpush1.msra.mxu0 %v2295
      %2361 = vmatprep.subr.mxu0 0.0
      %2362 = vmatpush2.msra.mxu0 0.0
      %2363 = vmatprep.subr.mxu0 0.0
      %2364 = vmatpush2.msra.mxu0 0.0
      %2365 = vmatprep.subr.mxu0 0.0
      %2366 = vmatpush2.msra.mxu0 0.0
      %2367 = vmatprep.subr.mxu0 0.0
      %2368 = vmatpush2.msra.mxu0 0.0
      %2369 = vmatprep.subr.mxu0 0.0
      %2370 = vmatpush2.msra.mxu0 0.0
      %2371 = vmatprep.subr.mxu0 0.0
      %2372 = vmatpush2.msra.mxu0 0.0
      %2373 = vmatprep.subr.mxu0 0.0
      %2374 = vmatpush2.msra.mxu0 0.0
      %2375 = vmatprep.subr.mxu0 0.0
      %2376 = vmatpush2.msra.mxu0 0.0
      %2377 = vmatprep.subr.mxu0 0.0
      %2378 = vmatpush2.msra.mxu0 0.0
      %2379 = vmatprep.subr.mxu0 0.0
      %2380 = vmatpush2.msra.mxu0 0.0
      %2381 = vmatprep.subr.mxu0 0.0
      %2382 = vmatpush2.msra.mxu0 0.0
      %2383 = vmatprep.subr.mxu0 0.0
      %2384 = vmatpush2.msra.mxu0 0.0
      %2385 = vmatprep.subr.mxu0 0.0
      %2386 = vmatpush2.msra.mxu0 0.0
      %2387 = vmatprep.subr.mxu0 0.0
      %2388 = vmatpush2.msra.mxu0 0.0
      %2389 = vmatprep.subr.mxu0 0.0
      %2390 = vmatpush2.msra.mxu0 0.0
      %2391 = vmatprep.subr.mxu0 0.0
      %2392 = vmatpush2.msra.mxu0 0.0
      %2393 = vmatprep.mubr.f32.mxu0 0.0
      %2394 = vmatmul.mubr.f32.gmra.mxu0 %v2306
      %v2395 = vpop.f32.mrf.mxu0
      %v2396 = vadd.f32 %v2297, %v2395
      %v2397 = vpop.f32.mrf.mxu0
      %2398 = vmatprep.mubr.f32.mxu0 0.0
      %2399 = vmatmul.mubr.f32.gmra.mxu0 %v2309
      %v2400 = vpop.f32.mrf.mxu0
      %v2401 = vadd.f32 %v2298, %v2400
      %v2402 = vpop.f32.mrf.mxu0
      %2403 = vmatprep.mubr.f32.mxu0 0.0
      %2404 = vmatmul.mubr.f32.gmra.mxu0 %v2312
      %v2405 = vpop.f32.mrf.mxu0
      %v2406 = vadd.f32 %v2299, %v2405
      %v2407 = vpop.f32.mrf.mxu0
      %2408 = vmatprep.mubr.f32.mxu0 0.0
      %2409 = vmatmul.mubr.f32.gmra.mxu0 %v2315
      %v2410 = vpop.f32.mrf.mxu0
      %v2411 = vadd.f32 %v2300, %v2410
      %v2412 = vpop.f32.mrf.mxu0
      %2413 = vmatprep.mubr.f32.mxu0 0.0
      %2414 = vmatmul.mubr.f32.gmra.mxu0 %v2318
      %v2415 = vpop.f32.mrf.mxu0
      %v2416 = vadd.f32 %v2301, %v2415
      %v2417 = vpop.f32.mrf.mxu0
      %2418 = vmatprep.mubr.f32.mxu0 0.0
      %2419 = vmatmul.mubr.f32.gmra.mxu0 %v2321
      %v2420 = vpop.f32.mrf.mxu0
      %v2421 = vadd.f32 %v2302, %v2420
      %v2422 = vpop.f32.mrf.mxu0
      %2423 = vmatprep.mubr.f32.mxu0 0.0
      %2424 = vmatmul.mubr.f32.gmra.mxu0 %v2324
      %v2425 = vpop.f32.mrf.mxu0
      %v2426 = vadd.f32 %v2303, %v2425
      %v2427 = vpop.f32.mrf.mxu0
      %2428 = vmatprep.mubr.f32.mxu0 0.0
      %2429 = vmatmul.mubr.f32.gmra.mxu0 %v2327
      %v2430 = vpop.f32.mrf.mxu0
      %v2431 = vadd.f32 %v2304, %v2430
      %v2432 = vpop.f32.mrf.mxu0
      %2433 = vdwg.mxu0
      %v2434 = vmax.f32 %v2396, -1.0
      %v2435 = vmax.f32 %v2401, -1.0
      %v2436 = vmax.f32 %v2406, -1.0
      %v2437 = vmax.f32 %v2411, -1.0
      %v2438 = vmax.f32 %v2416, -1.0
      %v2439 = vmax.f32 %v2421, -1.0
      %v2440 = vmax.f32 %v2426, -1.0
      %v2441 = vmax.f32 %v2431, -1.0
      %v2442 = vmin.f32 %v2434, 1.0
      %v2443 = vmin.f32 %v2435, 1.0
      %v2444 = vmin.f32 %v2436, 1.0
      %v2445 = vmin.f32 %v2437, 1.0
      %v2446 = vmin.f32 %v2438, 1.0
      %v2447 = vmin.f32 %v2439, 1.0
      %v2448 = vmin.f32 %v2440, 1.0
      %v2449 = vmin.f32 %v2441, 1.0
      %vm2450 = vcmask 31744
      %2451 = vst.msk [vmem:[%s620] sm:$0xff] %vm2450, %v2442
      %2452 = vst.msk [vmem:[%s620 + $0x8] sm:$0xff] %vm2450, %v2443
      %2453 = vst.msk [vmem:[%s620 + $0x10] sm:$0xff] %vm2450, %v2444
      %2454 = vst.msk [vmem:[%s620 + $0x18] sm:$0xff] %vm2450, %v2445
      %2455 = vst.msk [vmem:[%s620 + $0x20] sm:$0xff] %vm2450, %v2446
      %2456 = vst.msk [vmem:[%s620 + $0x28] sm:$0xff] %vm2450, %v2447
      %2457 = vst.msk [vmem:[%s620 + $0x30] sm:$0xff] %vm2450, %v2448
      %2458 = vst.msk [vmem:[%s620 + $0x38] sm:$0xff] %vm2450, %v2449
      %p2459 = scmp.lt.s32.totalorder %s30, 1
      %s2460 = scalar_select %p2459, %s30, 1
      %s2461 = smul.addr %s2460, 8
      %s2462 = smul.addr %s2461, 8
      %s2463 = scalar_lea.vmem %s16, %s2462
      %p2464 = scmp.lt.s32.totalorder %s30, 1
      %s2465 = scalar_select %p2464, %s30, 1
      %s2466 = smul.addr %s2465, 8
      %s2467 = smul.addr %s2466, 8
      %s2468 = scalar_lea.vmem %s17, %s2467
      %p2469 = scmp.lt.s32.totalorder %s30, 1
      %s2470 = scalar_select %p2469, %s30, 1
      %s2471 = smul.addr %s2470, 8
      %s2472 = smul.addr %s2471, 8
      %s2473 = scalar_lea.vmem %s18, %s2472
      // Predicated region
      $region85: #{transformer_encoder_forward.2} parent=83 // pred_check
        %p2474 = pneg %p394
      $region86: #{transformer_encoder_forward.2} parent=83 // pred_check_branch
        %2476 = sbr.rel (%p2474) target = $region88
      $region87: #{transformer_encoder_forward.2} parent=83 // pred_region
        _
      $region88: #{transformer_encoder_forward.2} parent=83 // pred_fallthru
        _
      // Predicated region
      $region89: #{transformer_encoder_forward.2} parent=83 // pred_check
        %p2477 = pneg %p420
      $region90: #{transformer_encoder_forward.2} parent=83 // pred_check_branch
        %2479 = sbr.rel (%p2477) target = $region92
      $region91: #{transformer_encoder_forward.2} parent=83 // pred_region
        _
      $region92: #{transformer_encoder_forward.2} parent=83 // pred_fallthru
        _
      // Predicated region
      $region93: #{transformer_encoder_forward.2} parent=83 // pred_check
        %p2480 = pneg %p446
      $region94: #{transformer_encoder_forward.2} parent=83 // pred_check_branch
        %2482 = sbr.rel (%p2480) target = $region96
      $region95: #{transformer_encoder_forward.2} parent=83 // pred_region
        _
      $region96: #{transformer_encoder_forward.2} parent=83 // pred_fallthru
        _
    $region84: #{transformer_encoder_forward.2} parent=5 // pred_fallthru
      _
    %p2483 = scmp.le.s32.totalorder 2, %s25
    // Predicated region
    $region97: #{transformer_encoder_forward.2} parent=5 // pred_check
      %p2484 = pneg %p2483
    $region98: #{transformer_encoder_forward.2} parent=5 // pred_check_branch
      %2486 = sbr.rel (%p2484) target = $region100
    $region99: #{transformer_encoder_forward.2} parent=5 // pred_region
      %s2487 = ssub.s32 %s25, 2
      // Predicated region
      $region101: #{transformer_encoder_forward.2} parent=99 // pred_check
        %p2488 = pneg %p400
      $region102: #{transformer_encoder_forward.2} parent=99 // pred_check_branch
        %2490 = sbr.rel (%p2488) target = $region104
      $region103: #{transformer_encoder_forward.2} parent=99 // pred_region
        %p2491 = scmp.lt.s32.totalorder %s31, 1
        %s2492 = scalar_select %p2491, %s31, 1
        %s2493 = smul.addr %s2492, 8
        %s2494 = smul.addr %s2493, 8
        %s2495 = scalar_lea.vmem %s16, %s2494
      $region104: #{transformer_encoder_forward.2} parent=99 // pred_fallthru
        _
      // Predicated region
      $region105: #{transformer_encoder_forward.2} parent=99 // pred_check
        %p2496 = pneg %p426
      $region106: #{transformer_encoder_forward.2} parent=99 // pred_check_branch
        %2498 = sbr.rel (%p2496) target = $region108
      $region107: #{transformer_encoder_forward.2} parent=99 // pred_region
        %p2499 = scmp.lt.s32.totalorder %s31, 1
        %s2500 = scalar_select %p2499, %s31, 1
        %s2501 = smul.addr %s2500, 8
        %s2502 = smul.addr %s2501, 8
        %s2503 = scalar_lea.vmem %s17, %s2502
      $region108: #{transformer_encoder_forward.2} parent=99 // pred_fallthru
        _
      // Predicated region
      $region109: #{transformer_encoder_forward.2} parent=99 // pred_check
        %p2504 = pneg %p452
      $region110: #{transformer_encoder_forward.2} parent=99 // pred_check_branch
        %2506 = sbr.rel (%p2504) target = $region112
      $region111: #{transformer_encoder_forward.2} parent=99 // pred_region
        %p2507 = scmp.lt.s32.totalorder %s31, 1
        %s2508 = scalar_select %p2507, %s31, 1
        %s2509 = smul.addr %s2508, 8
        %s2510 = smul.addr %s2509, 8
        %s2511 = scalar_lea.vmem %s18, %s2510
      $region112: #{transformer_encoder_forward.2} parent=99 // pred_fallthru
        _
    $region100: #{transformer_encoder_forward.2} parent=5 // pred_fallthru
      _
  $region6: #{transformer_encoder_forward.2} parent=0 // loop_footer
    %s29 = sadd.s32 1, %s25
  $region7: #{transformer_encoder_forward.2} parent=0 // loop_footer_branch
    %24 = sbr.rel target = $region3
  $region8: #{transformer_encoder_forward.2} parent=0 // loop_exit
    _

// kernel: transformer_encoder_forward.3
$region0: #{transformer_encoder_forward.3}
  #allocation0 [shape = 'u32[]', space=smem, size = 0x4, offset = 0x4, fixed_abs, tag = 'smem constant byte address 0x4 - core index']
  #allocation1 [shape = 'u32[144,128]{1,0:T(1,128)}', space=vmem, size = 0x12000, scoped, tag = 'internal scratch']
  #allocation2 [shape = 'f32[64,16]{1,0:T(8,128)}', space=vmem, size = 0x8000, scoped, tag = 'scratch operand']
  #allocation3 [shape = 'f32[64,16]{1,0:T(8,128)}', space=vmem, size = 0x8000, scoped, tag = 'scratch operand']
  %s0 = inlined_call_operand.vmem [shape: f32[2,64,16], index: 0, kind: input, shape index: {}, may-alias: {0,24}]
  %s1 = inlined_call_operand.vmem [shape: f32[2,64,16], index: 1, kind: input, shape index: {}]
  %s2 = inlined_call_operand.vmem [shape: f32[2,64,16], index: 2, kind: input, shape index: {}]
  %s3 = inlined_call_operand.vmem [shape: f32[2,64,16], index: 3, kind: input, shape index: {}]
  %s4 = inlined_call_operand.vmem [shape: bf16[16,32], index: 4, kind: input, shape index: {}]
  %s5 = inlined_call_operand.vmem [shape: f32[1,32], index: 5, kind: input, shape index: {}]
  %s6 = inlined_call_operand.vmem [shape: bf16[16,16], index: 6, kind: input, shape index: {}]
  %s7 = inlined_call_operand.vmem [shape: f32[1,16], index: 7, kind: input, shape index: {}]
  %s8 = inlined_call_operand.vmem [shape: f32[1,16], index: 8, kind: input, shape index: {}]
  %s9 = inlined_call_operand.vmem [shape: f32[1,16], index: 9, kind: input, shape index: {}]
  %s10 = inlined_call_operand.vmem [shape: f32[1,16], index: 10, kind: input, shape index: {}]
  %s11 = inlined_call_operand.vmem [shape: f32[1,16], index: 11, kind: input, shape index: {}]
  %s12 = inlined_call_operand.vmem [shape: bf16[16,16], index: 12, kind: input, shape index: {}]
  %s13 = inlined_call_operand.vmem [shape: f32[9,16], index: 13, kind: input, shape index: {}]
  %s14 = inlined_call_operand.vmem [shape: bf16[16,32], index: 14, kind: input, shape index: {}]
  %s15 = inlined_call_operand.vmem [shape: f32[9,32], index: 15, kind: input, shape index: {}]
  %s16 = inlined_call_operand.vmem [shape: bf16[16,16], index: 16, kind: input, shape index: {}]
  %s17 = inlined_call_operand.vmem [shape: f32[2], index: 17, kind: input, shape index: {}]
  %s18 = inlined_call_operand.vmem [shape: f32[1,16], index: 18, kind: input, shape index: {}]
  %s19 = inlined_call_operand.vmem [shape: f32[1,16], index: 19, kind: input, shape index: {}]
  %s20 = inlined_call_operand.vmem [shape: bf16[16,64], index: 20, kind: input, shape index: {}]
  %s21 = inlined_call_operand.vmem [shape: f32[9,64], index: 21, kind: input, shape index: {}]
  %s22 = inlined_call_operand.vmem [shape: bf16[32,16], index: 22, kind: input, shape index: {}]
  %s23 = inlined_call_operand.vmem [shape: f32[9,64,1], index: 23, kind: input, shape index: {}]
  %s24 = inlined_call_operand.vmem [shape: f32[2,64,16], index: 24, kind: output, shape index: {}, may-alias: {0,24}]
  %s25 = sld [smem:[#allocation0]]
  $region133: #{transformer_encoder_forward.3} parent=0
    _
  %s27 = ssub.s32 1, %s25
  %s28 = scalar_select 0, %s27, %s25
  $region1: #{transformer_encoder_forward.3} parent=0
    #allocation4 [shape = 'u8[512]{0}', space=smem, size = 0x200, scoped, tag = 'input window, operand 17, single buffered']
    #allocation5 [shape = 's32[2]{0}', space=sflag, size = 0x8, scoped, tag = 'scoped memory for transformer_encoder_forward.3']
    %29 = vsyncpa [#allocation5], 0
    loop: start=0, step=1, limit=4
    $region2: #{transformer_encoder_forward.3} parent=1 // loop_pre_header
      _
    $region3: #{transformer_encoder_forward.3} parent=1 // loop_header
      %s31 = sphi 0, %s35
      %p32 = scmp.ge.s32.totalorder %s31, 4
      %s41 = sphi 0, %s43
      %s44 = sphi 0, %s41
      %s45 = sphi 0, %s44
      %s61 = sphi 0, %s45
      %s67 = sphi 0, %s69
      %s70 = sphi 0, %s67
      %s71 = sphi 0, %s70
      %s87 = sphi 0, %s71
      %s93 = sphi 0, %s95
      %s96 = sphi 0, %s93
      %s97 = sphi 0, %s96
      %s113 = sphi 0, %s97
      %s119 = sphi 0, %s121
      %s122 = sphi 0, %s119
      %s123 = sphi 0, %s122
      %s139 = sphi 0, %s123
      %s143 = sphi 0, %s143
      %s145 = sphi 0, %s143
      %s146 = sphi 0, %s145
      %s160 = sphi 0, %s146
      %s164 = sphi 0, %s164
      %s166 = sphi 0, %s164
      %s167 = sphi 0, %s166
      %s181 = sphi 0, %s167
      %s185 = sphi 0, %s185
      %s187 = sphi 0, %s185
      %s188 = sphi 0, %s187
      %s202 = sphi 0, %s188
      %s206 = sphi 0, %s206
      %s208 = sphi 0, %s206
      %s209 = sphi 0, %s208
      %s223 = sphi 0, %s209
      %s227 = sphi 0, %s227
      %s229 = sphi 0, %s227
      %s230 = sphi 0, %s229
      %s244 = sphi 0, %s230
      %s248 = sphi 0, %s248
      %s250 = sphi 0, %s248
      %s251 = sphi 0, %s250
      %s265 = sphi 0, %s251
      %s269 = sphi 0, %s269
      %s271 = sphi 0, %s269
      %s272 = sphi 0, %s271
      %s286 = sphi 0, %s272
      %s290 = sphi 0, %s290
      %s292 = sphi 0, %s290
      %s293 = sphi 0, %s292
      %s307 = sphi 0, %s293
      %s311 = sphi 0, %s311
      %s313 = sphi 0, %s311
      %s314 = sphi 0, %s313
      %s328 = sphi 0, %s314
      %s332 = sphi 0, %s332
      %s334 = sphi 0, %s332
      %s335 = sphi 0, %s334
      %s349 = sphi 0, %s335
      %s353 = sphi 0, %s353
      %s355 = sphi 0, %s353
      %s356 = sphi 0, %s355
      %s370 = sphi 0, %s356
      %s374 = sphi 0, %s374
      %s376 = sphi 0, %s374
      %s377 = sphi 0, %s376
      %s391 = sphi 0, %s377
      %s395 = sphi 0, %s395
      %s397 = sphi 0, %s395
      %s398 = sphi 0, %s397
      %s412 = sphi 0, %s398
      %s416 = sphi 0, %s416
      %s418 = sphi 0, %s416
      %s419 = sphi 0, %s418
      %s433 = sphi 0, %s419
      %s437 = sphi 0, %s437
      %s439 = sphi 0, %s437
      %s440 = sphi 0, %s439
      %s454 = sphi 0, %s440
      %s458 = sphi 0, %s458
      %s460 = sphi 0, %s458
      %s461 = sphi 0, %s460
      %s475 = sphi 0, %s461
      %s479 = sphi 0, %s479
      %s481 = sphi 0, %s479
      %s482 = sphi 0, %s481
      %s496 = sphi 0, %s482
      %s500 = sphi 0, %s500
      %s502 = sphi 0, %s500
      %s503 = sphi 0, %s502
      %s517 = sphi 0, %s503
      %s521 = sphi 0, %s521
      %s523 = sphi 0, %s521
      %s524 = sphi 0, %s523
      %s538 = sphi 0, %s524
      %s542 = sphi 0, %s542
      %s544 = sphi 0, %s542
      %s545 = sphi 0, %s544
      %s559 = sphi 0, %s545
      %s565 = sphi 0, %s567
      %s568 = sphi 0, %s565
      %s569 = sphi 0, %s568
      %s585 = sphi 0, %s569
    $region4: #{transformer_encoder_forward.3} parent=1 // loop_header_branch
      %34 = sbr.rel (%p32) target = $region8
    $region5: #{transformer_encoder_forward.3} parent=1 // loop_body
      %s36 = ssub.s32 %s31, 1
      %s37 = ssub.s32 %s31, 2
      %s38 = sadd.s32 %s31, 1
      %s39 = ssub.s32 %s31, %s38
      %p40 = scmp.eq.s32.totalorder %s39, 0
      %s42 = sadd.s32 %s41, 1
      %s43 = scalar_select %p40, %s41, %s42
      %p46 = pneg %p40
      %p47 = scmp.eq.s32.totalorder %s31, 1
      %p48 = por %p46, %p47
      %p49 = scmp.ne.s32.totalorder %s41, %s44
      %p50 = scmp.eq.s32.totalorder %s31, 0
      %p51 = por %p49, %p50
      %p52 = scmp.ne.s32.totalorder %s41, %s44
      %p53 = scmp.eq.s32.totalorder %s36, 1
      %p54 = por %p52, %p53
      %p55 = scmp.ne.s32.totalorder %s44, %s45
      %p56 = scmp.eq.s32.totalorder %s36, 0
      %p57 = por %p55, %p56
      %p58 = scmp.ne.s32.totalorder %s44, %s45
      %p59 = scmp.eq.s32.totalorder %s37, 1
      %p60 = por %p58, %p59
      %p62 = scmp.ne.s32.totalorder %s45, %s61
      %p63 = scmp.eq.s32.totalorder %s37, 0
      %p64 = por %p62, %p63
      %s65 = ssub.s32 %s31, %s38
      %p66 = scmp.eq.s32.totalorder %s65, 0
      %s68 = sadd.s32 %s67, 1
      %s69 = scalar_select %p66, %s67, %s68
      %p72 = pneg %p66
      %p73 = scmp.eq.s32.totalorder %s31, 1
      %p74 = por %p72, %p73
      %p75 = scmp.ne.s32.totalorder %s67, %s70
      %p76 = scmp.eq.s32.totalorder %s31, 0
      %p77 = por %p75, %p76
      %p78 = scmp.ne.s32.totalorder %s67, %s70
      %p79 = scmp.eq.s32.totalorder %s36, 1
      %p80 = por %p78, %p79
      %p81 = scmp.ne.s32.totalorder %s70, %s71
      %p82 = scmp.eq.s32.totalorder %s36, 0
      %p83 = por %p81, %p82
      %p84 = scmp.ne.s32.totalorder %s70, %s71
      %p85 = scmp.eq.s32.totalorder %s37, 1
      %p86 = por %p84, %p85
      %p88 = scmp.ne.s32.totalorder %s71, %s87
      %p89 = scmp.eq.s32.totalorder %s37, 0
      %p90 = por %p88, %p89
      %s91 = ssub.s32 %s31, %s38
      %p92 = scmp.eq.s32.totalorder %s91, 0
      %s94 = sadd.s32 %s93, 1
      %s95 = scalar_select %p92, %s93, %s94
      %p98 = pneg %p92
      %p99 = scmp.eq.s32.totalorder %s31, 1
      %p100 = por %p98, %p99
      %p101 = scmp.ne.s32.totalorder %s93, %s96
      %p102 = scmp.eq.s32.totalorder %s31, 0
      %p103 = por %p101, %p102
      %p104 = scmp.ne.s32.totalorder %s93, %s96
      %p105 = scmp.eq.s32.totalorder %s36, 1
      %p106 = por %p104, %p105
      %p107 = scmp.ne.s32.totalorder %s96, %s97
      %p108 = scmp.eq.s32.totalorder %s36, 0
      %p109 = por %p107, %p108
      %p110 = scmp.ne.s32.totalorder %s96, %s97
      %p111 = scmp.eq.s32.totalorder %s37, 1
      %p112 = por %p110, %p111
      %p114 = scmp.ne.s32.totalorder %s97, %s113
      %p115 = scmp.eq.s32.totalorder %s37, 0
      %p116 = por %p114, %p115
      %s117 = ssub.s32 %s31, %s38
      %p118 = scmp.eq.s32.totalorder %s117, 0
      %s120 = sadd.s32 %s119, 1
      %s121 = scalar_select %p118, %s119, %s120
      %p124 = pneg %p118
      %p125 = scmp.eq.s32.totalorder %s31, 1
      %p126 = por %p124, %p125
      %p127 = scmp.ne.s32.totalorder %s119, %s122
      %p128 = scmp.eq.s32.totalorder %s31, 0
      %p129 = por %p127, %p128
      %p130 = scmp.ne.s32.totalorder %s119, %s122
      %p131 = scmp.eq.s32.totalorder %s36, 1
      %p132 = por %p130, %p131
      %p133 = scmp.ne.s32.totalorder %s122, %s123
      %p134 = scmp.eq.s32.totalorder %s36, 0
      %p135 = por %p133, %p134
      %p136 = scmp.ne.s32.totalorder %s122, %s123
      %p137 = scmp.eq.s32.totalorder %s37, 1
      %p138 = por %p136, %p137
      %p140 = scmp.ne.s32.totalorder %s123, %s139
      %p141 = scmp.eq.s32.totalorder %s37, 0
      %p142 = por %p140, %p141
      %s144 = sadd.s32 %s143, 1
      %p147 = scmp.eq.s32.totalorder %s31, 1
      %p148 = scmp.ne.s32.totalorder %s143, %s145
      %p149 = scmp.eq.s32.totalorder %s31, 0
      %p150 = por %p148, %p149
      %p151 = scmp.ne.s32.totalorder %s143, %s145
      %p152 = scmp.eq.s32.totalorder %s36, 1
      %p153 = por %p151, %p152
      %p154 = scmp.ne.s32.totalorder %s145, %s146
      %p155 = scmp.eq.s32.totalorder %s36, 0
      %p156 = por %p154, %p155
      %p157 = scmp.ne.s32.totalorder %s145, %s146
      %p158 = scmp.eq.s32.totalorder %s37, 1
      %p159 = por %p157, %p158
      %p161 = scmp.ne.s32.totalorder %s146, %s160
      %p162 = scmp.eq.s32.totalorder %s37, 0
      %p163 = por %p161, %p162
      %s165 = sadd.s32 %s164, 1
      %p168 = scmp.eq.s32.totalorder %s31, 1
      %p169 = scmp.ne.s32.totalorder %s164, %s166
      %p170 = scmp.eq.s32.totalorder %s31, 0
      %p171 = por %p169, %p170
      %p172 = scmp.ne.s32.totalorder %s164, %s166
      %p173 = scmp.eq.s32.totalorder %s36, 1
      %p174 = por %p172, %p173
      %p175 = scmp.ne.s32.totalorder %s166, %s167
      %p176 = scmp.eq.s32.totalorder %s36, 0
      %p177 = por %p175, %p176
      %p178 = scmp.ne.s32.totalorder %s166, %s167
      %p179 = scmp.eq.s32.totalorder %s37, 1
      %p180 = por %p178, %p179
      %p182 = scmp.ne.s32.totalorder %s167, %s181
      %p183 = scmp.eq.s32.totalorder %s37, 0
      %p184 = por %p182, %p183
      %s186 = sadd.s32 %s185, 1
      %p189 = scmp.eq.s32.totalorder %s31, 1
      %p190 = scmp.ne.s32.totalorder %s185, %s187
      %p191 = scmp.eq.s32.totalorder %s31, 0
      %p192 = por %p190, %p191
      %p193 = scmp.ne.s32.totalorder %s185, %s187
      %p194 = scmp.eq.s32.totalorder %s36, 1
      %p195 = por %p193, %p194
      %p196 = scmp.ne.s32.totalorder %s187, %s188
      %p197 = scmp.eq.s32.totalorder %s36, 0
      %p198 = por %p196, %p197
      %p199 = scmp.ne.s32.totalorder %s187, %s188
      %p200 = scmp.eq.s32.totalorder %s37, 1
      %p201 = por %p199, %p200
      %p203 = scmp.ne.s32.totalorder %s188, %s202
      %p204 = scmp.eq.s32.totalorder %s37, 0
      %p205 = por %p203, %p204
      %s207 = sadd.s32 %s206, 1
      %p210 = scmp.eq.s32.totalorder %s31, 1
      %p211 = scmp.ne.s32.totalorder %s206, %s208
      %p212 = scmp.eq.s32.totalorder %s31, 0
      %p213 = por %p211, %p212
      %p214 = scmp.ne.s32.totalorder %s206, %s208
      %p215 = scmp.eq.s32.totalorder %s36, 1
      %p216 = por %p214, %p215
      %p217 = scmp.ne.s32.totalorder %s208, %s209
      %p218 = scmp.eq.s32.totalorder %s36, 0
      %p219 = por %p217, %p218
      %p220 = scmp.ne.s32.totalorder %s208, %s209
      %p221 = scmp.eq.s32.totalorder %s37, 1
      %p222 = por %p220, %p221
      %p224 = scmp.ne.s32.totalorder %s209, %s223
      %p225 = scmp.eq.s32.totalorder %s37, 0
      %p226 = por %p224, %p225
      %s228 = sadd.s32 %s227, 1
      %p231 = scmp.eq.s32.totalorder %s31, 1
      %p232 = scmp.ne.s32.totalorder %s227, %s229
      %p233 = scmp.eq.s32.totalorder %s31, 0
      %p234 = por %p232, %p233
      %p235 = scmp.ne.s32.totalorder %s227, %s229
      %p236 = scmp.eq.s32.totalorder %s36, 1
      %p237 = por %p235, %p236
      %p238 = scmp.ne.s32.totalorder %s229, %s230
      %p239 = scmp.eq.s32.totalorder %s36, 0
      %p240 = por %p238, %p239
      %p241 = scmp.ne.s32.totalorder %s229, %s230
      %p242 = scmp.eq.s32.totalorder %s37, 1
      %p243 = por %p241, %p242
      %p245 = scmp.ne.s32.totalorder %s230, %s244
      %p246 = scmp.eq.s32.totalorder %s37, 0
      %p247 = por %p245, %p246
      %s249 = sadd.s32 %s248, 1
      %p252 = scmp.eq.s32.totalorder %s31, 1
      %p253 = scmp.ne.s32.totalorder %s248, %s250
      %p254 = scmp.eq.s32.totalorder %s31, 0
      %p255 = por %p253, %p254
      %p256 = scmp.ne.s32.totalorder %s248, %s250
      %p257 = scmp.eq.s32.totalorder %s36, 1
      %p258 = por %p256, %p257
      %p259 = scmp.ne.s32.totalorder %s250, %s251
      %p260 = scmp.eq.s32.totalorder %s36, 0
      %p261 = por %p259, %p260
      %p262 = scmp.ne.s32.totalorder %s250, %s251
      %p263 = scmp.eq.s32.totalorder %s37, 1
      %p264 = por %p262, %p263
      %p266 = scmp.ne.s32.totalorder %s251, %s265
      %p267 = scmp.eq.s32.totalorder %s37, 0
      %p268 = por %p266, %p267
      %s270 = sadd.s32 %s269, 1
      %p273 = scmp.eq.s32.totalorder %s31, 1
      %p274 = scmp.ne.s32.totalorder %s269, %s271
      %p275 = scmp.eq.s32.totalorder %s31, 0
      %p276 = por %p274, %p275
      %p277 = scmp.ne.s32.totalorder %s269, %s271
      %p278 = scmp.eq.s32.totalorder %s36, 1
      %p279 = por %p277, %p278
      %p280 = scmp.ne.s32.totalorder %s271, %s272
      %p281 = scmp.eq.s32.totalorder %s36, 0
      %p282 = por %p280, %p281
      %p283 = scmp.ne.s32.totalorder %s271, %s272
      %p284 = scmp.eq.s32.totalorder %s37, 1
      %p285 = por %p283, %p284
      %p287 = scmp.ne.s32.totalorder %s272, %s286
      %p288 = scmp.eq.s32.totalorder %s37, 0
      %p289 = por %p287, %p288
      %s291 = sadd.s32 %s290, 1
      %p294 = scmp.eq.s32.totalorder %s31, 1
      %p295 = scmp.ne.s32.totalorder %s290, %s292
      %p296 = scmp.eq.s32.totalorder %s31, 0
      %p297 = por %p295, %p296
      %p298 = scmp.ne.s32.totalorder %s290, %s292
      %p299 = scmp.eq.s32.totalorder %s36, 1
      %p300 = por %p298, %p299
      %p301 = scmp.ne.s32.totalorder %s292, %s293
      %p302 = scmp.eq.s32.totalorder %s36, 0
      %p303 = por %p301, %p302
      %p304 = scmp.ne.s32.totalorder %s292, %s293
      %p305 = scmp.eq.s32.totalorder %s37, 1
      %p306 = por %p304, %p305
      %p308 = scmp.ne.s32.totalorder %s293, %s307
      %p309 = scmp.eq.s32.totalorder %s37, 0
      %p310 = por %p308, %p309
      %s312 = sadd.s32 %s311, 1
      %p315 = scmp.eq.s32.totalorder %s31, 1
      %p316 = scmp.ne.s32.totalorder %s311, %s313
      %p317 = scmp.eq.s32.totalorder %s31, 0
      %p318 = por %p316, %p317
      %p319 = scmp.ne.s32.totalorder %s311, %s313
      %p320 = scmp.eq.s32.totalorder %s36, 1
      %p321 = por %p319, %p320
      %p322 = scmp.ne.s32.totalorder %s313, %s314
      %p323 = scmp.eq.s32.totalorder %s36, 0
      %p324 = por %p322, %p323
      %p325 = scmp.ne.s32.totalorder %s313, %s314
      %p326 = scmp.eq.s32.totalorder %s37, 1
      %p327 = por %p325, %p326
      %p329 = scmp.ne.s32.totalorder %s314, %s328
      %p330 = scmp.eq.s32.totalorder %s37, 0
      %p331 = por %p329, %p330
      %s333 = sadd.s32 %s332, 1
      %p336 = scmp.eq.s32.totalorder %s31, 1
      %p337 = scmp.ne.s32.totalorder %s332, %s334
      %p338 = scmp.eq.s32.totalorder %s31, 0
      %p339 = por %p337, %p338
      %p340 = scmp.ne.s32.totalorder %s332, %s334
      %p341 = scmp.eq.s32.totalorder %s36, 1
      %p342 = por %p340, %p341
      %p343 = scmp.ne.s32.totalorder %s334, %s335
      %p344 = scmp.eq.s32.totalorder %s36, 0
      %p345 = por %p343, %p344
      %p346 = scmp.ne.s32.totalorder %s334, %s335
      %p347 = scmp.eq.s32.totalorder %s37, 1
      %p348 = por %p346, %p347
      %p350 = scmp.ne.s32.totalorder %s335, %s349
      %p351 = scmp.eq.s32.totalorder %s37, 0
      %p352 = por %p350, %p351
      %s354 = sadd.s32 %s353, 1
      %p357 = scmp.eq.s32.totalorder %s31, 1
      %p358 = scmp.ne.s32.totalorder %s353, %s355
      %p359 = scmp.eq.s32.totalorder %s31, 0
      %p360 = por %p358, %p359
      %p361 = scmp.ne.s32.totalorder %s353, %s355
      %p362 = scmp.eq.s32.totalorder %s36, 1
      %p363 = por %p361, %p362
      %p364 = scmp.ne.s32.totalorder %s355, %s356
      %p365 = scmp.eq.s32.totalorder %s36, 0
      %p366 = por %p364, %p365
      %p367 = scmp.ne.s32.totalorder %s355, %s356
      %p368 = scmp.eq.s32.totalorder %s37, 1
      %p369 = por %p367, %p368
      %p371 = scmp.ne.s32.totalorder %s356, %s370
      %p372 = scmp.eq.s32.totalorder %s37, 0
      %p373 = por %p371, %p372
      %s375 = sadd.s32 %s374, 1
      %p378 = scmp.eq.s32.totalorder %s31, 1
      %p379 = scmp.ne.s32.totalorder %s374, %s376
      %p380 = scmp.eq.s32.totalorder %s31, 0
      %p381 = por %p379, %p380
      %p382 = scmp.ne.s32.totalorder %s374, %s376
      %p383 = scmp.eq.s32.totalorder %s36, 1
      %p384 = por %p382, %p383
      %p385 = scmp.ne.s32.totalorder %s376, %s377
      %p386 = scmp.eq.s32.totalorder %s36, 0
      %p387 = por %p385, %p386
      %p388 = scmp.ne.s32.totalorder %s376, %s377
      %p389 = scmp.eq.s32.totalorder %s37, 1
      %p390 = por %p388, %p389
      %p392 = scmp.ne.s32.totalorder %s377, %s391
      %p393 = scmp.eq.s32.totalorder %s37, 0
      %p394 = por %p392, %p393
      %s396 = sadd.s32 %s395, 1
      %p399 = scmp.eq.s32.totalorder %s31, 1
      %p400 = scmp.ne.s32.totalorder %s395, %s397
      %p401 = scmp.eq.s32.totalorder %s31, 0
      %p402 = por %p400, %p401
      %p403 = scmp.ne.s32.totalorder %s395, %s397
      %p404 = scmp.eq.s32.totalorder %s36, 1
      %p405 = por %p403, %p404
      %p406 = scmp.ne.s32.totalorder %s397, %s398
      %p407 = scmp.eq.s32.totalorder %s36, 0
      %p408 = por %p406, %p407
      %p409 = scmp.ne.s32.totalorder %s397, %s398
      %p410 = scmp.eq.s32.totalorder %s37, 1
      %p411 = por %p409, %p410
      %p413 = scmp.ne.s32.totalorder %s398, %s412
      %p414 = scmp.eq.s32.totalorder %s37, 0
      %p415 = por %p413, %p414
      %s417 = sadd.s32 %s416, 1
      %p420 = scmp.eq.s32.totalorder %s31, 1
      %p421 = scmp.ne.s32.totalorder %s416, %s418
      %p422 = scmp.eq.s32.totalorder %s31, 0
      %p423 = por %p421, %p422
      %p424 = scmp.ne.s32.totalorder %s416, %s418
      %p425 = scmp.eq.s32.totalorder %s36, 1
      %p426 = por %p424, %p425
      %p427 = scmp.ne.s32.totalorder %s418, %s419
      %p428 = scmp.eq.s32.totalorder %s36, 0
      %p429 = por %p427, %p428
      %p430 = scmp.ne.s32.totalorder %s418, %s419
      %p431 = scmp.eq.s32.totalorder %s37, 1
      %p432 = por %p430, %p431
      %p434 = scmp.ne.s32.totalorder %s419, %s433
      %p435 = scmp.eq.s32.totalorder %s37, 0
      %p436 = por %p434, %p435
      %s438 = sadd.s32 %s437, 1
      %p441 = scmp.eq.s32.totalorder %s31, 1
      %p442 = scmp.ne.s32.totalorder %s437, %s439
      %p443 = scmp.eq.s32.totalorder %s31, 0
      %p444 = por %p442, %p443
      %p445 = scmp.ne.s32.totalorder %s437, %s439
      %p446 = scmp.eq.s32.totalorder %s36, 1
      %p447 = por %p445, %p446
      %p448 = scmp.ne.s32.totalorder %s439, %s440
      %p449 = scmp.eq.s32.totalorder %s36, 0
      %p450 = por %p448, %p449
      %p451 = scmp.ne.s32.totalorder %s439, %s440
      %p452 = scmp.eq.s32.totalorder %s37, 1
      %p453 = por %p451, %p452
      %p455 = scmp.ne.s32.totalorder %s440, %s454
      %p456 = scmp.eq.s32.totalorder %s37, 0
      %p457 = por %p455, %p456
      %s459 = sadd.s32 %s458, 1
      %p462 = scmp.eq.s32.totalorder %s31, 1
      %p463 = scmp.ne.s32.totalorder %s458, %s460
      %p464 = scmp.eq.s32.totalorder %s31, 0
      %p465 = por %p463, %p464
      %p466 = scmp.ne.s32.totalorder %s458, %s460
      %p467 = scmp.eq.s32.totalorder %s36, 1
      %p468 = por %p466, %p467
      %p469 = scmp.ne.s32.totalorder %s460, %s461
      %p470 = scmp.eq.s32.totalorder %s36, 0
      %p471 = por %p469, %p470
      %p472 = scmp.ne.s32.totalorder %s460, %s461
      %p473 = scmp.eq.s32.totalorder %s37, 1
      %p474 = por %p472, %p473
      %p476 = scmp.ne.s32.totalorder %s461, %s475
      %p477 = scmp.eq.s32.totalorder %s37, 0
      %p478 = por %p476, %p477
      %s480 = sadd.s32 %s479, 1
      %p483 = scmp.eq.s32.totalorder %s31, 1
      %p484 = scmp.ne.s32.totalorder %s479, %s481
      %p485 = scmp.eq.s32.totalorder %s31, 0
      %p486 = por %p484, %p485
      %p487 = scmp.ne.s32.totalorder %s479, %s481
      %p488 = scmp.eq.s32.totalorder %s36, 1
      %p489 = por %p487, %p488
      %p490 = scmp.ne.s32.totalorder %s481, %s482
      %p491 = scmp.eq.s32.totalorder %s36, 0
      %p492 = por %p490, %p491
      %p493 = scmp.ne.s32.totalorder %s481, %s482
      %p494 = scmp.eq.s32.totalorder %s37, 1
      %p495 = por %p493, %p494
      %p497 = scmp.ne.s32.totalorder %s482, %s496
      %p498 = scmp.eq.s32.totalorder %s37, 0
      %p499 = por %p497, %p498
      %s501 = sadd.s32 %s500, 1
      %p504 = scmp.eq.s32.totalorder %s31, 1
      %p505 = scmp.ne.s32.totalorder %s500, %s502
      %p506 = scmp.eq.s32.totalorder %s31, 0
      %p507 = por %p505, %p506
      %p508 = scmp.ne.s32.totalorder %s500, %s502
      %p509 = scmp.eq.s32.totalorder %s36, 1
      %p510 = por %p508, %p509
      %p511 = scmp.ne.s32.totalorder %s502, %s503
      %p512 = scmp.eq.s32.totalorder %s36, 0
      %p513 = por %p511, %p512
      %p514 = scmp.ne.s32.totalorder %s502, %s503
      %p515 = scmp.eq.s32.totalorder %s37, 1
      %p516 = por %p514, %p515
      %p518 = scmp.ne.s32.totalorder %s503, %s517
      %p519 = scmp.eq.s32.totalorder %s37, 0
      %p520 = por %p518, %p519
      %s522 = sadd.s32 %s521, 1
      %p525 = scmp.eq.s32.totalorder %s31, 1
      %p526 = scmp.ne.s32.totalorder %s521, %s523
      %p527 = scmp.eq.s32.totalorder %s31, 0
      %p528 = por %p526, %p527
      %p529 = scmp.ne.s32.totalorder %s521, %s523
      %p530 = scmp.eq.s32.totalorder %s36, 1
      %p531 = por %p529, %p530
      %p532 = scmp.ne.s32.totalorder %s523, %s524
      %p533 = scmp.eq.s32.totalorder %s36, 0
      %p534 = por %p532, %p533
      %p535 = scmp.ne.s32.totalorder %s523, %s524
      %p536 = scmp.eq.s32.totalorder %s37, 1
      %p537 = por %p535, %p536
      %p539 = scmp.ne.s32.totalorder %s524, %s538
      %p540 = scmp.eq.s32.totalorder %s37, 0
      %p541 = por %p539, %p540
      %s543 = sadd.s32 %s542, 1
      %p546 = scmp.eq.s32.totalorder %s31, 1
      %p547 = scmp.ne.s32.totalorder %s542, %s544
      %p548 = scmp.eq.s32.totalorder %s31, 0
      %p549 = por %p547, %p548
      %p550 = scmp.ne.s32.totalorder %s542, %s544
      %p551 = scmp.eq.s32.totalorder %s36, 1
      %p552 = por %p550, %p551
      %p553 = scmp.ne.s32.totalorder %s544, %s545
      %p554 = scmp.eq.s32.totalorder %s36, 0
      %p555 = por %p553, %p554
      %p556 = scmp.ne.s32.totalorder %s544, %s545
      %p557 = scmp.eq.s32.totalorder %s37, 1
      %p558 = por %p556, %p557
      %p560 = scmp.ne.s32.totalorder %s545, %s559
      %p561 = scmp.eq.s32.totalorder %s37, 0
      %p562 = por %p560, %p561
      %s563 = ssub.s32 %s31, %s38
      %p564 = scmp.eq.s32.totalorder %s563, 0
      %s566 = sadd.s32 %s565, 1
      %s567 = scalar_select %p564, %s565, %s566
      %p570 = pneg %p564
      %p571 = scmp.eq.s32.totalorder %s31, 1
      %p572 = por %p570, %p571
      %p573 = scmp.ne.s32.totalorder %s565, %s568
      %p574 = scmp.eq.s32.totalorder %s31, 0
      %p575 = por %p573, %p574
      %p576 = scmp.ne.s32.totalorder %s565, %s568
      %p577 = scmp.eq.s32.totalorder %s36, 1
      %p578 = por %p576, %p577
      %p579 = scmp.ne.s32.totalorder %s568, %s569
      %p580 = scmp.eq.s32.totalorder %s36, 0
      %p581 = por %p579, %p580
      %p582 = scmp.ne.s32.totalorder %s568, %s569
      %p583 = scmp.eq.s32.totalorder %s37, 1
      %p584 = por %p582, %p583
      %p586 = scmp.ne.s32.totalorder %s569, %s585
      %p587 = scmp.eq.s32.totalorder %s37, 0
      %p588 = por %p586, %p587
      %p589 = scmp.le.s32.totalorder 1, %s31
      %p590 = scmp.lt.s32.totalorder %s31, 3
      %p591 = pnand %p589, %p590
      %p592 = pneg %p591
      // Predicated region
      $region9: #{transformer_encoder_forward.3} parent=5 // pred_check
        _
      $region10: #{transformer_encoder_forward.3} parent=5 // pred_check_branch
        %594 = sbr.rel (%p591) target = $region12
      $region11: #{transformer_encoder_forward.3} parent=5 // pred_region
        %s595 = ssub.s32 %s31, 1
        // Predicated region
        $region13: #{transformer_encoder_forward.3} parent=11 // pred_check
          %p596 = pneg %p156
        $region14: #{transformer_encoder_forward.3} parent=11 // pred_check_branch
          %598 = sbr.rel (%p596) target = $region16
        $region15: #{transformer_encoder_forward.3} parent=11 // pred_region
          _
        $region16: #{transformer_encoder_forward.3} parent=11 // pred_fallthru
          _
        // Predicated region
        $region17: #{transformer_encoder_forward.3} parent=11 // pred_check
          %p599 = pneg %p177
        $region18: #{transformer_encoder_forward.3} parent=11 // pred_check_branch
          %601 = sbr.rel (%p599) target = $region20
        $region19: #{transformer_encoder_forward.3} parent=11 // pred_region
          _
        $region20: #{transformer_encoder_forward.3} parent=11 // pred_fallthru
          _
        // Predicated region
        $region21: #{transformer_encoder_forward.3} parent=11 // pred_check
          %p602 = pneg %p198
        $region22: #{transformer_encoder_forward.3} parent=11 // pred_check_branch
          %604 = sbr.rel (%p602) target = $region24
        $region23: #{transformer_encoder_forward.3} parent=11 // pred_region
          _
        $region24: #{transformer_encoder_forward.3} parent=11 // pred_fallthru
          _
        // Predicated region
        $region25: #{transformer_encoder_forward.3} parent=11 // pred_check
          %p605 = pneg %p219
        $region26: #{transformer_encoder_forward.3} parent=11 // pred_check_branch
          %607 = sbr.rel (%p605) target = $region28
        $region27: #{transformer_encoder_forward.3} parent=11 // pred_region
          _
        $region28: #{transformer_encoder_forward.3} parent=11 // pred_fallthru
          _
        // Predicated region
        $region29: #{transformer_encoder_forward.3} parent=11 // pred_check
          %p608 = pneg %p240
        $region30: #{transformer_encoder_forward.3} parent=11 // pred_check_branch
          %610 = sbr.rel (%p608) target = $region32
        $region31: #{transformer_encoder_forward.3} parent=11 // pred_region
          _
        $region32: #{transformer_encoder_forward.3} parent=11 // pred_fallthru
          _
        // Predicated region
        $region33: #{transformer_encoder_forward.3} parent=11 // pred_check
          %p611 = pneg %p261
        $region34: #{transformer_encoder_forward.3} parent=11 // pred_check_branch
          %613 = sbr.rel (%p611) target = $region36
        $region35: #{transformer_encoder_forward.3} parent=11 // pred_region
          _
        $region36: #{transformer_encoder_forward.3} parent=11 // pred_fallthru
          _
        // Predicated region
        $region37: #{transformer_encoder_forward.3} parent=11 // pred_check
          %p614 = pneg %p282
        $region38: #{transformer_encoder_forward.3} parent=11 // pred_check_branch
          %616 = sbr.rel (%p614) target = $region40
        $region39: #{transformer_encoder_forward.3} parent=11 // pred_region
          _
        $region40: #{transformer_encoder_forward.3} parent=11 // pred_fallthru
          _
        // Predicated region
        $region41: #{transformer_encoder_forward.3} parent=11 // pred_check
          %p617 = pneg %p303
        $region42: #{transformer_encoder_forward.3} parent=11 // pred_check_branch
          %619 = sbr.rel (%p617) target = $region44
        $region43: #{transformer_encoder_forward.3} parent=11 // pred_region
          _
        $region44: #{transformer_encoder_forward.3} parent=11 // pred_fallthru
          _
        // Predicated region
        $region45: #{transformer_encoder_forward.3} parent=11 // pred_check
          %p620 = pneg %p324
        $region46: #{transformer_encoder_forward.3} parent=11 // pred_check_branch
          %622 = sbr.rel (%p620) target = $region48
        $region47: #{transformer_encoder_forward.3} parent=11 // pred_region
          _
        $region48: #{transformer_encoder_forward.3} parent=11 // pred_fallthru
          _
        // Predicated region
        $region49: #{transformer_encoder_forward.3} parent=11 // pred_check
          %p623 = pneg %p345
        $region50: #{transformer_encoder_forward.3} parent=11 // pred_check_branch
          %625 = sbr.rel (%p623) target = $region52
        $region51: #{transformer_encoder_forward.3} parent=11 // pred_region
          _
        $region52: #{transformer_encoder_forward.3} parent=11 // pred_fallthru
          _
        // Predicated region
        $region53: #{transformer_encoder_forward.3} parent=11 // pred_check
          %p626 = pneg %p366
        $region54: #{transformer_encoder_forward.3} parent=11 // pred_check_branch
          %628 = sbr.rel (%p626) target = $region56
        $region55: #{transformer_encoder_forward.3} parent=11 // pred_region
          _
        $region56: #{transformer_encoder_forward.3} parent=11 // pred_fallthru
          _
        // Predicated region
        $region57: #{transformer_encoder_forward.3} parent=11 // pred_check
          %p629 = pneg %p387
        $region58: #{transformer_encoder_forward.3} parent=11 // pred_check_branch
          %631 = sbr.rel (%p629) target = $region60
        $region59: #{transformer_encoder_forward.3} parent=11 // pred_region
          _
        $region60: #{transformer_encoder_forward.3} parent=11 // pred_fallthru
          _
        // Predicated region
        $region61: #{transformer_encoder_forward.3} parent=11 // pred_check
          %p632 = pneg %p408
        $region62: #{transformer_encoder_forward.3} parent=11 // pred_check_branch
          %634 = sbr.rel (%p632) target = $region64
        $region63: #{transformer_encoder_forward.3} parent=11 // pred_region
          _
        $region64: #{transformer_encoder_forward.3} parent=11 // pred_fallthru
          _
        // Predicated region
        $region65: #{transformer_encoder_forward.3} parent=11 // pred_check
          %p635 = pneg %p429
        $region66: #{transformer_encoder_forward.3} parent=11 // pred_check_branch
          %637 = sbr.rel (%p635) target = $region68
        $region67: #{transformer_encoder_forward.3} parent=11 // pred_region
          %s639 = ssub.s32 16, 16
          %640 = vsyncadd [#allocation5], %s639
          %s642 = sshll.u32 %s17, 4
          %s643 = int_to_ptr.vmem [resolvable:$true] %s642
          %645 = dma.vmem_to_smem %s643, 16, [#allocation4], [#allocation5]
        $region68: #{transformer_encoder_forward.3} parent=11 // pred_fallthru
          _
        // Predicated region
        $region69: #{transformer_encoder_forward.3} parent=11 // pred_check
          %p646 = pneg %p450
        $region70: #{transformer_encoder_forward.3} parent=11 // pred_check_branch
          %648 = sbr.rel (%p646) target = $region72
        $region71: #{transformer_encoder_forward.3} parent=11 // pred_region
          _
        $region72: #{transformer_encoder_forward.3} parent=11 // pred_fallthru
          _
        // Predicated region
        $region73: #{transformer_encoder_forward.3} parent=11 // pred_check
          %p649 = pneg %p471
        $region74: #{transformer_encoder_forward.3} parent=11 // pred_check_branch
          %651 = sbr.rel (%p649) target = $region76
        $region75: #{transformer_encoder_forward.3} parent=11 // pred_region
          _
        $region76: #{transformer_encoder_forward.3} parent=11 // pred_fallthru
          _
        // Predicated region
        $region77: #{transformer_encoder_forward.3} parent=11 // pred_check
          %p652 = pneg %p492
        $region78: #{transformer_encoder_forward.3} parent=11 // pred_check_branch
          %654 = sbr.rel (%p652) target = $region80
        $region79: #{transformer_encoder_forward.3} parent=11 // pred_region
          _
        $region80: #{transformer_encoder_forward.3} parent=11 // pred_fallthru
          _
        // Predicated region
        $region81: #{transformer_encoder_forward.3} parent=11 // pred_check
          %p655 = pneg %p513
        $region82: #{transformer_encoder_forward.3} parent=11 // pred_check_branch
          %657 = sbr.rel (%p655) target = $region84
        $region83: #{transformer_encoder_forward.3} parent=11 // pred_region
          _
        $region84: #{transformer_encoder_forward.3} parent=11 // pred_fallthru
          _
        // Predicated region
        $region85: #{transformer_encoder_forward.3} parent=11 // pred_check
          %p658 = pneg %p534
        $region86: #{transformer_encoder_forward.3} parent=11 // pred_check_branch
          %660 = sbr.rel (%p658) target = $region88
        $region87: #{transformer_encoder_forward.3} parent=11 // pred_region
          _
        $region88: #{transformer_encoder_forward.3} parent=11 // pred_fallthru
          _
        // Predicated region
        $region89: #{transformer_encoder_forward.3} parent=11 // pred_check
          %p661 = pneg %p555
        $region90: #{transformer_encoder_forward.3} parent=11 // pred_check_branch
          %663 = sbr.rel (%p661) target = $region92
        $region91: #{transformer_encoder_forward.3} parent=11 // pred_region
          _
        $region92: #{transformer_encoder_forward.3} parent=11 // pred_fallthru
          _
      $region12: #{transformer_encoder_forward.3} parent=5 // pred_fallthru
        _
      %p664 = scmp.lt.s32.totalorder %s31, 2
      // Predicated region
      $region93: #{transformer_encoder_forward.3} parent=5 // pred_check
        %p665 = pneg %p664
      $region94: #{transformer_encoder_forward.3} parent=5 // pred_check_branch
        %667 = sbr.rel (%p665) target = $region96
      $region95: #{transformer_encoder_forward.3} parent=5 // pred_region
        // Predicated region
        $region97: #{transformer_encoder_forward.3} parent=95 // pred_check
          %p668 = pneg %p51
        $region98: #{transformer_encoder_forward.3} parent=95 // pred_check_branch
          %670 = sbr.rel (%p668) target = $region100
        $region99: #{transformer_encoder_forward.3} parent=95 // pred_region
          %p671 = scmp.lt.s32.totalorder %s31, 1
          %s672 = scalar_select %p671, %s31, 1
          %s673 = smul.addr %s672, 8
          %s674 = smul.addr %s673, 8
          %s675 = scalar_lea.vmem %s0, %s674
        $region100: #{transformer_encoder_forward.3} parent=95 // pred_fallthru
          _
        // Predicated region
        $region101: #{transformer_encoder_forward.3} parent=95 // pred_check
          %p676 = pneg %p77
        $region102: #{transformer_encoder_forward.3} parent=95 // pred_check_branch
          %678 = sbr.rel (%p676) target = $region104
        $region103: #{transformer_encoder_forward.3} parent=95 // pred_region
          %p679 = scmp.lt.s32.totalorder %s31, 1
          %s680 = scalar_select %p679, %s31, 1
          %s681 = smul.addr %s680, 8
          %s682 = smul.addr %s681, 8
          %s683 = scalar_lea.vmem %s1, %s682
        $region104: #{transformer_encoder_forward.3} parent=95 // pred_fallthru
          _
        // Predicated region
        $region105: #{transformer_encoder_forward.3} parent=95 // pred_check
          %p684 = pneg %p103
        $region106: #{transformer_encoder_forward.3} parent=95 // pred_check_branch
          %686 = sbr.rel (%p684) target = $region108
        $region107: #{transformer_encoder_forward.3} parent=95 // pred_region
          %p687 = scmp.lt.s32.totalorder %s31, 1
          %s688 = scalar_select %p687, %s31, 1
          %s689 = smul.addr %s688, 8
          %s690 = smul.addr %s689, 8
          %s691 = scalar_lea.vmem %s2, %s690
        $region108: #{transformer_encoder_forward.3} parent=95 // pred_fallthru
          _
        // Predicated region
        $region109: #{transformer_encoder_forward.3} parent=95 // pred_check
          %p692 = pneg %p129
        $region110: #{transformer_encoder_forward.3} parent=95 // pred_check_branch
          %694 = sbr.rel (%p692) target = $region112
        $region111: #{transformer_encoder_forward.3} parent=95 // pred_region
          %p695 = scmp.lt.s32.totalorder %s31, 1
          %s696 = scalar_select %p695, %s31, 1
          %s697 = smul.addr %s696, 8
          %s698 = smul.addr %s697, 8
          %s699 = scalar_lea.vmem %s3, %s698
        $region112: #{transformer_encoder_forward.3} parent=95 // pred_fallthru
          _
      $region96: #{transformer_encoder_forward.3} parent=5 // pred_fallthru
        _
      %p700 = scmp.le.s32.totalorder 1, %s31
      %p701 = scmp.lt.s32.totalorder %s31, 3
      %p702 = pnand %p700, %p701
      %p703 = pneg %p702
      // Predicated region
      $region113: #{transformer_encoder_forward.3} parent=5 // pred_check
        _
      $region114: #{transformer_encoder_forward.3} parent=5 // pred_check_branch
        %705 = sbr.rel (%p702) target = $region116
      $region115: #{transformer_encoder_forward.3} parent=5 // pred_region
        %s706 = ssub.s32 %s31, 1
        // Predicated region
        $region117: #{transformer_encoder_forward.3} parent=115 // pred_check
          %p707 = pneg %p429
        $region118: #{transformer_encoder_forward.3} parent=115 // pred_check_branch
          %709 = sbr.rel (%p707) target = $region120
        $region119: #{transformer_encoder_forward.3} parent=115 // pred_region
          %710 = dma.done [#allocation5], 16
        $region120: #{transformer_encoder_forward.3} parent=115 // pred_fallthru
          _
        %711 = sfence
        %p712 = scmp.lt.s32.totalorder %s36, 1
        %s713 = scalar_select %p712, %s36, 1
        %s714 = smul.addr %s713, 8
        %s715 = smul.addr %s714, 8
        %s716 = scalar_lea.vmem %s0, %s715
        %p717 = pneg %p57
        %p718 = pneg %p54
        %p719 = scmp.lt.s32.totalorder %s36, 1
        %s720 = scalar_select %p719, %s36, 1
        %s721 = smul.addr %s720, 8
        %s722 = smul.addr %s721, 8
        %s723 = scalar_lea.vmem %s1, %s722
        %p724 = pneg %p83
        %p725 = pneg %p80
        %p726 = scmp.lt.s32.totalorder %s36, 1
        %s727 = scalar_select %p726, %s36, 1
        %s728 = smul.addr %s727, 8
        %s729 = smul.addr %s728, 8
        %s730 = scalar_lea.vmem %s2, %s729
        %p731 = pneg %p109
        %p732 = pneg %p106
        %p733 = scmp.lt.s32.totalorder %s36, 1
        %s734 = scalar_select %p733, %s36, 1
        %s735 = smul.addr %s734, 8
        %s736 = smul.addr %s735, 8
        %s737 = scalar_lea.vmem %s3, %s736
        %p738 = pneg %p135
        %p739 = pneg %p132
        %p740 = pneg %p156
        %p741 = pneg %p153
        %p742 = pneg %p177
        %p743 = pneg %p174
        %p744 = pneg %p198
        %p745 = pneg %p195
        %p746 = pneg %p219
        %p747 = pneg %p216
        %p748 = pneg %p240
        %p749 = pneg %p237
        %p750 = pneg %p261
        %p751 = pneg %p258
        %p752 = pneg %p282
        %p753 = pneg %p279
        %p754 = pneg %p303
        %p755 = pneg %p300
        %p756 = pneg %p324
        %p757 = pneg %p321
        %p758 = pneg %p345
        %p759 = pneg %p342
        %p760 = pneg %p366
        %p761 = pneg %p363
        %p762 = pneg %p387
        %p763 = pneg %p384
        %p764 = pneg %p408
        %p765 = pneg %p405
        %p766 = pneg %p429
        %p767 = pneg %p426
        %p768 = pneg %p450
        %p769 = pneg %p447
        %p770 = pneg %p471
        %p771 = pneg %p468
        %p772 = pneg %p492
        %p773 = pneg %p489
        %p774 = pneg %p513
        %p775 = pneg %p510
        %p776 = pneg %p534
        %p777 = pneg %p531
        %p778 = pneg %p555
        %p779 = pneg %p552
        %p780 = pneg %p581
        %p781 = pneg %p578
        %p782 = scmp.lt.s32.totalorder %s36, 1
        %s783 = scalar_select %p782, %s36, 1
        %s784 = smul.addr %s783, 8
        %s785 = smul.addr %s784, 8
        %s786 = scalar_lea.vmem %s24, %s785
        %p787 = scmp.lt.s32.totalorder %s36, 1
        %s788 = scalar_select %p787, %s36, 1
        %s789 = smul.addr %s788, 8
        %s790 = smul.addr %s789, 8
        %s791 = scalar_lea.vmem %s0, %s790
        %p792 = scmp.lt.s32.totalorder %s36, 1
        %s793 = scalar_select %p792, %s36, 1
        %s794 = smul.addr %s793, 8
        %s795 = smul.addr %s794, 8
        %s796 = scalar_lea.vmem %s1, %s795
        %p797 = scmp.lt.s32.totalorder %s36, 1
        %s798 = scalar_select %p797, %s36, 1
        %s799 = smul.addr %s798, 8
        %s800 = smul.addr %s799, 8
        %s801 = scalar_lea.vmem %s2, %s800
        %p802 = scmp.lt.s32.totalorder %s36, 1
        %s803 = scalar_select %p802, %s36, 1
        %s804 = smul.addr %s803, 8
        %s805 = smul.addr %s804, 8
        %s806 = scalar_lea.vmem %s3, %s805
        %p807 = scmp.lt.s32.totalorder %s36, 1
        %s808 = scalar_select %p807, %s36, 1
        %s809 = smul.addr %s808, 8
        %s810 = smul.addr %s809, 8
        %s811 = scalar_lea.vmem %s24, %s810
        %v813 = vld [vmem:[%s791] sm:$0xff]
        %v814 = vld [vmem:[%s791 + $0x8] sm:$0xff]
        %v815 = vld [vmem:[%s791 + $0x10] sm:$0xff]
        %v816 = vld [vmem:[%s791 + $0x18] sm:$0xff]
        %v817 = vld [vmem:[%s791 + $0x20] sm:$0xff]
        %v818 = vld [vmem:[%s791 + $0x28] sm:$0xff]
        %v819 = vld [vmem:[%s791 + $0x30] sm:$0xff]
        %v820 = vld [vmem:[%s791 + $0x38] sm:$0xff]
        %v821 = vld [vmem:[%s796] sm:$0xff]
        %v822 = vld [vmem:[%s796 + $0x8] sm:$0xff]
        %v823 = vld [vmem:[%s796 + $0x10] sm:$0xff]
        %v824 = vld [vmem:[%s796 + $0x18] sm:$0xff]
        %v825 = vld [vmem:[%s796 + $0x20] sm:$0xff]
        %v826 = vld [vmem:[%s796 + $0x28] sm:$0xff]
        %v827 = vld [vmem:[%s796 + $0x30] sm:$0xff]
        %v828 = vld [vmem:[%s796 + $0x38] sm:$0xff]
        %v829 = vmul.f32 %v821, 0.35355338
        %v830 = vmul.f32 %v822, 0.35355338
        %v831 = vmul.f32 %v823, 0.35355338
        %v832 = vmul.f32 %v824, 0.35355338
        %v833 = vmul.f32 %v825, 0.35355338
        %v834 = vmul.f32 %v826, 0.35355338
        %v835 = vmul.f32 %v827, 0.35355338
        %v836 = vmul.f32 %v828, 0.35355338
        %v837 = vld [vmem:[%s801] sm:$0xff]
        %v838 = vld [vmem:[%s801 + $0x8] sm:$0xff]
        %v839 = vld [vmem:[%s801 + $0x10] sm:$0xff]
        %v840 = vld [vmem:[%s801 + $0x18] sm:$0xff]
        %v841 = vld [vmem:[%s801 + $0x20] sm:$0xff]
        %v842 = vld [vmem:[%s801 + $0x28] sm:$0xff]
        %v843 = vld [vmem:[%s801 + $0x30] sm:$0xff]
        %v844 = vld [vmem:[%s801 + $0x38] sm:$0xff]
        %v845 = vld [vmem:[%s806] sm:$0xff]
        %v846 = vld [vmem:[%s806 + $0x8] sm:$0xff]
        %v847 = vld [vmem:[%s806 + $0x10] sm:$0xff]
        %v848 = vld [vmem:[%s806 + $0x18] sm:$0xff]
        %v849 = vld [vmem:[%s806 + $0x20] sm:$0xff]
        %v850 = vld [vmem:[%s806 + $0x28] sm:$0xff]
        %v851 = vld [vmem:[%s806 + $0x30] sm:$0xff]
        %v852 = vld [vmem:[%s806 + $0x38] sm:$0xff]
        %v853 = vld [vmem:[%s4] sm:$0xf]
        %v854 = vld [vmem:[%s4 + $0x4] sm:$0xf]
        %v855 = vpack.c.bf16 %v838, %v837
        %v856 = vpack.c.bf16 %v840, %v839
        %v857 = vpack.c.bf16 %v842, %v841
        %v858 = vpack.c.bf16 %v844, %v843
        %v859 = vld [vmem:[%s5] sm:$0x1]
        %v861 = vlaneseq
        %v862 = vshrl.u32 %v861, 7
        %v863 = vsub.s32 0, %v862
        %v864 = vrot.slane %v859, %v863
        %v868 = vunpack.c.l.b16 %v853
        %v869 = vunpack.c.l.b16 %v854
        %v870 = vpack.c.b16 %v869, %v868
        %vm872 = vcmask 130048
        %v874 = vsel %vm872, %v855, 0
        %v877 = vsel %vm872, %v856, 0
        %v880 = vsel %vm872, %v857, 0
        %v883 = vsel %vm872, %v858, 0
        %885 = vmatprep.subr.bf16.mxu0 0
        %886 = vmatpush1.bf16.msra.mxu0 0
        %887 = vmatprep.subr.bf16.mxu0 0
        %888 = vmatpush1.bf16.msra.mxu0 0
        %889 = vmatprep.subr.bf16.mxu0 0
        %890 = vmatpush1.bf16.msra.mxu0 0
        %891 = vmatprep.subr.bf16.mxu0 0
        %892 = vmatpush1.bf16.msra.mxu0 0
        %893 = vmatprep.subr.bf16.mxu0 0
        %894 = vmatpush1.bf16.msra.mxu0 0
        %895 = vmatprep.subr.bf16.mxu0 0
        %896 = vmatpush1.bf16.msra.mxu0 0
        %897 = vmatprep.subr.bf16.mxu0 0
        %898 = vmatpush1.bf16.msra.mxu0 0
        %899 = vmatprep.subr.bf16.mxu0 0
        %900 = vmatpush1.bf16.msra.mxu0 %v870
        %901 = vmatprep.subr.bf16.mxu0 0
        %902 = vmatpush2.bf16.msra.mxu0 0
        %903 = vmatprep.subr.bf16.mxu0 0
        %904 = vmatpush2.bf16.msra.mxu0 0
        %905 = vmatprep.subr.bf16.mxu0 0
        %906 = vmatpush2.bf16.msra.mxu0 0
        %907 = vmatprep.subr.bf16.mxu0 0
        %908 = vmatpush2.bf16.msra.mxu0 0
        %909 = vmatprep.subr.bf16.mxu0 0
        %910 = vmatpush2.bf16.msra.mxu0 0
        %911 = vmatprep.subr.bf16.mxu0 0
        %912 = vmatpush2.bf16.msra.mxu0 0
        %913 = vmatprep.subr.bf16.mxu0 0
        %914 = vmatpush2.bf16.msra.mxu0 0
        %915 = vmatprep.subr.bf16.mxu0 0
        %916 = vmatpush2.bf16.msra.mxu0 0
        %917 = vmatprep.mubr.bf16.mxu0 0
        %918 = vmatmul.mubr.bf16.gmra.mxu0 %v874
        %v919 = vpop.f32.mrf.mxu0
        %v920 = vadd.f32 %v864, %v919
        %v921 = vpop.f32.mrf.mxu0
        %v922 = vpop.f32.mrf.mxu0
        %v923 = vadd.f32 %v864, %v922
        %v924 = vpop.f32.mrf.mxu0
        %925 = vmatprep.mubr.bf16.mxu0 0
        %926 = vmatmul.mubr.bf16.gmra.mxu0 %v877
        %v927 = vpop.f32.mrf.mxu0
        %v928 = vadd.f32 %v864, %v927
        %v929 = vpop.f32.mrf.mxu0
        %v930 = vpop.f32.mrf.mxu0
        %v931 = vadd.f32 %v864, %v930
        %v932 = vpop.f32.mrf.mxu0
        %933 = vmatprep.mubr.bf16.mxu0 0
        %934 = vmatmul.mubr.bf16.gmra.mxu0 %v880
        %v935 = vpop.f32.mrf.mxu0
        %v936 = vadd.f32 %v864, %v935
        %v937 = vpop.f32.mrf.mxu0
        %v938 = vpop.f32.mrf.mxu0
        %v939 = vadd.f32 %v864, %v938
        %v940 = vpop.f32.mrf.mxu0
        %941 = vmatprep.mubr.bf16.mxu0 0
        %942 = vmatmul.mubr.bf16.gmra.mxu0 %v883
        %v943 = vpop.f32.mrf.mxu0
        %v944 = vadd.f32 %v864, %v943
        %v945 = vpop.f32.mrf.mxu0
        %v946 = vpop.f32.mrf.mxu0
        %v947 = vadd.f32 %v864, %v946
        %v948 = vpop.f32.mrf.mxu0
        %949 = vdwg.mxu0
        %v950 = vpack.c.bf16 %v830, %v829
        %v951 = vpack.c.bf16 %v832, %v831
        %v952 = vpack.c.bf16 %v834, %v833
        %v953 = vpack.c.bf16 %v836, %v835
        %v954 = vpack.c.bf16 %v923, %v920
        %v955 = vpack.c.bf16 %v931, %v928
        %v956 = vpack.c.bf16 %v939, %v936
        %v957 = vpack.c.bf16 %v947, %v944
        %vm958 = vcmask 64512
        %v960 = vsel %vm958, %v950, 0
        %v963 = vsel %vm958, %v951, 0
        %v966 = vsel %vm958, %v952, 0
        %v969 = vsel %vm958, %v953, 0
        %v972 = vsel %vm958, %v954, 0
        %v975 = vsel %vm958, %v955, 0
        %v978 = vsel %vm958, %v956, 0
        %v981 = vsel %vm958, %v957, 0
        %983 = vmatprep.subr.bf16.mxu0 0
        %984 = vmatpush1.bf16.xpose.msra.mxu0 0
        %985 = vmatprep.subr.bf16.mxu0 0
        %986 = vmatpush1.bf16.xpose.msra.mxu0 0
        %987 = vmatprep.subr.bf16.mxu0 0
        %988 = vmatpush1.bf16.xpose.msra.mxu0 0
        %989 = vmatprep.subr.bf16.mxu0 0
        %990 = vmatpush1.bf16.xpose.msra.mxu0 0
        %991 = vmatprep.subr.bf16.mxu0 0
        %992 = vmatpush1.bf16.xpose.msra.mxu0 %v981
        %993 = vmatprep.subr.bf16.mxu0 0
        %994 = vmatpush1.bf16.xpose.msra.mxu0 %v978
        %995 = vmatprep.subr.bf16.mxu0 0
        %996 = vmatpush1.bf16.xpose.msra.mxu0 %v975
        %997 = vmatprep.subr.bf16.mxu0 0
        %998 = vmatpush1.bf16.xpose.msra.mxu0 %v972
        %999 = vmatprep.subr.bf16.mxu0 0
        %1000 = vmatpush2.bf16.xpose.msra.mxu0 0
        %1001 = vmatprep.subr.bf16.mxu0 0
        %1002 = vmatpush2.bf16.xpose.msra.mxu0 0
        %1003 = vmatprep.subr.bf16.mxu0 0
        %1004 = vmatpush2.bf16.xpose.msra.mxu0 0
        %1005 = vmatprep.subr.bf16.mxu0 0
        %1006 = vmatpush2.bf16.xpose.msra.mxu0 0
        %1007 = vmatprep.subr.bf16.mxu0 0
        %1008 = vmatpush2.bf16.xpose.msra.mxu0 0
        %1009 = vmatprep.subr.bf16.mxu0 0
        %1010 = vmatpush2.bf16.xpose.msra.mxu0 0
        %1011 = vmatprep.subr.bf16.mxu0 0
        %1012 = vmatpush2.bf16.xpose.msra.mxu0 0
        %1013 = vmatprep.subr.bf16.mxu0 0
        %1014 = vmatpush2.bf16.xpose.msra.mxu0 0
        %1015 = vmatprep.mubr.bf16.mxu0 0
        %1016 = vmatmul.mubr.bf16.gmra.mxu0 %v960
        %v1017 = vpop.f32.mrf.mxu0
        %v1018 = vadd.f32 0.0, %v1017
        %v1019 = vpop.f32.mrf.mxu0
        %v1020 = vpop.f32.mrf.mxu0
        %v1021 = vadd.f32 0.0, %v1020
        %v1022 = vpop.f32.mrf.mxu0
        %1023 = vmatprep.mubr.bf16.mxu0 0
        %1024 = vmatmul.mubr.bf16.gmra.mxu0 %v963
        %v1025 = vpop.f32.mrf.mxu0
        %v1026 = vadd.f32 0.0, %v1025
        %v1027 = vpop.f32.mrf.mxu0
        %v1028 = vpop.f32.mrf.mxu0
        %v1029 = vadd.f32 0.0, %v1028
        %v1030 = vpop.f32.mrf.mxu0
        %1031 = vmatprep.mubr.bf16.mxu0 0
        %1032 = vmatmul.mubr.bf16.gmra.mxu0 %v966
        %v1033 = vpop.f32.mrf.mxu0
        %v1034 = vadd.f32 0.0, %v1033
        %v1035 = vpop.f32.mrf.mxu0
        %v1036 = vpop.f32.mrf.mxu0
        %v1037 = vadd.f32 0.0, %v1036
        %v1038 = vpop.f32.mrf.mxu0
        %1039 = vmatprep.mubr.bf16.mxu0 0
        %1040 = vmatmul.mubr.bf16.gmra.mxu0 %v969
        %v1041 = vpop.f32.mrf.mxu0
        %v1042 = vadd.f32 0.0, %v1041
        %v1043 = vpop.f32.mrf.mxu0
        %v1044 = vpop.f32.mrf.mxu0
        %v1045 = vadd.f32 0.0, %v1044
        %v1046 = vpop.f32.mrf.mxu0
        %1047 = vdwg.mxu0
        %vm1048 = vcmask 523264
        %v1049 = vsel %vm1048, %v1018, -inf
        %1050 = vmax.xlane.f32.xlu0 %v1049
        %v1051 = vpop.xlane.xlu0 %1050
        %v1052 = vsel %vm1048, %v1021, -inf
        %1053 = vmax.xlane.f32.xlu0 %v1052
        %v1054 = vpop.xlane.xlu0 %1053
        %v1055 = vsel %vm1048, %v1026, -inf
        %1056 = vmax.xlane.f32.xlu0 %v1055
        %v1057 = vpop.xlane.xlu0 %1056
        %v1058 = vsel %vm1048, %v1029, -inf
        %1059 = vmax.xlane.f32.xlu0 %v1058
        %v1060 = vpop.xlane.xlu0 %1059
        %v1061 = vsel %vm1048, %v1034, -inf
        %1062 = vmax.xlane.f32.xlu0 %v1061
        %v1063 = vpop.xlane.xlu0 %1062
        %v1064 = vsel %vm1048, %v1037, -inf
        %1065 = vmax.xlane.f32.xlu0 %v1064
        %v1066 = vpop.xlane.xlu0 %1065
        %v1067 = vsel %vm1048, %v1042, -inf
        %1068 = vmax.xlane.f32.xlu0 %v1067
        %v1069 = vpop.xlane.xlu0 %1068
        %v1070 = vsel %vm1048, %v1045, -inf
        %1071 = vmax.xlane.f32.xlu0 %v1070
        %v1072 = vpop.xlane.xlu0 %1071
        %v1073 = vsub.f32 %v1018, %v1051
        %v1074 = vsub.f32 %v1021, %v1054
        %v1075 = vsub.f32 %v1026, %v1057
        %v1076 = vsub.f32 %v1029, %v1060
        %v1077 = vsub.f32 %v1034, %v1063
        %v1078 = vsub.f32 %v1037, %v1066
        %v1079 = vsub.f32 %v1042, %v1069
        %v1080 = vsub.f32 %v1045, %v1072
        %v1081 = vmul.f32 %v1073, 1.442695
        %v1082 = vpow.pop %v1081
        %v1083 = vmul.f32 %v1074, 1.442695
        %v1084 = vpow.pop %v1083
        %v1085 = vmul.f32 %v1075, 1.442695
        %v1086 = vpow.pop %v1085
        %v1087 = vmul.f32 %v1076, 1.442695
        %v1088 = vpow.pop %v1087
        %v1089 = vmul.f32 %v1077, 1.442695
        %v1090 = vpow.pop %v1089
        %v1091 = vmul.f32 %v1078, 1.442695
        %v1092 = vpow.pop %v1091
        %v1093 = vmul.f32 %v1079, 1.442695
        %v1094 = vpow.pop %v1093
        %v1095 = vmul.f32 %v1080, 1.442695
        %v1096 = vpow.pop %v1095
        %v1097 = vsel %vm1048, %v1082, 0.0
        %1098 = vadd.xlane.f32.xlu0 %v1097
        %v1099 = vpop.xlane.xlu0 %1098
        %v1100 = vsel %vm1048, %v1084, 0.0
        %1101 = vadd.xlane.f32.xlu0 %v1100
        %v1102 = vpop.xlane.xlu0 %1101
        %v1103 = vsel %vm1048, %v1086, 0.0
        %1104 = vadd.xlane.f32.xlu0 %v1103
        %v1105 = vpop.xlane.xlu0 %1104
        %v1106 = vsel %vm1048, %v1088, 0.0
        %1107 = vadd.xlane.f32.xlu0 %v1106
        %v1108 = vpop.xlane.xlu0 %1107
        %v1109 = vsel %vm1048, %v1090, 0.0
        %1110 = vadd.xlane.f32.xlu0 %v1109
        %v1111 = vpop.xlane.xlu0 %1110
        %v1112 = vsel %vm1048, %v1092, 0.0
        %1113 = vadd.xlane.f32.xlu0 %v1112
        %v1114 = vpop.xlane.xlu0 %1113
        %v1115 = vsel %vm1048, %v1094, 0.0
        %1116 = vadd.xlane.f32.xlu0 %v1115
        %v1117 = vpop.xlane.xlu0 %1116
        %v1118 = vsel %vm1048, %v1096, 0.0
        %1119 = vadd.xlane.f32.xlu0 %v1118
        %v1120 = vpop.xlane.xlu0 %1119
        %v1121 = vrcp.pop %v1099
        %v1122 = vrcp.pop %v1102
        %v1123 = vrcp.pop %v1105
        %v1124 = vrcp.pop %v1108
        %v1125 = vrcp.pop %v1111
        %v1126 = vrcp.pop %v1114
        %v1127 = vrcp.pop %v1117
        %v1128 = vrcp.pop %v1120
        %v1129 = vmul.f32 %v1082, %v1121
        %v1130 = vmul.f32 %v1084, %v1122
        %v1131 = vmul.f32 %v1086, %v1123
        %v1132 = vmul.f32 %v1088, %v1124
        %v1133 = vmul.f32 %v1090, %v1125
        %v1134 = vmul.f32 %v1092, %v1126
        %v1135 = vmul.f32 %v1094, %v1127
        %v1136 = vmul.f32 %v1096, %v1128
        %v1137 = vpack.c.bf16 %v1130, %v1129
        %v1138 = vpack.c.bf16 %v1132, %v1131
        %v1139 = vpack.c.bf16 %v1134, %v1133
        %v1140 = vpack.c.bf16 %v1136, %v1135
        %1145 = vrot.lane.b32.xlu0 %v954, 112
        %v1146 = vpop.permute.xlu0 %1145
        %1147 = vrot.lane.b32.xlu0 %v955, 112
        %v1148 = vpop.permute.xlu0 %1147
        %1149 = vrot.lane.b32.xlu0 %v956, 112
        %v1150 = vpop.permute.xlu0 %1149
        %1151 = vrot.lane.b32.xlu0 %v957, 112
        %v1152 = vpop.permute.xlu0 %1151
        %v1158 = vsel %vm1048, %v1137, 0
        %v1161 = vsel %vm1048, %v1138, 0
        %v1164 = vsel %vm1048, %v1139, 0
        %v1167 = vsel %vm1048, %v1140, 0
        %1169 = vmatprep.subr.bf16.mxu0 0
        %1170 = vmatpush1.bf16.msra.mxu0 0
        %1171 = vmatprep.subr.bf16.mxu0 0
        %1172 = vmatpush1.bf16.msra.mxu0 0
        %1173 = vmatprep.subr.bf16.mxu0 0
        %1174 = vmatpush1.bf16.msra.mxu0 0
        %1175 = vmatprep.subr.bf16.mxu0 0
        %1176 = vmatpush1.bf16.msra.mxu0 0
        %1177 = vmatprep.subr.bf16.mxu0 0
        %1178 = vmatpush1.bf16.msra.mxu0 %v1152
        %1179 = vmatprep.subr.bf16.mxu0 0
        %1180 = vmatpush1.bf16.msra.mxu0 %v1150
        %1181 = vmatprep.subr.bf16.mxu0 0
        %1182 = vmatpush1.bf16.msra.mxu0 %v1148
        %1183 = vmatprep.subr.bf16.mxu0 0
        %1184 = vmatpush1.bf16.msra.mxu0 %v1146
        %1185 = vmatprep.subr.bf16.mxu0 0
        %1186 = vmatpush2.bf16.msra.mxu0 0
        %1187 = vmatprep.subr.bf16.mxu0 0
        %1188 = vmatpush2.bf16.msra.mxu0 0
        %1189 = vmatprep.subr.bf16.mxu0 0
        %1190 = vmatpush2.bf16.msra.mxu0 0
        %1191 = vmatprep.subr.bf16.mxu0 0
        %1192 = vmatpush2.bf16.msra.mxu0 0
        %1193 = vmatprep.subr.bf16.mxu0 0
        %1194 = vmatpush2.bf16.msra.mxu0 0
        %1195 = vmatprep.subr.bf16.mxu0 0
        %1196 = vmatpush2.bf16.msra.mxu0 0
        %1197 = vmatprep.subr.bf16.mxu0 0
        %1198 = vmatpush2.bf16.msra.mxu0 0
        %1199 = vmatprep.subr.bf16.mxu0 0
        %1200 = vmatpush2.bf16.msra.mxu0 0
        %1201 = vmatprep.mubr.bf16.mxu0 0
        %1202 = vmatmul.mubr.bf16.gmra.mxu0 %v1158
        %v1203 = vpop.f32.mrf.mxu0
        %v1204 = vadd.f32 0.0, %v1203
        %v1205 = vpop.f32.mrf.mxu0
        %v1206 = vpop.f32.mrf.mxu0
        %v1207 = vadd.f32 0.0, %v1206
        %v1208 = vpop.f32.mrf.mxu0
        %1209 = vmatprep.mubr.bf16.mxu0 0
        %1210 = vmatmul.mubr.bf16.gmra.mxu0 %v1161
        %v1211 = vpop.f32.mrf.mxu0
        %v1212 = vadd.f32 0.0, %v1211
        %v1213 = vpop.f32.mrf.mxu0
        %v1214 = vpop.f32.mrf.mxu0
        %v1215 = vadd.f32 0.0, %v1214
        %v1216 = vpop.f32.mrf.mxu0
        %1217 = vmatprep.mubr.bf16.mxu0 0
        %1218 = vmatmul.mubr.bf16.gmra.mxu0 %v1164
        %v1219 = vpop.f32.mrf.mxu0
        %v1220 = vadd.f32 0.0, %v1219
        %v1221 = vpop.f32.mrf.mxu0
        %v1222 = vpop.f32.mrf.mxu0
        %v1223 = vadd.f32 0.0, %v1222
        %v1224 = vpop.f32.mrf.mxu0
        %1225 = vmatprep.mubr.bf16.mxu0 0
        %1226 = vmatmul.mubr.bf16.gmra.mxu0 %v1167
        %v1227 = vpop.f32.mrf.mxu0
        %v1228 = vadd.f32 0.0, %v1227
        %v1229 = vpop.f32.mrf.mxu0
        %v1230 = vpop.f32.mrf.mxu0
        %v1231 = vadd.f32 0.0, %v1230
        %v1232 = vpop.f32.mrf.mxu0
        %1233 = vdwg.mxu0
        %1234 = vst.msk [vmem:[#allocation2] sm:$0xff] %vm958, %v1204
        %1235 = vst.msk [vmem:[#allocation2 + $0x8] sm:$0xff] %vm958, %v1207
        %1236 = vst.msk [vmem:[#allocation2 + $0x10] sm:$0xff] %vm958, %v1212
        %1237 = vst.msk [vmem:[#allocation2 + $0x18] sm:$0xff] %vm958, %v1215
        %1238 = vst.msk [vmem:[#allocation2 + $0x20] sm:$0xff] %vm958, %v1220
        %1239 = vst.msk [vmem:[#allocation2 + $0x28] sm:$0xff] %vm958, %v1223
        %1240 = vst.msk [vmem:[#allocation2 + $0x30] sm:$0xff] %vm958, %v1228
        %1241 = vst.msk [vmem:[#allocation2 + $0x38] sm:$0xff] %vm958, %v1231
        %1246 = vrot.lane.b32.xlu0 %v950, 120
        %v1247 = vpop.permute.xlu0 %1246
        %1248 = vrot.lane.b32.xlu0 %v951, 120
        %v1249 = vpop.permute.xlu0 %1248
        %1250 = vrot.lane.b32.xlu0 %v952, 120
        %v1251 = vpop.permute.xlu0 %1250
        %1252 = vrot.lane.b32.xlu0 %v953, 120
        %v1253 = vpop.permute.xlu0 %1252
        %1254 = vrot.lane.b32.xlu0 %v954, 120
        %v1255 = vpop.permute.xlu0 %1254
        %1256 = vrot.lane.b32.xlu0 %v955, 120
        %v1257 = vpop.permute.xlu0 %1256
        %1258 = vrot.lane.b32.xlu0 %v956, 120
        %v1259 = vpop.permute.xlu0 %1258
        %1260 = vrot.lane.b32.xlu0 %v957, 120
        %v1261 = vpop.permute.xlu0 %1260
        %v1263 = vsel %vm958, %v1247, 0
        %v1266 = vsel %vm958, %v1249, 0
        %v1269 = vsel %vm958, %v1251, 0
        %v1272 = vsel %vm958, %v1253, 0
        %v1275 = vsel %vm958, %v1255, 0
        %v1278 = vsel %vm958, %v1257, 0
        %v1281 = vsel %vm958, %v1259, 0
        %v1284 = vsel %vm958, %v1261, 0
        %1286 = vmatprep.subr.bf16.mxu0 0
        %1287 = vmatpush1.bf16.xpose.msra.mxu0 0
        %1288 = vmatprep.subr.bf16.mxu0 0
        %1289 = vmatpush1.bf16.xpose.msra.mxu0 0
        %1290 = vmatprep.subr.bf16.mxu0 0
        %1291 = vmatpush1.bf16.xpose.msra.mxu0 0
        %1292 = vmatprep.subr.bf16.mxu0 0
        %1293 = vmatpush1.bf16.xpose.msra.mxu0 0
        %1294 = vmatprep.subr.bf16.mxu0 0
        %1295 = vmatpush1.bf16.xpose.msra.mxu0 %v1284
        %1296 = vmatprep.subr.bf16.mxu0 0
        %1297 = vmatpush1.bf16.xpose.msra.mxu0 %v1281
        %1298 = vmatprep.subr.bf16.mxu0 0
        %1299 = vmatpush1.bf16.xpose.msra.mxu0 %v1278
        %1300 = vmatprep.subr.bf16.mxu0 0
        %1301 = vmatpush1.bf16.xpose.msra.mxu0 %v1275
        %1302 = vmatprep.subr.bf16.mxu0 0
        %1303 = vmatpush2.bf16.xpose.msra.mxu0 0
        %1304 = vmatprep.subr.bf16.mxu0 0
        %1305 = vmatpush2.bf16.xpose.msra.mxu0 0
        %1306 = vmatprep.subr.bf16.mxu0 0
        %1307 = vmatpush2.bf16.xpose.msra.mxu0 0
        %1308 = vmatprep.subr.bf16.mxu0 0
        %1309 = vmatpush2.bf16.xpose.msra.mxu0 0
        %1310 = vmatprep.subr.bf16.mxu0 0
        %1311 = vmatpush2.bf16.xpose.msra.mxu0 0
        %1312 = vmatprep.subr.bf16.mxu0 0
        %1313 = vmatpush2.bf16.xpose.msra.mxu0 0
        %1314 = vmatprep.subr.bf16.mxu0 0
        %1315 = vmatpush2.bf16.xpose.msra.mxu0 0
        %1316 = vmatprep.subr.bf16.mxu0 0
        %1317 = vmatpush2.bf16.xpose.msra.mxu0 0
        %1318 = vmatprep.mubr.bf16.mxu0 0
        %1319 = vmatmul.mubr.bf16.gmra.mxu0 %v1263
        %v1320 = vpop.f32.mrf.mxu0
        %v1321 = vadd.f32 0.0, %v1320
        %v1322 = vpop.f32.mrf.mxu0
        %v1323 = vpop.f32.mrf.mxu0
        %v1324 = vadd.f32 0.0, %v1323
        %v1325 = vpop.f32.mrf.mxu0
        %1326 = vmatprep.mubr.bf16.mxu0 0
        %1327 = vmatmul.mubr.bf16.gmra.mxu0 %v1266
        %v1328 = vpop.f32.mrf.mxu0
        %v1329 = vadd.f32 0.0, %v1328
        %v1330 = vpop.f32.mrf.mxu0
        %v1331 = vpop.f32.mrf.mxu0
        %v1332 = vadd.f32 0.0, %v1331
        %v1333 = vpop.f32.mrf.mxu0
        %1334 = vmatprep.mubr.bf16.mxu0 0
        %1335 = vmatmul.mubr.bf16.gmra.mxu0 %v1269
        %v1336 = vpop.f32.mrf.mxu0
        %v1337 = vadd.f32 0.0, %v1336
        %v1338 = vpop.f32.mrf.mxu0
        %v1339 = vpop.f32.mrf.mxu0
        %v1340 = vadd.f32 0.0, %v1339
        %v1341 = vpop.f32.mrf.mxu0
        %1342 = vmatprep.mubr.bf16.mxu0 0
        %1343 = vmatmul.mubr.bf16.gmra.mxu0 %v1272
        %v1344 = vpop.f32.mrf.mxu0
        %v1345 = vadd.f32 0.0, %v1344
        %v1346 = vpop.f32.mrf.mxu0
        %v1347 = vpop.f32.mrf.mxu0
        %v1348 = vadd.f32 0.0, %v1347
        %v1349 = vpop.f32.mrf.mxu0
        %1350 = vdwg.mxu0
        %v1351 = vsel %vm1048, %v1321, -inf
        %1352 = vmax.xlane.f32.xlu0 %v1351
        %v1353 = vpop.xlane.xlu0 %1352
        %v1354 = vsel %vm1048, %v1324, -inf
        %1355 = vmax.xlane.f32.xlu0 %v1354
        %v1356 = vpop.xlane.xlu0 %1355
        %v1357 = vsel %vm1048, %v1329, -inf
        %1358 = vmax.xlane.f32.xlu0 %v1357
        %v1359 = vpop.xlane.xlu0 %1358
        %v1360 = vsel %vm1048, %v1332, -inf
        %1361 = vmax.xlane.f32.xlu0 %v1360
        %v1362 = vpop.xlane.xlu0 %1361
        %v1363 = vsel %vm1048, %v1337, -inf
        %1364 = vmax.xlane.f32.xlu0 %v1363
        %v1365 = vpop.xlane.xlu0 %1364
        %v1366 = vsel %vm1048, %v1340, -inf
        %1367 = vmax.xlane.f32.xlu0 %v1366
        %v1368 = vpop.xlane.xlu0 %1367
        %v1369 = vsel %vm1048, %v1345, -inf
        %1370 = vmax.xlane.f32.xlu0 %v1369
        %v1371 = vpop.xlane.xlu0 %1370
        %v1372 = vsel %vm1048, %v1348, -inf
        %1373 = vmax.xlane.f32.xlu0 %v1372
        %v1374 = vpop.xlane.xlu0 %1373
        %v1375 = vsub.f32 %v1321, %v1353
        %v1376 = vsub.f32 %v1324, %v1356
        %v1377 = vsub.f32 %v1329, %v1359
        %v1378 = vsub.f32 %v1332, %v1362
        %v1379 = vsub.f32 %v1337, %v1365
        %v1380 = vsub.f32 %v1340, %v1368
        %v1381 = vsub.f32 %v1345, %v1371
        %v1382 = vsub.f32 %v1348, %v1374
        %v1383 = vmul.f32 %v1375, 1.442695
        %v1384 = vpow.pop %v1383
        %v1385 = vmul.f32 %v1376, 1.442695
        %v1386 = vpow.pop %v1385
        %v1387 = vmul.f32 %v1377, 1.442695
        %v1388 = vpow.pop %v1387
        %v1389 = vmul.f32 %v1378, 1.442695
        %v1390 = vpow.pop %v1389
        %v1391 = vmul.f32 %v1379, 1.442695
        %v1392 = vpow.pop %v1391
        %v1393 = vmul.f32 %v1380, 1.442695
        %v1394 = vpow.pop %v1393
        %v1395 = vmul.f32 %v1381, 1.442695
        %v1396 = vpow.pop %v1395
        %v1397 = vmul.f32 %v1382, 1.442695
        %v1398 = vpow.pop %v1397
        %v1399 = vsel %vm1048, %v1384, 0.0
        %1400 = vadd.xlane.f32.xlu0 %v1399
        %v1401 = vpop.xlane.xlu0 %1400
        %v1402 = vsel %vm1048, %v1386, 0.0
        %1403 = vadd.xlane.f32.xlu0 %v1402
        %v1404 = vpop.xlane.xlu0 %1403
        %v1405 = vsel %vm1048, %v1388, 0.0
        %1406 = vadd.xlane.f32.xlu0 %v1405
        %v1407 = vpop.xlane.xlu0 %1406
        %v1408 = vsel %vm1048, %v1390, 0.0
        %1409 = vadd.xlane.f32.xlu0 %v1408
        %v1410 = vpop.xlane.xlu0 %1409
        %v1411 = vsel %vm1048, %v1392, 0.0
        %1412 = vadd.xlane.f32.xlu0 %v1411
        %v1413 = vpop.xlane.xlu0 %1412
        %v1414 = vsel %vm1048, %v1394, 0.0
        %1415 = vadd.xlane.f32.xlu0 %v1414
        %v1416 = vpop.xlane.xlu0 %1415
        %v1417 = vsel %vm1048, %v1396, 0.0
        %1418 = vadd.xlane.f32.xlu0 %v1417
        %v1419 = vpop.xlane.xlu0 %1418
        %v1420 = vsel %vm1048, %v1398, 0.0
        %1421 = vadd.xlane.f32.xlu0 %v1420
        %v1422 = vpop.xlane.xlu0 %1421
        %v1423 = vrcp.pop %v1401
        %v1424 = vrcp.pop %v1404
        %v1425 = vrcp.pop %v1407
        %v1426 = vrcp.pop %v1410
        %v1427 = vrcp.pop %v1413
        %v1428 = vrcp.pop %v1416
        %v1429 = vrcp.pop %v1419
        %v1430 = vrcp.pop %v1422
        %v1431 = vmul.f32 %v1384, %v1423
        %v1432 = vmul.f32 %v1386, %v1424
        %v1433 = vmul.f32 %v1388, %v1425
        %v1434 = vmul.f32 %v1390, %v1426
        %v1435 = vmul.f32 %v1392, %v1427
        %v1436 = vmul.f32 %v1394, %v1428
        %v1437 = vmul.f32 %v1396, %v1429
        %v1438 = vmul.f32 %v1398, %v1430
        %v1439 = vpack.c.bf16 %v1432, %v1431
        %v1440 = vpack.c.bf16 %v1434, %v1433
        %v1441 = vpack.c.bf16 %v1436, %v1435
        %v1442 = vpack.c.bf16 %v1438, %v1437
        %1443 = vrot.lane.b32.xlu0 %v954, 104
        %v1444 = vpop.permute.xlu0 %1443
        %1445 = vrot.lane.b32.xlu0 %v955, 104
        %v1446 = vpop.permute.xlu0 %1445
        %1447 = vrot.lane.b32.xlu0 %v956, 104
        %v1448 = vpop.permute.xlu0 %1447
        %1449 = vrot.lane.b32.xlu0 %v957, 104
        %v1450 = vpop.permute.xlu0 %1449
        %v1456 = vsel %vm1048, %v1439, 0
        %v1459 = vsel %vm1048, %v1440, 0
        %v1462 = vsel %vm1048, %v1441, 0
        %v1465 = vsel %vm1048, %v1442, 0
        %1467 = vmatprep.subr.bf16.mxu0 0
        %1468 = vmatpush1.bf16.msra.mxu0 0
        %1469 = vmatprep.subr.bf16.mxu0 0
        %1470 = vmatpush1.bf16.msra.mxu0 0
        %1471 = vmatprep.subr.bf16.mxu0 0
        %1472 = vmatpush1.bf16.msra.mxu0 0
        %1473 = vmatprep.subr.bf16.mxu0 0
        %1474 = vmatpush1.bf16.msra.mxu0 0
        %1475 = vmatprep.subr.bf16.mxu0 0
        %1476 = vmatpush1.bf16.msra.mxu0 %v1450
        %1477 = vmatprep.subr.bf16.mxu0 0
        %1478 = vmatpush1.bf16.msra.mxu0 %v1448
        %1479 = vmatprep.subr.bf16.mxu0 0
        %1480 = vmatpush1.bf16.msra.mxu0 %v1446
        %1481 = vmatprep.subr.bf16.mxu0 0
        %1482 = vmatpush1.bf16.msra.mxu0 %v1444
        %1483 = vmatprep.subr.bf16.mxu0 0
        %1484 = vmatpush2.bf16.msra.mxu0 0
        %1485 = vmatprep.subr.bf16.mxu0 0
        %1486 = vmatpush2.bf16.msra.mxu0 0
        %1487 = vmatprep.subr.bf16.mxu0 0
        %1488 = vmatpush2.bf16.msra.mxu0 0
        %1489 = vmatprep.subr.bf16.mxu0 0
        %1490 = vmatpush2.bf16.msra.mxu0 0
        %1491 = vmatprep.subr.bf16.mxu0 0
        %1492 = vmatpush2.bf16.msra.mxu0 0
        %1493 = vmatprep.subr.bf16.mxu0 0
        %1494 = vmatpush2.bf16.msra.mxu0 0
        %1495 = vmatprep.subr.bf16.mxu0 0
        %1496 = vmatpush2.bf16.msra.mxu0 0
        %1497 = vmatprep.subr.bf16.mxu0 0
        %1498 = vmatpush2.bf16.msra.mxu0 0
        %1499 = vmatprep.mubr.bf16.mxu0 0
        %1500 = vmatmul.mubr.bf16.gmra.mxu0 %v1456
        %v1501 = vpop.f32.mrf.mxu0
        %v1502 = vadd.f32 0.0, %v1501
        %v1503 = vpop.f32.mrf.mxu0
        %v1504 = vpop.f32.mrf.mxu0
        %v1505 = vadd.f32 0.0, %v1504
        %v1506 = vpop.f32.mrf.mxu0
        %1507 = vmatprep.mubr.bf16.mxu0 0
        %1508 = vmatmul.mubr.bf16.gmra.mxu0 %v1459
        %v1509 = vpop.f32.mrf.mxu0
        %v1510 = vadd.f32 0.0, %v1509
        %v1511 = vpop.f32.mrf.mxu0
        %v1512 = vpop.f32.mrf.mxu0
        %v1513 = vadd.f32 0.0, %v1512
        %v1514 = vpop.f32.mrf.mxu0
        %1515 = vmatprep.mubr.bf16.mxu0 0
        %1516 = vmatmul.mubr.bf16.gmra.mxu0 %v1462
        %v1517 = vpop.f32.mrf.mxu0
        %v1518 = vadd.f32 0.0, %v1517
        %v1519 = vpop.f32.mrf.mxu0
        %v1520 = vpop.f32.mrf.mxu0
        %v1521 = vadd.f32 0.0, %v1520
        %v1522 = vpop.f32.mrf.mxu0
        %1523 = vmatprep.mubr.bf16.mxu0 0
        %1524 = vmatmul.mubr.bf16.gmra.mxu0 %v1465
        %v1525 = vpop.f32.mrf.mxu0
        %v1526 = vadd.f32 0.0, %v1525
        %v1527 = vpop.f32.mrf.mxu0
        %v1528 = vpop.f32.mrf.mxu0
        %v1529 = vadd.f32 0.0, %v1528
        %v1530 = vpop.f32.mrf.mxu0
        %1531 = vdwg.mxu0
        %1540 = vrot.lane.b32.xlu0 %v1502, 8
        %v1541 = vpop.permute.xlu0 %1540
        %1542 = vrot.lane.b32.xlu0 %v1505, 8
        %v1543 = vpop.permute.xlu0 %1542
        %1544 = vrot.lane.b32.xlu0 %v1510, 8
        %v1545 = vpop.permute.xlu0 %1544
        %1546 = vrot.lane.b32.xlu0 %v1513, 8
        %v1547 = vpop.permute.xlu0 %1546
        %1548 = vrot.lane.b32.xlu0 %v1518, 8
        %v1549 = vpop.permute.xlu0 %1548
        %1550 = vrot.lane.b32.xlu0 %v1521, 8
        %v1551 = vpop.permute.xlu0 %1550
        %1552 = vrot.lane.b32.xlu0 %v1526, 8
        %v1553 = vpop.permute.xlu0 %1552
        %1554 = vrot.lane.b32.xlu0 %v1529, 8
        %v1555 = vpop.permute.xlu0 %1554
        %vm1564 = vcmask 130112
        %1565 = vst.msk [vmem:[#allocation2] sm:$0xff] %vm1564, %v1541
        %1566 = vst.msk [vmem:[#allocation2 + $0x8] sm:$0xff] %vm1564, %v1543
        %1567 = vst.msk [vmem:[#allocation2 + $0x10] sm:$0xff] %vm1564, %v1545
        %1568 = vst.msk [vmem:[#allocation2 + $0x18] sm:$0xff] %vm1564, %v1547
        %1569 = vst.msk [vmem:[#allocation2 + $0x20] sm:$0xff] %vm1564, %v1549
        %1570 = vst.msk [vmem:[#allocation2 + $0x28] sm:$0xff] %vm1564, %v1551
        %1571 = vst.msk [vmem:[#allocation2 + $0x30] sm:$0xff] %vm1564, %v1553
        %1572 = vst.msk [vmem:[#allocation2 + $0x38] sm:$0xff] %vm1564, %v1555
        %v1573 = vld [vmem:[#allocation2] sm:$0xff]
        %v1574 = vld [vmem:[#allocation2 + $0x8] sm:$0xff]
        %v1575 = vld [vmem:[#allocation2 + $0x10] sm:$0xff]
        %v1576 = vld [vmem:[#allocation2 + $0x18] sm:$0xff]
        %v1577 = vld [vmem:[#allocation2 + $0x20] sm:$0xff]
        %v1578 = vld [vmem:[#allocation2 + $0x28] sm:$0xff]
        %v1579 = vld [vmem:[#allocation2 + $0x30] sm:$0xff]
        %v1580 = vld [vmem:[#allocation2 + $0x38] sm:$0xff]
        %v1581 = vld [vmem:[%s6] sm:$0xf]
        %v1582 = vld [vmem:[%s6 + $0x4] sm:$0xf]
        %v1583 = vpack.c.bf16 %v1574, %v1573
        %v1584 = vpack.c.bf16 %v1576, %v1575
        %v1585 = vpack.c.bf16 %v1578, %v1577
        %v1586 = vpack.c.bf16 %v1580, %v1579
        %v1587 = vld [vmem:[%s7] sm:$0x1]
        %v1589 = vlaneseq
        %v1590 = vshrl.u32 %v1589, 7
        %v1591 = vsub.s32 0, %v1590
        %v1592 = vrot.slane %v1587, %v1591
        %v1596 = vunpack.c.l.b16 %v1581
        %v1597 = vunpack.c.l.b16 %v1582
        %v1598 = vpack.c.b16 %v1597, %v1596
        %v1601 = vsel %vm872, %v1583, 0
        %v1604 = vsel %vm872, %v1584, 0
        %v1607 = vsel %vm872, %v1585, 0
        %v1610 = vsel %vm872, %v1586, 0
        %1612 = vmatprep.subr.bf16.mxu0 0
        %1613 = vmatpush1.bf16.msra.mxu0 0
        %1614 = vmatprep.subr.bf16.mxu0 0
        %1615 = vmatpush1.bf16.msra.mxu0 0
        %1616 = vmatprep.subr.bf16.mxu0 0
        %1617 = vmatpush1.bf16.msra.mxu0 0
        %1618 = vmatprep.subr.bf16.mxu0 0
        %1619 = vmatpush1.bf16.msra.mxu0 0
        %1620 = vmatprep.subr.bf16.mxu0 0
        %1621 = vmatpush1.bf16.msra.mxu0 0
        %1622 = vmatprep.subr.bf16.mxu0 0
        %1623 = vmatpush1.bf16.msra.mxu0 0
        %1624 = vmatprep.subr.bf16.mxu0 0
        %1625 = vmatpush1.bf16.msra.mxu0 0
        %1626 = vmatprep.subr.bf16.mxu0 0
        %1627 = vmatpush1.bf16.msra.mxu0 %v1598
        %1628 = vmatprep.subr.bf16.mxu0 0
        %1629 = vmatpush2.bf16.msra.mxu0 0
        %1630 = vmatprep.subr.bf16.mxu0 0
        %1631 = vmatpush2.bf16.msra.mxu0 0
        %1632 = vmatprep.subr.bf16.mxu0 0
        %1633 = vmatpush2.bf16.msra.mxu0 0
        %1634 = vmatprep.subr.bf16.mxu0 0
        %1635 = vmatpush2.bf16.msra.mxu0 0
        %1636 = vmatprep.subr.bf16.mxu0 0
        %1637 = vmatpush2.bf16.msra.mxu0 0
        %1638 = vmatprep.subr.bf16.mxu0 0
        %1639 = vmatpush2.bf16.msra.mxu0 0
        %1640 = vmatprep.subr.bf16.mxu0 0
        %1641 = vmatpush2.bf16.msra.mxu0 0
        %1642 = vmatprep.subr.bf16.mxu0 0
        %1643 = vmatpush2.bf16.msra.mxu0 0
        %1644 = vmatprep.mubr.bf16.mxu0 0
        %1645 = vmatmul.mubr.bf16.gmra.mxu0 %v1601
        %v1646 = vpop.f32.mrf.mxu0
        %v1647 = vadd.f32 %v1592, %v1646
        %v1648 = vpop.f32.mrf.mxu0
        %v1649 = vpop.f32.mrf.mxu0
        %v1650 = vadd.f32 %v1592, %v1649
        %v1651 = vpop.f32.mrf.mxu0
        %1652 = vmatprep.mubr.bf16.mxu0 0
        %1653 = vmatmul.mubr.bf16.gmra.mxu0 %v1604
        %v1654 = vpop.f32.mrf.mxu0
        %v1655 = vadd.f32 %v1592, %v1654
        %v1656 = vpop.f32.mrf.mxu0
        %v1657 = vpop.f32.mrf.mxu0
        %v1658 = vadd.f32 %v1592, %v1657
        %v1659 = vpop.f32.mrf.mxu0
        %1660 = vmatprep.mubr.bf16.mxu0 0
        %1661 = vmatmul.mubr.bf16.gmra.mxu0 %v1607
        %v1662 = vpop.f32.mrf.mxu0
        %v1663 = vadd.f32 %v1592, %v1662
        %v1664 = vpop.f32.mrf.mxu0
        %v1665 = vpop.f32.mrf.mxu0
        %v1666 = vadd.f32 %v1592, %v1665
        %v1667 = vpop.f32.mrf.mxu0
        %1668 = vmatprep.mubr.bf16.mxu0 0
        %1669 = vmatmul.mubr.bf16.gmra.mxu0 %v1610
        %v1670 = vpop.f32.mrf.mxu0
        %v1671 = vadd.f32 %v1592, %v1670
        %v1672 = vpop.f32.mrf.mxu0
        %v1673 = vpop.f32.mrf.mxu0
        %v1674 = vadd.f32 %v1592, %v1673
        %v1675 = vpop.f32.mrf.mxu0
        %1676 = vdwg.mxu0
        %v1677 = vadd.f32 %v813, %v1647
        %v1678 = vadd.f32 %v814, %v1650
        %v1679 = vadd.f32 %v815, %v1655
        %v1680 = vadd.f32 %v816, %v1658
        %v1681 = vadd.f32 %v817, %v1663
        %v1682 = vadd.f32 %v818, %v1666
        %v1683 = vadd.f32 %v819, %v1671
        %v1684 = vadd.f32 %v820, %v1674
        %v1685 = vld [vmem:[%s8] sm:$0x1]
        %v1686 = vld [vmem:[%s9] sm:$0x1]
        %v1687 = vsel %vm872, %v1677, 0.0
        %1688 = vadd.xlane.f32.xlu0 %v1687
        %v1689 = vpop.xlane.xlu0 %1688
        %v1690 = vsel %vm872, %v1678, 0.0
        %1691 = vadd.xlane.f32.xlu0 %v1690
        %v1692 = vpop.xlane.xlu0 %1691
        %v1693 = vsel %vm872, %v1679, 0.0
        %1694 = vadd.xlane.f32.xlu0 %v1693
        %v1695 = vpop.xlane.xlu0 %1694
        %v1696 = vsel %vm872, %v1680, 0.0
        %1697 = vadd.xlane.f32.xlu0 %v1696
        %v1698 = vpop.xlane.xlu0 %1697
        %v1699 = vsel %vm872, %v1681, 0.0
        %1700 = vadd.xlane.f32.xlu0 %v1699
        %v1701 = vpop.xlane.xlu0 %1700
        %v1702 = vsel %vm872, %v1682, 0.0
        %1703 = vadd.xlane.f32.xlu0 %v1702
        %v1704 = vpop.xlane.xlu0 %1703
        %v1705 = vsel %vm872, %v1683, 0.0
        %1706 = vadd.xlane.f32.xlu0 %v1705
        %v1707 = vpop.xlane.xlu0 %1706
        %v1708 = vsel %vm872, %v1684, 0.0
        %1709 = vadd.xlane.f32.xlu0 %v1708
        %v1710 = vpop.xlane.xlu0 %1709
        %v1711 = vrcp.pop 16.0
        %v1712 = vmul.f32 %v1689, %v1711
        %v1713 = vmul.f32 %v1692, %v1711
        %v1714 = vmul.f32 %v1695, %v1711
        %v1715 = vmul.f32 %v1698, %v1711
        %v1716 = vmul.f32 %v1701, %v1711
        %v1717 = vmul.f32 %v1704, %v1711
        %v1718 = vmul.f32 %v1707, %v1711
        %v1719 = vmul.f32 %v1710, %v1711
        %v1720 = vsub.f32 %v1677, %v1712
        %v1721 = vsub.f32 %v1678, %v1713
        %v1722 = vsub.f32 %v1679, %v1714
        %v1723 = vsub.f32 %v1680, %v1715
        %v1724 = vsub.f32 %v1681, %v1716
        %v1725 = vsub.f32 %v1682, %v1717
        %v1726 = vsub.f32 %v1683, %v1718
        %v1727 = vsub.f32 %v1684, %v1719
        %v1728 = vmul.f32 %v1720, %v1720
        %v1729 = vmul.f32 %v1721, %v1721
        %v1730 = vmul.f32 %v1722, %v1722
        %v1731 = vmul.f32 %v1723, %v1723
        %v1732 = vmul.f32 %v1724, %v1724
        %v1733 = vmul.f32 %v1725, %v1725
        %v1734 = vmul.f32 %v1726, %v1726
        %v1735 = vmul.f32 %v1727, %v1727
        %v1736 = vsel %vm872, %v1728, 0.0
        %1737 = vadd.xlane.f32.xlu0 %v1736
        %v1738 = vpop.xlane.xlu0 %1737
        %v1739 = vsel %vm872, %v1729, 0.0
        %1740 = vadd.xlane.f32.xlu0 %v1739
        %v1741 = vpop.xlane.xlu0 %1740
        %v1742 = vsel %vm872, %v1730, 0.0
        %1743 = vadd.xlane.f32.xlu0 %v1742
        %v1744 = vpop.xlane.xlu0 %1743
        %v1745 = vsel %vm872, %v1731, 0.0
        %1746 = vadd.xlane.f32.xlu0 %v1745
        %v1747 = vpop.xlane.xlu0 %1746
        %v1748 = vsel %vm872, %v1732, 0.0
        %1749 = vadd.xlane.f32.xlu0 %v1748
        %v1750 = vpop.xlane.xlu0 %1749
        %v1751 = vsel %vm872, %v1733, 0.0
        %1752 = vadd.xlane.f32.xlu0 %v1751
        %v1753 = vpop.xlane.xlu0 %1752
        %v1754 = vsel %vm872, %v1734, 0.0
        %1755 = vadd.xlane.f32.xlu0 %v1754
        %v1756 = vpop.xlane.xlu0 %1755
        %v1757 = vsel %vm872, %v1735, 0.0
        %1758 = vadd.xlane.f32.xlu0 %v1757
        %v1759 = vpop.xlane.xlu0 %1758
        %v1760 = vmul.f32 %v1738, %v1711
        %v1761 = vmul.f32 %v1741, %v1711
        %v1762 = vmul.f32 %v1744, %v1711
        %v1763 = vmul.f32 %v1747, %v1711
        %v1764 = vmul.f32 %v1750, %v1711
        %v1765 = vmul.f32 %v1753, %v1711
        %v1766 = vmul.f32 %v1756, %v1711
        %v1767 = vmul.f32 %v1759, %v1711
        %v1768 = vadd.f32 %v1760, 1e-05
        %v1769 = vadd.f32 %v1761, 1e-05
        %v1770 = vadd.f32 %v1762, 1e-05
        %v1771 = vadd.f32 %v1763, 1e-05
        %v1772 = vadd.f32 %v1764, 1e-05
        %v1773 = vadd.f32 %v1765, 1e-05
        %v1774 = vadd.f32 %v1766, 1e-05
        %v1775 = vadd.f32 %v1767, 1e-05
        %v1776 = vrsqrt.pop %v1768
        %v1777 = vrsqrt.pop %v1769
        %v1778 = vrsqrt.pop %v1770
        %v1779 = vrsqrt.pop %v1771
        %v1780 = vrsqrt.pop %v1772
        %v1781 = vrsqrt.pop %v1773
        %v1782 = vrsqrt.pop %v1774
        %v1783 = vrsqrt.pop %v1775
        %v1784 = vmul.f32 %v1720, %v1776
        %v1785 = vmul.f32 %v1721, %v1777
        %v1786 = vmul.f32 %v1722, %v1778
        %v1787 = vmul.f32 %v1723, %v1779
        %v1788 = vmul.f32 %v1724, %v1780
        %v1789 = vmul.f32 %v1725, %v1781
        %v1790 = vmul.f32 %v1726, %v1782
        %v1791 = vmul.f32 %v1727, %v1783
        %v1793 = vlaneseq
        %v1794 = vshrl.u32 %v1793, 7
        %v1795 = vsub.s32 0, %v1794
        %v1796 = vrot.slane %v1685, %v1795
        %v1798 = vmul.f32 %v1784, %v1796
        %v1799 = vmul.f32 %v1785, %v1796
        %v1800 = vmul.f32 %v1786, %v1796
        %v1801 = vmul.f32 %v1787, %v1796
        %v1802 = vmul.f32 %v1788, %v1796
        %v1803 = vmul.f32 %v1789, %v1796
        %v1804 = vmul.f32 %v1790, %v1796
        %v1805 = vmul.f32 %v1791, %v1796
        %v1807 = vlaneseq
        %v1808 = vshrl.u32 %v1807, 7
        %v1809 = vsub.s32 0, %v1808
        %v1810 = vrot.slane %v1686, %v1809
        %v1812 = vadd.f32 %v1798, %v1810
        %v1813 = vadd.f32 %v1799, %v1810
        %v1814 = vadd.f32 %v1800, %v1810
        %v1815 = vadd.f32 %v1801, %v1810
        %v1816 = vadd.f32 %v1802, %v1810
        %v1817 = vadd.f32 %v1803, %v1810
        %v1818 = vadd.f32 %v1804, %v1810
        %v1819 = vadd.f32 %v1805, %v1810
        %v1820 = vld [vmem:[%s10] sm:$0x1]
        %v1821 = vld [vmem:[%s11] sm:$0x1]
        %v1822 = vsel %vm872, %v845, 0.0
        %1823 = vadd.xlane.f32.xlu0 %v1822
        %v1824 = vpop.xlane.xlu0 %1823
        %v1825 = vsel %vm872, %v846, 0.0
        %1826 = vadd.xlane.f32.xlu0 %v1825
        %v1827 = vpop.xlane.xlu0 %1826
        %v1828 = vsel %vm872, %v847, 0.0
        %1829 = vadd.xlane.f32.xlu0 %v1828
        %v1830 = vpop.xlane.xlu0 %1829
        %v1831 = vsel %vm872, %v848, 0.0
        %1832 = vadd.xlane.f32.xlu0 %v1831
        %v1833 = vpop.xlane.xlu0 %1832
        %v1834 = vsel %vm872, %v849, 0.0
        %1835 = vadd.xlane.f32.xlu0 %v1834
        %v1836 = vpop.xlane.xlu0 %1835
        %v1837 = vsel %vm872, %v850, 0.0
        %1838 = vadd.xlane.f32.xlu0 %v1837
        %v1839 = vpop.xlane.xlu0 %1838
        %v1840 = vsel %vm872, %v851, 0.0
        %1841 = vadd.xlane.f32.xlu0 %v1840
        %v1842 = vpop.xlane.xlu0 %1841
        %v1843 = vsel %vm872, %v852, 0.0
        %1844 = vadd.xlane.f32.xlu0 %v1843
        %v1845 = vpop.xlane.xlu0 %1844
        %v1846 = vmul.f32 %v1824, %v1711
        %v1847 = vmul.f32 %v1827, %v1711
        %v1848 = vmul.f32 %v1830, %v1711
        %v1849 = vmul.f32 %v1833, %v1711
        %v1850 = vmul.f32 %v1836, %v1711
        %v1851 = vmul.f32 %v1839, %v1711
        %v1852 = vmul.f32 %v1842, %v1711
        %v1853 = vmul.f32 %v1845, %v1711
        %v1854 = vsub.f32 %v845, %v1846
        %v1855 = vsub.f32 %v846, %v1847
        %v1856 = vsub.f32 %v847, %v1848
        %v1857 = vsub.f32 %v848, %v1849
        %v1858 = vsub.f32 %v849, %v1850
        %v1859 = vsub.f32 %v850, %v1851
        %v1860 = vsub.f32 %v851, %v1852
        %v1861 = vsub.f32 %v852, %v1853
        %v1862 = vmul.f32 %v1854, %v1854
        %v1863 = vmul.f32 %v1855, %v1855
        %v1864 = vmul.f32 %v1856, %v1856
        %v1865 = vmul.f32 %v1857, %v1857
        %v1866 = vmul.f32 %v1858, %v1858
        %v1867 = vmul.f32 %v1859, %v1859
        %v1868 = vmul.f32 %v1860, %v1860
        %v1869 = vmul.f32 %v1861, %v1861
        %v1870 = vsel %vm872, %v1862, 0.0
        %1871 = vadd.xlane.f32.xlu0 %v1870
        %v1872 = vpop.xlane.xlu0 %1871
        %v1873 = vsel %vm872, %v1863, 0.0
        %1874 = vadd.xlane.f32.xlu0 %v1873
        %v1875 = vpop.xlane.xlu0 %1874
        %v1876 = vsel %vm872, %v1864, 0.0
        %1877 = vadd.xlane.f32.xlu0 %v1876
        %v1878 = vpop.xlane.xlu0 %1877
        %v1879 = vsel %vm872, %v1865, 0.0
        %1880 = vadd.xlane.f32.xlu0 %v1879
        %v1881 = vpop.xlane.xlu0 %1880
        %v1882 = vsel %vm872, %v1866, 0.0
        %1883 = vadd.xlane.f32.xlu0 %v1882
        %v1884 = vpop.xlane.xlu0 %1883
        %v1885 = vsel %vm872, %v1867, 0.0
        %1886 = vadd.xlane.f32.xlu0 %v1885
        %v1887 = vpop.xlane.xlu0 %1886
        %v1888 = vsel %vm872, %v1868, 0.0
        %1889 = vadd.xlane.f32.xlu0 %v1888
        %v1890 = vpop.xlane.xlu0 %1889
        %v1891 = vsel %vm872, %v1869, 0.0
        %1892 = vadd.xlane.f32.xlu0 %v1891
        %v1893 = vpop.xlane.xlu0 %1892
        %v1894 = vmul.f32 %v1872, %v1711
        %v1895 = vmul.f32 %v1875, %v1711
        %v1896 = vmul.f32 %v1878, %v1711
        %v1897 = vmul.f32 %v1881, %v1711
        %v1898 = vmul.f32 %v1884, %v1711
        %v1899 = vmul.f32 %v1887, %v1711
        %v1900 = vmul.f32 %v1890, %v1711
        %v1901 = vmul.f32 %v1893, %v1711
        %v1902 = vadd.f32 %v1894, 1e-05
        %v1903 = vadd.f32 %v1895, 1e-05
        %v1904 = vadd.f32 %v1896, 1e-05
        %v1905 = vadd.f32 %v1897, 1e-05
        %v1906 = vadd.f32 %v1898, 1e-05
        %v1907 = vadd.f32 %v1899, 1e-05
        %v1908 = vadd.f32 %v1900, 1e-05
        %v1909 = vadd.f32 %v1901, 1e-05
        %v1910 = vrsqrt.pop %v1902
        %v1911 = vrsqrt.pop %v1903
        %v1912 = vrsqrt.pop %v1904
        %v1913 = vrsqrt.pop %v1905
        %v1914 = vrsqrt.pop %v1906
        %v1915 = vrsqrt.pop %v1907
        %v1916 = vrsqrt.pop %v1908
        %v1917 = vrsqrt.pop %v1909
        %v1918 = vmul.f32 %v1854, %v1910
        %v1919 = vmul.f32 %v1855, %v1911
        %v1920 = vmul.f32 %v1856, %v1912
        %v1921 = vmul.f32 %v1857, %v1913
        %v1922 = vmul.f32 %v1858, %v1914
        %v1923 = vmul.f32 %v1859, %v1915
        %v1924 = vmul.f32 %v1860, %v1916
        %v1925 = vmul.f32 %v1861, %v1917
        %v1927 = vlaneseq
        %v1928 = vshrl.u32 %v1927, 7
        %v1929 = vsub.s32 0, %v1928
        %v1930 = vrot.slane %v1820, %v1929
        %v1932 = vmul.f32 %v1918, %v1930
        %v1933 = vmul.f32 %v1919, %v1930
        %v1934 = vmul.f32 %v1920, %v1930
        %v1935 = vmul.f32 %v1921, %v1930
        %v1936 = vmul.f32 %v1922, %v1930
        %v1937 = vmul.f32 %v1923, %v1930
        %v1938 = vmul.f32 %v1924, %v1930
        %v1939 = vmul.f32 %v1925, %v1930
        %v1941 = vlaneseq
        %v1942 = vshrl.u32 %v1941, 7
        %v1943 = vsub.s32 0, %v1942
        %v1944 = vrot.slane %v1821, %v1943
        %v1946 = vadd.f32 %v1932, %v1944
        %v1947 = vadd.f32 %v1933, %v1944
        %v1948 = vadd.f32 %v1934, %v1944
        %v1949 = vadd.f32 %v1935, %v1944
        %v1950 = vadd.f32 %v1936, %v1944
        %v1951 = vadd.f32 %v1937, %v1944
        %v1952 = vadd.f32 %v1938, %v1944
        %v1953 = vadd.f32 %v1939, %v1944
        %v1954 = vld [vmem:[%s12] sm:$0xf]
        %v1955 = vld [vmem:[%s12 + $0x4] sm:$0xf]
        %v1956 = vpack.c.bf16 %v1813, %v1812
        %v1957 = vpack.c.bf16 %v1815, %v1814
        %v1958 = vpack.c.bf16 %v1817, %v1816
        %v1959 = vpack.c.bf16 %v1819, %v1818
        %v1962 = vunpack.c.l.b16 %v1954
        %v1963 = vunpack.c.l.b16 %v1955
        %v1964 = vpack.c.b16 %v1963, %v1962
        %v1967 = vsel %vm872, %v1956, 0
        %v1970 = vsel %vm872, %v1957, 0
        %v1973 = vsel %vm872, %v1958, 0
        %v1976 = vsel %vm872, %v1959, 0
        %1978 = vmatprep.subr.bf16.mxu0 0
        %1979 = vmatpush1.bf16.msra.mxu0 0
        %1980 = vmatprep.subr.bf16.mxu0 0
        %1981 = vmatpush1.bf16.msra.mxu0 0
        %1982 = vmatprep.subr.bf16.mxu0 0
        %1983 = vmatpush1.bf16.msra.mxu0 0
        %1984 = vmatprep.subr.bf16.mxu0 0
        %1985 = vmatpush1.bf16.msra.mxu0 0
        %1986 = vmatprep.subr.bf16.mxu0 0
        %1987 = vmatpush1.bf16.msra.mxu0 0
        %1988 = vmatprep.subr.bf16.mxu0 0
        %1989 = vmatpush1.bf16.msra.mxu0 0
        %1990 = vmatprep.subr.bf16.mxu0 0
        %1991 = vmatpush1.bf16.msra.mxu0 0
        %1992 = vmatprep.subr.bf16.mxu0 0
        %1993 = vmatpush1.bf16.msra.mxu0 %v1964
        %1994 = vmatprep.subr.bf16.mxu0 0
        %1995 = vmatpush2.bf16.msra.mxu0 0
        %1996 = vmatprep.subr.bf16.mxu0 0
        %1997 = vmatpush2.bf16.msra.mxu0 0
        %1998 = vmatprep.subr.bf16.mxu0 0
        %1999 = vmatpush2.bf16.msra.mxu0 0
        %2000 = vmatprep.subr.bf16.mxu0 0
        %2001 = vmatpush2.bf16.msra.mxu0 0
        %2002 = vmatprep.subr.bf16.mxu0 0
        %2003 = vmatpush2.bf16.msra.mxu0 0
        %2004 = vmatprep.subr.bf16.mxu0 0
        %2005 = vmatpush2.bf16.msra.mxu0 0
        %2006 = vmatprep.subr.bf16.mxu0 0
        %2007 = vmatpush2.bf16.msra.mxu0 0
        %2008 = vmatprep.subr.bf16.mxu0 0
        %2009 = vmatpush2.bf16.msra.mxu0 0
        %2010 = vmatprep.mubr.bf16.mxu0 0
        %2011 = vmatmul.mubr.bf16.gmra.mxu0 %v1967
        %v2012 = vpop.f32.mrf.mxu0
        %v2013 = vadd.f32 0.0, %v2012
        %v2014 = vpop.f32.mrf.mxu0
        %v2015 = vpop.f32.mrf.mxu0
        %v2016 = vadd.f32 0.0, %v2015
        %v2017 = vpop.f32.mrf.mxu0
        %2018 = vmatprep.mubr.bf16.mxu0 0
        %2019 = vmatmul.mubr.bf16.gmra.mxu0 %v1970
        %v2020 = vpop.f32.mrf.mxu0
        %v2021 = vadd.f32 0.0, %v2020
        %v2022 = vpop.f32.mrf.mxu0
        %v2023 = vpop.f32.mrf.mxu0
        %v2024 = vadd.f32 0.0, %v2023
        %v2025 = vpop.f32.mrf.mxu0
        %2026 = vmatprep.mubr.bf16.mxu0 0
        %2027 = vmatmul.mubr.bf16.gmra.mxu0 %v1973
        %v2028 = vpop.f32.mrf.mxu0
        %v2029 = vadd.f32 0.0, %v2028
        %v2030 = vpop.f32.mrf.mxu0
        %v2031 = vpop.f32.mrf.mxu0
        %v2032 = vadd.f32 0.0, %v2031
        %v2033 = vpop.f32.mrf.mxu0
        %2034 = vmatprep.mubr.bf16.mxu0 0
        %2035 = vmatmul.mubr.bf16.gmra.mxu0 %v1976
        %v2036 = vpop.f32.mrf.mxu0
        %v2037 = vadd.f32 0.0, %v2036
        %v2038 = vpop.f32.mrf.mxu0
        %v2039 = vpop.f32.mrf.mxu0
        %v2040 = vadd.f32 0.0, %v2039
        %v2041 = vpop.f32.mrf.mxu0
        %2042 = vdwg.mxu0
        %v2043 = vld [vmem:[%s13] sm:$0xff]
        %v2044 = vld [vmem:[%s13 + $0x8] sm:$0x1]
        %v2045 = vrot.slane %v2013, 7
        %v2046 = vrot.slane %v2016, 7
        %v2047 = vrot.slane %v2021, 7
        %v2048 = vrot.slane %v2024, 7
        %v2049 = vrot.slane %v2029, 7
        %v2050 = vrot.slane %v2032, 7
        %v2051 = vrot.slane %v2037, 7
        %v2052 = vrot.slane %v2040, 7
        %v2053 = vlaneseq
        %v2054 = vshrl.u32 %v2053, 7
        %vm2055 = vcmp.lt.s32.totalorder %v2054, 1
        %v2056 = vsel %vm2055, %v2051, %v2052
        %v2057 = vsel %vm2055, %v2050, %v2051
        %v2058 = vsel %vm2055, %v2049, %v2050
        %v2059 = vsel %vm2055, %v2048, %v2049
        %v2060 = vsel %vm2055, %v2047, %v2048
        %v2061 = vsel %vm2055, %v2046, %v2047
        %v2062 = vsel %vm2055, %v2045, %v2046
        %v2063 = vsel %vm2055, %v2052, %v2045
        %v2064 = vld [vmem:[%s23] sm:$0xff]
        %v2065 = vld [vmem:[%s23 + $0x8] sm:$0xff]
        %v2066 = vld [vmem:[%s23 + $0x10] sm:$0xff]
        %v2067 = vld [vmem:[%s23 + $0x18] sm:$0xff]
        %v2068 = vld [vmem:[%s23 + $0x20] sm:$0xff]
        %v2069 = vld [vmem:[%s23 + $0x28] sm:$0xff]
        %v2070 = vld [vmem:[%s23 + $0x30] sm:$0xff]
        %v2071 = vld [vmem:[%s23 + $0x38] sm:$0xff]
        %2073 = vset.pattern.permute.xlu0 0
        %2074 = vperm.xlu0 %2073, %v2064
        %v2075 = vpop.permute.xlu0 %2074
        %2078 = vset.pattern.permute.xlu0 0
        %2079 = vperm.xlu0 %2078, %v2065
        %v2080 = vpop.permute.xlu0 %2079
        %2083 = vset.pattern.permute.xlu0 0
        %2084 = vperm.xlu0 %2083, %v2066
        %v2085 = vpop.permute.xlu0 %2084
        %2088 = vset.pattern.permute.xlu0 0
        %2089 = vperm.xlu0 %2088, %v2067
        %v2090 = vpop.permute.xlu0 %2089
        %2093 = vset.pattern.permute.xlu0 0
        %2094 = vperm.xlu0 %2093, %v2068
        %v2095 = vpop.permute.xlu0 %2094
        %2098 = vset.pattern.permute.xlu0 0
        %2099 = vperm.xlu0 %2098, %v2069
        %v2100 = vpop.permute.xlu0 %2099
        %2103 = vset.pattern.permute.xlu0 0
        %2104 = vperm.xlu0 %2103, %v2070
        %v2105 = vpop.permute.xlu0 %2104
        %2108 = vset.pattern.permute.xlu0 0
        %2109 = vperm.xlu0 %2108, %v2071
        %v2110 = vpop.permute.xlu0 %2109
        %v2112 = vmul.f32 %v2056, %v2075
        %v2113 = vmul.f32 %v2063, %v2080
        %v2114 = vmul.f32 %v2062, %v2085
        %v2115 = vmul.f32 %v2061, %v2090
        %v2116 = vmul.f32 %v2060, %v2095
        %v2117 = vmul.f32 %v2059, %v2100
        %v2118 = vmul.f32 %v2058, %v2105
        %v2119 = vmul.f32 %v2057, %v2110
        %v2120 = vlaneseq
        %v2121 = vshrl.u32 %v2120, 7
        %v2122 = vsub.s32 0, %v2121
        %v2123 = vrot.slane %v2043, %v2122
        %v2124 = vmul.f32 %v2112, %v2123
        %v2125 = vmul.f32 %v2113, %v2123
        %v2126 = vmul.f32 %v2114, %v2123
        %v2127 = vmul.f32 %v2115, %v2123
        %v2128 = vmul.f32 %v2116, %v2123
        %v2129 = vmul.f32 %v2117, %v2123
        %v2130 = vmul.f32 %v2118, %v2123
        %v2131 = vmul.f32 %v2119, %v2123
        %v2132 = vadd.f32 %v2124, 0.0
        %v2133 = vadd.f32 %v2125, 0.0
        %v2134 = vadd.f32 %v2126, 0.0
        %v2135 = vadd.f32 %v2127, 0.0
        %v2136 = vadd.f32 %v2128, 0.0
        %v2137 = vadd.f32 %v2129, 0.0
        %v2138 = vadd.f32 %v2130, 0.0
        %v2139 = vadd.f32 %v2131, 0.0
        %s2140 = scalar_lea.vmem %s23, 64
        %v2141 = vld [vmem:[%s2140] sm:$0xff]
        %v2142 = vld [vmem:[%s2140 + $0x8] sm:$0xff]
        %v2143 = vld [vmem:[%s2140 + $0x10] sm:$0xff]
        %v2144 = vld [vmem:[%s2140 + $0x18] sm:$0xff]
        %v2145 = vld [vmem:[%s2140 + $0x20] sm:$0xff]
        %v2146 = vld [vmem:[%s2140 + $0x28] sm:$0xff]
        %v2147 = vld [vmem:[%s2140 + $0x30] sm:$0xff]
        %v2148 = vld [vmem:[%s2140 + $0x38] sm:$0xff]
        %2150 = vset.pattern.permute.xlu0 0
        %2151 = vperm.xlu0 %2150, %v2141
        %v2152 = vpop.permute.xlu0 %2151
        %2155 = vset.pattern.permute.xlu0 0
        %2156 = vperm.xlu0 %2155, %v2142
        %v2157 = vpop.permute.xlu0 %2156
        %2160 = vset.pattern.permute.xlu0 0
        %2161 = vperm.xlu0 %2160, %v2143
        %v2162 = vpop.permute.xlu0 %2161
        %2165 = vset.pattern.permute.xlu0 0
        %2166 = vperm.xlu0 %2165, %v2144
        %v2167 = vpop.permute.xlu0 %2166
        %2170 = vset.pattern.permute.xlu0 0
        %2171 = vperm.xlu0 %2170, %v2145
        %v2172 = vpop.permute.xlu0 %2171
        %2175 = vset.pattern.permute.xlu0 0
        %2176 = vperm.xlu0 %2175, %v2146
        %v2177 = vpop.permute.xlu0 %2176
        %2180 = vset.pattern.permute.xlu0 0
        %2181 = vperm.xlu0 %2180, %v2147
        %v2182 = vpop.permute.xlu0 %2181
        %2185 = vset.pattern.permute.xlu0 0
        %2186 = vperm.xlu0 %2185, %v2148
        %v2187 = vpop.permute.xlu0 %2186
        %v2189 = vmul.f32 %v2040, %v2152
        %v2190 = vmul.f32 %v2013, %v2157
        %v2191 = vmul.f32 %v2016, %v2162
        %v2192 = vmul.f32 %v2021, %v2167
        %v2193 = vmul.f32 %v2024, %v2172
        %v2194 = vmul.f32 %v2029, %v2177
        %v2195 = vmul.f32 %v2032, %v2182
        %v2196 = vmul.f32 %v2037, %v2187
        %v2197 = vlaneseq
        %v2198 = vshrl.u32 %v2197, 7
        %v2199 = vsub.s32 1, %v2198
        %v2200 = vrot.slane %v2043, %v2199
        %v2201 = vmul.f32 %v2189, %v2200
        %v2202 = vmul.f32 %v2190, %v2200
        %v2203 = vmul.f32 %v2191, %v2200
        %v2204 = vmul.f32 %v2192, %v2200
        %v2205 = vmul.f32 %v2193, %v2200
        %v2206 = vmul.f32 %v2194, %v2200
        %v2207 = vmul.f32 %v2195, %v2200
        %v2208 = vmul.f32 %v2196, %v2200
        %v2209 = vadd.f32 %v2132, %v2201
        %v2210 = vadd.f32 %v2133, %v2202
        %v2211 = vadd.f32 %v2134, %v2203
        %v2212 = vadd.f32 %v2135, %v2204
        %v2213 = vadd.f32 %v2136, %v2205
        %v2214 = vadd.f32 %v2137, %v2206
        %v2215 = vadd.f32 %v2138, %v2207
        %v2216 = vadd.f32 %v2139, %v2208
        %v2217 = vrot.slane %v2013, 1
        %v2218 = vrot.slane %v2016, 1
        %v2219 = vrot.slane %v2021, 1
        %v2220 = vrot.slane %v2024, 1
        %v2221 = vrot.slane %v2029, 1
        %v2222 = vrot.slane %v2032, 1
        %v2223 = vrot.slane %v2037, 1
        %v2224 = vrot.slane %v2040, 1
        %vm2225 = vcmp.lt.s32.totalorder %v2054, 7
        %v2226 = vsel %vm2225, %v2223, %v2224
        %v2227 = vsel %vm2225, %v2222, %v2223
        %v2228 = vsel %vm2225, %v2221, %v2222
        %v2229 = vsel %vm2225, %v2220, %v2221
        %v2230 = vsel %vm2225, %v2219, %v2220
        %v2231 = vsel %vm2225, %v2218, %v2219
        %v2232 = vsel %vm2225, %v2217, %v2218
        %v2233 = vsel %vm2225, %v2224, %v2217
        %s2234 = scalar_lea.vmem %s23, 128
        %v2235 = vld [vmem:[%s2234] sm:$0xff]
        %v2236 = vld [vmem:[%s2234 + $0x8] sm:$0xff]
        %v2237 = vld [vmem:[%s2234 + $0x10] sm:$0xff]
        %v2238 = vld [vmem:[%s2234 + $0x18] sm:$0xff]
        %v2239 = vld [vmem:[%s2234 + $0x20] sm:$0xff]
        %v2240 = vld [vmem:[%s2234 + $0x28] sm:$0xff]
        %v2241 = vld [vmem:[%s2234 + $0x30] sm:$0xff]
        %v2242 = vld [vmem:[%s2234 + $0x38] sm:$0xff]
        %2244 = vset.pattern.permute.xlu0 0
        %2245 = vperm.xlu0 %2244, %v2235
        %v2246 = vpop.permute.xlu0 %2245
        %2249 = vset.pattern.permute.xlu0 0
        %2250 = vperm.xlu0 %2249, %v2236
        %v2251 = vpop.permute.xlu0 %2250
        %2254 = vset.pattern.permute.xlu0 0
        %2255 = vperm.xlu0 %2254, %v2237
        %v2256 = vpop.permute.xlu0 %2255
        %2259 = vset.pattern.permute.xlu0 0
        %2260 = vperm.xlu0 %2259, %v2238
        %v2261 = vpop.permute.xlu0 %2260
        %2264 = vset.pattern.permute.xlu0 0
        %2265 = vperm.xlu0 %2264, %v2239
        %v2266 = vpop.permute.xlu0 %2265
        %2269 = vset.pattern.permute.xlu0 0
        %2270 = vperm.xlu0 %2269, %v2240
        %v2271 = vpop.permute.xlu0 %2270
        %2274 = vset.pattern.permute.xlu0 0
        %2275 = vperm.xlu0 %2274, %v2241
        %v2276 = vpop.permute.xlu0 %2275
        %2279 = vset.pattern.permute.xlu0 0
        %2280 = vperm.xlu0 %2279, %v2242
        %v2281 = vpop.permute.xlu0 %2280
        %v2283 = vmul.f32 %v2233, %v2246
        %v2284 = vmul.f32 %v2232, %v2251
        %v2285 = vmul.f32 %v2231, %v2256
        %v2286 = vmul.f32 %v2230, %v2261
        %v2287 = vmul.f32 %v2229, %v2266
        %v2288 = vmul.f32 %v2228, %v2271
        %v2289 = vmul.f32 %v2227, %v2276
        %v2290 = vmul.f32 %v2226, %v2281
        %v2291 = vlaneseq
        %v2292 = vshrl.u32 %v2291, 7
        %v2293 = vsub.s32 2, %v2292
        %v2294 = vrot.slane %v2043, %v2293
        %v2295 = vmul.f32 %v2283, %v2294
        %v2296 = vmul.f32 %v2284, %v2294
        %v2297 = vmul.f32 %v2285, %v2294
        %v2298 = vmul.f32 %v2286, %v2294
        %v2299 = vmul.f32 %v2287, %v2294
        %v2300 = vmul.f32 %v2288, %v2294
        %v2301 = vmul.f32 %v2289, %v2294
        %v2302 = vmul.f32 %v2290, %v2294
        %v2303 = vadd.f32 %v2209, %v2295
        %v2304 = vadd.f32 %v2210, %v2296
        %v2305 = vadd.f32 %v2211, %v2297
        %v2306 = vadd.f32 %v2212, %v2298
        %v2307 = vadd.f32 %v2213, %v2299
        %v2308 = vadd.f32 %v2214, %v2300
        %v2309 = vadd.f32 %v2215, %v2301
        %v2310 = vadd.f32 %v2216, %v2302
        %s2311 = scalar_lea.vmem %s23, 192
        %v2312 = vld [vmem:[%s2311] sm:$0xff]
        %v2313 = vld [vmem:[%s2311 + $0x8] sm:$0xff]
        %v2314 = vld [vmem:[%s2311 + $0x10] sm:$0xff]
        %v2315 = vld [vmem:[%s2311 + $0x18] sm:$0xff]
        %v2316 = vld [vmem:[%s2311 + $0x20] sm:$0xff]
        %v2317 = vld [vmem:[%s2311 + $0x28] sm:$0xff]
        %v2318 = vld [vmem:[%s2311 + $0x30] sm:$0xff]
        %v2319 = vld [vmem:[%s2311 + $0x38] sm:$0xff]
        %2321 = vset.pattern.permute.xlu0 0
        %2322 = vperm.xlu0 %2321, %v2312
        %v2323 = vpop.permute.xlu0 %2322
        %2326 = vset.pattern.permute.xlu0 0
        %2327 = vperm.xlu0 %2326, %v2313
        %v2328 = vpop.permute.xlu0 %2327
        %2331 = vset.pattern.permute.xlu0 0
        %2332 = vperm.xlu0 %2331, %v2314
        %v2333 = vpop.permute.xlu0 %2332
        %2336 = vset.pattern.permute.xlu0 0
        %2337 = vperm.xlu0 %2336, %v2315
        %v2338 = vpop.permute.xlu0 %2337
        %2341 = vset.pattern.permute.xlu0 0
        %2342 = vperm.xlu0 %2341, %v2316
        %v2343 = vpop.permute.xlu0 %2342
        %2346 = vset.pattern.permute.xlu0 0
        %2347 = vperm.xlu0 %2346, %v2317
        %v2348 = vpop.permute.xlu0 %2347
        %2351 = vset.pattern.permute.xlu0 0
        %2352 = vperm.xlu0 %2351, %v2318
        %v2353 = vpop.permute.xlu0 %2352
        %2356 = vset.pattern.permute.xlu0 0
        %2357 = vperm.xlu0 %2356, %v2319
        %v2358 = vpop.permute.xlu0 %2357
        %v2360 = vmul.f32 %v2063, %v2323
        %v2361 = vmul.f32 %v2062, %v2328
        %v2362 = vmul.f32 %v2061, %v2333
        %v2363 = vmul.f32 %v2060, %v2338
        %v2364 = vmul.f32 %v2059, %v2343
        %v2365 = vmul.f32 %v2058, %v2348
        %v2366 = vmul.f32 %v2057, %v2353
        %v2367 = vmul.f32 %v2056, %v2358
        %v2368 = vlaneseq
        %v2369 = vshrl.u32 %v2368, 7
        %v2370 = vsub.s32 3, %v2369
        %v2371 = vrot.slane %v2043, %v2370
        %v2372 = vmul.f32 %v2360, %v2371
        %v2373 = vmul.f32 %v2361, %v2371
        %v2374 = vmul.f32 %v2362, %v2371
        %v2375 = vmul.f32 %v2363, %v2371
        %v2376 = vmul.f32 %v2364, %v2371
        %v2377 = vmul.f32 %v2365, %v2371
        %v2378 = vmul.f32 %v2366, %v2371
        %v2379 = vmul.f32 %v2367, %v2371
        %v2380 = vadd.f32 %v2303, %v2372
        %v2381 = vadd.f32 %v2304, %v2373
        %v2382 = vadd.f32 %v2305, %v2374
        %v2383 = vadd.f32 %v2306, %v2375
        %v2384 = vadd.f32 %v2307, %v2376
        %v2385 = vadd.f32 %v2308, %v2377
        %v2386 = vadd.f32 %v2309, %v2378
        %v2387 = vadd.f32 %v2310, %v2379
        %s2388 = scalar_lea.vmem %s23, 256
        %v2389 = vld [vmem:[%s2388] sm:$0xff]
        %v2390 = vld [vmem:[%s2388 + $0x8] sm:$0xff]
        %v2391 = vld [vmem:[%s2388 + $0x10] sm:$0xff]
        %v2392 = vld [vmem:[%s2388 + $0x18] sm:$0xff]
        %v2393 = vld [vmem:[%s2388 + $0x20] sm:$0xff]
        %v2394 = vld [vmem:[%s2388 + $0x28] sm:$0xff]
        %v2395 = vld [vmem:[%s2388 + $0x30] sm:$0xff]
        %v2396 = vld [vmem:[%s2388 + $0x38] sm:$0xff]
        %2398 = vset.pattern.permute.xlu0 0
        %2399 = vperm.xlu0 %2398, %v2389
        %v2400 = vpop.permute.xlu0 %2399
        %2403 = vset.pattern.permute.xlu0 0
        %2404 = vperm.xlu0 %2403, %v2390
        %v2405 = vpop.permute.xlu0 %2404
        %2408 = vset.pattern.permute.xlu0 0
        %2409 = vperm.xlu0 %2408, %v2391
        %v2410 = vpop.permute.xlu0 %2409
        %2413 = vset.pattern.permute.xlu0 0
        %2414 = vperm.xlu0 %2413, %v2392
        %v2415 = vpop.permute.xlu0 %2414
        %2418 = vset.pattern.permute.xlu0 0
        %2419 = vperm.xlu0 %2418, %v2393
        %v2420 = vpop.permute.xlu0 %2419
        %2423 = vset.pattern.permute.xlu0 0
        %2424 = vperm.xlu0 %2423, %v2394
        %v2425 = vpop.permute.xlu0 %2424
        %2428 = vset.pattern.permute.xlu0 0
        %2429 = vperm.xlu0 %2428, %v2395
        %v2430 = vpop.permute.xlu0 %2429
        %2433 = vset.pattern.permute.xlu0 0
        %2434 = vperm.xlu0 %2433, %v2396
        %v2435 = vpop.permute.xlu0 %2434
        %v2437 = vmul.f32 %v2013, %v2400
        %v2438 = vmul.f32 %v2016, %v2405
        %v2439 = vmul.f32 %v2021, %v2410
        %v2440 = vmul.f32 %v2024, %v2415
        %v2441 = vmul.f32 %v2029, %v2420
        %v2442 = vmul.f32 %v2032, %v2425
        %v2443 = vmul.f32 %v2037, %v2430
        %v2444 = vmul.f32 %v2040, %v2435
        %v2445 = vlaneseq
        %v2446 = vshrl.u32 %v2445, 7
        %v2447 = vsub.s32 4, %v2446
        %v2448 = vrot.slane %v2043, %v2447
        %v2449 = vmul.f32 %v2437, %v2448
        %v2450 = vmul.f32 %v2438, %v2448
        %v2451 = vmul.f32 %v2439, %v2448
        %v2452 = vmul.f32 %v2440, %v2448
        %v2453 = vmul.f32 %v2441, %v2448
        %v2454 = vmul.f32 %v2442, %v2448
        %v2455 = vmul.f32 %v2443, %v2448
        %v2456 = vmul.f32 %v2444, %v2448
        %v2457 = vadd.f32 %v2380, %v2449
        %v2458 = vadd.f32 %v2381, %v2450
        %v2459 = vadd.f32 %v2382, %v2451
        %v2460 = vadd.f32 %v2383, %v2452
        %v2461 = vadd.f32 %v2384, %v2453
        %v2462 = vadd.f32 %v2385, %v2454
        %v2463 = vadd.f32 %v2386, %v2455
        %v2464 = vadd.f32 %v2387, %v2456
        %s2465 = scalar_lea.vmem %s23, 320
        %v2466 = vld [vmem:[%s2465] sm:$0xff]
        %v2467 = vld [vmem:[%s2465 + $0x8] sm:$0xff]
        %v2468 = vld [vmem:[%s2465 + $0x10] sm:$0xff]
        %v2469 = vld [vmem:[%s2465 + $0x18] sm:$0xff]
        %v2470 = vld [vmem:[%s2465 + $0x20] sm:$0xff]
        %v2471 = vld [vmem:[%s2465 + $0x28] sm:$0xff]
        %v2472 = vld [vmem:[%s2465 + $0x30] sm:$0xff]
        %v2473 = vld [vmem:[%s2465 + $0x38] sm:$0xff]
        %2475 = vset.pattern.permute.xlu0 0
        %2476 = vperm.xlu0 %2475, %v2466
        %v2477 = vpop.permute.xlu0 %2476
        %2480 = vset.pattern.permute.xlu0 0
        %2481 = vperm.xlu0 %2480, %v2467
        %v2482 = vpop.permute.xlu0 %2481
        %2485 = vset.pattern.permute.xlu0 0
        %2486 = vperm.xlu0 %2485, %v2468
        %v2487 = vpop.permute.xlu0 %2486
        %2490 = vset.pattern.permute.xlu0 0
        %2491 = vperm.xlu0 %2490, %v2469
        %v2492 = vpop.permute.xlu0 %2491
        %2495 = vset.pattern.permute.xlu0 0
        %2496 = vperm.xlu0 %2495, %v2470
        %v2497 = vpop.permute.xlu0 %2496
        %2500 = vset.pattern.permute.xlu0 0
        %2501 = vperm.xlu0 %2500, %v2471
        %v2502 = vpop.permute.xlu0 %2501
        %2505 = vset.pattern.permute.xlu0 0
        %2506 = vperm.xlu0 %2505, %v2472
        %v2507 = vpop.permute.xlu0 %2506
        %2510 = vset.pattern.permute.xlu0 0
        %2511 = vperm.xlu0 %2510, %v2473
        %v2512 = vpop.permute.xlu0 %2511
        %v2514 = vmul.f32 %v2232, %v2477
        %v2515 = vmul.f32 %v2231, %v2482
        %v2516 = vmul.f32 %v2230, %v2487
        %v2517 = vmul.f32 %v2229, %v2492
        %v2518 = vmul.f32 %v2228, %v2497
        %v2519 = vmul.f32 %v2227, %v2502
        %v2520 = vmul.f32 %v2226, %v2507
        %v2521 = vmul.f32 %v2233, %v2512
        %v2522 = vlaneseq
        %v2523 = vshrl.u32 %v2522, 7
        %v2524 = vsub.s32 5, %v2523
        %v2525 = vrot.slane %v2043, %v2524
        %v2526 = vmul.f32 %v2514, %v2525
        %v2527 = vmul.f32 %v2515, %v2525
        %v2528 = vmul.f32 %v2516, %v2525
        %v2529 = vmul.f32 %v2517, %v2525
        %v2530 = vmul.f32 %v2518, %v2525
        %v2531 = vmul.f32 %v2519, %v2525
        %v2532 = vmul.f32 %v2520, %v2525
        %v2533 = vmul.f32 %v2521, %v2525
        %v2534 = vadd.f32 %v2457, %v2526
        %v2535 = vadd.f32 %v2458, %v2527
        %v2536 = vadd.f32 %v2459, %v2528
        %v2537 = vadd.f32 %v2460, %v2529
        %v2538 = vadd.f32 %v2461, %v2530
        %v2539 = vadd.f32 %v2462, %v2531
        %v2540 = vadd.f32 %v2463, %v2532
        %v2541 = vadd.f32 %v2464, %v2533
        %s2542 = scalar_lea.vmem %s23, 384
        %v2543 = vld [vmem:[%s2542] sm:$0xff]
        %v2544 = vld [vmem:[%s2542 + $0x8] sm:$0xff]
        %v2545 = vld [vmem:[%s2542 + $0x10] sm:$0xff]
        %v2546 = vld [vmem:[%s2542 + $0x18] sm:$0xff]
        %v2547 = vld [vmem:[%s2542 + $0x20] sm:$0xff]
        %v2548 = vld [vmem:[%s2542 + $0x28] sm:$0xff]
        %v2549 = vld [vmem:[%s2542 + $0x30] sm:$0xff]
        %v2550 = vld [vmem:[%s2542 + $0x38] sm:$0xff]
        %2552 = vset.pattern.permute.xlu0 0
        %2553 = vperm.xlu0 %2552, %v2543
        %v2554 = vpop.permute.xlu0 %2553
        %2557 = vset.pattern.permute.xlu0 0
        %2558 = vperm.xlu0 %2557, %v2544
        %v2559 = vpop.permute.xlu0 %2558
        %2562 = vset.pattern.permute.xlu0 0
        %2563 = vperm.xlu0 %2562, %v2545
        %v2564 = vpop.permute.xlu0 %2563
        %2567 = vset.pattern.permute.xlu0 0
        %2568 = vperm.xlu0 %2567, %v2546
        %v2569 = vpop.permute.xlu0 %2568
        %2572 = vset.pattern.permute.xlu0 0
        %2573 = vperm.xlu0 %2572, %v2547
        %v2574 = vpop.permute.xlu0 %2573
        %2577 = vset.pattern.permute.xlu0 0
        %2578 = vperm.xlu0 %2577, %v2548
        %v2579 = vpop.permute.xlu0 %2578
        %2582 = vset.pattern.permute.xlu0 0
        %2583 = vperm.xlu0 %2582, %v2549
        %v2584 = vpop.permute.xlu0 %2583
        %2587 = vset.pattern.permute.xlu0 0
        %2588 = vperm.xlu0 %2587, %v2550
        %v2589 = vpop.permute.xlu0 %2588
        %v2591 = vmul.f32 %v2062, %v2554
        %v2592 = vmul.f32 %v2061, %v2559
        %v2593 = vmul.f32 %v2060, %v2564
        %v2594 = vmul.f32 %v2059, %v2569
        %v2595 = vmul.f32 %v2058, %v2574
        %v2596 = vmul.f32 %v2057, %v2579
        %v2597 = vmul.f32 %v2056, %v2584
        %v2598 = vmul.f32 %v2063, %v2589
        %v2599 = vlaneseq
        %v2600 = vshrl.u32 %v2599, 7
        %v2601 = vsub.s32 6, %v2600
        %v2602 = vrot.slane %v2043, %v2601
        %v2603 = vmul.f32 %v2591, %v2602
        %v2604 = vmul.f32 %v2592, %v2602
        %v2605 = vmul.f32 %v2593, %v2602
        %v2606 = vmul.f32 %v2594, %v2602
        %v2607 = vmul.f32 %v2595, %v2602
        %v2608 = vmul.f32 %v2596, %v2602
        %v2609 = vmul.f32 %v2597, %v2602
        %v2610 = vmul.f32 %v2598, %v2602
        %v2611 = vadd.f32 %v2534, %v2603
        %v2612 = vadd.f32 %v2535, %v2604
        %v2613 = vadd.f32 %v2536, %v2605
        %v2614 = vadd.f32 %v2537, %v2606
        %v2615 = vadd.f32 %v2538, %v2607
        %v2616 = vadd.f32 %v2539, %v2608
        %v2617 = vadd.f32 %v2540, %v2609
        %v2618 = vadd.f32 %v2541, %v2610
        %s2619 = scalar_lea.vmem %s23, 448
        %v2620 = vld [vmem:[%s2619] sm:$0xff]
        %v2621 = vld [vmem:[%s2619 + $0x8] sm:$0xff]
        %v2622 = vld [vmem:[%s2619 + $0x10] sm:$0xff]
        %v2623 = vld [vmem:[%s2619 + $0x18] sm:$0xff]
        %v2624 = vld [vmem:[%s2619 + $0x20] sm:$0xff]
        %v2625 = vld [vmem:[%s2619 + $0x28] sm:$0xff]
        %v2626 = vld [vmem:[%s2619 + $0x30] sm:$0xff]
        %v2627 = vld [vmem:[%s2619 + $0x38] sm:$0xff]
        %2629 = vset.pattern.permute.xlu0 0
        %2630 = vperm.xlu0 %2629, %v2620
        %v2631 = vpop.permute.xlu0 %2630
        %2634 = vset.pattern.permute.xlu0 0
        %2635 = vperm.xlu0 %2634, %v2621
        %v2636 = vpop.permute.xlu0 %2635
        %2639 = vset.pattern.permute.xlu0 0
        %2640 = vperm.xlu0 %2639, %v2622
        %v2641 = vpop.permute.xlu0 %2640
        %2644 = vset.pattern.permute.xlu0 0
        %2645 = vperm.xlu0 %2644, %v2623
        %v2646 = vpop.permute.xlu0 %2645
        %2649 = vset.pattern.permute.xlu0 0
        %2650 = vperm.xlu0 %2649, %v2624
        %v2651 = vpop.permute.xlu0 %2650
        %2654 = vset.pattern.permute.xlu0 0
        %2655 = vperm.xlu0 %2654, %v2625
        %v2656 = vpop.permute.xlu0 %2655
        %2659 = vset.pattern.permute.xlu0 0
        %2660 = vperm.xlu0 %2659, %v2626
        %v2661 = vpop.permute.xlu0 %2660
        %2664 = vset.pattern.permute.xlu0 0
        %2665 = vperm.xlu0 %2664, %v2627
        %v2666 = vpop.permute.xlu0 %2665
        %v2668 = vmul.f32 %v2016, %v2631
        %v2669 = vmul.f32 %v2021, %v2636
        %v2670 = vmul.f32 %v2024, %v2641
        %v2671 = vmul.f32 %v2029, %v2646
        %v2672 = vmul.f32 %v2032, %v2651
        %v2673 = vmul.f32 %v2037, %v2656
        %v2674 = vmul.f32 %v2040, %v2661
        %v2675 = vmul.f32 %v2013, %v2666
        %v2676 = vlaneseq
        %v2677 = vshrl.u32 %v2676, 7
        %v2678 = vsub.s32 7, %v2677
        %v2679 = vrot.slane %v2043, %v2678
        %v2680 = vmul.f32 %v2668, %v2679
        %v2681 = vmul.f32 %v2669, %v2679
        %v2682 = vmul.f32 %v2670, %v2679
        %v2683 = vmul.f32 %v2671, %v2679
        %v2684 = vmul.f32 %v2672, %v2679
        %v2685 = vmul.f32 %v2673, %v2679
        %v2686 = vmul.f32 %v2674, %v2679
        %v2687 = vmul.f32 %v2675, %v2679
        %v2688 = vadd.f32 %v2611, %v2680
        %v2689 = vadd.f32 %v2612, %v2681
        %v2690 = vadd.f32 %v2613, %v2682
        %v2691 = vadd.f32 %v2614, %v2683
        %v2692 = vadd.f32 %v2615, %v2684
        %v2693 = vadd.f32 %v2616, %v2685
        %v2694 = vadd.f32 %v2617, %v2686
        %v2695 = vadd.f32 %v2618, %v2687
        %s2696 = scalar_lea.vmem %s23, 512
        %v2697 = vld [vmem:[%s2696] sm:$0xff]
        %v2698 = vld [vmem:[%s2696 + $0x8] sm:$0xff]
        %v2699 = vld [vmem:[%s2696 + $0x10] sm:$0xff]
        %v2700 = vld [vmem:[%s2696 + $0x18] sm:$0xff]
        %v2701 = vld [vmem:[%s2696 + $0x20] sm:$0xff]
        %v2702 = vld [vmem:[%s2696 + $0x28] sm:$0xff]
        %v2703 = vld [vmem:[%s2696 + $0x30] sm:$0xff]
        %v2704 = vld [vmem:[%s2696 + $0x38] sm:$0xff]
        %2706 = vset.pattern.permute.xlu0 0
        %2707 = vperm.xlu0 %2706, %v2697
        %v2708 = vpop.permute.xlu0 %2707
        %2711 = vset.pattern.permute.xlu0 0
        %2712 = vperm.xlu0 %2711, %v2698
        %v2713 = vpop.permute.xlu0 %2712
        %2716 = vset.pattern.permute.xlu0 0
        %2717 = vperm.xlu0 %2716, %v2699
        %v2718 = vpop.permute.xlu0 %2717
        %2721 = vset.pattern.permute.xlu0 0
        %2722 = vperm.xlu0 %2721, %v2700
        %v2723 = vpop.permute.xlu0 %2722
        %2726 = vset.pattern.permute.xlu0 0
        %2727 = vperm.xlu0 %2726, %v2701
        %v2728 = vpop.permute.xlu0 %2727
        %2731 = vset.pattern.permute.xlu0 0
        %2732 = vperm.xlu0 %2731, %v2702
        %v2733 = vpop.permute.xlu0 %2732
        %2736 = vset.pattern.permute.xlu0 0
        %2737 = vperm.xlu0 %2736, %v2703
        %v2738 = vpop.permute.xlu0 %2737
        %2741 = vset.pattern.permute.xlu0 0
        %2742 = vperm.xlu0 %2741, %v2704
        %v2743 = vpop.permute.xlu0 %2742
        %v2745 = vmul.f32 %v2231, %v2708
        %v2746 = vmul.f32 %v2230, %v2713
        %v2747 = vmul.f32 %v2229, %v2718
        %v2748 = vmul.f32 %v2228, %v2723
        %v2749 = vmul.f32 %v2227, %v2728
        %v2750 = vmul.f32 %v2226, %v2733
        %v2751 = vmul.f32 %v2233, %v2738
        %v2752 = vmul.f32 %v2232, %v2743
        %v2753 = vlaneseq
        %v2754 = vshrl.u32 %v2753, 7
        %v2755 = vsub.s32 0, %v2754
        %v2756 = vrot.slane %v2044, %v2755
        %v2757 = vmul.f32 %v2745, %v2756
        %v2758 = vmul.f32 %v2746, %v2756
        %v2759 = vmul.f32 %v2747, %v2756
        %v2760 = vmul.f32 %v2748, %v2756
        %v2761 = vmul.f32 %v2749, %v2756
        %v2762 = vmul.f32 %v2750, %v2756
        %v2763 = vmul.f32 %v2751, %v2756
        %v2764 = vmul.f32 %v2752, %v2756
        %v2765 = vadd.f32 %v2688, %v2757
        %v2766 = vadd.f32 %v2689, %v2758
        %v2767 = vadd.f32 %v2690, %v2759
        %v2768 = vadd.f32 %v2691, %v2760
        %v2769 = vadd.f32 %v2692, %v2761
        %v2770 = vadd.f32 %v2693, %v2762
        %v2771 = vadd.f32 %v2694, %v2763
        %v2772 = vadd.f32 %v2695, %v2764
        %v2773 = vld [vmem:[%s14] sm:$0xf]
        %v2774 = vld [vmem:[%s14 + $0x4] sm:$0xf]
        %v2775 = vpack.c.bf16 %v1947, %v1946
        %v2776 = vpack.c.bf16 %v1949, %v1948
        %v2777 = vpack.c.bf16 %v1951, %v1950
        %v2778 = vpack.c.bf16 %v1953, %v1952
        %v2781 = vunpack.c.l.b16 %v2773
        %v2782 = vunpack.c.l.b16 %v2774
        %v2783 = vpack.c.b16 %v2782, %v2781
        %v2786 = vsel %vm872, %v2775, 0
        %v2789 = vsel %vm872, %v2776, 0
        %v2792 = vsel %vm872, %v2777, 0
        %v2795 = vsel %vm872, %v2778, 0
        %2797 = vmatprep.subr.bf16.mxu0 0
        %2798 = vmatpush1.bf16.msra.mxu0 0
        %2799 = vmatprep.subr.bf16.mxu0 0
        %2800 = vmatpush1.bf16.msra.mxu0 0
        %2801 = vmatprep.subr.bf16.mxu0 0
        %2802 = vmatpush1.bf16.msra.mxu0 0
        %2803 = vmatprep.subr.bf16.mxu0 0
        %2804 = vmatpush1.bf16.msra.mxu0 0
        %2805 = vmatprep.subr.bf16.mxu0 0
        %2806 = vmatpush1.bf16.msra.mxu0 0
        %2807 = vmatprep.subr.bf16.mxu0 0
        %2808 = vmatpush1.bf16.msra.mxu0 0
        %2809 = vmatprep.subr.bf16.mxu0 0
        %2810 = vmatpush1.bf16.msra.mxu0 0
        %2811 = vmatprep.subr.bf16.mxu0 0
        %2812 = vmatpush1.bf16.msra.mxu0 %v2783
        %2813 = vmatprep.subr.bf16.mxu0 0
        %2814 = vmatpush2.bf16.msra.mxu0 0
        %2815 = vmatprep.subr.bf16.mxu0 0
        %2816 = vmatpush2.bf16.msra.mxu0 0
        %2817 = vmatprep.subr.bf16.mxu0 0
        %2818 = vmatpush2.bf16.msra.mxu0 0
        %2819 = vmatprep.subr.bf16.mxu0 0
        %2820 = vmatpush2.bf16.msra.mxu0 0
        %2821 = vmatprep.subr.bf16.mxu0 0
        %2822 = vmatpush2.bf16.msra.mxu0 0
        %2823 = vmatprep.subr.bf16.mxu0 0
        %2824 = vmatpush2.bf16.msra.mxu0 0
        %2825 = vmatprep.subr.bf16.mxu0 0
        %2826 = vmatpush2.bf16.msra.mxu0 0
        %2827 = vmatprep.subr.bf16.mxu0 0
        %2828 = vmatpush2.bf16.msra.mxu0 0
        %2829 = vmatprep.mubr.bf16.mxu0 0
        %2830 = vmatmul.mubr.bf16.gmra.mxu0 %v2786
        %v2831 = vpop.f32.mrf.mxu0
        %v2832 = vadd.f32 0.0, %v2831
        %v2833 = vpop.f32.mrf.mxu0
        %v2834 = vpop.f32.mrf.mxu0
        %v2835 = vadd.f32 0.0, %v2834
        %v2836 = vpop.f32.mrf.mxu0
        %2837 = vmatprep.mubr.bf16.mxu0 0
        %2838 = vmatmul.mubr.bf16.gmra.mxu0 %v2789
        %v2839 = vpop.f32.mrf.mxu0
        %v2840 = vadd.f32 0.0, %v2839
        %v2841 = vpop.f32.mrf.mxu0
        %v2842 = vpop.f32.mrf.mxu0
        %v2843 = vadd.f32 0.0, %v2842
        %v2844 = vpop.f32.mrf.mxu0
        %2845 = vmatprep.mubr.bf16.mxu0 0
        %2846 = vmatmul.mubr.bf16.gmra.mxu0 %v2792
        %v2847 = vpop.f32.mrf.mxu0
        %v2848 = vadd.f32 0.0, %v2847
        %v2849 = vpop.f32.mrf.mxu0
        %v2850 = vpop.f32.mrf.mxu0
        %v2851 = vadd.f32 0.0, %v2850
        %v2852 = vpop.f32.mrf.mxu0
        %2853 = vmatprep.mubr.bf16.mxu0 0
        %2854 = vmatmul.mubr.bf16.gmra.mxu0 %v2795
        %v2855 = vpop.f32.mrf.mxu0
        %v2856 = vadd.f32 0.0, %v2855
        %v2857 = vpop.f32.mrf.mxu0
        %v2858 = vpop.f32.mrf.mxu0
        %v2859 = vadd.f32 0.0, %v2858
        %v2860 = vpop.f32.mrf.mxu0
        %2861 = vdwg.mxu0
        %v2862 = vld [vmem:[%s15] sm:$0xff]
        %v2863 = vld [vmem:[%s15 + $0x8] sm:$0x1]
        %v2864 = vrot.slane %v2832, 7
        %v2865 = vrot.slane %v2835, 7
        %v2866 = vrot.slane %v2840, 7
        %v2867 = vrot.slane %v2843, 7
        %v2868 = vrot.slane %v2848, 7
        %v2869 = vrot.slane %v2851, 7
        %v2870 = vrot.slane %v2856, 7
        %v2871 = vrot.slane %v2859, 7
        %v2872 = vsel %vm2055, %v2870, %v2871
        %v2873 = vsel %vm2055, %v2869, %v2870
        %v2874 = vsel %vm2055, %v2868, %v2869
        %v2875 = vsel %vm2055, %v2867, %v2868
        %v2876 = vsel %vm2055, %v2866, %v2867
        %v2877 = vsel %vm2055, %v2865, %v2866
        %v2878 = vsel %vm2055, %v2864, %v2865
        %v2879 = vsel %vm2055, %v2871, %v2864
        %v2880 = vmul.f32 %v2872, %v2075
        %v2881 = vmul.f32 %v2879, %v2080
        %v2882 = vmul.f32 %v2878, %v2085
        %v2883 = vmul.f32 %v2877, %v2090
        %v2884 = vmul.f32 %v2876, %v2095
        %v2885 = vmul.f32 %v2875, %v2100
        %v2886 = vmul.f32 %v2874, %v2105
        %v2887 = vmul.f32 %v2873, %v2110
        %v2888 = vlaneseq
        %v2889 = vshrl.u32 %v2888, 7
        %v2890 = vsub.s32 0, %v2889
        %v2891 = vrot.slane %v2862, %v2890
        %v2892 = vmul.f32 %v2880, %v2891
        %v2893 = vmul.f32 %v2881, %v2891
        %v2894 = vmul.f32 %v2882, %v2891
        %v2895 = vmul.f32 %v2883, %v2891
        %v2896 = vmul.f32 %v2884, %v2891
        %v2897 = vmul.f32 %v2885, %v2891
        %v2898 = vmul.f32 %v2886, %v2891
        %v2899 = vmul.f32 %v2887, %v2891
        %v2900 = vadd.f32 %v2892, 0.0
        %v2901 = vadd.f32 %v2893, 0.0
        %v2902 = vadd.f32 %v2894, 0.0
        %v2903 = vadd.f32 %v2895, 0.0
        %v2904 = vadd.f32 %v2896, 0.0
        %v2905 = vadd.f32 %v2897, 0.0
        %v2906 = vadd.f32 %v2898, 0.0
        %v2907 = vadd.f32 %v2899, 0.0
        %v2908 = vmul.f32 %v2859, %v2152
        %v2909 = vmul.f32 %v2832, %v2157
        %v2910 = vmul.f32 %v2835, %v2162
        %v2911 = vmul.f32 %v2840, %v2167
        %v2912 = vmul.f32 %v2843, %v2172
        %v2913 = vmul.f32 %v2848, %v2177
        %v2914 = vmul.f32 %v2851, %v2182
        %v2915 = vmul.f32 %v2856, %v2187
        %v2916 = vlaneseq
        %v2917 = vshrl.u32 %v2916, 7
        %v2918 = vsub.s32 1, %v2917
        %v2919 = vrot.slane %v2862, %v2918
        %v2920 = vmul.f32 %v2908, %v2919
        %v2921 = vmul.f32 %v2909, %v2919
        %v2922 = vmul.f32 %v2910, %v2919
        %v2923 = vmul.f32 %v2911, %v2919
        %v2924 = vmul.f32 %v2912, %v2919
        %v2925 = vmul.f32 %v2913, %v2919
        %v2926 = vmul.f32 %v2914, %v2919
        %v2927 = vmul.f32 %v2915, %v2919
        %v2928 = vadd.f32 %v2900, %v2920
        %v2929 = vadd.f32 %v2901, %v2921
        %v2930 = vadd.f32 %v2902, %v2922
        %v2931 = vadd.f32 %v2903, %v2923
        %v2932 = vadd.f32 %v2904, %v2924
        %v2933 = vadd.f32 %v2905, %v2925
        %v2934 = vadd.f32 %v2906, %v2926
        %v2935 = vadd.f32 %v2907, %v2927
        %v2936 = vrot.slane %v2832, 1
        %v2937 = vrot.slane %v2835, 1
        %v2938 = vrot.slane %v2840, 1
        %v2939 = vrot.slane %v2843, 1
        %v2940 = vrot.slane %v2848, 1
        %v2941 = vrot.slane %v2851, 1
        %v2942 = vrot.slane %v2856, 1
        %v2943 = vrot.slane %v2859, 1
        %v2944 = vsel %vm2225, %v2942, %v2943
        %v2945 = vsel %vm2225, %v2941, %v2942
        %v2946 = vsel %vm2225, %v2940, %v2941
        %v2947 = vsel %vm2225, %v2939, %v2940
        %v2948 = vsel %vm2225, %v2938, %v2939
        %v2949 = vsel %vm2225, %v2937, %v2938
        %v2950 = vsel %vm2225, %v2936, %v2937
        %v2951 = vsel %vm2225, %v2943, %v2936
        %v2952 = vmul.f32 %v2951, %v2246
        %v2953 = vmul.f32 %v2950, %v2251
        %v2954 = vmul.f32 %v2949, %v2256
        %v2955 = vmul.f32 %v2948, %v2261
        %v2956 = vmul.f32 %v2947, %v2266
        %v2957 = vmul.f32 %v2946, %v2271
        %v2958 = vmul.f32 %v2945, %v2276
        %v2959 = vmul.f32 %v2944, %v2281
        %v2960 = vlaneseq
        %v2961 = vshrl.u32 %v2960, 7
        %v2962 = vsub.s32 2, %v2961
        %v2963 = vrot.slane %v2862, %v2962
        %v2964 = vmul.f32 %v2952, %v2963
        %v2965 = vmul.f32 %v2953, %v2963
        %v2966 = vmul.f32 %v2954, %v2963
        %v2967 = vmul.f32 %v2955, %v2963
        %v2968 = vmul.f32 %v2956, %v2963
        %v2969 = vmul.f32 %v2957, %v2963
        %v2970 = vmul.f32 %v2958, %v2963
        %v2971 = vmul.f32 %v2959, %v2963
        %v2972 = vadd.f32 %v2928, %v2964
        %v2973 = vadd.f32 %v2929, %v2965
        %v2974 = vadd.f32 %v2930, %v2966
        %v2975 = vadd.f32 %v2931, %v2967
        %v2976 = vadd.f32 %v2932, %v2968
        %v2977 = vadd.f32 %v2933, %v2969
        %v2978 = vadd.f32 %v2934, %v2970
        %v2979 = vadd.f32 %v2935, %v2971
        %v2980 = vmul.f32 %v2879, %v2323
        %v2981 = vmul.f32 %v2878, %v2328
        %v2982 = vmul.f32 %v2877, %v2333
        %v2983 = vmul.f32 %v2876, %v2338
        %v2984 = vmul.f32 %v2875, %v2343
        %v2985 = vmul.f32 %v2874, %v2348
        %v2986 = vmul.f32 %v2873, %v2353
        %v2987 = vmul.f32 %v2872, %v2358
        %v2988 = vlaneseq
        %v2989 = vshrl.u32 %v2988, 7
        %v2990 = vsub.s32 3, %v2989
        %v2991 = vrot.slane %v2862, %v2990
        %v2992 = vmul.f32 %v2980, %v2991
        %v2993 = vmul.f32 %v2981, %v2991
        %v2994 = vmul.f32 %v2982, %v2991
        %v2995 = vmul.f32 %v2983, %v2991
        %v2996 = vmul.f32 %v2984, %v2991
        %v2997 = vmul.f32 %v2985, %v2991
        %v2998 = vmul.f32 %v2986, %v2991
        %v2999 = vmul.f32 %v2987, %v2991
        %v3000 = vadd.f32 %v2972, %v2992
        %v3001 = vadd.f32 %v2973, %v2993
        %v3002 = vadd.f32 %v2974, %v2994
        %v3003 = vadd.f32 %v2975, %v2995
        %v3004 = vadd.f32 %v2976, %v2996
        %v3005 = vadd.f32 %v2977, %v2997
        %v3006 = vadd.f32 %v2978, %v2998
        %v3007 = vadd.f32 %v2979, %v2999
        %v3008 = vmul.f32 %v2832, %v2400
        %v3009 = vmul.f32 %v2835, %v2405
        %v3010 = vmul.f32 %v2840, %v2410
        %v3011 = vmul.f32 %v2843, %v2415
        %v3012 = vmul.f32 %v2848, %v2420
        %v3013 = vmul.f32 %v2851, %v2425
        %v3014 = vmul.f32 %v2856, %v2430
        %v3015 = vmul.f32 %v2859, %v2435
        %v3016 = vlaneseq
        %v3017 = vshrl.u32 %v3016, 7
        %v3018 = vsub.s32 4, %v3017
        %v3019 = vrot.slane %v2862, %v3018
        %v3020 = vmul.f32 %v3008, %v3019
        %v3021 = vmul.f32 %v3009, %v3019
        %v3022 = vmul.f32 %v3010, %v3019
        %v3023 = vmul.f32 %v3011, %v3019
        %v3024 = vmul.f32 %v3012, %v3019
        %v3025 = vmul.f32 %v3013, %v3019
        %v3026 = vmul.f32 %v3014, %v3019
        %v3027 = vmul.f32 %v3015, %v3019
        %v3028 = vadd.f32 %v3000, %v3020
        %v3029 = vadd.f32 %v3001, %v3021
        %v3030 = vadd.f32 %v3002, %v3022
        %v3031 = vadd.f32 %v3003, %v3023
        %v3032 = vadd.f32 %v3004, %v3024
        %v3033 = vadd.f32 %v3005, %v3025
        %v3034 = vadd.f32 %v3006, %v3026
        %v3035 = vadd.f32 %v3007, %v3027
        %v3036 = vmul.f32 %v2950, %v2477
        %v3037 = vmul.f32 %v2949, %v2482
        %v3038 = vmul.f32 %v2948, %v2487
        %v3039 = vmul.f32 %v2947, %v2492
        %v3040 = vmul.f32 %v2946, %v2497
        %v3041 = vmul.f32 %v2945, %v2502
        %v3042 = vmul.f32 %v2944, %v2507
        %v3043 = vmul.f32 %v2951, %v2512
        %v3044 = vlaneseq
        %v3045 = vshrl.u32 %v3044, 7
        %v3046 = vsub.s32 5, %v3045
        %v3047 = vrot.slane %v2862, %v3046
        %v3048 = vmul.f32 %v3036, %v3047
        %v3049 = vmul.f32 %v3037, %v3047
        %v3050 = vmul.f32 %v3038, %v3047
        %v3051 = vmul.f32 %v3039, %v3047
        %v3052 = vmul.f32 %v3040, %v3047
        %v3053 = vmul.f32 %v3041, %v3047
        %v3054 = vmul.f32 %v3042, %v3047
        %v3055 = vmul.f32 %v3043, %v3047
        %v3056 = vadd.f32 %v3028, %v3048
        %v3057 = vadd.f32 %v3029, %v3049
        %v3058 = vadd.f32 %v3030, %v3050
        %v3059 = vadd.f32 %v3031, %v3051
        %v3060 = vadd.f32 %v3032, %v3052
        %v3061 = vadd.f32 %v3033, %v3053
        %v3062 = vadd.f32 %v3034, %v3054
        %v3063 = vadd.f32 %v3035, %v3055
        %v3064 = vmul.f32 %v2878, %v2554
        %v3065 = vmul.f32 %v2877, %v2559
        %v3066 = vmul.f32 %v2876, %v2564
        %v3067 = vmul.f32 %v2875, %v2569
        %v3068 = vmul.f32 %v2874, %v2574
        %v3069 = vmul.f32 %v2873, %v2579
        %v3070 = vmul.f32 %v2872, %v2584
        %v3071 = vmul.f32 %v2879, %v2589
        %v3072 = vlaneseq
        %v3073 = vshrl.u32 %v3072, 7
        %v3074 = vsub.s32 6, %v3073
        %v3075 = vrot.slane %v2862, %v3074
        %v3076 = vmul.f32 %v3064, %v3075
        %v3077 = vmul.f32 %v3065, %v3075
        %v3078 = vmul.f32 %v3066, %v3075
        %v3079 = vmul.f32 %v3067, %v3075
        %v3080 = vmul.f32 %v3068, %v3075
        %v3081 = vmul.f32 %v3069, %v3075
        %v3082 = vmul.f32 %v3070, %v3075
        %v3083 = vmul.f32 %v3071, %v3075
        %v3084 = vadd.f32 %v3056, %v3076
        %v3085 = vadd.f32 %v3057, %v3077
        %v3086 = vadd.f32 %v3058, %v3078
        %v3087 = vadd.f32 %v3059, %v3079
        %v3088 = vadd.f32 %v3060, %v3080
        %v3089 = vadd.f32 %v3061, %v3081
        %v3090 = vadd.f32 %v3062, %v3082
        %v3091 = vadd.f32 %v3063, %v3083
        %v3092 = vmul.f32 %v2835, %v2631
        %v3093 = vmul.f32 %v2840, %v2636
        %v3094 = vmul.f32 %v2843, %v2641
        %v3095 = vmul.f32 %v2848, %v2646
        %v3096 = vmul.f32 %v2851, %v2651
        %v3097 = vmul.f32 %v2856, %v2656
        %v3098 = vmul.f32 %v2859, %v2661
        %v3099 = vmul.f32 %v2832, %v2666
        %v3100 = vlaneseq
        %v3101 = vshrl.u32 %v3100, 7
        %v3102 = vsub.s32 7, %v3101
        %v3103 = vrot.slane %v2862, %v3102
        %v3104 = vmul.f32 %v3092, %v3103
        %v3105 = vmul.f32 %v3093, %v3103
        %v3106 = vmul.f32 %v3094, %v3103
        %v3107 = vmul.f32 %v3095, %v3103
        %v3108 = vmul.f32 %v3096, %v3103
        %v3109 = vmul.f32 %v3097, %v3103
        %v3110 = vmul.f32 %v3098, %v3103
        %v3111 = vmul.f32 %v3099, %v3103
        %v3112 = vadd.f32 %v3084, %v3104
        %v3113 = vadd.f32 %v3085, %v3105
        %v3114 = vadd.f32 %v3086, %v3106
        %v3115 = vadd.f32 %v3087, %v3107
        %v3116 = vadd.f32 %v3088, %v3108
        %v3117 = vadd.f32 %v3089, %v3109
        %v3118 = vadd.f32 %v3090, %v3110
        %v3119 = vadd.f32 %v3091, %v3111
        %v3120 = vmul.f32 %v2949, %v2708
        %v3121 = vmul.f32 %v2948, %v2713
        %v3122 = vmul.f32 %v2947, %v2718
        %v3123 = vmul.f32 %v2946, %v2723
        %v3124 = vmul.f32 %v2945, %v2728
        %v3125 = vmul.f32 %v2944, %v2733
        %v3126 = vmul.f32 %v2951, %v2738
        %v3127 = vmul.f32 %v2950, %v2743
        %v3128 = vlaneseq
        %v3129 = vshrl.u32 %v3128, 7
        %v3130 = vsub.s32 0, %v3129
        %v3131 = vrot.slane %v2863, %v3130
        %v3132 = vmul.f32 %v3120, %v3131
        %v3133 = vmul.f32 %v3121, %v3131
        %v3134 = vmul.f32 %v3122, %v3131
        %v3135 = vmul.f32 %v3123, %v3131
        %v3136 = vmul.f32 %v3124, %v3131
        %v3137 = vmul.f32 %v3125, %v3131
        %v3138 = vmul.f32 %v3126, %v3131
        %v3139 = vmul.f32 %v3127, %v3131
        %v3140 = vadd.f32 %v3112, %v3132
        %v3141 = vadd.f32 %v3113, %v3133
        %v3142 = vadd.f32 %v3114, %v3134
        %v3143 = vadd.f32 %v3115, %v3135
        %v3144 = vadd.f32 %v3116, %v3136
        %v3145 = vadd.f32 %v3117, %v3137
        %v3146 = vadd.f32 %v3118, %v3138
        %v3147 = vadd.f32 %v3119, %v3139
        %v3148 = vmul.f32 %v2765, %v2765
        %v3149 = vmul.f32 %v2766, %v2766
        %v3150 = vmul.f32 %v2767, %v2767
        %v3151 = vmul.f32 %v2768, %v2768
        %v3152 = vmul.f32 %v2769, %v2769
        %v3153 = vmul.f32 %v2770, %v2770
        %v3154 = vmul.f32 %v2771, %v2771
        %v3155 = vmul.f32 %v2772, %v2772
        %v3156 = vsel %vm958, %v3148, 0.0
        %v3157 = vsel %vm958, %v3149, 0.0
        %v3158 = vadd.f32 %v3156, %v3157
        %v3159 = vsel %vm958, %v3150, 0.0
        %v3160 = vadd.f32 %v3158, %v3159
        %v3161 = vsel %vm958, %v3151, 0.0
        %v3162 = vadd.f32 %v3160, %v3161
        %v3163 = vsel %vm958, %v3152, 0.0
        %v3164 = vadd.f32 %v3162, %v3163
        %v3165 = vsel %vm958, %v3153, 0.0
        %v3166 = vadd.f32 %v3164, %v3165
        %v3167 = vsel %vm958, %v3154, 0.0
        %v3168 = vadd.f32 %v3166, %v3167
        %v3169 = vsel %vm958, %v3155, 0.0
        %v3170 = vadd.f32 %v3168, %v3169
        %v3171 = vrot.slane %v3170, 4
        %v3172 = vadd.f32 %v3170, %v3171
        %v3173 = vrot.slane %v3172, 2
        %v3174 = vadd.f32 %v3172, %v3173
        %v3175 = vrot.slane %v3174, 1
        %v3176 = vadd.f32 %v3174, %v3175
        %v3177 = vmax.f32 %v3176, 1e-24
        %v3178 = vrsqrt.pop %v3177
        %v3179 = vmul.f32 %v2765, %v3178
        %v3180 = vmul.f32 %v2766, %v3178
        %v3181 = vmul.f32 %v2767, %v3178
        %v3182 = vmul.f32 %v2768, %v3178
        %v3183 = vmul.f32 %v2769, %v3178
        %v3184 = vmul.f32 %v2770, %v3178
        %v3185 = vmul.f32 %v2771, %v3178
        %v3186 = vmul.f32 %v2772, %v3178
        %v3187 = vmul.f32 %v3140, %v3140
        %v3188 = vmul.f32 %v3141, %v3141
        %v3189 = vmul.f32 %v3142, %v3142
        %v3190 = vmul.f32 %v3143, %v3143
        %v3191 = vmul.f32 %v3144, %v3144
        %v3192 = vmul.f32 %v3145, %v3145
        %v3193 = vmul.f32 %v3146, %v3146
        %v3194 = vmul.f32 %v3147, %v3147
        %v3195 = vsel %vm958, %v3187, 0.0
        %v3196 = vsel %vm958, %v3188, 0.0
        %v3197 = vadd.f32 %v3195, %v3196
        %v3198 = vsel %vm958, %v3189, 0.0
        %v3199 = vadd.f32 %v3197, %v3198
        %v3200 = vsel %vm958, %v3190, 0.0
        %v3201 = vadd.f32 %v3199, %v3200
        %v3202 = vsel %vm958, %v3191, 0.0
        %v3203 = vadd.f32 %v3201, %v3202
        %v3204 = vsel %vm958, %v3192, 0.0
        %v3205 = vadd.f32 %v3203, %v3204
        %v3206 = vsel %vm958, %v3193, 0.0
        %v3207 = vadd.f32 %v3205, %v3206
        %v3208 = vsel %vm958, %v3194, 0.0
        %v3209 = vadd.f32 %v3207, %v3208
        %v3210 = vrot.slane %v3209, 4
        %v3211 = vadd.f32 %v3209, %v3210
        %v3212 = vrot.slane %v3211, 2
        %v3213 = vadd.f32 %v3211, %v3212
        %v3214 = vrot.slane %v3213, 1
        %v3215 = vadd.f32 %v3213, %v3214
        %v3216 = vmax.f32 %v3215, 1e-24
        %v3217 = vrsqrt.pop %v3216
        %v3218 = vmul.f32 %v3140, %v3217
        %v3219 = vmul.f32 %v3141, %v3217
        %v3220 = vmul.f32 %v3142, %v3217
        %v3221 = vmul.f32 %v3143, %v3217
        %v3222 = vmul.f32 %v3144, %v3217
        %v3223 = vmul.f32 %v3145, %v3217
        %v3224 = vmul.f32 %v3146, %v3217
        %v3225 = vmul.f32 %v3147, %v3217
        %3226 = vxpose.xlu0.b32.start [1/16] %v3179, 128
        %3227 = vxpose.xlu0.b32.cont [2/16] %v3180, 128
        %3228 = vxpose.xlu0.b32.cont [3/16] %v3181, 128
        %3229 = vxpose.xlu0.b32.cont [4/16] %v3182, 128
        %3230 = vxpose.xlu0.b32.cont [5/16] %v3183, 128
        %3231 = vxpose.xlu0.b32.cont [6/16] %v3184, 128
        %3232 = vxpose.xlu0.b32.cont [7/16] %v3185, 128
        %3233 = vxpose.xlu0.b32.cont [8/16] %v3186, 128
        %3234 = vxpose.xlu0.b32.cont [9/16] 0.0, 128
        %3235 = vxpose.xlu0.b32.cont [10/16] 0.0, 128
        %3236 = vxpose.xlu0.b32.cont [11/16] 0.0, 128
        %3237 = vxpose.xlu0.b32.cont [12/16] 0.0, 128
        %3238 = vxpose.xlu0.b32.cont [13/16] 0.0, 128
        %3239 = vxpose.xlu0.b32.cont [14/16] 0.0, 128
        %3240 = vxpose.xlu0.b32.cont [15/16] 0.0, 128
        %3241 = vxpose.xlu0.b32.end [16/16] 0.0, 128
        %v3242 = vpop.trf.xlu0
        %v3243 = vpop.trf.xlu0
        %v3244 = vpop.trf.xlu0
        %v3245 = vpop.trf.xlu0
        %v3246 = vpop.trf.xlu0
        %v3247 = vpop.trf.xlu0
        %v3248 = vpop.trf.xlu0
        %v3249 = vpop.trf.xlu0
        %v3250 = vpop.trf.xlu0
        %v3251 = vpop.trf.xlu0
        %v3252 = vpop.trf.xlu0
        %v3253 = vpop.trf.xlu0
        %v3254 = vpop.trf.xlu0
        %v3255 = vpop.trf.xlu0
        %v3256 = vpop.trf.xlu0
        %v3257 = vpop.trf.xlu0
        %v3259 = vsel %vm1048, %v3242, 0
        %3261 = vmatprep.subr.mxu0 0.0
        %3262 = vmatpush1.msra.mxu0 0.0
        %3263 = vmatprep.subr.mxu0 0.0
        %3264 = vmatpush1.msra.mxu0 0.0
        %3265 = vmatprep.subr.mxu0 0.0
        %3266 = vmatpush1.msra.mxu0 0.0
        %3267 = vmatprep.subr.mxu0 0.0
        %3268 = vmatpush1.msra.mxu0 0.0
        %3269 = vmatprep.subr.mxu0 0.0
        %3270 = vmatpush1.msra.mxu0 0.0
        %3271 = vmatprep.subr.mxu0 0.0
        %3272 = vmatpush1.msra.mxu0 0.0
        %3273 = vmatprep.subr.mxu0 0.0
        %3274 = vmatpush1.msra.mxu0 0.0
        %3275 = vmatprep.subr.mxu0 0.0
        %3276 = vmatpush1.msra.mxu0 0.0
        %3277 = vmatprep.subr.mxu0 0.0
        %3278 = vmatpush1.msra.mxu0 %v3225
        %3279 = vmatprep.subr.mxu0 0.0
        %3280 = vmatpush1.msra.mxu0 %v3224
        %3281 = vmatprep.subr.mxu0 0.0
        %3282 = vmatpush1.msra.mxu0 %v3223
        %3283 = vmatprep.subr.mxu0 0.0
        %3284 = vmatpush1.msra.mxu0 %v3222
        %3285 = vmatprep.subr.mxu0 0.0
        %3286 = vmatpush1.msra.mxu0 %v3221
        %3287 = vmatprep.subr.mxu0 0.0
        %3288 = vmatpush1.msra.mxu0 %v3220
        %3289 = vmatprep.subr.mxu0 0.0
        %3290 = vmatpush1.msra.mxu0 %v3219
        %3291 = vmatprep.subr.mxu0 0.0
        %3292 = vmatpush1.msra.mxu0 %v3218
        %3293 = vmatprep.subr.mxu0 0.0
        %3294 = vmatpush2.msra.mxu0 0.0
        %3295 = vmatprep.subr.mxu0 0.0
        %3296 = vmatpush2.msra.mxu0 0.0
        %3297 = vmatprep.subr.mxu0 0.0
        %3298 = vmatpush2.msra.mxu0 0.0
        %3299 = vmatprep.subr.mxu0 0.0
        %3300 = vmatpush2.msra.mxu0 0.0
        %3301 = vmatprep.subr.mxu0 0.0
        %3302 = vmatpush2.msra.mxu0 0.0
        %3303 = vmatprep.subr.mxu0 0.0
        %3304 = vmatpush2.msra.mxu0 0.0
        %3305 = vmatprep.subr.mxu0 0.0
        %3306 = vmatpush2.msra.mxu0 0.0
        %3307 = vmatprep.subr.mxu0 0.0
        %3308 = vmatpush2.msra.mxu0 0.0
        %3309 = vmatprep.subr.mxu0 0.0
        %3310 = vmatpush2.msra.mxu0 0.0
        %3311 = vmatprep.subr.mxu0 0.0
        %3312 = vmatpush2.msra.mxu0 0.0
        %3313 = vmatprep.subr.mxu0 0.0
        %3314 = vmatpush2.msra.mxu0 0.0
        %3315 = vmatprep.subr.mxu0 0.0
        %3316 = vmatpush2.msra.mxu0 0.0
        %3317 = vmatprep.subr.mxu0 0.0
        %3318 = vmatpush2.msra.mxu0 0.0
        %3319 = vmatprep.subr.mxu0 0.0
        %3320 = vmatpush2.msra.mxu0 0.0
        %3321 = vmatprep.subr.mxu0 0.0
        %3322 = vmatpush2.msra.mxu0 0.0
        %3323 = vmatprep.subr.mxu0 0.0
        %3324 = vmatpush2.msra.mxu0 0.0
        %3325 = vmatprep.mubr.f32.mxu0 0.0
        %3326 = vmatmul.mubr.f32.gmra.mxu0 %v3259
        %v3327 = vpop.f32.mrf.mxu0
        %v3328 = vadd.f32 0.0, %v3327
        %v3329 = vpop.f32.mrf.mxu0
        %3330 = vdwg.mxu0
        %s3331 = sld [smem:[#allocation4]]
        %v3332 = vstv %s3331
        %v3333 = vmul.f32 %v3328, %v3332
        %v3334 = vsel %vm958, %v3333, -inf
        %3335 = vmax.xlane.f32.xlu0 %v3334
        %v3336 = vpop.xlane.xlu0 %3335
        %v3337 = vsub.f32 %v3333, %v3336
        %v3338 = vmul.f32 %v3337, 1.442695
        %v3339 = vpow.pop %v3338
        %v3340 = vsel %vm958, %v3339, 0.0
        %3341 = vadd.xlane.f32.xlu0 %v3340
        %v3342 = vpop.xlane.xlu0 %3341
        %v3343 = vrcp.pop %v3342
        %v3344 = vmul.f32 %v3339, %v3343
        %3353 = vrot.lane.b32.xlu0 %v3140, 112
        %v3354 = vpop.permute.xlu0 %3353
        %3355 = vrot.lane.b32.xlu0 %v3141, 112
        %v3356 = vpop.permute.xlu0 %3355
        %3357 = vrot.lane.b32.xlu0 %v3142, 112
        %v3358 = vpop.permute.xlu0 %3357
        %3359 = vrot.lane.b32.xlu0 %v3143, 112
        %v3360 = vpop.permute.xlu0 %3359
        %3361 = vrot.lane.b32.xlu0 %v3144, 112
        %v3362 = vpop.permute.xlu0 %3361
        %3363 = vrot.lane.b32.xlu0 %v3145, 112
        %v3364 = vpop.permute.xlu0 %3363
        %3365 = vrot.lane.b32.xlu0 %v3146, 112
        %v3366 = vpop.permute.xlu0 %3365
        %3367 = vrot.lane.b32.xlu0 %v3147, 112
        %v3368 = vpop.permute.xlu0 %3367
        %v3369 = vsel %vm958, %v3354, 0
        %v3371 = vsel %vm958, %v3356, 0
        %v3373 = vsel %vm958, %v3358, 0
        %v3375 = vsel %vm958, %v3360, 0
        %v3377 = vsel %vm958, %v3362, 0
        %v3379 = vsel %vm958, %v3364, 0
        %v3381 = vsel %vm958, %v3366, 0
        %v3383 = vsel %vm958, %v3368, 0
        %v3386 = vsel %vm958, %v3344, 0
        %3388 = vmatprep.subr.mxu0 0.0
        %3389 = vmatpush1.xpose.msra.mxu0 0.0
        %3390 = vmatprep.subr.mxu0 0.0
        %3391 = vmatpush1.xpose.msra.mxu0 0.0
        %3392 = vmatprep.subr.mxu0 0.0
        %3393 = vmatpush1.xpose.msra.mxu0 0.0
        %3394 = vmatprep.subr.mxu0 0.0
        %3395 = vmatpush1.xpose.msra.mxu0 0.0
        %3396 = vmatprep.subr.mxu0 0.0
        %3397 = vmatpush1.xpose.msra.mxu0 0.0
        %3398 = vmatprep.subr.mxu0 0.0
        %3399 = vmatpush1.xpose.msra.mxu0 0.0
        %3400 = vmatprep.subr.mxu0 0.0
        %3401 = vmatpush1.xpose.msra.mxu0 0.0
        %3402 = vmatprep.subr.mxu0 0.0
        %3403 = vmatpush1.xpose.msra.mxu0 0.0
        %3404 = vmatprep.subr.mxu0 0.0
        %3405 = vmatpush1.xpose.msra.mxu0 0.0
        %3406 = vmatprep.subr.mxu0 0.0
        %3407 = vmatpush1.xpose.msra.mxu0 0.0
        %3408 = vmatprep.subr.mxu0 0.0
        %3409 = vmatpush1.xpose.msra.mxu0 0.0
        %3410 = vmatprep.subr.mxu0 0.0
        %3411 = vmatpush1.xpose.msra.mxu0 0.0
        %3412 = vmatprep.subr.mxu0 0.0
        %3413 = vmatpush1.xpose.msra.mxu0 0.0
        %3414 = vmatprep.subr.mxu0 0.0
        %3415 = vmatpush1.xpose.msra.mxu0 0.0
        %3416 = vmatprep.subr.mxu0 0.0
        %3417 = vmatpush1.xpose.msra.mxu0 0.0
        %3418 = vmatprep.subr.mxu0 0.0
        %3419 = vmatpush1.xpose.msra.mxu0 %v3386
        %3420 = vmatprep.subr.mxu0 0.0
        %3421 = vmatpush2.xpose.msra.mxu0 0.0
        %3422 = vmatprep.subr.mxu0 0.0
        %3423 = vmatpush2.xpose.msra.mxu0 0.0
        %3424 = vmatprep.subr.mxu0 0.0
        %3425 = vmatpush2.xpose.msra.mxu0 0.0
        %3426 = vmatprep.subr.mxu0 0.0
        %3427 = vmatpush2.xpose.msra.mxu0 0.0
        %3428 = vmatprep.subr.mxu0 0.0
        %3429 = vmatpush2.xpose.msra.mxu0 0.0
        %3430 = vmatprep.subr.mxu0 0.0
        %3431 = vmatpush2.xpose.msra.mxu0 0.0
        %3432 = vmatprep.subr.mxu0 0.0
        %3433 = vmatpush2.xpose.msra.mxu0 0.0
        %3434 = vmatprep.subr.mxu0 0.0
        %3435 = vmatpush2.xpose.msra.mxu0 0.0
        %3436 = vmatprep.subr.mxu0 0.0
        %3437 = vmatpush2.xpose.msra.mxu0 0.0
        %3438 = vmatprep.subr.mxu0 0.0
        %3439 = vmatpush2.xpose.msra.mxu0 0.0
        %3440 = vmatprep.subr.mxu0 0.0
        %3441 = vmatpush2.xpose.msra.mxu0 0.0
        %3442 = vmatprep.subr.mxu0 0.0
        %3443 = vmatpush2.xpose.msra.mxu0 0.0
        %3444 = vmatprep.subr.mxu0 0.0
        %3445 = vmatpush2.xpose.msra.mxu0 0.0
        %3446 = vmatprep.subr.mxu0 0.0
        %3447 = vmatpush2.xpose.msra.mxu0 0.0
        %3448 = vmatprep.subr.mxu0 0.0
        %3449 = vmatpush2.xpose.msra.mxu0 0.0
        %3450 = vmatprep.subr.mxu0 0.0
        %3451 = vmatpush2.xpose.msra.mxu0 0.0
        %3452 = vmatprep.mubr.f32.mxu0 0.0
        %3453 = vmatmul.mubr.f32.gmra.mxu0 %v3369
        %v3454 = vpop.f32.mrf.mxu0
        %v3455 = vadd.f32 0.0, %v3454
        %v3456 = vpop.f32.mrf.mxu0
        %3457 = vmatprep.mubr.f32.mxu0 0.0
        %3458 = vmatmul.mubr.f32.gmra.mxu0 %v3371
        %v3459 = vpop.f32.mrf.mxu0
        %v3460 = vadd.f32 0.0, %v3459
        %v3461 = vpop.f32.mrf.mxu0
        %3462 = vmatprep.mubr.f32.mxu0 0.0
        %3463 = vmatmul.mubr.f32.gmra.mxu0 %v3373
        %v3464 = vpop.f32.mrf.mxu0
        %v3465 = vadd.f32 0.0, %v3464
        %v3466 = vpop.f32.mrf.mxu0
        %3467 = vmatprep.mubr.f32.mxu0 0.0
        %3468 = vmatmul.mubr.f32.gmra.mxu0 %v3375
        %v3469 = vpop.f32.mrf.mxu0
        %v3470 = vadd.f32 0.0, %v3469
        %v3471 = vpop.f32.mrf.mxu0
        %3472 = vmatprep.mubr.f32.mxu0 0.0
        %3473 = vmatmul.mubr.f32.gmra.mxu0 %v3377
        %v3474 = vpop.f32.mrf.mxu0
        %v3475 = vadd.f32 0.0, %v3474
        %v3476 = vpop.f32.mrf.mxu0
        %3477 = vmatprep.mubr.f32.mxu0 0.0
        %3478 = vmatmul.mubr.f32.gmra.mxu0 %v3379
        %v3479 = vpop.f32.mrf.mxu0
        %v3480 = vadd.f32 0.0, %v3479
        %v3481 = vpop.f32.mrf.mxu0
        %3482 = vmatprep.mubr.f32.mxu0 0.0
        %3483 = vmatmul.mubr.f32.gmra.mxu0 %v3381
        %v3484 = vpop.f32.mrf.mxu0
        %v3485 = vadd.f32 0.0, %v3484
        %v3486 = vpop.f32.mrf.mxu0
        %3487 = vmatprep.mubr.f32.mxu0 0.0
        %3488 = vmatmul.mubr.f32.gmra.mxu0 %v3383
        %v3489 = vpop.f32.mrf.mxu0
        %v3490 = vadd.f32 0.0, %v3489
        %v3491 = vpop.f32.mrf.mxu0
        %3492 = vdwg.mxu0
        %3493 = vst.msk [vmem:[#allocation3] sm:$0xff] %vm958, %v3455
        %3494 = vst.msk [vmem:[#allocation3 + $0x8] sm:$0xff] %vm958, %v3460
        %3495 = vst.msk [vmem:[#allocation3 + $0x10] sm:$0xff] %vm958, %v3465
        %3496 = vst.msk [vmem:[#allocation3 + $0x18] sm:$0xff] %vm958, %v3470
        %3497 = vst.msk [vmem:[#allocation3 + $0x20] sm:$0xff] %vm958, %v3475
        %3498 = vst.msk [vmem:[#allocation3 + $0x28] sm:$0xff] %vm958, %v3480
        %3499 = vst.msk [vmem:[#allocation3 + $0x30] sm:$0xff] %vm958, %v3485
        %3500 = vst.msk [vmem:[#allocation3 + $0x38] sm:$0xff] %vm958, %v3490
        %v3501 = vsel %vm1564, %v3148, 0.0
        %v3502 = vsel %vm1564, %v3149, 0.0
        %v3503 = vadd.f32 %v3501, %v3502
        %v3504 = vsel %vm1564, %v3150, 0.0
        %v3505 = vadd.f32 %v3503, %v3504
        %v3506 = vsel %vm1564, %v3151, 0.0
        %v3507 = vadd.f32 %v3505, %v3506
        %v3508 = vsel %vm1564, %v3152, 0.0
        %v3509 = vadd.f32 %v3507, %v3508
        %v3510 = vsel %vm1564, %v3153, 0.0
        %v3511 = vadd.f32 %v3509, %v3510
        %v3512 = vsel %vm1564, %v3154, 0.0
        %v3513 = vadd.f32 %v3511, %v3512
        %v3514 = vsel %vm1564, %v3155, 0.0
        %v3515 = vadd.f32 %v3513, %v3514
        %v3516 = vrot.slane %v3515, 4
        %v3517 = vadd.f32 %v3515, %v3516
        %v3518 = vrot.slane %v3517, 2
        %v3519 = vadd.f32 %v3517, %v3518
        %v3520 = vrot.slane %v3519, 1
        %v3521 = vadd.f32 %v3519, %v3520
        %v3522 = vmax.f32 %v3521, 1e-24
        %v3523 = vrsqrt.pop %v3522
        %v3524 = vmul.f32 %v2765, %v3523
        %v3525 = vmul.f32 %v2766, %v3523
        %v3526 = vmul.f32 %v2767, %v3523
        %v3527 = vmul.f32 %v2768, %v3523
        %v3528 = vmul.f32 %v2769, %v3523
        %v3529 = vmul.f32 %v2770, %v3523
        %v3530 = vmul.f32 %v2771, %v3523
        %v3531 = vmul.f32 %v2772, %v3523
        %v3532 = vsel %vm1564, %v3187, 0.0
        %v3533 = vsel %vm1564, %v3188, 0.0
        %v3534 = vadd.f32 %v3532, %v3533
        %v3535 = vsel %vm1564, %v3189, 0.0
        %v3536 = vadd.f32 %v3534, %v3535
        %v3537 = vsel %vm1564, %v3190, 0.0
        %v3538 = vadd.f32 %v3536, %v3537
        %v3539 = vsel %vm1564, %v3191, 0.0
        %v3540 = vadd.f32 %v3538, %v3539
        %v3541 = vsel %vm1564, %v3192, 0.0
        %v3542 = vadd.f32 %v3540, %v3541
        %v3543 = vsel %vm1564, %v3193, 0.0
        %v3544 = vadd.f32 %v3542, %v3543
        %v3545 = vsel %vm1564, %v3194, 0.0
        %v3546 = vadd.f32 %v3544, %v3545
        %v3547 = vrot.slane %v3546, 4
        %v3548 = vadd.f32 %v3546, %v3547
        %v3549 = vrot.slane %v3548, 2
        %v3550 = vadd.f32 %v3548, %v3549
        %v3551 = vrot.slane %v3550, 1
        %v3552 = vadd.f32 %v3550, %v3551
        %v3553 = vmax.f32 %v3552, 1e-24
        %v3554 = vrsqrt.pop %v3553
        %v3555 = vmul.f32 %v3140, %v3554
        %v3556 = vmul.f32 %v3141, %v3554
        %v3557 = vmul.f32 %v3142, %v3554
        %v3558 = vmul.f32 %v3143, %v3554
        %v3559 = vmul.f32 %v3144, %v3554
        %v3560 = vmul.f32 %v3145, %v3554
        %v3561 = vmul.f32 %v3146, %v3554
        %v3562 = vmul.f32 %v3147, %v3554
        %3571 = vrot.lane.b32.xlu0 %v3524, 120
        %v3572 = vpop.permute.xlu0 %3571
        %3573 = vrot.lane.b32.xlu0 %v3525, 120
        %v3574 = vpop.permute.xlu0 %3573
        %3575 = vrot.lane.b32.xlu0 %v3526, 120
        %v3576 = vpop.permute.xlu0 %3575
        %3577 = vrot.lane.b32.xlu0 %v3527, 120
        %v3578 = vpop.permute.xlu0 %3577
        %3579 = vrot.lane.b32.xlu0 %v3528, 120
        %v3580 = vpop.permute.xlu0 %3579
        %3581 = vrot.lane.b32.xlu0 %v3529, 120
        %v3582 = vpop.permute.xlu0 %3581
        %3583 = vrot.lane.b32.xlu0 %v3530, 120
        %v3584 = vpop.permute.xlu0 %3583
        %3585 = vrot.lane.b32.xlu0 %v3531, 120
        %v3586 = vpop.permute.xlu0 %3585
        %3595 = vxpose.xlu0.b32.start [1/16] %v3572, 128
        %3596 = vxpose.xlu0.b32.cont [2/16] %v3574, 128
        %3597 = vxpose.xlu0.b32.cont [3/16] %v3576, 128
        %3598 = vxpose.xlu0.b32.cont [4/16] %v3578, 128
        %3599 = vxpose.xlu0.b32.cont [5/16] %v3580, 128
        %3600 = vxpose.xlu0.b32.cont [6/16] %v3582, 128
        %3601 = vxpose.xlu0.b32.cont [7/16] %v3584, 128
        %3602 = vxpose.xlu0.b32.cont [8/16] %v3586, 128
        %3603 = vxpose.xlu0.b32.cont [9/16] 0.0, 128
        %3604 = vxpose.xlu0.b32.cont [10/16] 0.0, 128
        %3605 = vxpose.xlu0.b32.cont [11/16] 0.0, 128
        %3606 = vxpose.xlu0.b32.cont [12/16] 0.0, 128
        %3607 = vxpose.xlu0.b32.cont [13/16] 0.0, 128
        %3608 = vxpose.xlu0.b32.cont [14/16] 0.0, 128
        %3609 = vxpose.xlu0.b32.cont [15/16] 0.0, 128
        %3610 = vxpose.xlu0.b32.end [16/16] 0.0, 128
        %v3611 = vpop.trf.xlu0
        %v3612 = vpop.trf.xlu0
        %v3613 = vpop.trf.xlu0
        %v3614 = vpop.trf.xlu0
        %v3615 = vpop.trf.xlu0
        %v3616 = vpop.trf.xlu0
        %v3617 = vpop.trf.xlu0
        %v3618 = vpop.trf.xlu0
        %v3619 = vpop.trf.xlu0
        %v3620 = vpop.trf.xlu0
        %v3621 = vpop.trf.xlu0
        %v3622 = vpop.trf.xlu0
        %v3623 = vpop.trf.xlu0
        %v3624 = vpop.trf.xlu0
        %v3625 = vpop.trf.xlu0
        %v3626 = vpop.trf.xlu0
        %3635 = vrot.lane.b32.xlu0 %v3555, 120
        %v3636 = vpop.permute.xlu0 %3635
        %3637 = vrot.lane.b32.xlu0 %v3556, 120
        %v3638 = vpop.permute.xlu0 %3637
        %3639 = vrot.lane.b32.xlu0 %v3557, 120
        %v3640 = vpop.permute.xlu0 %3639
        %3641 = vrot.lane.b32.xlu0 %v3558, 120
        %v3642 = vpop.permute.xlu0 %3641
        %3643 = vrot.lane.b32.xlu0 %v3559, 120
        %v3644 = vpop.permute.xlu0 %3643
        %3645 = vrot.lane.b32.xlu0 %v3560, 120
        %v3646 = vpop.permute.xlu0 %3645
        %3647 = vrot.lane.b32.xlu0 %v3561, 120
        %v3648 = vpop.permute.xlu0 %3647
        %3649 = vrot.lane.b32.xlu0 %v3562, 120
        %v3650 = vpop.permute.xlu0 %3649
        %v3660 = vsel %vm1048, %v3611, 0
        %3662 = vmatprep.subr.mxu0 0.0
        %3663 = vmatpush1.msra.mxu0 0.0
        %3664 = vmatprep.subr.mxu0 0.0
        %3665 = vmatpush1.msra.mxu0 0.0
        %3666 = vmatprep.subr.mxu0 0.0
        %3667 = vmatpush1.msra.mxu0 0.0
        %3668 = vmatprep.subr.mxu0 0.0
        %3669 = vmatpush1.msra.mxu0 0.0
        %3670 = vmatprep.subr.mxu0 0.0
        %3671 = vmatpush1.msra.mxu0 0.0
        %3672 = vmatprep.subr.mxu0 0.0
        %3673 = vmatpush1.msra.mxu0 0.0
        %3674 = vmatprep.subr.mxu0 0.0
        %3675 = vmatpush1.msra.mxu0 0.0
        %3676 = vmatprep.subr.mxu0 0.0
        %3677 = vmatpush1.msra.mxu0 0.0
        %3678 = vmatprep.subr.mxu0 0.0
        %3679 = vmatpush1.msra.mxu0 %v3650
        %3680 = vmatprep.subr.mxu0 0.0
        %3681 = vmatpush1.msra.mxu0 %v3648
        %3682 = vmatprep.subr.mxu0 0.0
        %3683 = vmatpush1.msra.mxu0 %v3646
        %3684 = vmatprep.subr.mxu0 0.0
        %3685 = vmatpush1.msra.mxu0 %v3644
        %3686 = vmatprep.subr.mxu0 0.0
        %3687 = vmatpush1.msra.mxu0 %v3642
        %3688 = vmatprep.subr.mxu0 0.0
        %3689 = vmatpush1.msra.mxu0 %v3640
        %3690 = vmatprep.subr.mxu0 0.0
        %3691 = vmatpush1.msra.mxu0 %v3638
        %3692 = vmatprep.subr.mxu0 0.0
        %3693 = vmatpush1.msra.mxu0 %v3636
        %3694 = vmatprep.subr.mxu0 0.0
        %3695 = vmatpush2.msra.mxu0 0.0
        %3696 = vmatprep.subr.mxu0 0.0
        %3697 = vmatpush2.msra.mxu0 0.0
        %3698 = vmatprep.subr.mxu0 0.0
        %3699 = vmatpush2.msra.mxu0 0.0
        %3700 = vmatprep.subr.mxu0 0.0
        %3701 = vmatpush2.msra.mxu0 0.0
        %3702 = vmatprep.subr.mxu0 0.0
        %3703 = vmatpush2.msra.mxu0 0.0
        %3704 = vmatprep.subr.mxu0 0.0
        %3705 = vmatpush2.msra.mxu0 0.0
        %3706 = vmatprep.subr.mxu0 0.0
        %3707 = vmatpush2.msra.mxu0 0.0
        %3708 = vmatprep.subr.mxu0 0.0
        %3709 = vmatpush2.msra.mxu0 0.0
        %3710 = vmatprep.subr.mxu0 0.0
        %3711 = vmatpush2.msra.mxu0 0.0
        %3712 = vmatprep.subr.mxu0 0.0
        %3713 = vmatpush2.msra.mxu0 0.0
        %3714 = vmatprep.subr.mxu0 0.0
        %3715 = vmatpush2.msra.mxu0 0.0
        %3716 = vmatprep.subr.mxu0 0.0
        %3717 = vmatpush2.msra.mxu0 0.0
        %3718 = vmatprep.subr.mxu0 0.0
        %3719 = vmatpush2.msra.mxu0 0.0
        %3720 = vmatprep.subr.mxu0 0.0
        %3721 = vmatpush2.msra.mxu0 0.0
        %3722 = vmatprep.subr.mxu0 0.0
        %3723 = vmatpush2.msra.mxu0 0.0
        %3724 = vmatprep.subr.mxu0 0.0
        %3725 = vmatpush2.msra.mxu0 0.0
        %3726 = vmatprep.mubr.f32.mxu0 0.0
        %3727 = vmatmul.mubr.f32.gmra.mxu0 %v3660
        %v3728 = vpop.f32.mrf.mxu0
        %v3729 = vadd.f32 0.0, %v3728
        %v3730 = vpop.f32.mrf.mxu0
        %3731 = vdwg.mxu0
        %s3732 = sld [smem:[#allocation4 + $0x1]]
        %v3733 = vstv %s3732
        %v3734 = vmul.f32 %v3729, %v3733
        %v3735 = vsel %vm958, %v3734, -inf
        %3736 = vmax.xlane.f32.xlu0 %v3735
        %v3737 = vpop.xlane.xlu0 %3736
        %v3738 = vsub.f32 %v3734, %v3737
        %v3739 = vmul.f32 %v3738, 1.442695
        %v3740 = vpow.pop %v3739
        %v3741 = vsel %vm958, %v3740, 0.0
        %3742 = vadd.xlane.f32.xlu0 %v3741
        %v3743 = vpop.xlane.xlu0 %3742
        %v3744 = vrcp.pop %v3743
        %v3745 = vmul.f32 %v3740, %v3744
        %3746 = vrot.lane.b32.xlu0 %v3140, 104
        %v3747 = vpop.permute.xlu0 %3746
        %3748 = vrot.lane.b32.xlu0 %v3141, 104
        %v3749 = vpop.permute.xlu0 %3748
        %3750 = vrot.lane.b32.xlu0 %v3142, 104
        %v3751 = vpop.permute.xlu0 %3750
        %3752 = vrot.lane.b32.xlu0 %v3143, 104
        %v3753 = vpop.permute.xlu0 %3752
        %3754 = vrot.lane.b32.xlu0 %v3144, 104
        %v3755 = vpop.permute.xlu0 %3754
        %3756 = vrot.lane.b32.xlu0 %v3145, 104
        %v3757 = vpop.permute.xlu0 %3756
        %3758 = vrot.lane.b32.xlu0 %v3146, 104
        %v3759 = vpop.permute.xlu0 %3758
        %3760 = vrot.lane.b32.xlu0 %v3147, 104
        %v3761 = vpop.permute.xlu0 %3760
        %v3762 = vsel %vm958, %v3747, 0
        %v3764 = vsel %vm958, %v3749, 0
        %v3766 = vsel %vm958, %v3751, 0
        %v3768 = vsel %vm958, %v3753, 0
        %v3770 = vsel %vm958, %v3755, 0
        %v3772 = vsel %vm958, %v3757, 0
        %v3774 = vsel %vm958, %v3759, 0
        %v3776 = vsel %vm958, %v3761, 0
        %v3779 = vsel %vm958, %v3745, 0
        %3781 = vmatprep.subr.mxu0 0.0
        %3782 = vmatpush1.xpose.msra.mxu0 0.0
        %3783 = vmatprep.subr.mxu0 0.0
        %3784 = vmatpush1.xpose.msra.mxu0 0.0
        %3785 = vmatprep.subr.mxu0 0.0
        %3786 = vmatpush1.xpose.msra.mxu0 0.0
        %3787 = vmatprep.subr.mxu0 0.0
        %3788 = vmatpush1.xpose.msra.mxu0 0.0
        %3789 = vmatprep.subr.mxu0 0.0
        %3790 = vmatpush1.xpose.msra.mxu0 0.0
        %3791 = vmatprep.subr.mxu0 0.0
        %3792 = vmatpush1.xpose.msra.mxu0 0.0
        %3793 = vmatprep.subr.mxu0 0.0
        %3794 = vmatpush1.xpose.msra.mxu0 0.0
        %3795 = vmatprep.subr.mxu0 0.0
        %3796 = vmatpush1.xpose.msra.mxu0 0.0
        %3797 = vmatprep.subr.mxu0 0.0
        %3798 = vmatpush1.xpose.msra.mxu0 0.0
        %3799 = vmatprep.subr.mxu0 0.0
        %3800 = vmatpush1.xpose.msra.mxu0 0.0
        %3801 = vmatprep.subr.mxu0 0.0
        %3802 = vmatpush1.xpose.msra.mxu0 0.0
        %3803 = vmatprep.subr.mxu0 0.0
        %3804 = vmatpush1.xpose.msra.mxu0 0.0
        %3805 = vmatprep.subr.mxu0 0.0
        %3806 = vmatpush1.xpose.msra.mxu0 0.0
        %3807 = vmatprep.subr.mxu0 0.0
        %3808 = vmatpush1.xpose.msra.mxu0 0.0
        %3809 = vmatprep.subr.mxu0 0.0
        %3810 = vmatpush1.xpose.msra.mxu0 0.0
        %3811 = vmatprep.subr.mxu0 0.0
        %3812 = vmatpush1.xpose.msra.mxu0 %v3779
        %3813 = vmatprep.subr.mxu0 0.0
        %3814 = vmatpush2.xpose.msra.mxu0 0.0
        %3815 = vmatprep.subr.mxu0 0.0
        %3816 = vmatpush2.xpose.msra.mxu0 0.0
        %3817 = vmatprep.subr.mxu0 0.0
        %3818 = vmatpush2.xpose.msra.mxu0 0.0
        %3819 = vmatprep.subr.mxu0 0.0
        %3820 = vmatpush2.xpose.msra.mxu0 0.0
        %3821 = vmatprep.subr.mxu0 0.0
        %3822 = vmatpush2.xpose.msra.mxu0 0.0
        %3823 = vmatprep.subr.mxu0 0.0
        %3824 = vmatpush2.xpose.msra.mxu0 0.0
        %3825 = vmatprep.subr.mxu0 0.0
        %3826 = vmatpush2.xpose.msra.mxu0 0.0
        %3827 = vmatprep.subr.mxu0 0.0
        %3828 = vmatpush2.xpose.msra.mxu0 0.0
        %3829 = vmatprep.subr.mxu0 0.0
        %3830 = vmatpush2.xpose.msra.mxu0 0.0
        %3831 = vmatprep.subr.mxu0 0.0
        %3832 = vmatpush2.xpose.msra.mxu0 0.0
        %3833 = vmatprep.subr.mxu0 0.0
        %3834 = vmatpush2.xpose.msra.mxu0 0.0
        %3835 = vmatprep.subr.mxu0 0.0
        %3836 = vmatpush2.xpose.msra.mxu0 0.0
        %3837 = vmatprep.subr.mxu0 0.0
        %3838 = vmatpush2.xpose.msra.mxu0 0.0
        %3839 = vmatprep.subr.mxu0 0.0
        %3840 = vmatpush2.xpose.msra.mxu0 0.0
        %3841 = vmatprep.subr.mxu0 0.0
        %3842 = vmatpush2.xpose.msra.mxu0 0.0
        %3843 = vmatprep.subr.mxu0 0.0
        %3844 = vmatpush2.xpose.msra.mxu0 0.0
        %3845 = vmatprep.mubr.f32.mxu0 0.0
        %3846 = vmatmul.mubr.f32.gmra.mxu0 %v3762
        %v3847 = vpop.f32.mrf.mxu0
        %v3848 = vadd.f32 0.0, %v3847
        %v3849 = vpop.f32.mrf.mxu0
        %3850 = vmatprep.mubr.f32.mxu0 0.0
        %3851 = vmatmul.mubr.f32.gmra.mxu0 %v3764
        %v3852 = vpop.f32.mrf.mxu0
        %v3853 = vadd.f32 0.0, %v3852
        %v3854 = vpop.f32.mrf.mxu0
        %3855 = vmatprep.mubr.f32.mxu0 0.0
        %3856 = vmatmul.mubr.f32.gmra.mxu0 %v3766
        %v3857 = vpop.f32.mrf.mxu0
        %v3858 = vadd.f32 0.0, %v3857
        %v3859 = vpop.f32.mrf.mxu0
        %3860 = vmatprep.mubr.f32.mxu0 0.0
        %3861 = vmatmul.mubr.f32.gmra.mxu0 %v3768
        %v3862 = vpop.f32.mrf.mxu0
        %v3863 = vadd.f32 0.0, %v3862
        %v3864 = vpop.f32.mrf.mxu0
        %3865 = vmatprep.mubr.f32.mxu0 0.0
        %3866 = vmatmul.mubr.f32.gmra.mxu0 %v3770
        %v3867 = vpop.f32.mrf.mxu0
        %v3868 = vadd.f32 0.0, %v3867
        %v3869 = vpop.f32.mrf.mxu0
        %3870 = vmatprep.mubr.f32.mxu0 0.0
        %3871 = vmatmul.mubr.f32.gmra.mxu0 %v3772
        %v3872 = vpop.f32.mrf.mxu0
        %v3873 = vadd.f32 0.0, %v3872
        %v3874 = vpop.f32.mrf.mxu0
        %3875 = vmatprep.mubr.f32.mxu0 0.0
        %3876 = vmatmul.mubr.f32.gmra.mxu0 %v3774
        %v3877 = vpop.f32.mrf.mxu0
        %v3878 = vadd.f32 0.0, %v3877
        %v3879 = vpop.f32.mrf.mxu0
        %3880 = vmatprep.mubr.f32.mxu0 0.0
        %3881 = vmatmul.mubr.f32.gmra.mxu0 %v3776
        %v3882 = vpop.f32.mrf.mxu0
        %v3883 = vadd.f32 0.0, %v3882
        %v3884 = vpop.f32.mrf.mxu0
        %3885 = vdwg.mxu0
        %3894 = vrot.lane.b32.xlu0 %v3848, 8
        %v3895 = vpop.permute.xlu0 %3894
        %3896 = vrot.lane.b32.xlu0 %v3853, 8
        %v3897 = vpop.permute.xlu0 %3896
        %3898 = vrot.lane.b32.xlu0 %v3858, 8
        %v3899 = vpop.permute.xlu0 %3898
        %3900 = vrot.lane.b32.xlu0 %v3863, 8
        %v3901 = vpop.permute.xlu0 %3900
        %3902 = vrot.lane.b32.xlu0 %v3868, 8
        %v3903 = vpop.permute.xlu0 %3902
        %3904 = vrot.lane.b32.xlu0 %v3873, 8
        %v3905 = vpop.permute.xlu0 %3904
        %3906 = vrot.lane.b32.xlu0 %v3878, 8
        %v3907 = vpop.permute.xlu0 %3906
        %3908 = vrot.lane.b32.xlu0 %v3883, 8
        %v3909 = vpop.permute.xlu0 %3908
        %3918 = vst.msk [vmem:[#allocation3] sm:$0xff] %vm1564, %v3895
        %3919 = vst.msk [vmem:[#allocation3 + $0x8] sm:$0xff] %vm1564, %v3897
        %3920 = vst.msk [vmem:[#allocation3 + $0x10] sm:$0xff] %vm1564, %v3899
        %3921 = vst.msk [vmem:[#allocation3 + $0x18] sm:$0xff] %vm1564, %v3901
        %3922 = vst.msk [vmem:[#allocation3 + $0x20] sm:$0xff] %vm1564, %v3903
        %3923 = vst.msk [vmem:[#allocation3 + $0x28] sm:$0xff] %vm1564, %v3905
        %3924 = vst.msk [vmem:[#allocation3 + $0x30] sm:$0xff] %vm1564, %v3907
        %3925 = vst.msk [vmem:[#allocation3 + $0x38] sm:$0xff] %vm1564, %v3909
        %v3926 = vld [vmem:[#allocation3] sm:$0xff]
        %v3927 = vld [vmem:[#allocation3 + $0x8] sm:$0xff]
        %v3928 = vld [vmem:[#allocation3 + $0x10] sm:$0xff]
        %v3929 = vld [vmem:[#allocation3 + $0x18] sm:$0xff]
        %v3930 = vld [vmem:[#allocation3 + $0x20] sm:$0xff]
        %v3931 = vld [vmem:[#allocation3 + $0x28] sm:$0xff]
        %v3932 = vld [vmem:[#allocation3 + $0x30] sm:$0xff]
        %v3933 = vld [vmem:[#allocation3 + $0x38] sm:$0xff]
        %v3934 = vld [vmem:[%s16] sm:$0xf]
        %v3935 = vld [vmem:[%s16 + $0x4] sm:$0xf]
        %v3936 = vpack.c.bf16 %v3927, %v3926
        %v3937 = vpack.c.bf16 %v3929, %v3928
        %v3938 = vpack.c.bf16 %v3931, %v3930
        %v3939 = vpack.c.bf16 %v3933, %v3932
        %v3942 = vunpack.c.l.b16 %v3934
        %v3943 = vunpack.c.l.b16 %v3935
        %v3944 = vpack.c.b16 %v3943, %v3942
        %v3947 = vsel %vm872, %v3936, 0
        %v3950 = vsel %vm872, %v3937, 0
        %v3953 = vsel %vm872, %v3938, 0
        %v3956 = vsel %vm872, %v3939, 0
        %3958 = vmatprep.subr.bf16.mxu0 0
        %3959 = vmatpush1.bf16.msra.mxu0 0
        %3960 = vmatprep.subr.bf16.mxu0 0
        %3961 = vmatpush1.bf16.msra.mxu0 0
        %3962 = vmatprep.subr.bf16.mxu0 0
        %3963 = vmatpush1.bf16.msra.mxu0 0
        %3964 = vmatprep.subr.bf16.mxu0 0
        %3965 = vmatpush1.bf16.msra.mxu0 0
        %3966 = vmatprep.subr.bf16.mxu0 0
        %3967 = vmatpush1.bf16.msra.mxu0 0
        %3968 = vmatprep.subr.bf16.mxu0 0
        %3969 = vmatpush1.bf16.msra.mxu0 0
        %3970 = vmatprep.subr.bf16.mxu0 0
        %3971 = vmatpush1.bf16.msra.mxu0 0
        %3972 = vmatprep.subr.bf16.mxu0 0
        %3973 = vmatpush1.bf16.msra.mxu0 %v3944
        %3974 = vmatprep.subr.bf16.mxu0 0
        %3975 = vmatpush2.bf16.msra.mxu0 0
        %3976 = vmatprep.subr.bf16.mxu0 0
        %3977 = vmatpush2.bf16.msra.mxu0 0
        %3978 = vmatprep.subr.bf16.mxu0 0
        %3979 = vmatpush2.bf16.msra.mxu0 0
        %3980 = vmatprep.subr.bf16.mxu0 0
        %3981 = vmatpush2.bf16.msra.mxu0 0
        %3982 = vmatprep.subr.bf16.mxu0 0
        %3983 = vmatpush2.bf16.msra.mxu0 0
        %3984 = vmatprep.subr.bf16.mxu0 0
        %3985 = vmatpush2.bf16.msra.mxu0 0
        %3986 = vmatprep.subr.bf16.mxu0 0
        %3987 = vmatpush2.bf16.msra.mxu0 0
        %3988 = vmatprep.subr.bf16.mxu0 0
        %3989 = vmatpush2.bf16.msra.mxu0 0
        %3990 = vmatprep.mubr.bf16.mxu0 0
        %3991 = vmatmul.mubr.bf16.gmra.mxu0 %v3947
        %v3992 = vpop.f32.mrf.mxu0
        %v3993 = vadd.f32 0.0, %v3992
        %v3994 = vpop.f32.mrf.mxu0
        %v3995 = vpop.f32.mrf.mxu0
        %v3996 = vadd.f32 0.0, %v3995
        %v3997 = vpop.f32.mrf.mxu0
        %3998 = vmatprep.mubr.bf16.mxu0 0
        %3999 = vmatmul.mubr.bf16.gmra.mxu0 %v3950
        %v4000 = vpop.f32.mrf.mxu0
        %v4001 = vadd.f32 0.0, %v4000
        %v4002 = vpop.f32.mrf.mxu0
        %v4003 = vpop.f32.mrf.mxu0
        %v4004 = vadd.f32 0.0, %v4003
        %v4005 = vpop.f32.mrf.mxu0
        %4006 = vmatprep.mubr.bf16.mxu0 0
        %4007 = vmatmul.mubr.bf16.gmra.mxu0 %v3953
        %v4008 = vpop.f32.mrf.mxu0
        %v4009 = vadd.f32 0.0, %v4008
        %v4010 = vpop.f32.mrf.mxu0
        %v4011 = vpop.f32.mrf.mxu0
        %v4012 = vadd.f32 0.0, %v4011
        %v4013 = vpop.f32.mrf.mxu0
        %4014 = vmatprep.mubr.bf16.mxu0 0
        %4015 = vmatmul.mubr.bf16.gmra.mxu0 %v3956
        %v4016 = vpop.f32.mrf.mxu0
        %v4017 = vadd.f32 0.0, %v4016
        %v4018 = vpop.f32.mrf.mxu0
        %v4019 = vpop.f32.mrf.mxu0
        %v4020 = vadd.f32 0.0, %v4019
        %v4021 = vpop.f32.mrf.mxu0
        %4022 = vdwg.mxu0
        %v4023 = vadd.f32 %v1677, %v3993
        %v4024 = vadd.f32 %v1678, %v3996
        %v4025 = vadd.f32 %v1679, %v4001
        %v4026 = vadd.f32 %v1680, %v4004
        %v4027 = vadd.f32 %v1681, %v4009
        %v4028 = vadd.f32 %v1682, %v4012
        %v4029 = vadd.f32 %v1683, %v4017
        %v4030 = vadd.f32 %v1684, %v4020
        %v4031 = vld [vmem:[%s18] sm:$0x1]
        %v4032 = vld [vmem:[%s19] sm:$0x1]
        %v4033 = vsel %vm872, %v4023, 0.0
        %4034 = vadd.xlane.f32.xlu0 %v4033
        %v4035 = vpop.xlane.xlu0 %4034
        %v4036 = vsel %vm872, %v4024, 0.0
        %4037 = vadd.xlane.f32.xlu0 %v4036
        %v4038 = vpop.xlane.xlu0 %4037
        %v4039 = vsel %vm872, %v4025, 0.0
        %4040 = vadd.xlane.f32.xlu0 %v4039
        %v4041 = vpop.xlane.xlu0 %4040
        %v4042 = vsel %vm872, %v4026, 0.0
        %4043 = vadd.xlane.f32.xlu0 %v4042
        %v4044 = vpop.xlane.xlu0 %4043
        %v4045 = vsel %vm872, %v4027, 0.0
        %4046 = vadd.xlane.f32.xlu0 %v4045
        %v4047 = vpop.xlane.xlu0 %4046
        %v4048 = vsel %vm872, %v4028, 0.0
        %4049 = vadd.xlane.f32.xlu0 %v4048
        %v4050 = vpop.xlane.xlu0 %4049
        %v4051 = vsel %vm872, %v4029, 0.0
        %4052 = vadd.xlane.f32.xlu0 %v4051
        %v4053 = vpop.xlane.xlu0 %4052
        %v4054 = vsel %vm872, %v4030, 0.0
        %4055 = vadd.xlane.f32.xlu0 %v4054
        %v4056 = vpop.xlane.xlu0 %4055
        %v4057 = vmul.f32 %v4035, %v1711
        %v4058 = vmul.f32 %v4038, %v1711
        %v4059 = vmul.f32 %v4041, %v1711
        %v4060 = vmul.f32 %v4044, %v1711
        %v4061 = vmul.f32 %v4047, %v1711
        %v4062 = vmul.f32 %v4050, %v1711
        %v4063 = vmul.f32 %v4053, %v1711
        %v4064 = vmul.f32 %v4056, %v1711
        %v4065 = vsub.f32 %v4023, %v4057
        %v4066 = vsub.f32 %v4024, %v4058
        %v4067 = vsub.f32 %v4025, %v4059
        %v4068 = vsub.f32 %v4026, %v4060
        %v4069 = vsub.f32 %v4027, %v4061
        %v4070 = vsub.f32 %v4028, %v4062
        %v4071 = vsub.f32 %v4029, %v4063
        %v4072 = vsub.f32 %v4030, %v4064
        %v4073 = vmul.f32 %v4065, %v4065
        %v4074 = vmul.f32 %v4066, %v4066
        %v4075 = vmul.f32 %v4067, %v4067
        %v4076 = vmul.f32 %v4068, %v4068
        %v4077 = vmul.f32 %v4069, %v4069
        %v4078 = vmul.f32 %v4070, %v4070
        %v4079 = vmul.f32 %v4071, %v4071
        %v4080 = vmul.f32 %v4072, %v4072
        %v4081 = vsel %vm872, %v4073, 0.0
        %4082 = vadd.xlane.f32.xlu0 %v4081
        %v4083 = vpop.xlane.xlu0 %4082
        %v4084 = vsel %vm872, %v4074, 0.0
        %4085 = vadd.xlane.f32.xlu0 %v4084
        %v4086 = vpop.xlane.xlu0 %4085
        %v4087 = vsel %vm872, %v4075, 0.0
        %4088 = vadd.xlane.f32.xlu0 %v4087
        %v4089 = vpop.xlane.xlu0 %4088
        %v4090 = vsel %vm872, %v4076, 0.0
        %4091 = vadd.xlane.f32.xlu0 %v4090
        %v4092 = vpop.xlane.xlu0 %4091
        %v4093 = vsel %vm872, %v4077, 0.0
        %4094 = vadd.xlane.f32.xlu0 %v4093
        %v4095 = vpop.xlane.xlu0 %4094
        %v4096 = vsel %vm872, %v4078, 0.0
        %4097 = vadd.xlane.f32.xlu0 %v4096
        %v4098 = vpop.xlane.xlu0 %4097
        %v4099 = vsel %vm872, %v4079, 0.0
        %4100 = vadd.xlane.f32.xlu0 %v4099
        %v4101 = vpop.xlane.xlu0 %4100
        %v4102 = vsel %vm872, %v4080, 0.0
        %4103 = vadd.xlane.f32.xlu0 %v4102
        %v4104 = vpop.xlane.xlu0 %4103
        %v4105 = vmul.f32 %v4083, %v1711
        %v4106 = vmul.f32 %v4086, %v1711
        %v4107 = vmul.f32 %v4089, %v1711
        %v4108 = vmul.f32 %v4092, %v1711
        %v4109 = vmul.f32 %v4095, %v1711
        %v4110 = vmul.f32 %v4098, %v1711
        %v4111 = vmul.f32 %v4101, %v1711
        %v4112 = vmul.f32 %v4104, %v1711
        %v4113 = vadd.f32 %v4105, 1e-05
        %v4114 = vadd.f32 %v4106, 1e-05
        %v4115 = vadd.f32 %v4107, 1e-05
        %v4116 = vadd.f32 %v4108, 1e-05
        %v4117 = vadd.f32 %v4109, 1e-05
        %v4118 = vadd.f32 %v4110, 1e-05
        %v4119 = vadd.f32 %v4111, 1e-05
        %v4120 = vadd.f32 %v4112, 1e-05
        %v4121 = vrsqrt.pop %v4113
        %v4122 = vrsqrt.pop %v4114
        %v4123 = vrsqrt.pop %v4115
        %v4124 = vrsqrt.pop %v4116
        %v4125 = vrsqrt.pop %v4117
        %v4126 = vrsqrt.pop %v4118
        %v4127 = vrsqrt.pop %v4119
        %v4128 = vrsqrt.pop %v4120
        %v4129 = vmul.f32 %v4065, %v4121
        %v4130 = vmul.f32 %v4066, %v4122
        %v4131 = vmul.f32 %v4067, %v4123
        %v4132 = vmul.f32 %v4068, %v4124
        %v4133 = vmul.f32 %v4069, %v4125
        %v4134 = vmul.f32 %v4070, %v4126
        %v4135 = vmul.f32 %v4071, %v4127
        %v4136 = vmul.f32 %v4072, %v4128
        %v4138 = vlaneseq
        %v4139 = vshrl.u32 %v4138, 7
        %v4140 = vsub.s32 0, %v4139
        %v4141 = vrot.slane %v4031, %v4140
        %v4143 = vmul.f32 %v4129, %v4141
        %v4144 = vmul.f32 %v4130, %v4141
        %v4145 = vmul.f32 %v4131, %v4141
        %v4146 = vmul.f32 %v4132, %v4141
        %v4147 = vmul.f32 %v4133, %v4141
        %v4148 = vmul.f32 %v4134, %v4141
        %v4149 = vmul.f32 %v4135, %v4141
        %v4150 = vmul.f32 %v4136, %v4141
        %v4152 = vlaneseq
        %v4153 = vshrl.u32 %v4152, 7
        %v4154 = vsub.s32 0, %v4153
        %v4155 = vrot.slane %v4032, %v4154
        %v4157 = vadd.f32 %v4143, %v4155
        %v4158 = vadd.f32 %v4144, %v4155
        %v4159 = vadd.f32 %v4145, %v4155
        %v4160 = vadd.f32 %v4146, %v4155
        %v4161 = vadd.f32 %v4147, %v4155
        %v4162 = vadd.f32 %v4148, %v4155
        %v4163 = vadd.f32 %v4149, %v4155
        %v4164 = vadd.f32 %v4150, %v4155
        %v4165 = vld [vmem:[%s20] sm:$0xf]
        %v4166 = vld [vmem:[%s20 + $0x4] sm:$0xf]
        %v4167 = vpack.c.bf16 %v4158, %v4157
        %v4168 = vpack.c.bf16 %v4160, %v4159
        %v4169 = vpack.c.bf16 %v4162, %v4161
        %v4170 = vpack.c.bf16 %v4164, %v4163
        %v4173 = vunpack.c.l.b16 %v4165
        %v4174 = vunpack.c.l.b16 %v4166
        %v4175 = vpack.c.b16 %v4174, %v4173
        %v4178 = vsel %vm872, %v4167, 0
        %v4181 = vsel %vm872, %v4168, 0
        %v4184 = vsel %vm872, %v4169, 0
        %v4187 = vsel %vm872, %v4170, 0
        %4189 = vmatprep.subr.bf16.mxu0 0
        %4190 = vmatpush1.bf16.msra.mxu0 0
        %4191 = vmatprep.subr.bf16.mxu0 0
        %4192 = vmatpush1.bf16.msra.mxu0 0
        %4193 = vmatprep.subr.bf16.mxu0 0
        %4194 = vmatpush1.bf16.msra.mxu0 0
        %4195 = vmatprep.subr.bf16.mxu0 0
        %4196 = vmatpush1.bf16.msra.mxu0 0
        %4197 = vmatprep.subr.bf16.mxu0 0
        %4198 = vmatpush1.bf16.msra.mxu0 0
        %4199 = vmatprep.subr.bf16.mxu0 0
        %4200 = vmatpush1.bf16.msra.mxu0 0
        %4201 = vmatprep.subr.bf16.mxu0 0
        %4202 = vmatpush1.bf16.msra.mxu0 0
        %4203 = vmatprep.subr.bf16.mxu0 0
        %4204 = vmatpush1.bf16.msra.mxu0 %v4175
        %4205 = vmatprep.subr.bf16.mxu0 0
        %4206 = vmatpush2.bf16.msra.mxu0 0
        %4207 = vmatprep.subr.bf16.mxu0 0
        %4208 = vmatpush2.bf16.msra.mxu0 0
        %4209 = vmatprep.subr.bf16.mxu0 0
        %4210 = vmatpush2.bf16.msra.mxu0 0
        %4211 = vmatprep.subr.bf16.mxu0 0
        %4212 = vmatpush2.bf16.msra.mxu0 0
        %4213 = vmatprep.subr.bf16.mxu0 0
        %4214 = vmatpush2.bf16.msra.mxu0 0
        %4215 = vmatprep.subr.bf16.mxu0 0
        %4216 = vmatpush2.bf16.msra.mxu0 0
        %4217 = vmatprep.subr.bf16.mxu0 0
        %4218 = vmatpush2.bf16.msra.mxu0 0
        %4219 = vmatprep.subr.bf16.mxu0 0
        %4220 = vmatpush2.bf16.msra.mxu0 0
        %4221 = vmatprep.mubr.bf16.mxu0 0
        %4222 = vmatmul.mubr.bf16.gmra.mxu0 %v4178
        %v4223 = vpop.f32.mrf.mxu0
        %v4224 = vadd.f32 0.0, %v4223
        %v4225 = vpop.f32.mrf.mxu0
        %v4226 = vpop.f32.mrf.mxu0
        %v4227 = vadd.f32 0.0, %v4226
        %v4228 = vpop.f32.mrf.mxu0
        %4229 = vmatprep.mubr.bf16.mxu0 0
        %4230 = vmatmul.mubr.bf16.gmra.mxu0 %v4181
        %v4231 = vpop.f32.mrf.mxu0
        %v4232 = vadd.f32 0.0, %v4231
        %v4233 = vpop.f32.mrf.mxu0
        %v4234 = vpop.f32.mrf.mxu0
        %v4235 = vadd.f32 0.0, %v4234
        %v4236 = vpop.f32.mrf.mxu0
        %4237 = vmatprep.mubr.bf16.mxu0 0
        %4238 = vmatmul.mubr.bf16.gmra.mxu0 %v4184
        %v4239 = vpop.f32.mrf.mxu0
        %v4240 = vadd.f32 0.0, %v4239
        %v4241 = vpop.f32.mrf.mxu0
        %v4242 = vpop.f32.mrf.mxu0
        %v4243 = vadd.f32 0.0, %v4242
        %v4244 = vpop.f32.mrf.mxu0
        %4245 = vmatprep.mubr.bf16.mxu0 0
        %4246 = vmatmul.mubr.bf16.gmra.mxu0 %v4187
        %v4247 = vpop.f32.mrf.mxu0
        %v4248 = vadd.f32 0.0, %v4247
        %v4249 = vpop.f32.mrf.mxu0
        %v4250 = vpop.f32.mrf.mxu0
        %v4251 = vadd.f32 0.0, %v4250
        %v4252 = vpop.f32.mrf.mxu0
        %4253 = vdwg.mxu0
        %v4254 = vld [vmem:[%s21] sm:$0xff]
        %v4255 = vld [vmem:[%s21 + $0x8] sm:$0x1]
        %v4256 = vrot.slane %v4224, 7
        %v4257 = vrot.slane %v4227, 7
        %v4258 = vrot.slane %v4232, 7
        %v4259 = vrot.slane %v4235, 7
        %v4260 = vrot.slane %v4240, 7
        %v4261 = vrot.slane %v4243, 7
        %v4262 = vrot.slane %v4248, 7
        %v4263 = vrot.slane %v4251, 7
        %v4264 = vsel %vm2055, %v4262, %v4263
        %v4265 = vsel %vm2055, %v4261, %v4262
        %v4266 = vsel %vm2055, %v4260, %v4261
        %v4267 = vsel %vm2055, %v4259, %v4260
        %v4268 = vsel %vm2055, %v4258, %v4259
        %v4269 = vsel %vm2055, %v4257, %v4258
        %v4270 = vsel %vm2055, %v4256, %v4257
        %v4271 = vsel %vm2055, %v4263, %v4256
        %v4272 = vld [vmem:[%s23] sm:$0xff]
        %v4273 = vld [vmem:[%s23 + $0x8] sm:$0xff]
        %v4274 = vld [vmem:[%s23 + $0x10] sm:$0xff]
        %v4275 = vld [vmem:[%s23 + $0x18] sm:$0xff]
        %v4276 = vld [vmem:[%s23 + $0x20] sm:$0xff]
        %v4277 = vld [vmem:[%s23 + $0x28] sm:$0xff]
        %v4278 = vld [vmem:[%s23 + $0x30] sm:$0xff]
        %v4279 = vld [vmem:[%s23 + $0x38] sm:$0xff]
        %4281 = vset.pattern.permute.xlu0 0
        %4282 = vperm.xlu0 %4281, %v4272
        %v4283 = vpop.permute.xlu0 %4282
        %4286 = vset.pattern.permute.xlu0 0
        %4287 = vperm.xlu0 %4286, %v4273
        %v4288 = vpop.permute.xlu0 %4287
        %4291 = vset.pattern.permute.xlu0 0
        %4292 = vperm.xlu0 %4291, %v4274
        %v4293 = vpop.permute.xlu0 %4292
        %4296 = vset.pattern.permute.xlu0 0
        %4297 = vperm.xlu0 %4296, %v4275
        %v4298 = vpop.permute.xlu0 %4297
        %4301 = vset.pattern.permute.xlu0 0
        %4302 = vperm.xlu0 %4301, %v4276
        %v4303 = vpop.permute.xlu0 %4302
        %4306 = vset.pattern.permute.xlu0 0
        %4307 = vperm.xlu0 %4306, %v4277
        %v4308 = vpop.permute.xlu0 %4307
        %4311 = vset.pattern.permute.xlu0 0
        %4312 = vperm.xlu0 %4311, %v4278
        %v4313 = vpop.permute.xlu0 %4312
        %4316 = vset.pattern.permute.xlu0 0
        %4317 = vperm.xlu0 %4316, %v4279
        %v4318 = vpop.permute.xlu0 %4317
        %v4320 = vmul.f32 %v4264, %v4283
        %v4321 = vmul.f32 %v4271, %v4288
        %v4322 = vmul.f32 %v4270, %v4293
        %v4323 = vmul.f32 %v4269, %v4298
        %v4324 = vmul.f32 %v4268, %v4303
        %v4325 = vmul.f32 %v4267, %v4308
        %v4326 = vmul.f32 %v4266, %v4313
        %v4327 = vmul.f32 %v4265, %v4318
        %v4328 = vlaneseq
        %v4329 = vshrl.u32 %v4328, 7
        %v4330 = vsub.s32 0, %v4329
        %v4331 = vrot.slane %v4254, %v4330
        %v4332 = vmul.f32 %v4320, %v4331
        %v4333 = vmul.f32 %v4321, %v4331
        %v4334 = vmul.f32 %v4322, %v4331
        %v4335 = vmul.f32 %v4323, %v4331
        %v4336 = vmul.f32 %v4324, %v4331
        %v4337 = vmul.f32 %v4325, %v4331
        %v4338 = vmul.f32 %v4326, %v4331
        %v4339 = vmul.f32 %v4327, %v4331
        %v4340 = vadd.f32 %v4332, 0.0
        %v4341 = vadd.f32 %v4333, 0.0
        %v4342 = vadd.f32 %v4334, 0.0
        %v4343 = vadd.f32 %v4335, 0.0
        %v4344 = vadd.f32 %v4336, 0.0
        %v4345 = vadd.f32 %v4337, 0.0
        %v4346 = vadd.f32 %v4338, 0.0
        %v4347 = vadd.f32 %v4339, 0.0
        %v4348 = vld [vmem:[%s2140] sm:$0xff]
        %v4349 = vld [vmem:[%s2140 + $0x8] sm:$0xff]
        %v4350 = vld [vmem:[%s2140 + $0x10] sm:$0xff]
        %v4351 = vld [vmem:[%s2140 + $0x18] sm:$0xff]
        %v4352 = vld [vmem:[%s2140 + $0x20] sm:$0xff]
        %v4353 = vld [vmem:[%s2140 + $0x28] sm:$0xff]
        %v4354 = vld [vmem:[%s2140 + $0x30] sm:$0xff]
        %v4355 = vld [vmem:[%s2140 + $0x38] sm:$0xff]
        %4357 = vset.pattern.permute.xlu0 0
        %4358 = vperm.xlu0 %4357, %v4348
        %v4359 = vpop.permute.xlu0 %4358
        %4362 = vset.pattern.permute.xlu0 0
        %4363 = vperm.xlu0 %4362, %v4349
        %v4364 = vpop.permute.xlu0 %4363
        %4367 = vset.pattern.permute.xlu0 0
        %4368 = vperm.xlu0 %4367, %v4350
        %v4369 = vpop.permute.xlu0 %4368
        %4372 = vset.pattern.permute.xlu0 0
        %4373 = vperm.xlu0 %4372, %v4351
        %v4374 = vpop.permute.xlu0 %4373
        %4377 = vset.pattern.permute.xlu0 0
        %4378 = vperm.xlu0 %4377, %v4352
        %v4379 = vpop.permute.xlu0 %4378
        %4382 = vset.pattern.permute.xlu0 0
        %4383 = vperm.xlu0 %4382, %v4353
        %v4384 = vpop.permute.xlu0 %4383
        %4387 = vset.pattern.permute.xlu0 0
        %4388 = vperm.xlu0 %4387, %v4354
        %v4389 = vpop.permute.xlu0 %4388
        %4392 = vset.pattern.permute.xlu0 0
        %4393 = vperm.xlu0 %4392, %v4355
        %v4394 = vpop.permute.xlu0 %4393
        %v4396 = vmul.f32 %v4251, %v4359
        %v4397 = vmul.f32 %v4224, %v4364
        %v4398 = vmul.f32 %v4227, %v4369
        %v4399 = vmul.f32 %v4232, %v4374
        %v4400 = vmul.f32 %v4235, %v4379
        %v4401 = vmul.f32 %v4240, %v4384
        %v4402 = vmul.f32 %v4243, %v4389
        %v4403 = vmul.f32 %v4248, %v4394
        %v4404 = vlaneseq
        %v4405 = vshrl.u32 %v4404, 7
        %v4406 = vsub.s32 1, %v4405
        %v4407 = vrot.slane %v4254, %v4406
        %v4408 = vmul.f32 %v4396, %v4407
        %v4409 = vmul.f32 %v4397, %v4407
        %v4410 = vmul.f32 %v4398, %v4407
        %v4411 = vmul.f32 %v4399, %v4407
        %v4412 = vmul.f32 %v4400, %v4407
        %v4413 = vmul.f32 %v4401, %v4407
        %v4414 = vmul.f32 %v4402, %v4407
        %v4415 = vmul.f32 %v4403, %v4407
        %v4416 = vadd.f32 %v4340, %v4408
        %v4417 = vadd.f32 %v4341, %v4409
        %v4418 = vadd.f32 %v4342, %v4410
        %v4419 = vadd.f32 %v4343, %v4411
        %v4420 = vadd.f32 %v4344, %v4412
        %v4421 = vadd.f32 %v4345, %v4413
        %v4422 = vadd.f32 %v4346, %v4414
        %v4423 = vadd.f32 %v4347, %v4415
        %v4424 = vrot.slane %v4224, 1
        %v4425 = vrot.slane %v4227, 1
        %v4426 = vrot.slane %v4232, 1
        %v4427 = vrot.slane %v4235, 1
        %v4428 = vrot.slane %v4240, 1
        %v4429 = vrot.slane %v4243, 1
        %v4430 = vrot.slane %v4248, 1
        %v4431 = vrot.slane %v4251, 1
        %v4432 = vsel %vm2225, %v4430, %v4431
        %v4433 = vsel %vm2225, %v4429, %v4430
        %v4434 = vsel %vm2225, %v4428, %v4429
        %v4435 = vsel %vm2225, %v4427, %v4428
        %v4436 = vsel %vm2225, %v4426, %v4427
        %v4437 = vsel %vm2225, %v4425, %v4426
        %v4438 = vsel %vm2225, %v4424, %v4425
        %v4439 = vsel %vm2225, %v4431, %v4424
        %v4440 = vld [vmem:[%s2234] sm:$0xff]
        %v4441 = vld [vmem:[%s2234 + $0x8] sm:$0xff]
        %v4442 = vld [vmem:[%s2234 + $0x10] sm:$0xff]
        %v4443 = vld [vmem:[%s2234 + $0x18] sm:$0xff]
        %v4444 = vld [vmem:[%s2234 + $0x20] sm:$0xff]
        %v4445 = vld [vmem:[%s2234 + $0x28] sm:$0xff]
        %v4446 = vld [vmem:[%s2234 + $0x30] sm:$0xff]
        %v4447 = vld [vmem:[%s2234 + $0x38] sm:$0xff]
        %4449 = vset.pattern.permute.xlu0 0
        %4450 = vperm.xlu0 %4449, %v4440
        %v4451 = vpop.permute.xlu0 %4450
        %4454 = vset.pattern.permute.xlu0 0
        %4455 = vperm.xlu0 %4454, %v4441
        %v4456 = vpop.permute.xlu0 %4455
        %4459 = vset.pattern.permute.xlu0 0
        %4460 = vperm.xlu0 %4459, %v4442
        %v4461 = vpop.permute.xlu0 %4460
        %4464 = vset.pattern.permute.xlu0 0
        %4465 = vperm.xlu0 %4464, %v4443
        %v4466 = vpop.permute.xlu0 %4465
        %4469 = vset.pattern.permute.xlu0 0
        %4470 = vperm.xlu0 %4469, %v4444
        %v4471 = vpop.permute.xlu0 %4470
        %4474 = vset.pattern.permute.xlu0 0
        %4475 = vperm.xlu0 %4474, %v4445
        %v4476 = vpop.permute.xlu0 %4475
        %4479 = vset.pattern.permute.xlu0 0
        %4480 = vperm.xlu0 %4479, %v4446
        %v4481 = vpop.permute.xlu0 %4480
        %4484 = vset.pattern.permute.xlu0 0
        %4485 = vperm.xlu0 %4484, %v4447
        %v4486 = vpop.permute.xlu0 %4485
        %v4488 = vmul.f32 %v4439, %v4451
        %v4489 = vmul.f32 %v4438, %v4456
        %v4490 = vmul.f32 %v4437, %v4461
        %v4491 = vmul.f32 %v4436, %v4466
        %v4492 = vmul.f32 %v4435, %v4471
        %v4493 = vmul.f32 %v4434, %v4476
        %v4494 = vmul.f32 %v4433, %v4481
        %v4495 = vmul.f32 %v4432, %v4486
        %v4496 = vlaneseq
        %v4497 = vshrl.u32 %v4496, 7
        %v4498 = vsub.s32 2, %v4497
        %v4499 = vrot.slane %v4254, %v4498
        %v4500 = vmul.f32 %v4488, %v4499
        %v4501 = vmul.f32 %v4489, %v4499
        %v4502 = vmul.f32 %v4490, %v4499
        %v4503 = vmul.f32 %v4491, %v4499
        %v4504 = vmul.f32 %v4492, %v4499
        %v4505 = vmul.f32 %v4493, %v4499
        %v4506 = vmul.f32 %v4494, %v4499
        %v4507 = vmul.f32 %v4495, %v4499
        %v4508 = vadd.f32 %v4416, %v4500
        %v4509 = vadd.f32 %v4417, %v4501
        %v4510 = vadd.f32 %v4418, %v4502
        %v4511 = vadd.f32 %v4419, %v4503
        %v4512 = vadd.f32 %v4420, %v4504
        %v4513 = vadd.f32 %v4421, %v4505
        %v4514 = vadd.f32 %v4422, %v4506
        %v4515 = vadd.f32 %v4423, %v4507
        %v4516 = vld [vmem:[%s2311] sm:$0xff]
        %v4517 = vld [vmem:[%s2311 + $0x8] sm:$0xff]
        %v4518 = vld [vmem:[%s2311 + $0x10] sm:$0xff]
        %v4519 = vld [vmem:[%s2311 + $0x18] sm:$0xff]
        %v4520 = vld [vmem:[%s2311 + $0x20] sm:$0xff]
        %v4521 = vld [vmem:[%s2311 + $0x28] sm:$0xff]
        %v4522 = vld [vmem:[%s2311 + $0x30] sm:$0xff]
        %v4523 = vld [vmem:[%s2311 + $0x38] sm:$0xff]
        %4525 = vset.pattern.permute.xlu0 0
        %4526 = vperm.xlu0 %4525, %v4516
        %v4527 = vpop.permute.xlu0 %4526
        %4530 = vset.pattern.permute.xlu0 0
        %4531 = vperm.xlu0 %4530, %v4517
        %v4532 = vpop.permute.xlu0 %4531
        %4535 = vset.pattern.permute.xlu0 0
        %4536 = vperm.xlu0 %4535, %v4518
        %v4537 = vpop.permute.xlu0 %4536
        %4540 = vset.pattern.permute.xlu0 0
        %4541 = vperm.xlu0 %4540, %v4519
        %v4542 = vpop.permute.xlu0 %4541
        %4545 = vset.pattern.permute.xlu0 0
        %4546 = vperm.xlu0 %4545, %v4520
        %v4547 = vpop.permute.xlu0 %4546
        %4550 = vset.pattern.permute.xlu0 0
        %4551 = vperm.xlu0 %4550, %v4521
        %v4552 = vpop.permute.xlu0 %4551
        %4555 = vset.pattern.permute.xlu0 0
        %4556 = vperm.xlu0 %4555, %v4522
        %v4557 = vpop.permute.xlu0 %4556
        %4560 = vset.pattern.permute.xlu0 0
        %4561 = vperm.xlu0 %4560, %v4523
        %v4562 = vpop.permute.xlu0 %4561
        %v4564 = vmul.f32 %v4271, %v4527
        %v4565 = vmul.f32 %v4270, %v4532
        %v4566 = vmul.f32 %v4269, %v4537
        %v4567 = vmul.f32 %v4268, %v4542
        %v4568 = vmul.f32 %v4267, %v4547
        %v4569 = vmul.f32 %v4266, %v4552
        %v4570 = vmul.f32 %v4265, %v4557
        %v4571 = vmul.f32 %v4264, %v4562
        %v4572 = vlaneseq
        %v4573 = vshrl.u32 %v4572, 7
        %v4574 = vsub.s32 3, %v4573
        %v4575 = vrot.slane %v4254, %v4574
        %v4576 = vmul.f32 %v4564, %v4575
        %v4577 = vmul.f32 %v4565, %v4575
        %v4578 = vmul.f32 %v4566, %v4575
        %v4579 = vmul.f32 %v4567, %v4575
        %v4580 = vmul.f32 %v4568, %v4575
        %v4581 = vmul.f32 %v4569, %v4575
        %v4582 = vmul.f32 %v4570, %v4575
        %v4583 = vmul.f32 %v4571, %v4575
        %v4584 = vadd.f32 %v4508, %v4576
        %v4585 = vadd.f32 %v4509, %v4577
        %v4586 = vadd.f32 %v4510, %v4578
        %v4587 = vadd.f32 %v4511, %v4579
        %v4588 = vadd.f32 %v4512, %v4580
        %v4589 = vadd.f32 %v4513, %v4581
        %v4590 = vadd.f32 %v4514, %v4582
        %v4591 = vadd.f32 %v4515, %v4583
        %v4592 = vld [vmem:[%s2388] sm:$0xff]
        %v4593 = vld [vmem:[%s2388 + $0x8] sm:$0xff]
        %v4594 = vld [vmem:[%s2388 + $0x10] sm:$0xff]
        %v4595 = vld [vmem:[%s2388 + $0x18] sm:$0xff]
        %v4596 = vld [vmem:[%s2388 + $0x20] sm:$0xff]
        %v4597 = vld [vmem:[%s2388 + $0x28] sm:$0xff]
        %v4598 = vld [vmem:[%s2388 + $0x30] sm:$0xff]
        %v4599 = vld [vmem:[%s2388 + $0x38] sm:$0xff]
        %4601 = vset.pattern.permute.xlu0 0
        %4602 = vperm.xlu0 %4601, %v4592
        %v4603 = vpop.permute.xlu0 %4602
        %4606 = vset.pattern.permute.xlu0 0
        %4607 = vperm.xlu0 %4606, %v4593
        %v4608 = vpop.permute.xlu0 %4607
        %4611 = vset.pattern.permute.xlu0 0
        %4612 = vperm.xlu0 %4611, %v4594
        %v4613 = vpop.permute.xlu0 %4612
        %4616 = vset.pattern.permute.xlu0 0
        %4617 = vperm.xlu0 %4616, %v4595
        %v4618 = vpop.permute.xlu0 %4617
        %4621 = vset.pattern.permute.xlu0 0
        %4622 = vperm.xlu0 %4621, %v4596
        %v4623 = vpop.permute.xlu0 %4622
        %4626 = vset.pattern.permute.xlu0 0
        %4627 = vperm.xlu0 %4626, %v4597
        %v4628 = vpop.permute.xlu0 %4627
        %4631 = vset.pattern.permute.xlu0 0
        %4632 = vperm.xlu0 %4631, %v4598
        %v4633 = vpop.permute.xlu0 %4632
        %4636 = vset.pattern.permute.xlu0 0
        %4637 = vperm.xlu0 %4636, %v4599
        %v4638 = vpop.permute.xlu0 %4637
        %v4640 = vmul.f32 %v4224, %v4603
        %v4641 = vmul.f32 %v4227, %v4608
        %v4642 = vmul.f32 %v4232, %v4613
        %v4643 = vmul.f32 %v4235, %v4618
        %v4644 = vmul.f32 %v4240, %v4623
        %v4645 = vmul.f32 %v4243, %v4628
        %v4646 = vmul.f32 %v4248, %v4633
        %v4647 = vmul.f32 %v4251, %v4638
        %v4648 = vlaneseq
        %v4649 = vshrl.u32 %v4648, 7
        %v4650 = vsub.s32 4, %v4649
        %v4651 = vrot.slane %v4254, %v4650
        %v4652 = vmul.f32 %v4640, %v4651
        %v4653 = vmul.f32 %v4641, %v4651
        %v4654 = vmul.f32 %v4642, %v4651
        %v4655 = vmul.f32 %v4643, %v4651
        %v4656 = vmul.f32 %v4644, %v4651
        %v4657 = vmul.f32 %v4645, %v4651
        %v4658 = vmul.f32 %v4646, %v4651
        %v4659 = vmul.f32 %v4647, %v4651
        %v4660 = vadd.f32 %v4584, %v4652
        %v4661 = vadd.f32 %v4585, %v4653
        %v4662 = vadd.f32 %v4586, %v4654
        %v4663 = vadd.f32 %v4587, %v4655
        %v4664 = vadd.f32 %v4588, %v4656
        %v4665 = vadd.f32 %v4589, %v4657
        %v4666 = vadd.f32 %v4590, %v4658
        %v4667 = vadd.f32 %v4591, %v4659
        %v4668 = vld [vmem:[%s2465] sm:$0xff]
        %v4669 = vld [vmem:[%s2465 + $0x8] sm:$0xff]
        %v4670 = vld [vmem:[%s2465 + $0x10] sm:$0xff]
        %v4671 = vld [vmem:[%s2465 + $0x18] sm:$0xff]
        %v4672 = vld [vmem:[%s2465 + $0x20] sm:$0xff]
        %v4673 = vld [vmem:[%s2465 + $0x28] sm:$0xff]
        %v4674 = vld [vmem:[%s2465 + $0x30] sm:$0xff]
        %v4675 = vld [vmem:[%s2465 + $0x38] sm:$0xff]
        %4677 = vset.pattern.permute.xlu0 0
        %4678 = vperm.xlu0 %4677, %v4668
        %v4679 = vpop.permute.xlu0 %4678
        %4682 = vset.pattern.permute.xlu0 0
        %4683 = vperm.xlu0 %4682, %v4669
        %v4684 = vpop.permute.xlu0 %4683
        %4687 = vset.pattern.permute.xlu0 0
        %4688 = vperm.xlu0 %4687, %v4670
        %v4689 = vpop.permute.xlu0 %4688
        %4692 = vset.pattern.permute.xlu0 0
        %4693 = vperm.xlu0 %4692, %v4671
        %v4694 = vpop.permute.xlu0 %4693
        %4697 = vset.pattern.permute.xlu0 0
        %4698 = vperm.xlu0 %4697, %v4672
        %v4699 = vpop.permute.xlu0 %4698
        %4702 = vset.pattern.permute.xlu0 0
        %4703 = vperm.xlu0 %4702, %v4673
        %v4704 = vpop.permute.xlu0 %4703
        %4707 = vset.pattern.permute.xlu0 0
        %4708 = vperm.xlu0 %4707, %v4674
        %v4709 = vpop.permute.xlu0 %4708
        %4712 = vset.pattern.permute.xlu0 0
        %4713 = vperm.xlu0 %4712, %v4675
        %v4714 = vpop.permute.xlu0 %4713
        %v4716 = vmul.f32 %v4438, %v4679
        %v4717 = vmul.f32 %v4437, %v4684
        %v4718 = vmul.f32 %v4436, %v4689
        %v4719 = vmul.f32 %v4435, %v4694
        %v4720 = vmul.f32 %v4434, %v4699
        %v4721 = vmul.f32 %v4433, %v4704
        %v4722 = vmul.f32 %v4432, %v4709
        %v4723 = vmul.f32 %v4439, %v4714
        %v4724 = vlaneseq
        %v4725 = vshrl.u32 %v4724, 7
        %v4726 = vsub.s32 5, %v4725
        %v4727 = vrot.slane %v4254, %v4726
        %v4728 = vmul.f32 %v4716, %v4727
        %v4729 = vmul.f32 %v4717, %v4727
        %v4730 = vmul.f32 %v4718, %v4727
        %v4731 = vmul.f32 %v4719, %v4727
        %v4732 = vmul.f32 %v4720, %v4727
        %v4733 = vmul.f32 %v4721, %v4727
        %v4734 = vmul.f32 %v4722, %v4727
        %v4735 = vmul.f32 %v4723, %v4727
        %v4736 = vadd.f32 %v4660, %v4728
        %v4737 = vadd.f32 %v4661, %v4729
        %v4738 = vadd.f32 %v4662, %v4730
        %v4739 = vadd.f32 %v4663, %v4731
        %v4740 = vadd.f32 %v4664, %v4732
        %v4741 = vadd.f32 %v4665, %v4733
        %v4742 = vadd.f32 %v4666, %v4734
        %v4743 = vadd.f32 %v4667, %v4735
        %v4744 = vld [vmem:[%s2542] sm:$0xff]
        %v4745 = vld [vmem:[%s2542 + $0x8] sm:$0xff]
        %v4746 = vld [vmem:[%s2542 + $0x10] sm:$0xff]
        %v4747 = vld [vmem:[%s2542 + $0x18] sm:$0xff]
        %v4748 = vld [vmem:[%s2542 + $0x20] sm:$0xff]
        %v4749 = vld [vmem:[%s2542 + $0x28] sm:$0xff]
        %v4750 = vld [vmem:[%s2542 + $0x30] sm:$0xff]
        %v4751 = vld [vmem:[%s2542 + $0x38] sm:$0xff]
        %4753 = vset.pattern.permute.xlu0 0
        %4754 = vperm.xlu0 %4753, %v4744
        %v4755 = vpop.permute.xlu0 %4754
        %4758 = vset.pattern.permute.xlu0 0
        %4759 = vperm.xlu0 %4758, %v4745
        %v4760 = vpop.permute.xlu0 %4759
        %4763 = vset.pattern.permute.xlu0 0
        %4764 = vperm.xlu0 %4763, %v4746
        %v4765 = vpop.permute.xlu0 %4764
        %4768 = vset.pattern.permute.xlu0 0
        %4769 = vperm.xlu0 %4768, %v4747
        %v4770 = vpop.permute.xlu0 %4769
        %4773 = vset.pattern.permute.xlu0 0
        %4774 = vperm.xlu0 %4773, %v4748
        %v4775 = vpop.permute.xlu0 %4774
        %4778 = vset.pattern.permute.xlu0 0
        %4779 = vperm.xlu0 %4778, %v4749
        %v4780 = vpop.permute.xlu0 %4779
        %4783 = vset.pattern.permute.xlu0 0
        %4784 = vperm.xlu0 %4783, %v4750
        %v4785 = vpop.permute.xlu0 %4784
        %4788 = vset.pattern.permute.xlu0 0
        %4789 = vperm.xlu0 %4788, %v4751
        %v4790 = vpop.permute.xlu0 %4789
        %v4792 = vmul.f32 %v4270, %v4755
        %v4793 = vmul.f32 %v4269, %v4760
        %v4794 = vmul.f32 %v4268, %v4765
        %v4795 = vmul.f32 %v4267, %v4770
        %v4796 = vmul.f32 %v4266, %v4775
        %v4797 = vmul.f32 %v4265, %v4780
        %v4798 = vmul.f32 %v4264, %v4785
        %v4799 = vmul.f32 %v4271, %v4790
        %v4800 = vlaneseq
        %v4801 = vshrl.u32 %v4800, 7
        %v4802 = vsub.s32 6, %v4801
        %v4803 = vrot.slane %v4254, %v4802
        %v4804 = vmul.f32 %v4792, %v4803
        %v4805 = vmul.f32 %v4793, %v4803
        %v4806 = vmul.f32 %v4794, %v4803
        %v4807 = vmul.f32 %v4795, %v4803
        %v4808 = vmul.f32 %v4796, %v4803
        %v4809 = vmul.f32 %v4797, %v4803
        %v4810 = vmul.f32 %v4798, %v4803
        %v4811 = vmul.f32 %v4799, %v4803
        %v4812 = vadd.f32 %v4736, %v4804
        %v4813 = vadd.f32 %v4737, %v4805
        %v4814 = vadd.f32 %v4738, %v4806
        %v4815 = vadd.f32 %v4739, %v4807
        %v4816 = vadd.f32 %v4740, %v4808
        %v4817 = vadd.f32 %v4741, %v4809
        %v4818 = vadd.f32 %v4742, %v4810
        %v4819 = vadd.f32 %v4743, %v4811
        %v4820 = vld [vmem:[%s2619] sm:$0xff]
        %v4821 = vld [vmem:[%s2619 + $0x8] sm:$0xff]
        %v4822 = vld [vmem:[%s2619 + $0x10] sm:$0xff]
        %v4823 = vld [vmem:[%s2619 + $0x18] sm:$0xff]
        %v4824 = vld [vmem:[%s2619 + $0x20] sm:$0xff]
        %v4825 = vld [vmem:[%s2619 + $0x28] sm:$0xff]
        %v4826 = vld [vmem:[%s2619 + $0x30] sm:$0xff]
        %v4827 = vld [vmem:[%s2619 + $0x38] sm:$0xff]
        %4829 = vset.pattern.permute.xlu0 0
        %4830 = vperm.xlu0 %4829, %v4820
        %v4831 = vpop.permute.xlu0 %4830
        %4834 = vset.pattern.permute.xlu0 0
        %4835 = vperm.xlu0 %4834, %v4821
        %v4836 = vpop.permute.xlu0 %4835
        %4839 = vset.pattern.permute.xlu0 0
        %4840 = vperm.xlu0 %4839, %v4822
        %v4841 = vpop.permute.xlu0 %4840
        %4844 = vset.pattern.permute.xlu0 0
        %4845 = vperm.xlu0 %4844, %v4823
        %v4846 = vpop.permute.xlu0 %4845
        %4849 = vset.pattern.permute.xlu0 0
        %4850 = vperm.xlu0 %4849, %v4824
        %v4851 = vpop.permute.xlu0 %4850
        %4854 = vset.pattern.permute.xlu0 0
        %4855 = vperm.xlu0 %4854, %v4825
        %v4856 = vpop.permute.xlu0 %4855
        %4859 = vset.pattern.permute.xlu0 0
        %4860 = vperm.xlu0 %4859, %v4826
        %v4861 = vpop.permute.xlu0 %4860
        %4864 = vset.pattern.permute.xlu0 0
        %4865 = vperm.xlu0 %4864, %v4827
        %v4866 = vpop.permute.xlu0 %4865
        %v4868 = vmul.f32 %v4227, %v4831
        %v4869 = vmul.f32 %v4232, %v4836
        %v4870 = vmul.f32 %v4235, %v4841
        %v4871 = vmul.f32 %v4240, %v4846
        %v4872 = vmul.f32 %v4243, %v4851
        %v4873 = vmul.f32 %v4248, %v4856
        %v4874 = vmul.f32 %v4251, %v4861
        %v4875 = vmul.f32 %v4224, %v4866
        %v4876 = vlaneseq
        %v4877 = vshrl.u32 %v4876, 7
        %v4878 = vsub.s32 7, %v4877
        %v4879 = vrot.slane %v4254, %v4878
        %v4880 = vmul.f32 %v4868, %v4879
        %v4881 = vmul.f32 %v4869, %v4879
        %v4882 = vmul.f32 %v4870, %v4879
        %v4883 = vmul.f32 %v4871, %v4879
        %v4884 = vmul.f32 %v4872, %v4879
        %v4885 = vmul.f32 %v4873, %v4879
        %v4886 = vmul.f32 %v4874, %v4879
        %v4887 = vmul.f32 %v4875, %v4879
        %v4888 = vadd.f32 %v4812, %v4880
        %v4889 = vadd.f32 %v4813, %v4881
        %v4890 = vadd.f32 %v4814, %v4882
        %v4891 = vadd.f32 %v4815, %v4883
        %v4892 = vadd.f32 %v4816, %v4884
        %v4893 = vadd.f32 %v4817, %v4885
        %v4894 = vadd.f32 %v4818, %v4886
        %v4895 = vadd.f32 %v4819, %v4887
        %v4896 = vld [vmem:[%s2696] sm:$0xff]
        %v4897 = vld [vmem:[%s2696 + $0x8] sm:$0xff]
        %v4898 = vld [vmem:[%s2696 + $0x10] sm:$0xff]
        %v4899 = vld [vmem:[%s2696 + $0x18] sm:$0xff]
        %v4900 = vld [vmem:[%s2696 + $0x20] sm:$0xff]
        %v4901 = vld [vmem:[%s2696 + $0x28] sm:$0xff]
        %v4902 = vld [vmem:[%s2696 + $0x30] sm:$0xff]
        %v4903 = vld [vmem:[%s2696 + $0x38] sm:$0xff]
        %4905 = vset.pattern.permute.xlu0 0
        %4906 = vperm.xlu0 %4905, %v4896
        %v4907 = vpop.permute.xlu0 %4906
        %4910 = vset.pattern.permute.xlu0 0
        %4911 = vperm.xlu0 %4910, %v4897
        %v4912 = vpop.permute.xlu0 %4911
        %4915 = vset.pattern.permute.xlu0 0
        %4916 = vperm.xlu0 %4915, %v4898
        %v4917 = vpop.permute.xlu0 %4916
        %4920 = vset.pattern.permute.xlu0 0
        %4921 = vperm.xlu0 %4920, %v4899
        %v4922 = vpop.permute.xlu0 %4921
        %4925 = vset.pattern.permute.xlu0 0
        %4926 = vperm.xlu0 %4925, %v4900
        %v4927 = vpop.permute.xlu0 %4926
        %4930 = vset.pattern.permute.xlu0 0
        %4931 = vperm.xlu0 %4930, %v4901
        %v4932 = vpop.permute.xlu0 %4931
        %4935 = vset.pattern.permute.xlu0 0
        %4936 = vperm.xlu0 %4935, %v4902
        %v4937 = vpop.permute.xlu0 %4936
        %4940 = vset.pattern.permute.xlu0 0
        %4941 = vperm.xlu0 %4940, %v4903
        %v4942 = vpop.permute.xlu0 %4941
        %v4944 = vmul.f32 %v4437, %v4907
        %v4945 = vmul.f32 %v4436, %v4912
        %v4946 = vmul.f32 %v4435, %v4917
        %v4947 = vmul.f32 %v4434, %v4922
        %v4948 = vmul.f32 %v4433, %v4927
        %v4949 = vmul.f32 %v4432, %v4932
        %v4950 = vmul.f32 %v4439, %v4937
        %v4951 = vmul.f32 %v4438, %v4942
        %v4952 = vlaneseq
        %v4953 = vshrl.u32 %v4952, 7
        %v4954 = vsub.s32 0, %v4953
        %v4955 = vrot.slane %v4255, %v4954
        %v4956 = vmul.f32 %v4944, %v4955
        %v4957 = vmul.f32 %v4945, %v4955
        %v4958 = vmul.f32 %v4946, %v4955
        %v4959 = vmul.f32 %v4947, %v4955
        %v4960 = vmul.f32 %v4948, %v4955
        %v4961 = vmul.f32 %v4949, %v4955
        %v4962 = vmul.f32 %v4950, %v4955
        %v4963 = vmul.f32 %v4951, %v4955
        %v4964 = vadd.f32 %v4888, %v4956
        %v4965 = vadd.f32 %v4889, %v4957
        %v4966 = vadd.f32 %v4890, %v4958
        %v4967 = vadd.f32 %v4891, %v4959
        %v4968 = vadd.f32 %v4892, %v4960
        %v4969 = vadd.f32 %v4893, %v4961
        %v4970 = vadd.f32 %v4894, %v4962
        %v4971 = vadd.f32 %v4895, %v4963
        %v4972 = vmul.f32 %v4964, 0.5
        %v4973 = vmul.f32 %v4965, 0.5
        %v4974 = vmul.f32 %v4966, 0.5
        %v4975 = vmul.f32 %v4967, 0.5
        %v4976 = vmul.f32 %v4968, 0.5
        %v4977 = vmul.f32 %v4969, 0.5
        %v4978 = vmul.f32 %v4970, 0.5
        %v4979 = vmul.f32 %v4971, 0.5
        %v4980 = vmul.f32 %v4964, 0.70710677
        %v4981 = vmul.f32 %v4965, 0.70710677
        %v4982 = vmul.f32 %v4966, 0.70710677
        %v4983 = vmul.f32 %v4967, 0.70710677
        %v4984 = vmul.f32 %v4968, 0.70710677
        %v4985 = vmul.f32 %v4969, 0.70710677
        %v4986 = vmul.f32 %v4970, 0.70710677
        %v4987 = vmul.f32 %v4971, 0.70710677
        %v4988 = vand.u32 2147483647, %v4980
        %v4989 = vand.u32 2147483647, %v4981
        %v4990 = vand.u32 2147483647, %v4982
        %v4991 = vand.u32 2147483647, %v4983
        %v4992 = vand.u32 2147483647, %v4984
        %v4993 = vand.u32 2147483647, %v4985
        %v4994 = vand.u32 2147483647, %v4986
        %v4995 = vand.u32 2147483647, %v4987
        %v4996 = vmul.f32 %v4988, 0.3275911
        %v4997 = vmul.f32 %v4989, 0.3275911
        %v4998 = vmul.f32 %v4990, 0.3275911
        %v4999 = vmul.f32 %v4991, 0.3275911
        %v5000 = vmul.f32 %v4992, 0.3275911
        %v5001 = vmul.f32 %v4993, 0.3275911
        %v5002 = vmul.f32 %v4994, 0.3275911
        %v5003 = vmul.f32 %v4995, 0.3275911
        %v5004 = vadd.f32 %v4996, 1.0
        %v5005 = vadd.f32 %v4997, 1.0
        %v5006 = vadd.f32 %v4998, 1.0
        %v5007 = vadd.f32 %v4999, 1.0
        %v5008 = vadd.f32 %v5000, 1.0
        %v5009 = vadd.f32 %v5001, 1.0
        %v5010 = vadd.f32 %v5002, 1.0
        %v5011 = vadd.f32 %v5003, 1.0
        %v5012 = vrcp.pop %v5004
        %v5013 = vrcp.pop %v5005
        %v5014 = vrcp.pop %v5006
        %v5015 = vrcp.pop %v5007
        %v5016 = vrcp.pop %v5008
        %v5017 = vrcp.pop %v5009
        %v5018 = vrcp.pop %v5010
        %v5019 = vrcp.pop %v5011
        %v5020 = vmul.f32 %v5012, 1.0614054
        %v5021 = vmul.f32 %v5013, 1.0614054
        %v5022 = vmul.f32 %v5014, 1.0614054
        %v5023 = vmul.f32 %v5015, 1.0614054
        %v5024 = vmul.f32 %v5016, 1.0614054
        %v5025 = vmul.f32 %v5017, 1.0614054
        %v5026 = vmul.f32 %v5018, 1.0614054
        %v5027 = vmul.f32 %v5019, 1.0614054
        %v5028 = vadd.f32 %v5020, -1.4531521
        %v5029 = vadd.f32 %v5021, -1.4531521
        %v5030 = vadd.f32 %v5022, -1.4531521
        %v5031 = vadd.f32 %v5023, -1.4531521
        %v5032 = vadd.f32 %v5024, -1.4531521
        %v5033 = vadd.f32 %v5025, -1.4531521
        %v5034 = vadd.f32 %v5026, -1.4531521
        %v5035 = vadd.f32 %v5027, -1.4531521
        %v5036 = vmul.f32 %v5028, %v5012
        %v5037 = vmul.f32 %v5029, %v5013
        %v5038 = vmul.f32 %v5030, %v5014
        %v5039 = vmul.f32 %v5031, %v5015
        %v5040 = vmul.f32 %v5032, %v5016
        %v5041 = vmul.f32 %v5033, %v5017
        %v5042 = vmul.f32 %v5034, %v5018
        %v5043 = vmul.f32 %v5035, %v5019
        %v5044 = vadd.f32 %v5036, 1.4214138
        %v5045 = vadd.f32 %v5037, 1.4214138
        %v5046 = vadd.f32 %v5038, 1.4214138
        %v5047 = vadd.f32 %v5039, 1.4214138
        %v5048 = vadd.f32 %v5040, 1.4214138
        %v5049 = vadd.f32 %v5041, 1.4214138
        %v5050 = vadd.f32 %v5042, 1.4214138
        %v5051 = vadd.f32 %v5043, 1.4214138
        %v5052 = vmul.f32 %v5044, %v5012
        %v5053 = vmul.f32 %v5045, %v5013
        %v5054 = vmul.f32 %v5046, %v5014
        %v5055 = vmul.f32 %v5047, %v5015
        %v5056 = vmul.f32 %v5048, %v5016
        %v5057 = vmul.f32 %v5049, %v5017
        %v5058 = vmul.f32 %v5050, %v5018
        %v5059 = vmul.f32 %v5051, %v5019
        %v5060 = vadd.f32 %v5052, -0.28449672
        %v5061 = vadd.f32 %v5053, -0.28449672
        %v5062 = vadd.f32 %v5054, -0.28449672
        %v5063 = vadd.f32 %v5055, -0.28449672
        %v5064 = vadd.f32 %v5056, -0.28449672
        %v5065 = vadd.f32 %v5057, -0.28449672
        %v5066 = vadd.f32 %v5058, -0.28449672
        %v5067 = vadd.f32 %v5059, -0.28449672
        %v5068 = vmul.f32 %v5060, %v5012
        %v5069 = vmul.f32 %v5061, %v5013
        %v5070 = vmul.f32 %v5062, %v5014
        %v5071 = vmul.f32 %v5063, %v5015
        %v5072 = vmul.f32 %v5064, %v5016
        %v5073 = vmul.f32 %v5065, %v5017
        %v5074 = vmul.f32 %v5066, %v5018
        %v5075 = vmul.f32 %v5067, %v5019
        %v5076 = vadd.f32 %v5068, 0.2548296
        %v5077 = vadd.f32 %v5069, 0.2548296
        %v5078 = vadd.f32 %v5070, 0.2548296
        %v5079 = vadd.f32 %v5071, 0.2548296
        %v5080 = vadd.f32 %v5072, 0.2548296
        %v5081 = vadd.f32 %v5073, 0.2548296
        %v5082 = vadd.f32 %v5074, 0.2548296
        %v5083 = vadd.f32 %v5075, 0.2548296
        %v5084 = vmul.f32 %v5076, %v5012
        %v5085 = vmul.f32 %v5077, %v5013
        %v5086 = vmul.f32 %v5078, %v5014
        %v5087 = vmul.f32 %v5079, %v5015
        %v5088 = vmul.f32 %v5080, %v5016
        %v5089 = vmul.f32 %v5081, %v5017
        %v5090 = vmul.f32 %v5082, %v5018
        %v5091 = vmul.f32 %v5083, %v5019
        %v5092 = vsub.f32 0.0, %v4988
        %v5093 = vsub.f32 0.0, %v4989
        %v5094 = vsub.f32 0.0, %v4990
        %v5095 = vsub.f32 0.0, %v4991
        %v5096 = vsub.f32 0.0, %v4992
        %v5097 = vsub.f32 0.0, %v4993
        %v5098 = vsub.f32 0.0, %v4994
        %v5099 = vsub.f32 0.0, %v4995
        %v5100 = vmul.f32 %v5092, %v4988
        %v5101 = vmul.f32 %v5093, %v4989
        %v5102 = vmul.f32 %v5094, %v4990
        %v5103 = vmul.f32 %v5095, %v4991
        %v5104 = vmul.f32 %v5096, %v4992
        %v5105 = vmul.f32 %v5097, %v4993
        %v5106 = vmul.f32 %v5098, %v4994
        %v5107 = vmul.f32 %v5099, %v4995
        %v5108 = vmul.f32 %v5100, 1.442695
        %v5109 = vpow.pop %v5108
        %v5110 = vmul.f32 %v5101, 1.442695
        %v5111 = vpow.pop %v5110
        %v5112 = vmul.f32 %v5102, 1.442695
        %v5113 = vpow.pop %v5112
        %v5114 = vmul.f32 %v5103, 1.442695
        %v5115 = vpow.pop %v5114
        %v5116 = vmul.f32 %v5104, 1.442695
        %v5117 = vpow.pop %v5116
        %v5118 = vmul.f32 %v5105, 1.442695
        %v5119 = vpow.pop %v5118
        %v5120 = vmul.f32 %v5106, 1.442695
        %v5121 = vpow.pop %v5120
        %v5122 = vmul.f32 %v5107, 1.442695
        %v5123 = vpow.pop %v5122
        %v5124 = vmul.f32 %v5084, %v5109
        %v5125 = vmul.f32 %v5085, %v5111
        %v5126 = vmul.f32 %v5086, %v5113
        %v5127 = vmul.f32 %v5087, %v5115
        %v5128 = vmul.f32 %v5088, %v5117
        %v5129 = vmul.f32 %v5089, %v5119
        %v5130 = vmul.f32 %v5090, %v5121
        %v5131 = vmul.f32 %v5091, %v5123
        %v5132 = vsub.f32 1.0, %v5124
        %v5133 = vsub.f32 1.0, %v5125
        %v5134 = vsub.f32 1.0, %v5126
        %v5135 = vsub.f32 1.0, %v5127
        %v5136 = vsub.f32 1.0, %v5128
        %v5137 = vsub.f32 1.0, %v5129
        %v5138 = vsub.f32 1.0, %v5130
        %v5139 = vsub.f32 1.0, %v5131
        %vm5140 = vcmp.ge.f32.partialorder %v4980, 0.0
        %vm5141 = vcmp.ge.f32.partialorder %v4981, 0.0
        %vm5142 = vcmp.ge.f32.partialorder %v4982, 0.0
        %vm5143 = vcmp.ge.f32.partialorder %v4983, 0.0
        %vm5144 = vcmp.ge.f32.partialorder %v4984, 0.0
        %vm5145 = vcmp.ge.f32.partialorder %v4985, 0.0
        %vm5146 = vcmp.ge.f32.partialorder %v4986, 0.0
        %vm5147 = vcmp.ge.f32.partialorder %v4987, 0.0
        %v5148 = vsub.f32 0.0, %v5132
        %v5149 = vsub.f32 0.0, %v5133
        %v5150 = vsub.f32 0.0, %v5134
        %v5151 = vsub.f32 0.0, %v5135
        %v5152 = vsub.f32 0.0, %v5136
        %v5153 = vsub.f32 0.0, %v5137
        %v5154 = vsub.f32 0.0, %v5138
        %v5155 = vsub.f32 0.0, %v5139
        %v5156 = vsel %vm5140, %v5132, %v5148
        %v5157 = vsel %vm5141, %v5133, %v5149
        %v5158 = vsel %vm5142, %v5134, %v5150
        %v5159 = vsel %vm5143, %v5135, %v5151
        %v5160 = vsel %vm5144, %v5136, %v5152
        %v5161 = vsel %vm5145, %v5137, %v5153
        %v5162 = vsel %vm5146, %v5138, %v5154
        %v5163 = vsel %vm5147, %v5139, %v5155
        %v5164 = vadd.f32 %v5156, 1.0
        %v5165 = vadd.f32 %v5157, 1.0
        %v5166 = vadd.f32 %v5158, 1.0
        %v5167 = vadd.f32 %v5159, 1.0
        %v5168 = vadd.f32 %v5160, 1.0
        %v5169 = vadd.f32 %v5161, 1.0
        %v5170 = vadd.f32 %v5162, 1.0
        %v5171 = vadd.f32 %v5163, 1.0
        %v5172 = vmul.f32 %v4972, %v5164
        %v5173 = vmul.f32 %v4973, %v5165
        %v5174 = vmul.f32 %v4974, %v5166
        %v5175 = vmul.f32 %v4975, %v5167
        %v5176 = vmul.f32 %v4976, %v5168
        %v5177 = vmul.f32 %v4977, %v5169
        %v5178 = vmul.f32 %v4978, %v5170
        %v5179 = vmul.f32 %v4979, %v5171
        %5188 = vrot.lane.b32.xlu0 %v4964, 96
        %v5189 = vpop.permute.xlu0 %5188
        %5190 = vrot.lane.b32.xlu0 %v4965, 96
        %v5191 = vpop.permute.xlu0 %5190
        %5192 = vrot.lane.b32.xlu0 %v4966, 96
        %v5193 = vpop.permute.xlu0 %5192
        %5194 = vrot.lane.b32.xlu0 %v4967, 96
        %v5195 = vpop.permute.xlu0 %5194
        %5196 = vrot.lane.b32.xlu0 %v4968, 96
        %v5197 = vpop.permute.xlu0 %5196
        %5198 = vrot.lane.b32.xlu0 %v4969, 96
        %v5199 = vpop.permute.xlu0 %5198
        %5200 = vrot.lane.b32.xlu0 %v4970, 96
        %v5201 = vpop.permute.xlu0 %5200
        %5202 = vrot.lane.b32.xlu0 %v4971, 96
        %v5203 = vpop.permute.xlu0 %5202
        %v5212 = vmul.f32 %v5172, %v5189
        %v5213 = vmul.f32 %v5173, %v5191
        %v5214 = vmul.f32 %v5174, %v5193
        %v5215 = vmul.f32 %v5175, %v5195
        %v5216 = vmul.f32 %v5176, %v5197
        %v5217 = vmul.f32 %v5177, %v5199
        %v5218 = vmul.f32 %v5178, %v5201
        %v5219 = vmul.f32 %v5179, %v5203
        %v5220 = vld [vmem:[%s22] sm:$0xf]
        %v5221 = vld [vmem:[%s22 + $0x4] sm:$0xf]
        %v5222 = vld [vmem:[%s22 + $0x8] sm:$0xf]
        %v5223 = vld [vmem:[%s22 + $0xc] sm:$0xf]
        %v5224 = vpack.c.bf16 %v5213, %v5212
        %v5225 = vpack.c.bf16 %v5215, %v5214
        %v5226 = vpack.c.bf16 %v5217, %v5216
        %v5227 = vpack.c.bf16 %v5219, %v5218
        %v5232 = vunpack.c.l.b16 %v5220
        %v5233 = vunpack.c.l.b16 %v5221
        %v5234 = vunpack.c.l.b16 %v5222
        %v5235 = vunpack.c.l.b16 %v5223
        %v5236 = vpack.c.b16 %v5233, %v5232
        %v5237 = vpack.c.b16 %v5235, %v5234
        %vm5240 = vcmask 261120
        %v5242 = vsel %vm5240, %v5224, 0
        %v5245 = vsel %vm5240, %v5225, 0
        %v5248 = vsel %vm5240, %v5226, 0
        %v5251 = vsel %vm5240, %v5227, 0
        %5253 = vmatprep.subr.bf16.mxu0 0
        %5254 = vmatpush1.bf16.msra.mxu0 0
        %5255 = vmatprep.subr.bf16.mxu0 0
        %5256 = vmatpush1.bf16.msra.mxu0 0
        %5257 = vmatprep.subr.bf16.mxu0 0
        %5258 = vmatpush1.bf16.msra.mxu0 0
        %5259 = vmatprep.subr.bf16.mxu0 0
        %5260 = vmatpush1.bf16.msra.mxu0 0
        %5261 = vmatprep.subr.bf16.mxu0 0
        %5262 = vmatpush1.bf16.msra.mxu0 0
        %5263 = vmatprep.subr.bf16.mxu0 0
        %5264 = vmatpush1.bf16.msra.mxu0 0
        %5265 = vmatprep.subr.bf16.mxu0 0
        %5266 = vmatpush1.bf16.msra.mxu0 %v5237
        %5267 = vmatprep.subr.bf16.mxu0 0
        %5268 = vmatpush1.bf16.msra.mxu0 %v5236
        %5269 = vmatprep.subr.bf16.mxu0 0
        %5270 = vmatpush2.bf16.msra.mxu0 0
        %5271 = vmatprep.subr.bf16.mxu0 0
        %5272 = vmatpush2.bf16.msra.mxu0 0
        %5273 = vmatprep.subr.bf16.mxu0 0
        %5274 = vmatpush2.bf16.msra.mxu0 0
        %5275 = vmatprep.subr.bf16.mxu0 0
        %5276 = vmatpush2.bf16.msra.mxu0 0
        %5277 = vmatprep.subr.bf16.mxu0 0
        %5278 = vmatpush2.bf16.msra.mxu0 0
        %5279 = vmatprep.subr.bf16.mxu0 0
        %5280 = vmatpush2.bf16.msra.mxu0 0
        %5281 = vmatprep.subr.bf16.mxu0 0
        %5282 = vmatpush2.bf16.msra.mxu0 0
        %5283 = vmatprep.subr.bf16.mxu0 0
        %5284 = vmatpush2.bf16.msra.mxu0 0
        %5285 = vmatprep.mubr.bf16.mxu0 0
        %5286 = vmatmul.mubr.bf16.gmra.mxu0 %v5242
        %v5287 = vpop.f32.mrf.mxu0
        %v5288 = vadd.f32 0.0, %v5287
        %v5289 = vpop.f32.mrf.mxu0
        %v5290 = vpop.f32.mrf.mxu0
        %v5291 = vadd.f32 0.0, %v5290
        %v5292 = vpop.f32.mrf.mxu0
        %5293 = vmatprep.mubr.bf16.mxu0 0
        %5294 = vmatmul.mubr.bf16.gmra.mxu0 %v5245
        %v5295 = vpop.f32.mrf.mxu0
        %v5296 = vadd.f32 0.0, %v5295
        %v5297 = vpop.f32.mrf.mxu0
        %v5298 = vpop.f32.mrf.mxu0
        %v5299 = vadd.f32 0.0, %v5298
        %v5300 = vpop.f32.mrf.mxu0
        %5301 = vmatprep.mubr.bf16.mxu0 0
        %5302 = vmatmul.mubr.bf16.gmra.mxu0 %v5248
        %v5303 = vpop.f32.mrf.mxu0
        %v5304 = vadd.f32 0.0, %v5303
        %v5305 = vpop.f32.mrf.mxu0
        %v5306 = vpop.f32.mrf.mxu0
        %v5307 = vadd.f32 0.0, %v5306
        %v5308 = vpop.f32.mrf.mxu0
        %5309 = vmatprep.mubr.bf16.mxu0 0
        %5310 = vmatmul.mubr.bf16.gmra.mxu0 %v5251
        %v5311 = vpop.f32.mrf.mxu0
        %v5312 = vadd.f32 0.0, %v5311
        %v5313 = vpop.f32.mrf.mxu0
        %v5314 = vpop.f32.mrf.mxu0
        %v5315 = vadd.f32 0.0, %v5314
        %v5316 = vpop.f32.mrf.mxu0
        %5317 = vdwg.mxu0
        %v5318 = vadd.f32 %v4023, %v5288
        %v5319 = vadd.f32 %v4024, %v5291
        %v5320 = vadd.f32 %v4025, %v5296
        %v5321 = vadd.f32 %v4026, %v5299
        %v5322 = vadd.f32 %v4027, %v5304
        %v5323 = vadd.f32 %v4028, %v5307
        %v5324 = vadd.f32 %v4029, %v5312
        %v5325 = vadd.f32 %v4030, %v5315
        %5326 = vst.msk [vmem:[%s811] sm:$0xff] %vm872, %v5318
        %5327 = vst.msk [vmem:[%s811 + $0x8] sm:$0xff] %vm872, %v5319
        %5328 = vst.msk [vmem:[%s811 + $0x10] sm:$0xff] %vm872, %v5320
        %5329 = vst.msk [vmem:[%s811 + $0x18] sm:$0xff] %vm872, %v5321
        %5330 = vst.msk [vmem:[%s811 + $0x20] sm:$0xff] %vm872, %v5322
        %5331 = vst.msk [vmem:[%s811 + $0x28] sm:$0xff] %vm872, %v5323
        %5332 = vst.msk [vmem:[%s811 + $0x30] sm:$0xff] %vm872, %v5324
        %5333 = vst.msk [vmem:[%s811 + $0x38] sm:$0xff] %vm872, %v5325
        %p5334 = scmp.lt.s32.totalorder %s36, 1
        %s5335 = scalar_select %p5334, %s36, 1
        %s5336 = smul.addr %s5335, 8
        %s5337 = smul.addr %s5336, 8
        %s5338 = scalar_lea.vmem %s24, %s5337
        // Predicated region
        $region121: #{transformer_encoder_forward.3} parent=115 // pred_check
          %p5339 = pneg %p578
        $region122: #{transformer_encoder_forward.3} parent=115 // pred_check_branch
          %5341 = sbr.rel (%p5339) target = $region124
        $region123: #{transformer_encoder_forward.3} parent=115 // pred_region
          _
        $region124: #{transformer_encoder_forward.3} parent=115 // pred_fallthru
          _
      $region116: #{transformer_encoder_forward.3} parent=5 // pred_fallthru
        _
      %p5342 = scmp.le.s32.totalorder 2, %s31
      // Predicated region
      $region125: #{transformer_encoder_forward.3} parent=5 // pred_check
        %p5343 = pneg %p5342
      $region126: #{transformer_encoder_forward.3} parent=5 // pred_check_branch
        %5345 = sbr.rel (%p5343) target = $region128
      $region127: #{transformer_encoder_forward.3} parent=5 // pred_region
        %s5346 = ssub.s32 %s31, 2
        // Predicated region
        $region129: #{transformer_encoder_forward.3} parent=127 // pred_check
          %p5347 = pneg %p584
        $region130: #{transformer_encoder_forward.3} parent=127 // pred_check_branch
          %5349 = sbr.rel (%p5347) target = $region132
        $region131: #{transformer_encoder_forward.3} parent=127 // pred_region
          %p5350 = scmp.lt.s32.totalorder %s37, 1
          %s5351 = scalar_select %p5350, %s37, 1
          %s5352 = smul.addr %s5351, 8
          %s5353 = smul.addr %s5352, 8
          %s5354 = scalar_lea.vmem %s24, %s5353
        $region132: #{transformer_encoder_forward.3} parent=127 // pred_fallthru
          _
      $region128: #{transformer_encoder_forward.3} parent=5 // pred_fallthru
        _
    $region6: #{transformer_encoder_forward.3} parent=1 // loop_footer
      %s35 = sadd.s32 1, %s31
    $region7: #{transformer_encoder_forward.3} parent=1 // loop_footer_branch
      %30 = sbr.rel target = $region3
    $region8: #{transformer_encoder_forward.3} parent=1 // loop_exit
      _
    %5355 = vsyncpa [#allocation5], 1
    %s5356 = scalar_lea.sflag [#allocation5], 1
    %5357 = vsyncpa %s5356, 1

</llo_original>
